<compile_context>
chip_gen: v7x
topology: tpu7x:2x2x1
jax: 0.10.0
libtpu: 0.0.40
codegen_flags: <defaults>
</compile_context>

<pallas_src>
import functools

import jax
import jax.numpy as jnp
import numpy as np
from jax.experimental import pallas as pl
from jax.experimental.pallas import tpu as pltpu

_INV_SQRT2 = 0.7071067811865476
_EPS = 1e-5  # nn.GroupNorm default eps


# ----------------------------- in-kernel helpers -----------------------------

def _gelu(x):
    # exact GELU (matches nn.GELU() default, approximate='none')
    return 0.5 * x * (1.0 + jax.lax.erf(x * _INV_SQRT2))


def _group_norm(y, w, b, eps):
    """GroupNorm(num_groups=1) over a per-sample (M, C) tile, one-pass E[x]/E[x^2].

    Sublane-axis (rows) reduction first, then a single (1, C) cross-lane reduce.
    """
    n = y.shape[0] * y.shape[1]
    s1 = jnp.sum(y, axis=0, keepdims=True)        # (1, C)
    s2 = jnp.sum(y * y, axis=0, keepdims=True)    # (1, C)
    mean = jnp.sum(s1, axis=1, keepdims=True) / n  # (1, 1)
    ex2 = jnp.sum(s2, axis=1, keepdims=True) / n
    var = jnp.maximum(ex2 - mean * mean, 0.0)
    return (y - mean) * jax.lax.rsqrt(var + eps) * w + b


def _conv3x3_from_pad(pad_ref, w_ref, H, W):
    """3x3 / stride-1 / pad-1 conv as 9 accumulated MXU matmuls.

    pad_ref: VMEM scratch of shape (H*W + 2*W + 2, Cin) whose rows [W+1, W+1+H*W) hold the
    flattened (H, W) sample and whose borders are zero (handles the i-boundary).  Each tap
    (dh, dw) is a static shifted slice; only the j-boundary needs a mask (j+dw in [0, W)).
    w_ref: (9, Cin, Cout) bf16 taps in (kh, kw) order.
    """
    HW = H * W
    Cout = w_ref.shape[2]
    col = jax.lax.broadcasted_iota(jnp.int32, (HW, 1), 0) % W
    left_ok = col >= 1           # valid when reading the pixel to the left  (dw = -1)
    right_ok = col <= (W - 2)    # valid when reading the pixel to the right (dw = +1)
    acc = jnp.zeros((HW, Cout), jnp.float32)
    for dh in (-1, 0, 1):
        for dw in (-1, 0, 1):
            t = (dh + 1) * 3 + (dw + 1)
            tap = pad_ref[pl.ds(W + 1 + dh * W + dw, HW), :]
            if dw == -1:
                tap = jnp.where(left_ok, tap, jnp.zeros_like(tap))
            elif dw == 1:
                tap = jnp.where(right_ok, tap, jnp.zeros_like(tap))
            acc = acc + jnp.dot(tap.astype(jnp.bfloat16), w_ref[t],
                                preferred_element_type=jnp.float32)
    return acc


# ------------------------------- Pallas kernels ------------------------------

def _stem_kernel(x_ref, w_ref, b_ref, o_ref, pad_ref, *, H, W):
    """Per-sample: 3x3 s1 p1 conv + bias + GELU (no HBM im2col)."""
    HW = H * W
    pad_ref[...] = jnp.zeros_like(pad_ref)
    pad_ref[pl.ds(W + 1, HW), :] = x_ref[...]
    y = _conv3x3_from_pad(pad_ref, w_ref, H, W) + b_ref[...]
    o_ref[...] = _gelu(y)


def _convblock_kernel(x_ref, w0_ref, b0_ref, w1_ref, b1_ref, gnw_ref, gnb_ref,
                      w2_ref, b2_ref, g_ref, o_ref, pad_ref, *, H, W, eps):
    """Fully fused ConvBlock for one sample (all intermediates stay in VMEM)."""
    HW = H * W
    x = x_ref[...]                                                   # (HW, C) f32 (residual)

    # conv0 (1x1) + GroupNorm(1, C/4) + GELU
    y = jnp.dot(x.astype(jnp.bfloat16), w0_ref[...],
                preferred_element_type=jnp.float32) + b0_ref[...]
    y = _gelu(_group_norm(y, gnw_ref[...], gnb_ref[...], eps))

    # conv1 (3x3 s1 p1) via shifted reads of a zero-padded scratch
    pad_ref[...] = jnp.zeros_like(pad_ref)
    pad_ref[pl.ds(W + 1, HW), :] = y
    z = _conv3x3_from_pad(pad_ref, w1_ref, H, W) + b1_ref[...]
    z = _gelu(_group_norm(z, gnw_ref[...], gnb_ref[...], eps))        # same norm params (reused)

    # conv2 (1x1) + layer-scale (gamma) + residual; drop_path(0.0) == Identity
    y2 = jnp.dot(z.astype(jnp.bfloat16), w2_ref[...],
                 preferred_element_type=jnp.float32) + b2_ref[...]
    o_ref[...] = x + g_ref[...] * y2


def _down0_kernel(x_ref, w_ref, b_ref, gnw_ref, gnb_ref, o_ref, *, eps):
    """Per-sample: Conv2d(k=4, s=4) as matmul on the patchified sample, then GroupNorm."""
    y = jnp.dot(x_ref[...].astype(jnp.bfloat16), w_ref[...],
                preferred_element_type=jnp.float32) + b_ref[...]
    o_ref[...] = _group_norm(y, gnw_ref[...], gnb_ref[...], eps)


def _down_gn_conv_kernel(x_ref, gnw_ref, gnb_ref, w_ref, b_ref, o_ref, *, eps):
    """Per-sample: GroupNorm (tiled affine, patchified layout) then Conv2d(k=2, s=2) matmul."""
    xn = _group_norm(x_ref[...], gnw_ref[...], gnb_ref[...], eps)
    o_ref[...] = jnp.dot(xn.astype(jnp.bfloat16), w_ref[...],
                         preferred_element_type=jnp.float32) + b_ref[...]


# ------------------------------- kernel wrappers ------------------------------

_PAR = pltpu.CompilerParams(dimension_semantics=("parallel",))


def _full_spec(shape):
    """BlockSpec covering a full (grid-invariant) parameter array."""
    if len(shape) == 2:
        return pl.BlockSpec(shape, lambda b: (0, 0))
    return pl.BlockSpec(shape, lambda b: (0, 0, 0))


def patchify(x, k):
    """NHWC -> (B, (H/k)*(W/k), k*k*C) non-overlapping patches (tap-major: kh, kw, c)."""
    B, H, W, C = x.shape
    Ho, Wo = H // k, W // k
    x = x.reshape(B, Ho, k, Wo, k, C).transpose(0, 1, 3, 2, 4, 5)
    return x.reshape(B, Ho * Wo, k * k * C)


def stem_forward(x, p):
    B, H, W, Cin = x.shape
    C0 = p["w"].shape[-1]
    HW = H * W
    out = pl.pallas_call(
        functools.partial(_stem_kernel, H=H, W=W),
        grid=(B,),
        in_specs=[pl.BlockSpec((None, HW, Cin), lambda b: (b, 0, 0)),
                  _full_spec((9, Cin, C0)),
                  _full_spec((1, C0))],
        out_specs=pl.BlockSpec((None, HW, C0), lambda b: (b, 0, 0)),
        out_shape=jax.ShapeDtypeStruct((B, HW, C0), jnp.float32),
        scratch_shapes=[pltpu.VMEM((HW + 2 * W + 2, Cin), jnp.float32)],
        compiler_params=_PAR,
    )(x.reshape(B, HW, Cin),
      p["w"].reshape(9, Cin, C0).astype(jnp.bfloat16),
      p["b"].reshape(1, C0))
    return out.reshape(B, H, W, C0)


def conv_block_forward(x, p):
    B, H, W, C = x.shape
    C4 = C // 4
    HW = H * W
    out = pl.pallas_call(
        functools.partial(_convblock_kernel, H=H, W=W, eps=_EPS),
        grid=(B,),
        in_specs=[pl.BlockSpec((None, HW, C), lambda b: (b, 0, 0)),
                  _full_spec((C, C4)), _full_spec((1, C4)),
                  _full_spec((9, C4, C4)), _full_spec((1, C4)),
                  _full_spec((1, C4)), _full_spec((1, C4)),
                  _full_spec((C4, C)), _full_spec((1, C)),
                  _full_spec((1, C))],
        out_specs=pl.BlockSpec((None, HW, C), lambda b: (b, 0, 0)),
        out_shape=jax.ShapeDtypeStruct((B, HW, C), jnp.float32),
        scratch_shapes=[pltpu.VMEM((HW + 2 * W + 2, C4), jnp.float32)],
        input_output_aliases={0: 0},   # reuse the residual buffer for the output
        compiler_params=_PAR,
    )(x.reshape(B, HW, C),
      p["w0"].astype(jnp.bfloat16), p["b0"].reshape(1, C4),
      p["w1"].reshape(9, C4, C4).astype(jnp.bfloat16), p["b1"].reshape(1, C4),
      p["gn_w"].reshape(1, C4), p["gn_b"].reshape(1, C4),
      p["w2"].astype(jnp.bfloat16), p["b2"].reshape(1, C),
      p["gamma"].reshape(1, C))
    return out.reshape(B, H, W, C)


def downsample_stage0(x, ds):
    B, H, W, C = x.shape
    Ho, Wo = H // 4, W // 4
    M, K = Ho * Wo, 16 * C
    Co = ds["w"].shape[-1]
    out = pl.pallas_call(
        functools.partial(_down0_kernel, eps=_EPS),
        grid=(B,),
        in_specs=[pl.BlockSpec((None, M, K), lambda b: (b, 0, 0)),
                  _full_spec((K, Co)), _full_spec((1, Co)),
                  _full_spec((1, Co)), _full_spec((1, Co))],
        out_specs=pl.BlockSpec((None, M, Co), lambda b: (b, 0, 0)),
        out_shape=jax.ShapeDtypeStruct((B, M, Co), jnp.float32),
        compiler_params=_PAR,
    )(patchify(x, 4),
      ds["w"].reshape(K, Co).astype(jnp.bfloat16), ds["b"].reshape(1, Co),
      ds["gn_w"].reshape(1, Co), ds["gn_b"].reshape(1, Co))
    return out.reshape(B, Ho, Wo, Co)


def downsample_later(x, ds):
    B, H, W, C = x.shape
    Ho, Wo = H // 2, W // 2
    M, K = Ho * Wo, 4 * C
    Co = ds["w"].shape[-1]
    # GroupNorm(1, C) statistics are identical on the patchified layout; the per-channel affine
    # params just need tiling over the 4 taps (column order is (kh, kw, c)).
    gnw = jnp.tile(ds["gn_w"], 4).reshape(1, K)
    gnb = jnp.tile(ds["gn_b"], 4).reshape(1, K)
    out = pl.pallas_call(
        functools.partial(_down_gn_conv_kernel, eps=_EPS),
        grid=(B,),
        in_specs=[pl.BlockSpec((None, M, K), lambda b: (b, 0, 0)),
                  _full_spec((1, K)), _full_spec((1, K)),
                  _full_spec((K, Co)), _full_spec((1, Co))],
        out_specs=pl.BlockSpec((None, M, Co), lambda b: (b, 0, 0)),
        out_shape=jax.ShapeDtypeStruct((B, M, Co), jnp.float32),
        compiler_params=_PAR,
    )(patchify(x, 2), gnw, gnb,
      ds["w"].reshape(K, Co).astype(jnp.bfloat16), ds["b"].reshape(1, Co))
    return out.reshape(B, Ho, Wo, Co)


# ----------------------------- parameter creation -----------------------------

def init_params(key, in_chans, dims, depths, layer_scale_init_value=1e-6, w_scale=0.1):
    keys = iter(jax.random.split(key, 1024))
    nk = lambda: next(keys)
    conv_w = lambda kh, kw, ci, co: w_scale * jax.random.normal(nk(), (kh, kw, ci, co), jnp.float32)
    lin_w = lambda ci, co: w_scale * jax.random.normal(nk(), (ci, co), jnp.float32)
    bias = lambda c: w_scale * jax.random.normal(nk(), (c,), jnp.float32)
    gnw = lambda c: 1.0 + 0.1 * jax.random.normal(nk(), (c,), jnp.float32)
    gnb = lambda c: 0.05 * jax.random.normal(nk(), (c,), jnp.float32)

    params = {"stem": {"w": conv_w(3, 3, in_chans, dims[0]), "b": bias(dims[0])}}
    params["downsample"] = [{
        "w": conv_w(4, 4, dims[0], dims[0]), "b": bias(dims[0]),
        "gn_w": gnw(dims[0]), "gn_b": gnb(dims[0]),
    }]
    for i in range(len(depths) - 1):
        params["downsample"].append({
            "gn_w": gnw(dims[i]), "gn_b": gnb(dims[i]),
            "w": conv_w(2, 2, dims[i], dims[i + 1]), "b": bias(dims[i + 1]),
        })
    params["stages"] = []
    for i, d in enumerate(depths):
        C, C4 = dims[i], dims[i] // 4
        blocks = []
        for _ in range(d):
            blocks.append({
                "w0": lin_w(C, C4), "b0": bias(C4),
                "w1": conv_w(3, 3, C4, C4), "b1": bias(C4),
                "w2": lin_w(C4, C), "b2": bias(C),
                "gn_w": gnw(C4), "gn_b": gnb(C4),
                "gamma": layer_scale_init_value * jnp.ones((C,), jnp.float32),
            })
        params["stages"].append(blocks)
    return params


# -------------------------------- model forward --------------------------------

def encoder_forward(x_nchw, params):
    x = jnp.transpose(x_nchw, (0, 2, 3, 1)).astype(jnp.float32)  # NCHW -> NHWC
    x = stem_forward(x, params["stem"])                          # 3x3 conv + GELU
    features = []
    for i, blocks in enumerate(params["stages"]):
        ds = params["downsample"][i]
        x = downsample_stage0(x, ds) if i == 0 else downsample_later(x, ds)
        for blk in blocks:
            x = conv_block_forward(x, blk)
        features.append(jnp.transpose(x, (0, 3, 1, 2)))          # back to NCHW like PyTorch
    return features


# ------------------------------ pure-JAX reference ------------------------------

def _ref_conv(x, w, b, stride, pad):
    y = jax.lax.conv_general_dilated(
        x, w, window_strides=(stride, stride), padding=((pad, pad), (pad, pad)),
        dimension_numbers=("NHWC", "HWIO", "NHWC"))
    return y + b


def _ref_gn(x, w, b, eps=_EPS):
    mean = jnp.mean(x, axis=(1, 2, 3), keepdims=True)
    var = jnp.mean((x - mean) ** 2, axis=(1, 2, 3), keepdims=True)
    return (x - mean) * jax.lax.rsqrt(var + eps) * w + b


def _ref_gelu(x):
    return jax.nn.gelu(x, approximate=False)


def ref_forward(x_nchw, params):
    x = jnp.transpose(x_nchw, (0, 2, 3, 1)).astype(jnp.float32)
    p = params["stem"]
    x = _ref_gelu(_ref_conv(x, p["w"], p["b"], 1, 1))
    feats = []
    for i, blocks in enumerate(params["stages"]):
        ds = params["downsample"][i]
        if i == 0:
            x = _ref_gn(_ref_conv(x, ds["w"], ds["b"], 4, 0), ds["gn_w"], ds["gn_b"])
        else:
            x = _ref_conv(_ref_gn(x, ds["gn_w"], ds["gn_b"]), ds["w"], ds["b"], 2, 0)
        for blk in blocks:
            inp = x
            C = x.shape[-1]
            C4 = C // 4
            y = _ref_conv(x, blk["w0"].reshape(1, 1, C, C4), blk["b0"], 1, 0)
            y = _ref_gelu(_ref_gn(y, blk["gn_w"], blk["gn_b"]))
            y = _ref_conv(y, blk["w1"], blk["b1"], 1, 1)
            y = _ref_gelu(_ref_gn(y, blk["gn_w"], blk["gn_b"]))
            y = _ref_conv(y, blk["w2"].reshape(1, 1, C4, C), blk["b2"], 1, 0)
            x = inp + blk["gamma"] * y
        feats.append(jnp.transpose(x, (0, 3, 1, 2)))
    return feats


# ------------------------------------ main ------------------------------------

if __name__ == "__main__":
    key = jax.random.PRNGKey(0)
    kx, kp = jax.random.split(key)

    B, in_chans, image_size = 2, 3, 16
    depths = [2, 2]
    dims = [32, 64]          # must be divisible by 4 (ConvBlock bottleneck dim//4)

    x = jax.random.normal(kx, (B, in_chans, image_size, image_size), jnp.float32)
    params = init_params(kp, in_chans, dims, depths)

    fwd = jax.jit(encoder_forward)
    feats = jax.block_until_ready(fwd(x, params))

    # sanity-check against a pure-JAX f32 reference of the same forward pass
    # (kernels use bf16 MXU operands + one-pass GroupNorm stats -> small numeric drift)
    refs = jax.block_until_ready(ref_forward(x, params))
    for f, r in zip(feats, refs):
        assert f.shape == r.shape and f.dtype == jnp.float32
        np.testing.assert_allclose(np.asarray(f), np.asarray(r), rtol=3e-2, atol=3e-2)

    print("KERNEL_OK")
</pallas_src>

<mosaic_0001>
module attributes {stable_mosaic.version = 11 : i64} {
  func.func @_stem_kernel(%arg0: i32, %arg1: memref<1x256x3xf32, #tpu.memory_space<vmem>>, %arg2: memref<9x3x32xbf16, #tpu.memory_space<vmem>>, %arg3: memref<1x32xf32, #tpu.memory_space<vmem>>, %arg4: memref<1x256x32xf32, #tpu.memory_space<vmem>>, %arg5: memref<290x3xf32, #tpu.memory_space<vmem>>) attributes {dimension_semantics = [#tpu.dimension_semantics<parallel>], iteration_bounds = array<i64: 2>, scalar_prefetch = 0 : i64, scratch_operands = 1 : i64, tpu.core_type = #tpu.core_type<tc>, window_params = [{transform_indices = @transform_0, window_bounds = array<i64: 1, 256, 3>}, {pipeline_mode = #tpu.pipeline_mode<synchronous>, transform_indices = @transform_1, window_bounds = array<i64: 9, 3, 32>}, {pipeline_mode = #tpu.pipeline_mode<synchronous>, transform_indices = @transform_2, window_bounds = array<i64: 1, 32>}, {transform_indices = @transform_3, window_bounds = array<i64: 1, 256, 32>}]} {
    %cst = arith.constant 0.000000e+00 : f32
    %0 = vector.broadcast %cst : f32 to vector<290x3xf32>
    %c0 = arith.constant 0 : index
    %c0_0 = arith.constant 0 : index
    %1 = vector.load %arg5[%c0, %c0_0] : memref<290x3xf32, #tpu.memory_space<vmem>>, vector<290x3xf32>
    tpu.vector_store %arg5[%c0, %c0_0], %0 {strides = array<i32>} : memref<290x3xf32, #tpu.memory_space<vmem>>, vector<290x3xf32>,
    %c0_1 = arith.constant 0 : index
    %c0_2 = arith.constant 0 : index
    %c0_3 = arith.constant 0 : index
    %2 = vector.load %arg1[%c0_1, %c0_2, %c0_3] : memref<1x256x3xf32, #tpu.memory_space<vmem>>, vector<1x256x3xf32>
    %3 = vector.shape_cast %2 : vector<1x256x3xf32> to vector<256x3xf32>
    %c17 = arith.constant 17 : index
    %c0_4 = arith.constant 0 : index
    %4 = vector.load %arg5[%c17, %c0_4] : memref<290x3xf32, #tpu.memory_space<vmem>>, vector<256x3xf32>
    tpu.vector_store %arg5[%c17, %c0_4], %3 {strides = array<i32>} : memref<290x3xf32, #tpu.memory_space<vmem>>, vector<256x3xf32>,
    %5 = tpu.iota {dimensions = array<i32: 0>} : vector<256x1xi32>
    %c16_i32 = arith.constant 16 : i32
    %c0_i32 = arith.constant 0 : i32
    %6 = arith.cmpi eq, %c16_i32, %c0_i32 : i32
    %c1_i32 = arith.constant 1 : i32
    %7 = arith.select %6, %c1_i32, %c16_i32 : i32
    %8 = vector.broadcast %7 : i32 to vector<256x1xi32>
    %9 = arith.remsi %5, %8 : vector<256x1xi32>
    %c0_i32_5 = arith.constant 0 : i32
    %10 = vector.broadcast %c0_i32_5 : i32 to vector<256x1xi32>
    %11 = arith.cmpi ne, %9, %10 : vector<256x1xi32>
    %c0_i32_6 = arith.constant 0 : i32
    %12 = vector.broadcast %c0_i32_6 : i32 to vector<256x1xi32>
    %13 = arith.cmpi slt, %9, %12 : vector<256x1xi32>
    %c0_i32_7 = arith.constant 0 : i32
    %14 = arith.cmpi slt, %7, %c0_i32_7 : i32
    %15 = vector.broadcast %14 : i1 to vector<256x1xi1>
    %16 = vector.broadcast %15 : vector<256x1xi1> to vector<256x1xi1>
    %17 = arith.xori %13, %16 : vector<256x1xi1>
    %18 = arith.andi %17, %11 : vector<256x1xi1>
    %19 = vector.broadcast %7 : i32 to vector<256x1xi32>
    %20 = arith.addi %9, %19 : vector<256x1xi32>
    %21 = arith.select %18, %20, %9 : vector<256x1xi1>, vector<256x1xi32>
    %c1_i32_8 = arith.constant 1 : i32
    %22 = vector.broadcast %c1_i32_8 : i32 to vector<256x1xi32>
    %23 = arith.cmpi sge, %21, %22 : vector<256x1xi32>
    %c14_i32 = arith.constant 14 : i32
    %24 = vector.broadcast %c14_i32 : i32 to vector<256x1xi32>
    %25 = arith.cmpi sle, %21, %24 : vector<256x1xi32>
    %cst_9 = arith.constant 0.000000e+00 : f32
    %26 = vector.broadcast %cst_9 : f32 to vector<256x32xf32>
    %c0_10 = arith.constant 0 : index
    %c0_11 = arith.constant 0 : index
    %27 = vector.load %arg5[%c0_10, %c0_11] : memref<290x3xf32, #tpu.memory_space<vmem>>, vector<256x3xf32>
    %cst_12 = arith.constant 0.000000e+00 : f32
    %28 = vector.broadcast %cst_12 : f32 to vector<256x3xf32>
    %29 = vector.shape_cast %23 : vector<256x1xi1> to vector<256x1xi1>
    %30 = vector.broadcast %29 : vector<256x1xi1> to vector<256x3xi1>
    %31 = arith.select %30, %27, %28 : vector<256x3xi1>, vector<256x3xf32>
    %32 = arith.truncf %31 : vector<256x3xf32> to vector<256x3xbf16>
    %c0_13 = arith.constant 0 : index
    %c0_14 = arith.constant 0 : index
    %c0_15 = arith.constant 0 : index
    %33 = vector.load %arg2[%c0_13, %c0_14, %c0_15] : memref<9x3x32xbf16, #tpu.memory_space<vmem>>, vector<1x3x32xbf16>
    %34 = vector.shape_cast %33 : vector<1x3x32xbf16> to vector<3x32xbf16>
    %cst_16 = arith.constant dense<0.000000e+00> : vector<256x32xf32>
    %35 = tpu.matmul %32, %34, %cst_16 {dimension_numbers = #tpu.dot_dimension_numbers<[1], [0], [0], [1], [0, 0, 1, 1], [], []>} : vector<256x3xbf16>, vector<3x32xbf16>, vector<256x32xf32> -> vector<256x32xf32>
    %36 = arith.addf %26, %35 : vector<256x32xf32>
    %c1 = arith.constant 1 : index
    %c0_17 = arith.constant 0 : index
    %37 = vector.load %arg5[%c1, %c0_17] : memref<290x3xf32, #tpu.memory_space<vmem>>, vector<256x3xf32>
    %38 = arith.truncf %37 : vector<256x3xf32> to vector<256x3xbf16>
    %c1_18 = arith.constant 1 : index
    %c0_19 = arith.constant 0 : index
    %c0_20 = arith.constant 0 : index
    %39 = vector.load %arg2[%c1_18, %c0_19, %c0_20] : memref<9x3x32xbf16, #tpu.memory_space<vmem>>, vector<1x3x32xbf16>
    %40 = vector.shape_cast %39 : vector<1x3x32xbf16> to vector<3x32xbf16>
    %cst_21 = arith.constant dense<0.000000e+00> : vector<256x32xf32>
    %41 = tpu.matmul %38, %40, %cst_21 {dimension_numbers = #tpu.dot_dimension_numbers<[1], [0], [0], [1], [0, 0, 1, 1], [], []>} : vector<256x3xbf16>, vector<3x32xbf16>, vector<256x32xf32> -> vector<256x32xf32>
    %42 = arith.addf %36, %41 : vector<256x32xf32>
    %c2 = arith.constant 2 : index
    %c0_22 = arith.constant 0 : index
    %43 = vector.load %arg5[%c2, %c0_22] : memref<290x3xf32, #tpu.memory_space<vmem>>, vector<256x3xf32>
    %cst_23 = arith.constant 0.000000e+00 : f32
    %44 = vector.broadcast %cst_23 : f32 to vector<256x3xf32>
    %45 = vector.shape_cast %25 : vector<256x1xi1> to vector<256x1xi1>
    %46 = vector.broadcast %45 : vector<256x1xi1> to vector<256x3xi1>
    %47 = arith.select %46, %43, %44 : vector<256x3xi1>, vector<256x3xf32>
    %48 = arith.truncf %47 : vector<256x3xf32> to vector<256x3xbf16>
    %c2_24 = arith.constant 2 : index
    %c0_25 = arith.constant 0 : index
    %c0_26 = arith.constant 0 : index
    %49 = vector.load %arg2[%c2_24, %c0_25, %c0_26] : memref<9x3x32xbf16, #tpu.memory_space<vmem>>, vector<1x3x32xbf16>
    %50 = vector.shape_cast %49 : vector<1x3x32xbf16> to vector<3x32xbf16>
    %cst_27 = arith.constant dense<0.000000e+00> : vector<256x32xf32>
    %51 = tpu.matmul %48, %50, %cst_27 {dimension_numbers = #tpu.dot_dimension_numbers<[1], [0], [0], [1], [0, 0, 1, 1], [], []>} : vector<256x3xbf16>, vector<3x32xbf16>, vector<256x32xf32> -> vector<256x32xf32>
    %52 = arith.addf %42, %51 : vector<256x32xf32>
    %c16 = arith.constant 16 : index
    %c0_28 = arith.constant 0 : index
    %53 = vector.load %arg5[%c16, %c0_28] : memref<290x3xf32, #tpu.memory_space<vmem>>, vector<256x3xf32>
    %cst_29 = arith.constant 0.000000e+00 : f32
    %54 = vector.broadcast %cst_29 : f32 to vector<256x3xf32>
    %55 = vector.shape_cast %23 : vector<256x1xi1> to vector<256x1xi1>
    %56 = vector.broadcast %55 : vector<256x1xi1> to vector<256x3xi1>
    %57 = arith.select %56, %53, %54 : vector<256x3xi1>, vector<256x3xf32>
    %58 = arith.truncf %57 : vector<256x3xf32> to vector<256x3xbf16>
    %c3 = arith.constant 3 : index
    %c0_30 = arith.constant 0 : index
    %c0_31 = arith.constant 0 : index
    %59 = vector.load %arg2[%c3, %c0_30, %c0_31] : memref<9x3x32xbf16, #tpu.memory_space<vmem>>, vector<1x3x32xbf16>
    %60 = vector.shape_cast %59 : vector<1x3x32xbf16> to vector<3x32xbf16>
    %cst_32 = arith.constant dense<0.000000e+00> : vector<256x32xf32>
    %61 = tpu.matmul %58, %60, %cst_32 {dimension_numbers = #tpu.dot_dimension_numbers<[1], [0], [0], [1], [0, 0, 1, 1], [], []>} : vector<256x3xbf16>, vector<3x32xbf16>, vector<256x32xf32> -> vector<256x32xf32>
    %62 = arith.addf %52, %61 : vector<256x32xf32>
    %c17_33 = arith.constant 17 : index
    %c0_34 = arith.constant 0 : index
    %63 = vector.load %arg5[%c17_33, %c0_34] : memref<290x3xf32, #tpu.memory_space<vmem>>, vector<256x3xf32>
    %64 = arith.truncf %63 : vector<256x3xf32> to vector<256x3xbf16>
    %c4 = arith.constant 4 : index
    %c0_35 = arith.constant 0 : index
    %c0_36 = arith.constant 0 : index
    %65 = vector.load %arg2[%c4, %c0_35, %c0_36] : memref<9x3x32xbf16, #tpu.memory_space<vmem>>, vector<1x3x32xbf16>
    %66 = vector.shape_cast %65 : vector<1x3x32xbf16> to vector<3x32xbf16>
    %cst_37 = arith.constant dense<0.000000e+00> : vector<256x32xf32>
    %67 = tpu.matmul %64, %66, %cst_37 {dimension_numbers = #tpu.dot_dimension_numbers<[1], [0], [0], [1], [0, 0, 1, 1], [], []>} : vector<256x3xbf16>, vector<3x32xbf16>, vector<256x32xf32> -> vector<256x32xf32>
    %68 = arith.addf %62, %67 : vector<256x32xf32>
    %c18 = arith.constant 18 : index
    %c0_38 = arith.constant 0 : index
    %69 = vector.load %arg5[%c18, %c0_38] : memref<290x3xf32, #tpu.memory_space<vmem>>, vector<256x3xf32>
    %cst_39 = arith.constant 0.000000e+00 : f32
    %70 = vector.broadcast %cst_39 : f32 to vector<256x3xf32>
    %71 = vector.shape_cast %25 : vector<256x1xi1> to vector<256x1xi1>
    %72 = vector.broadcast %71 : vector<256x1xi1> to vector<256x3xi1>
    %73 = arith.select %72, %69, %70 : vector<256x3xi1>, vector<256x3xf32>
    %74 = arith.truncf %73 : vector<256x3xf32> to vector<256x3xbf16>
    %c5 = arith.constant 5 : index
    %c0_40 = arith.constant 0 : index
    %c0_41 = arith.constant 0 : index
    %75 = vector.load %arg2[%c5, %c0_40, %c0_41] : memref<9x3x32xbf16, #tpu.memory_space<vmem>>, vector<1x3x32xbf16>
    %76 = vector.shape_cast %75 : vector<1x3x32xbf16> to vector<3x32xbf16>
    %cst_42 = arith.constant dense<0.000000e+00> : vector<256x32xf32>
    %77 = tpu.matmul %74, %76, %cst_42 {dimension_numbers = #tpu.dot_dimension_numbers<[1], [0], [0], [1], [0, 0, 1, 1], [], []>} : vector<256x3xbf16>, vector<3x32xbf16>, vector<256x32xf32> -> vector<256x32xf32>
    %78 = arith.addf %68, %77 : vector<256x32xf32>
    %c32 = arith.constant 32 : index
    %c0_43 = arith.constant 0 : index
    %79 = vector.load %arg5[%c32, %c0_43] : memref<290x3xf32, #tpu.memory_space<vmem>>, vector<256x3xf32>
    %cst_44 = arith.constant 0.000000e+00 : f32
    %80 = vector.broadcast %cst_44 : f32 to vector<256x3xf32>
    %81 = vector.shape_cast %23 : vector<256x1xi1> to vector<256x1xi1>
    %82 = vector.broadcast %81 : vector<256x1xi1> to vector<256x3xi1>
    %83 = arith.select %82, %79, %80 : vector<256x3xi1>, vector<256x3xf32>
    %84 = arith.truncf %83 : vector<256x3xf32> to vector<256x3xbf16>
    %c6 = arith.constant 6 : index
    %c0_45 = arith.constant 0 : index
    %c0_46 = arith.constant 0 : index
    %85 = vector.load %arg2[%c6, %c0_45, %c0_46] : memref<9x3x32xbf16, #tpu.memory_space<vmem>>, vector<1x3x32xbf16>
    %86 = vector.shape_cast %85 : vector<1x3x32xbf16> to vector<3x32xbf16>
    %cst_47 = arith.constant dense<0.000000e+00> : vector<256x32xf32>
    %87 = tpu.matmul %84, %86, %cst_47 {dimension_numbers = #tpu.dot_dimension_numbers<[1], [0], [0], [1], [0, 0, 1, 1], [], []>} : vector<256x3xbf16>, vector<3x32xbf16>, vector<256x32xf32> -> vector<256x32xf32>
    %88 = arith.addf %78, %87 : vector<256x32xf32>
    %c33 = arith.constant 33 : index
    %c0_48 = arith.constant 0 : index
    %89 = vector.load %arg5[%c33, %c0_48] : memref<290x3xf32, #tpu.memory_space<vmem>>, vector<256x3xf32>
    %90 = arith.truncf %89 : vector<256x3xf32> to vector<256x3xbf16>
    %c7 = arith.constant 7 : index
    %c0_49 = arith.constant 0 : index
    %c0_50 = arith.constant 0 : index
    %91 = vector.load %arg2[%c7, %c0_49, %c0_50] : memref<9x3x32xbf16, #tpu.memory_space<vmem>>, vector<1x3x32xbf16>
    %92 = vector.shape_cast %91 : vector<1x3x32xbf16> to vector<3x32xbf16>
    %cst_51 = arith.constant dense<0.000000e+00> : vector<256x32xf32>
    %93 = tpu.matmul %90, %92, %cst_51 {dimension_numbers = #tpu.dot_dimension_numbers<[1], [0], [0], [1], [0, 0, 1, 1], [], []>} : vector<256x3xbf16>, vector<3x32xbf16>, vector<256x32xf32> -> vector<256x32xf32>
    %94 = arith.addf %88, %93 : vector<256x32xf32>
    %c34 = arith.constant 34 : index
    %c0_52 = arith.constant 0 : index
    %95 = vector.load %arg5[%c34, %c0_52] : memref<290x3xf32, #tpu.memory_space<vmem>>, vector<256x3xf32>
    %cst_53 = arith.constant 0.000000e+00 : f32
    %96 = vector.broadcast %cst_53 : f32 to vector<256x3xf32>
    %97 = vector.shape_cast %25 : vector<256x1xi1> to vector<256x1xi1>
    %98 = vector.broadcast %97 : vector<256x1xi1> to vector<256x3xi1>
    %99 = arith.select %98, %95, %96 : vector<256x3xi1>, vector<256x3xf32>
    %100 = arith.truncf %99 : vector<256x3xf32> to vector<256x3xbf16>
    %c8 = arith.constant 8 : index
    %c0_54 = arith.constant 0 : index
    %c0_55 = arith.constant 0 : index
    %101 = vector.load %arg2[%c8, %c0_54, %c0_55] : memref<9x3x32xbf16, #tpu.memory_space<vmem>>, vector<1x3x32xbf16>
    %102 = vector.shape_cast %101 : vector<1x3x32xbf16> to vector<3x32xbf16>
    %cst_56 = arith.constant dense<0.000000e+00> : vector<256x32xf32>
    %103 = tpu.matmul %100, %102, %cst_56 {dimension_numbers = #tpu.dot_dimension_numbers<[1], [0], [0], [1], [0, 0, 1, 1], [], []>} : vector<256x3xbf16>, vector<3x32xbf16>, vector<256x32xf32> -> vector<256x32xf32>
    %104 = arith.addf %94, %103 : vector<256x32xf32>
    %c0_57 = arith.constant 0 : index
    %c0_58 = arith.constant 0 : index
    %105 = vector.load %arg3[%c0_57, %c0_58] : memref<1x32xf32, #tpu.memory_space<vmem>>, vector<1x32xf32>
    %106 = vector.broadcast %105 : vector<1x32xf32> to vector<256x32xf32>
    %107 = arith.addf %104, %106 : vector<256x32xf32>
    %cst_59 = arith.constant 5.000000e-01 : f32
    %108 = vector.broadcast %cst_59 : f32 to vector<256x32xf32>
    %109 = arith.mulf %108, %107 : vector<256x32xf32>
    %cst_60 = arith.constant 0.707106769 : f32
    %110 = vector.broadcast %cst_60 : f32 to vector<256x32xf32>
    %111 = arith.mulf %107, %110 : vector<256x32xf32>
    %112 = math.erf %111 : vector<256x32xf32>
    %cst_61 = arith.constant 1.000000e+00 : f32
    %113 = vector.broadcast %cst_61 : f32 to vector<256x32xf32>
    %114 = arith.addf %113, %112 : vector<256x32xf32>
    %115 = arith.mulf %109, %114 : vector<256x32xf32>
    %c0_62 = arith.constant 0 : index
    %c0_63 = arith.constant 0 : index
    %c0_64 = arith.constant 0 : index
    %116 = vector.load %arg4[%c0_62, %c0_63, %c0_64] : memref<1x256x32xf32, #tpu.memory_space<vmem>>, vector<1x256x32xf32>
    %117 = vector.shape_cast %116 : vector<1x256x32xf32> to vector<256x32xf32>
    %118 = vector.shape_cast %115 : vector<256x32xf32> to vector<1x256x32xf32>
    tpu.vector_store %arg4[%c0_62, %c0_63, %c0_64], %118 {strides = array<i32>} : memref<1x256x32xf32, #tpu.memory_space<vmem>>, vector<1x256x32xf32>,
    return
  }
  func.func @transform_0(%arg0: i32) -> (i32, i32, i32) {
    %c0_i32 = arith.constant 0 : i32
    %c0_i32_0 = arith.constant 0 : i32
    %c0_i32_1 = arith.constant 0 : i32
    return %arg0, %c0_i32, %c0_i32_0 : i32, i32, i32
  }
  func.func @transform_1(%arg0: i32) -> (i32, i32, i32) {
    %c0_i32 = arith.constant 0 : i32
    %c0_i32_0 = arith.constant 0 : i32
    %c0_i32_1 = arith.constant 0 : i32
    %c0_i32_2 = arith.constant 0 : i32
    return %c0_i32, %c0_i32_0, %c0_i32_1 : i32, i32, i32
  }
  func.func @transform_2(%arg0: i32) -> (i32, i32) {
    %c0_i32 = arith.constant 0 : i32
    %c0_i32_0 = arith.constant 0 : i32
    %c0_i32_1 = arith.constant 0 : i32
    return %c0_i32, %c0_i32_0 : i32, i32
  }
  func.func @transform_3(%arg0: i32) -> (i32, i32, i32) {
    %c0_i32 = arith.constant 0 : i32
    %c0_i32_0 = arith.constant 0 : i32
    %c0_i32_1 = arith.constant 0 : i32
    return %arg0, %c0_i32, %c0_i32_0 : i32, i32, i32
  }
}

module attributes {stable_mosaic.version = 11 : i64} {
  func.func @_down0_kernel(%arg0: i32, %arg1: memref<1x16x512xf32, #tpu.memory_space<vmem>>, %arg2: memref<512x32xbf16, #tpu.memory_space<vmem>>, %arg3: memref<1x32xf32, #tpu.memory_space<vmem>>, %arg4: memref<1x32xf32, #tpu.memory_space<vmem>>, %arg5: memref<1x32xf32, #tpu.memory_space<vmem>>, %arg6: memref<1x16x32xf32, #tpu.memory_space<vmem>>) attributes {dimension_semantics = [#tpu.dimension_semantics<parallel>], iteration_bounds = array<i64: 2>, scalar_prefetch = 0 : i64, scratch_operands = 0 : i64, tpu.core_type = #tpu.core_type<tc>, window_params = [{transform_indices = @transform_0, window_bounds = array<i64: 1, 16, 512>}, {pipeline_mode = #tpu.pipeline_mode<synchronous>, transform_indices = @transform_1, window_bounds = array<i64: 512, 32>}, {pipeline_mode = #tpu.pipeline_mode<synchronous>, transform_indices = @transform_2, window_bounds = array<i64: 1, 32>}, {pipeline_mode = #tpu.pipeline_mode<synchronous>, transform_indices = @transform_3, window_bounds = array<i64: 1, 32>}, {pipeline_mode = #tpu.pipeline_mode<synchronous>, transform_indices = @transform_4, window_bounds = array<i64: 1, 32>}, {transform_indices = @transform_5, window_bounds = array<i64: 1, 16, 32>}]} {
    %c0 = arith.constant 0 : index
    %c0_0 = arith.constant 0 : index
    %c0_1 = arith.constant 0 : index
    %0 = vector.load %arg1[%c0, %c0_0, %c0_1] : memref<1x16x512xf32, #tpu.memory_space<vmem>>, vector<1x16x512xf32>
    %1 = vector.shape_cast %0 : vector<1x16x512xf32> to vector<16x512xf32>
    %2 = arith.truncf %1 : vector<16x512xf32> to vector<16x512xbf16>
    %c0_2 = arith.constant 0 : index
    %c0_3 = arith.constant 0 : index
    %3 = vector.load %arg2[%c0_2, %c0_3] : memref<512x32xbf16, #tpu.memory_space<vmem>>, vector<512x32xbf16>
    %cst = arith.constant dense<0.000000e+00> : vector<16x32xf32>
    %4 = tpu.matmul %2, %3, %cst {dimension_numbers = #tpu.dot_dimension_numbers<[1], [0], [0], [1], [0, 0, 1, 1], [], []>} : vector<16x512xbf16>, vector<512x32xbf16>, vector<16x32xf32> -> vector<16x32xf32>
    %c0_4 = arith.constant 0 : index
    %c0_5 = arith.constant 0 : index
    %5 = vector.load %arg3[%c0_4, %c0_5] : memref<1x32xf32, #tpu.memory_space<vmem>>, vector<1x32xf32>
    %6 = vector.broadcast %5 : vector<1x32xf32> to vector<16x32xf32>
    %7 = arith.addf %4, %6 : vector<16x32xf32>
    %c0_6 = arith.constant 0 : index
    %c0_7 = arith.constant 0 : index
    %8 = vector.load %arg4[%c0_6, %c0_7] : memref<1x32xf32, #tpu.memory_space<vmem>>, vector<1x32xf32>
    %c0_8 = arith.constant 0 : index
    %c0_9 = arith.constant 0 : index
    %9 = vector.load %arg5[%c0_8, %c0_9] : memref<1x32xf32, #tpu.memory_space<vmem>>, vector<1x32xf32>
    %cst_10 = arith.constant dense<0.000000e+00> : vector<32xf32>
    %10 = vector.multi_reduction <add>, %7, %cst_10 [0] : vector<16x32xf32> to vector<32xf32>
    %11 = vector.shape_cast %10 : vector<32xf32> to vector<1x32xf32>
    %12 = arith.mulf %7, %7 : vector<16x32xf32>
    %cst_11 = arith.constant dense<0.000000e+00> : vector<32xf32>
    %13 = vector.multi_reduction <add>, %12, %cst_11 [0] : vector<16x32xf32> to vector<32xf32>
    %14 = vector.shape_cast %13 : vector<32xf32> to vector<1x32xf32>
    %cst_12 = arith.constant dense<0.000000e+00> : vector<1xf32>
    %15 = vector.multi_reduction <add>, %11, %cst_12 [1] : vector<1x32xf32> to vector<1xf32>
    %16 = vector.shape_cast %15 : vector<1xf32> to vector<1x1xf32>
    %cst_13 = arith.constant 5.120000e+02 : f32
    %17 = vector.broadcast %cst_13 : f32 to vector<1x1xf32>
    %18 = arith.divf %16, %17 : vector<1x1xf32>
    %cst_14 = arith.constant dense<0.000000e+00> : vector<1xf32>
    %19 = vector.multi_reduction <add>, %14, %cst_14 [1] : vector<1x32xf32> to vector<1xf32>
    %20 = vector.shape_cast %19 : vector<1xf32> to vector<1x1xf32>
    %cst_15 = arith.constant 5.120000e+02 : f32
    %21 = vector.broadcast %cst_15 : f32 to vector<1x1xf32>
    %22 = arith.divf %20, %21 : vector<1x1xf32>
    %23 = arith.mulf %18, %18 : vector<1x1xf32>
    %24 = arith.subf %22, %23 : vector<1x1xf32>
    %cst_16 = arith.constant 0.000000e+00 : f32
    %25 = vector.broadcast %cst_16 : f32 to vector<1x1xf32>
    %26 = arith.maximumf %24, %25 : vector<1x1xf32>
    %27 = vector.broadcast %18 : vector<1x1xf32> to vector<16x32xf32>
    %28 = arith.subf %7, %27 : vector<16x32xf32>
    %cst_17 = arith.constant 9.99999974E-6 : f32
    %29 = vector.broadcast %cst_17 : f32 to vector<1x1xf32>
    %30 = arith.addf %26, %29 : vector<1x1xf32>
    %31 = math.rsqrt %30 : vector<1x1xf32>
    %32 = vector.broadcast %31 : vector<1x1xf32> to vector<16x32xf32>
    %33 = arith.mulf %28, %32 : vector<16x32xf32>
    %34 = vector.broadcast %8 : vector<1x32xf32> to vector<16x32xf32>
    %35 = arith.mulf %33, %34 : vector<16x32xf32>
    %36 = vector.broadcast %9 : vector<1x32xf32> to vector<16x32xf32>
    %37 = arith.addf %35, %36 : vector<16x32xf32>
    %c0_18 = arith.constant 0 : index
    %c0_19 = arith.constant 0 : index
    %c0_20 = arith.constant 0 : index
    %38 = vector.load %arg6[%c0_18, %c0_19, %c0_20] : memref<1x16x32xf32, #tpu.memory_space<vmem>>, vector<1x16x32xf32>
    %39 = vector.shape_cast %38 : vector<1x16x32xf32> to vector<16x32xf32>
    %40 = vector.shape_cast %37 : vector<16x32xf32> to vector<1x16x32xf32>
    tpu.vector_store %arg6[%c0_18, %c0_19, %c0_20], %40 {strides = array<i32>} : memref<1x16x32xf32, #tpu.memory_space<vmem>>, vector<1x16x32xf32>,
    return
  }
  func.func @transform_0(%arg0: i32) -> (i32, i32, i32) {
    %c0_i32 = arith.constant 0 : i32
    %c0_i32_0 = arith.constant 0 : i32
    %c0_i32_1 = arith.constant 0 : i32
    return %arg0, %c0_i32, %c0_i32_0 : i32, i32, i32
  }
  func.func @transform_1(%arg0: i32) -> (i32, i32) {
    %c0_i32 = arith.constant 0 : i32
    %c0_i32_0 = arith.constant 0 : i32
    %c0_i32_1 = arith.constant 0 : i32
    return %c0_i32, %c0_i32_0 : i32, i32
  }
  func.func @transform_2(%arg0: i32) -> (i32, i32) {
    %c0_i32 = arith.constant 0 : i32
    %c0_i32_0 = arith.constant 0 : i32
    %c0_i32_1 = arith.constant 0 : i32
    return %c0_i32, %c0_i32_0 : i32, i32
  }
  func.func @transform_3(%arg0: i32) -> (i32, i32) {
    %c0_i32 = arith.constant 0 : i32
    %c0_i32_0 = arith.constant 0 : i32
    %c0_i32_1 = arith.constant 0 : i32
    return %c0_i32, %c0_i32_0 : i32, i32
  }
  func.func @transform_4(%arg0: i32) -> (i32, i32) {
    %c0_i32 = arith.constant 0 : i32
    %c0_i32_0 = arith.constant 0 : i32
    %c0_i32_1 = arith.constant 0 : i32
    return %c0_i32, %c0_i32_0 : i32, i32
  }
  func.func @transform_5(%arg0: i32) -> (i32, i32, i32) {
    %c0_i32 = arith.constant 0 : i32
    %c0_i32_0 = arith.constant 0 : i32
    %c0_i32_1 = arith.constant 0 : i32
    return %arg0, %c0_i32, %c0_i32_0 : i32, i32, i32
  }
}

module attributes {stable_mosaic.version = 11 : i64} {
  func.func @_convblock_kernel(%arg0: i32, %arg1: memref<1x16x32xf32, #tpu.memory_space<vmem>>, %arg2: memref<32x8xbf16, #tpu.memory_space<vmem>>, %arg3: memref<1x8xf32, #tpu.memory_space<vmem>>, %arg4: memref<9x8x8xbf16, #tpu.memory_space<vmem>>, %arg5: memref<1x8xf32, #tpu.memory_space<vmem>>, %arg6: memref<1x8xf32, #tpu.memory_space<vmem>>, %arg7: memref<1x8xf32, #tpu.memory_space<vmem>>, %arg8: memref<8x32xbf16, #tpu.memory_space<vmem>>, %arg9: memref<1x32xf32, #tpu.memory_space<vmem>>, %arg10: memref<1x32xf32, #tpu.memory_space<vmem>>, %arg11: memref<1x16x32xf32, #tpu.memory_space<vmem>>, %arg12: memref<26x8xf32, #tpu.memory_space<vmem>>) attributes {dimension_semantics = [#tpu.dimension_semantics<parallel>], iteration_bounds = array<i64: 2>, scalar_prefetch = 0 : i64, scratch_operands = 1 : i64, tpu.core_type = #tpu.core_type<tc>, window_params = [{transform_indices = @transform_0, window_bounds = array<i64: 1, 16, 32>}, {pipeline_mode = #tpu.pipeline_mode<synchronous>, transform_indices = @transform_1, window_bounds = array<i64: 32, 8>}, {pipeline_mode = #tpu.pipeline_mode<synchronous>, transform_indices = @transform_2, window_bounds = array<i64: 1, 8>}, {pipeline_mode = #tpu.pipeline_mode<synchronous>, transform_indices = @transform_3, window_bounds = array<i64: 9, 8, 8>}, {pipeline_mode = #tpu.pipeline_mode<synchronous>, transform_indices = @transform_4, window_bounds = array<i64: 1, 8>}, {pipeline_mode = #tpu.pipeline_mode<synchronous>, transform_indices = @transform_5, window_bounds = array<i64: 1, 8>}, {pipeline_mode = #tpu.pipeline_mode<synchronous>, transform_indices = @transform_6, window_bounds = array<i64: 1, 8>}, {pipeline_mode = #tpu.pipeline_mode<synchronous>, transform_indices = @transform_7, window_bounds = array<i64: 8, 32>}, {pipeline_mode = #tpu.pipeline_mode<synchronous>, transform_indices = @transform_8, window_bounds = array<i64: 1, 32>}, {pipeline_mode = #tpu.pipeline_mode<synchronous>, transform_indices = @transform_9, window_bounds = array<i64: 1, 32>}, {transform_indices = @transform_10, window_bounds = array<i64: 1, 16, 32>}]} {
    %c0 = arith.constant 0 : index
    %c0_0 = arith.constant 0 : index
    %c0_1 = arith.constant 0 : index
    %0 = vector.load %arg1[%c0, %c0_0, %c0_1] : memref<1x16x32xf32, #tpu.memory_space<vmem>>, vector<1x16x32xf32>
    %1 = vector.shape_cast %0 : vector<1x16x32xf32> to vector<16x32xf32>
    %2 = arith.truncf %1 : vector<16x32xf32> to vector<16x32xbf16>
    %c0_2 = arith.constant 0 : index
    %c0_3 = arith.constant 0 : index
    %3 = vector.load %arg2[%c0_2, %c0_3] : memref<32x8xbf16, #tpu.memory_space<vmem>>, vector<32x8xbf16>
    %cst = arith.constant dense<0.000000e+00> : vector<16x8xf32>
    %4 = tpu.matmul %2, %3, %cst {dimension_numbers = #tpu.dot_dimension_numbers<[1], [0], [0], [1], [0, 0, 1, 1], [], []>} : vector<16x32xbf16>, vector<32x8xbf16>, vector<16x8xf32> -> vector<16x8xf32>
    %c0_4 = arith.constant 0 : index
    %c0_5 = arith.constant 0 : index
    %5 = vector.load %arg3[%c0_4, %c0_5] : memref<1x8xf32, #tpu.memory_space<vmem>>, vector<1x8xf32>
    %6 = vector.broadcast %5 : vector<1x8xf32> to vector<16x8xf32>
    %7 = arith.addf %4, %6 : vector<16x8xf32>
    %c0_6 = arith.constant 0 : index
    %c0_7 = arith.constant 0 : index
    %8 = vector.load %arg6[%c0_6, %c0_7] : memref<1x8xf32, #tpu.memory_space<vmem>>, vector<1x8xf32>
    %c0_8 = arith.constant 0 : index
    %c0_9 = arith.constant 0 : index
    %9 = vector.load %arg7[%c0_8, %c0_9] : memref<1x8xf32, #tpu.memory_space<vmem>>, vector<1x8xf32>
    %cst_10 = arith.constant dense<0.000000e+00> : vector<8xf32>
    %10 = vector.multi_reduction <add>, %7, %cst_10 [0] : vector<16x8xf32> to vector<8xf32>
    %11 = vector.shape_cast %10 : vector<8xf32> to vector<1x8xf32>
    %12 = arith.mulf %7, %7 : vector<16x8xf32>
    %cst_11 = arith.constant dense<0.000000e+00> : vector<8xf32>
    %13 = vector.multi_reduction <add>, %12, %cst_11 [0] : vector<16x8xf32> to vector<8xf32>
    %14 = vector.shape_cast %13 : vector<8xf32> to vector<1x8xf32>
    %cst_12 = arith.constant dense<0.000000e+00> : vector<1xf32>
    %15 = vector.multi_reduction <add>, %11, %cst_12 [1] : vector<1x8xf32> to vector<1xf32>
    %16 = vector.shape_cast %15 : vector<1xf32> to vector<1x1xf32>
    %cst_13 = arith.constant 1.280000e+02 : f32
    %17 = vector.broadcast %cst_13 : f32 to vector<1x1xf32>
    %18 = arith.divf %16, %17 : vector<1x1xf32>
    %cst_14 = arith.constant dense<0.000000e+00> : vector<1xf32>
    %19 = vector.multi_reduction <add>, %14, %cst_14 [1] : vector<1x8xf32> to vector<1xf32>
    %20 = vector.shape_cast %19 : vector<1xf32> to vector<1x1xf32>
    %cst_15 = arith.constant 1.280000e+02 : f32
    %21 = vector.broadcast %cst_15 : f32 to vector<1x1xf32>
    %22 = arith.divf %20, %21 : vector<1x1xf32>
    %23 = arith.mulf %18, %18 : vector<1x1xf32>
    %24 = arith.subf %22, %23 : vector<1x1xf32>
    %cst_16 = arith.constant 0.000000e+00 : f32
    %25 = vector.broadcast %cst_16 : f32 to vector<1x1xf32>
    %26 = arith.maximumf %24, %25 : vector<1x1xf32>
    %27 = vector.broadcast %18 : vector<1x1xf32> to vector<16x8xf32>
    %28 = arith.subf %7, %27 : vector<16x8xf32>
    %cst_17 = arith.constant 9.99999974E-6 : f32
    %29 = vector.broadcast %cst_17 : f32 to vector<1x1xf32>
    %30 = arith.addf %26, %29 : vector<1x1xf32>
    %31 = math.rsqrt %30 : vector<1x1xf32>
    %32 = vector.broadcast %31 : vector<1x1xf32> to vector<16x8xf32>
    %33 = arith.mulf %28, %32 : vector<16x8xf32>
    %34 = vector.broadcast %8 : vector<1x8xf32> to vector<16x8xf32>
    %35 = arith.mulf %33, %34 : vector<16x8xf32>
    %36 = vector.broadcast %9 : vector<1x8xf32> to vector<16x8xf32>
    %37 = arith.addf %35, %36 : vector<16x8xf32>
    %cst_18 = arith.constant 5.000000e-01 : f32
    %38 = vector.broadcast %cst_18 : f32 to vector<16x8xf32>
    %39 = arith.mulf %38, %37 : vector<16x8xf32>
    %cst_19 = arith.constant 0.707106769 : f32
    %40 = vector.broadcast %cst_19 : f32 to vector<16x8xf32>
    %41 = arith.mulf %37, %40 : vector<16x8xf32>
    %42 = math.erf %41 : vector<16x8xf32>
    %cst_20 = arith.constant 1.000000e+00 : f32
    %43 = vector.broadcast %cst_20 : f32 to vector<16x8xf32>
    %44 = arith.addf %43, %42 : vector<16x8xf32>
    %45 = arith.mulf %39, %44 : vector<16x8xf32>
    %cst_21 = arith.constant 0.000000e+00 : f32
    %46 = vector.broadcast %cst_21 : f32 to vector<26x8xf32>
    %c0_22 = arith.constant 0 : index
    %c0_23 = arith.constant 0 : index
    %47 = vector.load %arg12[%c0_22, %c0_23] : memref<26x8xf32, #tpu.memory_space<vmem>>, vector<26x8xf32>
    tpu.vector_store %arg12[%c0_22, %c0_23], %46 {strides = array<i32>} : memref<26x8xf32, #tpu.memory_space<vmem>>, vector<26x8xf32>,
    %c5 = arith.constant 5 : index
    %c0_24 = arith.constant 0 : index
    %48 = vector.load %arg12[%c5, %c0_24] : memref<26x8xf32, #tpu.memory_space<vmem>>, vector<16x8xf32>
    tpu.vector_store %arg12[%c5, %c0_24], %45 {strides = array<i32>} : memref<26x8xf32, #tpu.memory_space<vmem>>, vector<16x8xf32>,
    %49 = tpu.iota {dimensions = array<i32: 0>} : vector<16x1xi32>
    %c4_i32 = arith.constant 4 : i32
    %c0_i32 = arith.constant 0 : i32
    %50 = arith.cmpi eq, %c4_i32, %c0_i32 : i32
    %c1_i32 = arith.constant 1 : i32
    %51 = arith.select %50, %c1_i32, %c4_i32 : i32
    %52 = vector.broadcast %51 : i32 to vector<16x1xi32>
    %53 = arith.remsi %49, %52 : vector<16x1xi32>
    %c0_i32_25 = arith.constant 0 : i32
    %54 = vector.broadcast %c0_i32_25 : i32 to vector<16x1xi32>
    %55 = arith.cmpi ne, %53, %54 : vector<16x1xi32>
    %c0_i32_26 = arith.constant 0 : i32
    %56 = vector.broadcast %c0_i32_26 : i32 to vector<16x1xi32>
    %57 = arith.cmpi slt, %53, %56 : vector<16x1xi32>
    %c0_i32_27 = arith.constant 0 : i32
    %58 = arith.cmpi slt, %51, %c0_i32_27 : i32
    %59 = vector.broadcast %58 : i1 to vector<16x1xi1>
    %60 = vector.broadcast %59 : vector<16x1xi1> to vector<16x1xi1>
    %61 = arith.xori %57, %60 : vector<16x1xi1>
    %62 = arith.andi %61, %55 : vector<16x1xi1>
    %63 = vector.broadcast %51 : i32 to vector<16x1xi32>
    %64 = arith.addi %53, %63 : vector<16x1xi32>
    %65 = arith.select %62, %64, %53 : vector<16x1xi1>, vector<16x1xi32>
    %c1_i32_28 = arith.constant 1 : i32
    %66 = vector.broadcast %c1_i32_28 : i32 to vector<16x1xi32>
    %67 = arith.cmpi sge, %65, %66 : vector<16x1xi32>
    %c2_i32 = arith.constant 2 : i32
    %68 = vector.broadcast %c2_i32 : i32 to vector<16x1xi32>
    %69 = arith.cmpi sle, %65, %68 : vector<16x1xi32>
    %cst_29 = arith.constant 0.000000e+00 : f32
    %70 = vector.broadcast %cst_29 : f32 to vector<16x8xf32>
    %c0_30 = arith.constant 0 : index
    %c0_31 = arith.constant 0 : index
    %71 = vector.load %arg12[%c0_30, %c0_31] : memref<26x8xf32, #tpu.memory_space<vmem>>, vector<16x8xf32>
    %cst_32 = arith.constant 0.000000e+00 : f32
    %72 = vector.broadcast %cst_32 : f32 to vector<16x8xf32>
    %73 = vector.shape_cast %67 : vector<16x1xi1> to vector<16x1xi1>
    %74 = vector.broadcast %73 : vector<16x1xi1> to vector<16x8xi1>
    %75 = arith.select %74, %71, %72 : vector<16x8xi1>, vector<16x8xf32>
    %76 = arith.truncf %75 : vector<16x8xf32> to vector<16x8xbf16>
    %c0_33 = arith.constant 0 : index
    %c0_34 = arith.constant 0 : index
    %c0_35 = arith.constant 0 : index
    %77 = vector.load %arg4[%c0_33, %c0_34, %c0_35] : memref<9x8x8xbf16, #tpu.memory_space<vmem>>, vector<1x8x8xbf16>
    %78 = vector.shape_cast %77 : vector<1x8x8xbf16> to vector<8x8xbf16>
    %cst_36 = arith.constant dense<0.000000e+00> : vector<16x8xf32>
    %79 = tpu.matmul %76, %78, %cst_36 {dimension_numbers = #tpu.dot_dimension_numbers<[1], [0], [0], [1], [0, 0, 1, 1], [], []>} : vector<16x8xbf16>, vector<8x8xbf16>, vector<16x8xf32> -> vector<16x8xf32>
    %80 = arith.addf %70, %79 : vector<16x8xf32>
    %c1 = arith.constant 1 : index
    %c0_37 = arith.constant 0 : index
    %81 = vector.load %arg12[%c1, %c0_37] : memref<26x8xf32, #tpu.memory_space<vmem>>, vector<16x8xf32>
    %82 = arith.truncf %81 : vector<16x8xf32> to vector<16x8xbf16>
    %c1_38 = arith.constant 1 : index
    %c0_39 = arith.constant 0 : index
    %c0_40 = arith.constant 0 : index
    %83 = vector.load %arg4[%c1_38, %c0_39, %c0_40] : memref<9x8x8xbf16, #tpu.memory_space<vmem>>, vector<1x8x8xbf16>
    %84 = vector.shape_cast %83 : vector<1x8x8xbf16> to vector<8x8xbf16>
    %cst_41 = arith.constant dense<0.000000e+00> : vector<16x8xf32>
    %85 = tpu.matmul %82, %84, %cst_41 {dimension_numbers = #tpu.dot_dimension_numbers<[1], [0], [0], [1], [0, 0, 1, 1], [], []>} : vector<16x8xbf16>, vector<8x8xbf16>, vector<16x8xf32> -> vector<16x8xf32>
    %86 = arith.addf %80, %85 : vector<16x8xf32>
    %c2 = arith.constant 2 : index
    %c0_42 = arith.constant 0 : index
    %87 = vector.load %arg12[%c2, %c0_42] : memref<26x8xf32, #tpu.memory_space<vmem>>, vector<16x8xf32>
    %cst_43 = arith.constant 0.000000e+00 : f32
    %88 = vector.broadcast %cst_43 : f32 to vector<16x8xf32>
    %89 = vector.shape_cast %69 : vector<16x1xi1> to vector<16x1xi1>
    %90 = vector.broadcast %89 : vector<16x1xi1> to vector<16x8xi1>
    %91 = arith.select %90, %87, %88 : vector<16x8xi1>, vector<16x8xf32>
    %92 = arith.truncf %91 : vector<16x8xf32> to vector<16x8xbf16>
    %c2_44 = arith.constant 2 : index
    %c0_45 = arith.constant 0 : index
    %c0_46 = arith.constant 0 : index
    %93 = vector.load %arg4[%c2_44, %c0_45, %c0_46] : memref<9x8x8xbf16, #tpu.memory_space<vmem>>, vector<1x8x8xbf16>
    %94 = vector.shape_cast %93 : vector<1x8x8xbf16> to vector<8x8xbf16>
    %cst_47 = arith.constant dense<0.000000e+00> : vector<16x8xf32>
    %95 = tpu.matmul %92, %94, %cst_47 {dimension_numbers = #tpu.dot_dimension_numbers<[1], [0], [0], [1], [0, 0, 1, 1], [], []>} : vector<16x8xbf16>, vector<8x8xbf16>, vector<16x8xf32> -> vector<16x8xf32>
    %96 = arith.addf %86, %95 : vector<16x8xf32>
    %c4 = arith.constant 4 : index
    %c0_48 = arith.constant 0 : index
    %97 = vector.load %arg12[%c4, %c0_48] : memref<26x8xf32, #tpu.memory_space<vmem>>, vector<16x8xf32>
    %cst_49 = arith.constant 0.000000e+00 : f32
    %98 = vector.broadcast %cst_49 : f32 to vector<16x8xf32>
    %99 = vector.shape_cast %67 : vector<16x1xi1> to vector<16x1xi1>
    %100 = vector.broadcast %99 : vector<16x1xi1> to vector<16x8xi1>
    %101 = arith.select %100, %97, %98 : vector<16x8xi1>, vector<16x8xf32>
    %102 = arith.truncf %101 : vector<16x8xf32> to vector<16x8xbf16>
    %c3 = arith.constant 3 : index
    %c0_50 = arith.constant 0 : index
    %c0_51 = arith.constant 0 : index
    %103 = vector.load %arg4[%c3, %c0_50, %c0_51] : memref<9x8x8xbf16, #tpu.memory_space<vmem>>, vector<1x8x8xbf16>
    %104 = vector.shape_cast %103 : vector<1x8x8xbf16> to vector<8x8xbf16>
    %cst_52 = arith.constant dense<0.000000e+00> : vector<16x8xf32>
    %105 = tpu.matmul %102, %104, %cst_52 {dimension_numbers = #tpu.dot_dimension_numbers<[1], [0], [0], [1], [0, 0, 1, 1], [], []>} : vector<16x8xbf16>, vector<8x8xbf16>, vector<16x8xf32> -> vector<16x8xf32>
    %106 = arith.addf %96, %105 : vector<16x8xf32>
    %c5_53 = arith.constant 5 : index
    %c0_54 = arith.constant 0 : index
    %107 = vector.load %arg12[%c5_53, %c0_54] : memref<26x8xf32, #tpu.memory_space<vmem>>, vector<16x8xf32>
    %108 = arith.truncf %107 : vector<16x8xf32> to vector<16x8xbf16>
    %c4_55 = arith.constant 4 : index
    %c0_56 = arith.constant 0 : index
    %c0_57 = arith.constant 0 : index
    %109 = vector.load %arg4[%c4_55, %c0_56, %c0_57] : memref<9x8x8xbf16, #tpu.memory_space<vmem>>, vector<1x8x8xbf16>
    %110 = vector.shape_cast %109 : vector<1x8x8xbf16> to vector<8x8xbf16>
    %cst_58 = arith.constant dense<0.000000e+00> : vector<16x8xf32>
    %111 = tpu.matmul %108, %110, %cst_58 {dimension_numbers = #tpu.dot_dimension_numbers<[1], [0], [0], [1], [0, 0, 1, 1], [], []>} : vector<16x8xbf16>, vector<8x8xbf16>, vector<16x8xf32> -> vector<16x8xf32>
    %112 = arith.addf %106, %111 : vector<16x8xf32>
    %c6 = arith.constant 6 : index
    %c0_59 = arith.constant 0 : index
    %113 = vector.load %arg12[%c6, %c0_59] : memref<26x8xf32, #tpu.memory_space<vmem>>, vector<16x8xf32>
    %cst_60 = arith.constant 0.000000e+00 : f32
    %114 = vector.broadcast %cst_60 : f32 to vector<16x8xf32>
    %115 = vector.shape_cast %69 : vector<16x1xi1> to vector<16x1xi1>
    %116 = vector.broadcast %115 : vector<16x1xi1> to vector<16x8xi1>
    %117 = arith.select %116, %113, %114 : vector<16x8xi1>, vector<16x8xf32>
    %118 = arith.truncf %117 : vector<16x8xf32> to vector<16x8xbf16>
    %c5_61 = arith.constant 5 : index
    %c0_62 = arith.constant 0 : index
    %c0_63 = arith.constant 0 : index
    %119 = vector.load %arg4[%c5_61, %c0_62, %c0_63] : memref<9x8x8xbf16, #tpu.memory_space<vmem>>, vector<1x8x8xbf16>
    %120 = vector.shape_cast %119 : vector<1x8x8xbf16> to vector<8x8xbf16>
    %cst_64 = arith.constant dense<0.000000e+00> : vector<16x8xf32>
    %121 = tpu.matmul %118, %120, %cst_64 {dimension_numbers = #tpu.dot_dimension_numbers<[1], [0], [0], [1], [0, 0, 1, 1], [], []>} : vector<16x8xbf16>, vector<8x8xbf16>, vector<16x8xf32> -> vector<16x8xf32>
    %122 = arith.addf %112, %121 : vector<16x8xf32>
    %c8 = arith.constant 8 : index
    %c0_65 = arith.constant 0 : index
    %123 = vector.load %arg12[%c8, %c0_65] : memref<26x8xf32, #tpu.memory_space<vmem>>, vector<16x8xf32>
    %cst_66 = arith.constant 0.000000e+00 : f32
    %124 = vector.broadcast %cst_66 : f32 to vector<16x8xf32>
    %125 = vector.shape_cast %67 : vector<16x1xi1> to vector<16x1xi1>
    %126 = vector.broadcast %125 : vector<16x1xi1> to vector<16x8xi1>
    %127 = arith.select %126, %123, %124 : vector<16x8xi1>, vector<16x8xf32>
    %128 = arith.truncf %127 : vector<16x8xf32> to vector<16x8xbf16>
    %c6_67 = arith.constant 6 : index
    %c0_68 = arith.constant 0 : index
    %c0_69 = arith.constant 0 : index
    %129 = vector.load %arg4[%c6_67, %c0_68, %c0_69] : memref<9x8x8xbf16, #tpu.memory_space<vmem>>, vector<1x8x8xbf16>
    %130 = vector.shape_cast %129 : vector<1x8x8xbf16> to vector<8x8xbf16>
    %cst_70 = arith.constant dense<0.000000e+00> : vector<16x8xf32>
    %131 = tpu.matmul %128, %130, %cst_70 {dimension_numbers = #tpu.dot_dimension_numbers<[1], [0], [0], [1], [0, 0, 1, 1], [], []>} : vector<16x8xbf16>, vector<8x8xbf16>, vector<16x8xf32> -> vector<16x8xf32>
    %132 = arith.addf %122, %131 : vector<16x8xf32>
    %c9 = arith.constant 9 : index
    %c0_71 = arith.constant 0 : index
    %133 = vector.load %arg12[%c9, %c0_71] : memref<26x8xf32, #tpu.memory_space<vmem>>, vector<16x8xf32>
    %134 = arith.truncf %133 : vector<16x8xf32> to vector<16x8xbf16>
    %c7 = arith.constant 7 : index
    %c0_72 = arith.constant 0 : index
    %c0_73 = arith.constant 0 : index
    %135 = vector.load %arg4[%c7, %c0_72, %c0_73] : memref<9x8x8xbf16, #tpu.memory_space<vmem>>, vector<1x8x8xbf16>
    %136 = vector.shape_cast %135 : vector<1x8x8xbf16> to vector<8x8xbf16>
    %cst_74 = arith.constant dense<0.000000e+00> : vector<16x8xf32>
    %137 = tpu.matmul %134, %136, %cst_74 {dimension_numbers = #tpu.dot_dimension_numbers<[1], [0], [0], [1], [0, 0, 1, 1], [], []>} : vector<16x8xbf16>, vector<8x8xbf16>, vector<16x8xf32> -> vector<16x8xf32>
    %138 = arith.addf %132, %137 : vector<16x8xf32>
    %c10 = arith.constant 10 : index
    %c0_75 = arith.constant 0 : index
    %139 = vector.load %arg12[%c10, %c0_75] : memref<26x8xf32, #tpu.memory_space<vmem>>, vector<16x8xf32>
    %cst_76 = arith.constant 0.000000e+00 : f32
    %140 = vector.broadcast %cst_76 : f32 to vector<16x8xf32>
    %141 = vector.shape_cast %69 : vector<16x1xi1> to vector<16x1xi1>
    %142 = vector.broadcast %141 : vector<16x1xi1> to vector<16x8xi1>
    %143 = arith.select %142, %139, %140 : vector<16x8xi1>, vector<16x8xf32>
    %144 = arith.truncf %143 : vector<16x8xf32> to vector<16x8xbf16>
    %c8_77 = arith.constant 8 : index
    %c0_78 = arith.constant 0 : index
    %c0_79 = arith.constant 0 : index
    %145 = vector.load %arg4[%c8_77, %c0_78, %c0_79] : memref<9x8x8xbf16, #tpu.memory_space<vmem>>, vector<1x8x8xbf16>
    %146 = vector.shape_cast %145 : vector<1x8x8xbf16> to vector<8x8xbf16>
    %cst_80 = arith.constant dense<0.000000e+00> : vector<16x8xf32>
    %147 = tpu.matmul %144, %146, %cst_80 {dimension_numbers = #tpu.dot_dimension_numbers<[1], [0], [0], [1], [0, 0, 1, 1], [], []>} : vector<16x8xbf16>, vector<8x8xbf16>, vector<16x8xf32> -> vector<16x8xf32>
    %148 = arith.addf %138, %147 : vector<16x8xf32>
    %c0_81 = arith.constant 0 : index
    %c0_82 = arith.constant 0 : index
    %149 = vector.load %arg5[%c0_81, %c0_82] : memref<1x8xf32, #tpu.memory_space<vmem>>, vector<1x8xf32>
    %150 = vector.broadcast %149 : vector<1x8xf32> to vector<16x8xf32>
    %151 = arith.addf %148, %150 : vector<16x8xf32>
    %c0_83 = arith.constant 0 : index
    %c0_84 = arith.constant 0 : index
    %152 = vector.load %arg6[%c0_83, %c0_84] : memref<1x8xf32, #tpu.memory_space<vmem>>, vector<1x8xf32>
    %c0_85 = arith.constant 0 : index
    %c0_86 = arith.constant 0 : index
    %153 = vector.load %arg7[%c0_85, %c0_86] : memref<1x8xf32, #tpu.memory_space<vmem>>, vector<1x8xf32>
    %cst_87 = arith.constant dense<0.000000e+00> : vector<8xf32>
    %154 = vector.multi_reduction <add>, %151, %cst_87 [0] : vector<16x8xf32> to vector<8xf32>
    %155 = vector.shape_cast %154 : vector<8xf32> to vector<1x8xf32>
    %156 = arith.mulf %151, %151 : vector<16x8xf32>
    %cst_88 = arith.constant dense<0.000000e+00> : vector<8xf32>
    %157 = vector.multi_reduction <add>, %156, %cst_88 [0] : vector<16x8xf32> to vector<8xf32>
    %158 = vector.shape_cast %157 : vector<8xf32> to vector<1x8xf32>
    %cst_89 = arith.constant dense<0.000000e+00> : vector<1xf32>
    %159 = vector.multi_reduction <add>, %155, %cst_89 [1] : vector<1x8xf32> to vector<1xf32>
    %160 = vector.shape_cast %159 : vector<1xf32> to vector<1x1xf32>
    %cst_90 = arith.constant 1.280000e+02 : f32
    %161 = vector.broadcast %cst_90 : f32 to vector<1x1xf32>
    %162 = arith.divf %160, %161 : vector<1x1xf32>
    %cst_91 = arith.constant dense<0.000000e+00> : vector<1xf32>
    %163 = vector.multi_reduction <add>, %158, %cst_91 [1] : vector<1x8xf32> to vector<1xf32>
    %164 = vector.shape_cast %163 : vector<1xf32> to vector<1x1xf32>
    %cst_92 = arith.constant 1.280000e+02 : f32
    %165 = vector.broadcast %cst_92 : f32 to vector<1x1xf32>
    %166 = arith.divf %164, %165 : vector<1x1xf32>
    %167 = arith.mulf %162, %162 : vector<1x1xf32>
    %168 = arith.subf %166, %167 : vector<1x1xf32>
    %cst_93 = arith.constant 0.000000e+00 : f32
    %169 = vector.broadcast %cst_93 : f32 to vector<1x1xf32>
    %170 = arith.maximumf %168, %169 : vector<1x1xf32>
    %171 = vector.broadcast %162 : vector<1x1xf32> to vector<16x8xf32>
    %172 = arith.subf %151, %171 : vector<16x8xf32>
    %cst_94 = arith.constant 9.99999974E-6 : f32
    %173 = vector.broadcast %cst_94 : f32 to vector<1x1xf32>
    %174 = arith.addf %170, %173 : vector<1x1xf32>
    %175 = math.rsqrt %174 : vector<1x1xf32>
    %176 = vector.broadcast %175 : vector<1x1xf32> to vector<16x8xf32>
    %177 = arith.mulf %172, %176 : vector<16x8xf32>
    %178 = vector.broadcast %152 : vector<1x8xf32> to vector<16x8xf32>
    %179 = arith.mulf %177, %178 : vector<16x8xf32>
    %180 = vector.broadcast %153 : vector<1x8xf32> to vector<16x8xf32>
    %181 = arith.addf %179, %180 : vector<16x8xf32>
    %cst_95 = arith.constant 5.000000e-01 : f32
    %182 = vector.broadcast %cst_95 : f32 to vector<16x8xf32>
    %183 = arith.mulf %182, %181 : vector<16x8xf32>
    %cst_96 = arith.constant 0.707106769 : f32
    %184 = vector.broadcast %cst_96 : f32 to vector<16x8xf32>
    %185 = arith.mulf %181, %184 : vector<16x8xf32>
    %186 = math.erf %185 : vector<16x8xf32>
    %cst_97 = arith.constant 1.000000e+00 : f32
    %187 = vector.broadcast %cst_97 : f32 to vector<16x8xf32>
    %188 = arith.addf %187, %186 : vector<16x8xf32>
    %189 = arith.mulf %183, %188 : vector<16x8xf32>
    %190 = arith.truncf %189 : vector<16x8xf32> to vector<16x8xbf16>
    %c0_98 = arith.constant 0 : index
    %c0_99 = arith.constant 0 : index
    %191 = vector.load %arg8[%c0_98, %c0_99] : memref<8x32xbf16, #tpu.memory_space<vmem>>, vector<8x32xbf16>
    %cst_100 = arith.constant dense<0.000000e+00> : vector<16x32xf32>
    %192 = tpu.matmul %190, %191, %cst_100 {dimension_numbers = #tpu.dot_dimension_numbers<[1], [0], [0], [1], [0, 0, 1, 1], [], []>} : vector<16x8xbf16>, vector<8x32xbf16>, vector<16x32xf32> -> vector<16x32xf32>
    %c0_101 = arith.constant 0 : index
    %c0_102 = arith.constant 0 : index
    %193 = vector.load %arg9[%c0_101, %c0_102] : memref<1x32xf32, #tpu.memory_space<vmem>>, vector<1x32xf32>
    %194 = vector.broadcast %193 : vector<1x32xf32> to vector<16x32xf32>
    %195 = arith.addf %192, %194 : vector<16x32xf32>
    %c0_103 = arith.constant 0 : index
    %c0_104 = arith.constant 0 : index
    %196 = vector.load %arg10[%c0_103, %c0_104] : memref<1x32xf32, #tpu.memory_space<vmem>>, vector<1x32xf32>
    %197 = vector.broadcast %196 : vector<1x32xf32> to vector<16x32xf32>
    %198 = arith.mulf %197, %195 : vector<16x32xf32>
    %199 = arith.addf %1, %198 : vector<16x32xf32>
    %c0_105 = arith.constant 0 : index
    %c0_106 = arith.constant 0 : index
    %c0_107 = arith.constant 0 : index
    %200 = vector.load %arg11[%c0_105, %c0_106, %c0_107] : memref<1x16x32xf32, #tpu.memory_space<vmem>>, vector<1x16x32xf32>
    %201 = vector.shape_cast %200 : vector<1x16x32xf32> to vector<16x32xf32>
    %202 = vector.shape_cast %199 : vector<16x32xf32> to vector<1x16x32xf32>
    tpu.vector_store %arg11[%c0_105, %c0_106, %c0_107], %202 {strides = array<i32>} : memref<1x16x32xf32, #tpu.memory_space<vmem>>, vector<1x16x32xf32>,
    return
  }
  func.func @transform_0(%arg0: i32) -> (i32, i32, i32) {
    %c0_i32 = arith.constant 0 : i32
    %c0_i32_0 = arith.constant 0 : i32
    %c0_i32_1 = arith.constant 0 : i32
    return %arg0, %c0_i32, %c0_i32_0 : i32, i32, i32
  }
  func.func @transform_1(%arg0: i32) -> (i32, i32) {
    %c0_i32 = arith.constant 0 : i32
    %c0_i32_0 = arith.constant 0 : i32
    %c0_i32_1 = arith.constant 0 : i32
    return %c0_i32, %c0_i32_0 : i32, i32
  }
  func.func @transform_2(%arg0: i32) -> (i32, i32) {
    %c0_i32 = arith.constant 0 : i32
    %c0_i32_0 = arith.constant 0 : i32
    %c0_i32_1 = arith.constant 0 : i32
    return %c0_i32, %c0_i32_0 : i32, i32
  }
  func.func @transform_3(%arg0: i32) -> (i32, i32, i32) {
    %c0_i32 = arith.constant 0 : i32
    %c0_i32_0 = arith.constant 0 : i32
    %c0_i32_1 = arith.constant 0 : i32
    %c0_i32_2 = arith.constant 0 : i32
    return %c0_i32, %c0_i32_0, %c0_i32_1 : i32, i32, i32
  }
  func.func @transform_4(%arg0: i32) -> (i32, i32) {
    %c0_i32 = arith.constant 0 : i32
    %c0_i32_0 = arith.constant 0 : i32
    %c0_i32_1 = arith.constant 0 : i32
    return %c0_i32, %c0_i32_0 : i32, i32
  }
  func.func @transform_5(%arg0: i32) -> (i32, i32) {
    %c0_i32 = arith.constant 0 : i32
    %c0_i32_0 = arith.constant 0 : i32
    %c0_i32_1 = arith.constant 0 : i32
    return %c0_i32, %c0_i32_0 : i32, i32
  }
  func.func @transform_6(%arg0: i32) -> (i32, i32) {
    %c0_i32 = arith.constant 0 : i32
    %c0_i32_0 = arith.constant 0 : i32
    %c0_i32_1 = arith.constant 0 : i32
    return %c0_i32, %c0_i32_0 : i32, i32
  }
  func.func @transform_7(%arg0: i32) -> (i32, i32) {
    %c0_i32 = arith.constant 0 : i32
    %c0_i32_0 = arith.constant 0 : i32
    %c0_i32_1 = arith.constant 0 : i32
    return %c0_i32, %c0_i32_0 : i32, i32
  }
  func.func @transform_8(%arg0: i32) -> (i32, i32) {
    %c0_i32 = arith.constant 0 : i32
    %c0_i32_0 = arith.constant 0 : i32
    %c0_i32_1 = arith.constant 0 : i32
    return %c0_i32, %c0_i32_0 : i32, i32
  }
  func.func @transform_9(%arg0: i32) -> (i32, i32) {
    %c0_i32 = arith.constant 0 : i32
    %c0_i32_0 = arith.constant 0 : i32
    %c0_i32_1 = arith.constant 0 : i32
    return %c0_i32, %c0_i32_0 : i32, i32
  }
  func.func @transform_10(%arg0: i32) -> (i32, i32, i32) {
    %c0_i32 = arith.constant 0 : i32
    %c0_i32_0 = arith.constant 0 : i32
    %c0_i32_1 = arith.constant 0 : i32
    return %arg0, %c0_i32, %c0_i32_0 : i32, i32, i32
  }
}

module attributes {stable_mosaic.version = 11 : i64} {
  func.func @_down_gn_conv_kernel(%arg0: i32, %arg1: memref<1x4x128xf32, #tpu.memory_space<vmem>>, %arg2: memref<1x128xf32, #tpu.memory_space<vmem>>, %arg3: memref<1x128xf32, #tpu.memory_space<vmem>>, %arg4: memref<128x64xbf16, #tpu.memory_space<vmem>>, %arg5: memref<1x64xf32, #tpu.memory_space<vmem>>, %arg6: memref<1x4x64xf32, #tpu.memory_space<vmem>>) attributes {dimension_semantics = [#tpu.dimension_semantics<parallel>], iteration_bounds = array<i64: 2>, scalar_prefetch = 0 : i64, scratch_operands = 0 : i64, tpu.core_type = #tpu.core_type<tc>, window_params = [{transform_indices = @transform_0, window_bounds = array<i64: 1, 4, 128>}, {pipeline_mode = #tpu.pipeline_mode<synchronous>, transform_indices = @transform_1, window_bounds = array<i64: 1, 128>}, {pipeline_mode = #tpu.pipeline_mode<synchronous>, transform_indices = @transform_2, window_bounds = array<i64: 1, 128>}, {pipeline_mode = #tpu.pipeline_mode<synchronous>, transform_indices = @transform_3, window_bounds = array<i64: 128, 64>}, {pipeline_mode = #tpu.pipeline_mode<synchronous>, transform_indices = @transform_4, window_bounds = array<i64: 1, 64>}, {transform_indices = @transform_5, window_bounds = array<i64: 1, 4, 64>}]} {
    %c0 = arith.constant 0 : index
    %c0_0 = arith.constant 0 : index
    %c0_1 = arith.constant 0 : index
    %0 = vector.load %arg1[%c0, %c0_0, %c0_1] : memref<1x4x128xf32, #tpu.memory_space<vmem>>, vector<1x4x128xf32>
    %1 = vector.shape_cast %0 : vector<1x4x128xf32> to vector<4x128xf32>
    %c0_2 = arith.constant 0 : index
    %c0_3 = arith.constant 0 : index
    %2 = vector.load %arg2[%c0_2, %c0_3] : memref<1x128xf32, #tpu.memory_space<vmem>>, vector<1x128xf32>
    %c0_4 = arith.constant 0 : index
    %c0_5 = arith.constant 0 : index
    %3 = vector.load %arg3[%c0_4, %c0_5] : memref<1x128xf32, #tpu.memory_space<vmem>>, vector<1x128xf32>
    %cst = arith.constant dense<0.000000e+00> : vector<128xf32>
    %4 = vector.multi_reduction <add>, %1, %cst [0] : vector<4x128xf32> to vector<128xf32>
    %5 = vector.shape_cast %4 : vector<128xf32> to vector<1x128xf32>
    %6 = arith.mulf %1, %1 : vector<4x128xf32>
    %cst_6 = arith.constant dense<0.000000e+00> : vector<128xf32>
    %7 = vector.multi_reduction <add>, %6, %cst_6 [0] : vector<4x128xf32> to vector<128xf32>
    %8 = vector.shape_cast %7 : vector<128xf32> to vector<1x128xf32>
    %cst_7 = arith.constant dense<0.000000e+00> : vector<1xf32>
    %9 = vector.multi_reduction <add>, %5, %cst_7 [1] : vector<1x128xf32> to vector<1xf32>
    %10 = vector.shape_cast %9 : vector<1xf32> to vector<1x1xf32>
    %cst_8 = arith.constant 5.120000e+02 : f32
    %11 = vector.broadcast %cst_8 : f32 to vector<1x1xf32>
    %12 = arith.divf %10, %11 : vector<1x1xf32>
    %cst_9 = arith.constant dense<0.000000e+00> : vector<1xf32>
    %13 = vector.multi_reduction <add>, %8, %cst_9 [1] : vector<1x128xf32> to vector<1xf32>
    %14 = vector.shape_cast %13 : vector<1xf32> to vector<1x1xf32>
    %cst_10 = arith.constant 5.120000e+02 : f32
    %15 = vector.broadcast %cst_10 : f32 to vector<1x1xf32>
    %16 = arith.divf %14, %15 : vector<1x1xf32>
    %17 = arith.mulf %12, %12 : vector<1x1xf32>
    %18 = arith.subf %16, %17 : vector<1x1xf32>
    %cst_11 = arith.constant 0.000000e+00 : f32
    %19 = vector.broadcast %cst_11 : f32 to vector<1x1xf32>
    %20 = arith.maximumf %18, %19 : vector<1x1xf32>
    %21 = vector.broadcast %12 : vector<1x1xf32> to vector<4x128xf32>
    %22 = arith.subf %1, %21 : vector<4x128xf32>
    %cst_12 = arith.constant 9.99999974E-6 : f32
    %23 = vector.broadcast %cst_12 : f32 to vector<1x1xf32>
    %24 = arith.addf %20, %23 : vector<1x1xf32>
    %25 = math.rsqrt %24 : vector<1x1xf32>
    %26 = vector.broadcast %25 : vector<1x1xf32> to vector<4x128xf32>
    %27 = arith.mulf %22, %26 : vector<4x128xf32>
    %28 = vector.broadcast %2 : vector<1x128xf32> to vector<4x128xf32>
    %29 = arith.mulf %27, %28 : vector<4x128xf32>
    %30 = vector.broadcast %3 : vector<1x128xf32> to vector<4x128xf32>
    %31 = arith.addf %29, %30 : vector<4x128xf32>
    %32 = arith.truncf %31 : vector<4x128xf32> to vector<4x128xbf16>
    %c0_13 = arith.constant 0 : index
    %c0_14 = arith.constant 0 : index
    %33 = vector.load %arg4[%c0_13, %c0_14] : memref<128x64xbf16, #tpu.memory_space<vmem>>, vector<128x64xbf16>
    %cst_15 = arith.constant dense<0.000000e+00> : vector<4x64xf32>
    %34 = tpu.matmul %32, %33, %cst_15 {dimension_numbers = #tpu.dot_dimension_numbers<[1], [0], [0], [1], [0, 0, 1, 1], [], []>} : vector<4x128xbf16>, vector<128x64xbf16>, vector<4x64xf32> -> vector<4x64xf32>
    %c0_16 = arith.constant 0 : index
    %c0_17 = arith.constant 0 : index
    %35 = vector.load %arg5[%c0_16, %c0_17] : memref<1x64xf32, #tpu.memory_space<vmem>>, vector<1x64xf32>
    %36 = vector.broadcast %35 : vector<1x64xf32> to vector<4x64xf32>
    %37 = arith.addf %34, %36 : vector<4x64xf32>
    %c0_18 = arith.constant 0 : index
    %c0_19 = arith.constant 0 : index
    %c0_20 = arith.constant 0 : index
    %38 = vector.load %arg6[%c0_18, %c0_19, %c0_20] : memref<1x4x64xf32, #tpu.memory_space<vmem>>, vector<1x4x64xf32>
    %39 = vector.shape_cast %38 : vector<1x4x64xf32> to vector<4x64xf32>
    %40 = vector.shape_cast %37 : vector<4x64xf32> to vector<1x4x64xf32>
    tpu.vector_store %arg6[%c0_18, %c0_19, %c0_20], %40 {strides = array<i32>} : memref<1x4x64xf32, #tpu.memory_space<vmem>>, vector<1x4x64xf32>,
    return
  }
  func.func @transform_0(%arg0: i32) -> (i32, i32, i32) {
    %c0_i32 = arith.constant 0 : i32
    %c0_i32_0 = arith.constant 0 : i32
    %c0_i32_1 = arith.constant 0 : i32
    return %arg0, %c0_i32, %c0_i32_0 : i32, i32, i32
  }
  func.func @transform_1(%arg0: i32) -> (i32, i32) {
    %c0_i32 = arith.constant 0 : i32
    %c0_i32_0 = arith.constant 0 : i32
    %c0_i32_1 = arith.constant 0 : i32
    return %c0_i32, %c0_i32_0 : i32, i32
  }
  func.func @transform_2(%arg0: i32) -> (i32, i32) {
    %c0_i32 = arith.constant 0 : i32
    %c0_i32_0 = arith.constant 0 : i32
    %c0_i32_1 = arith.constant 0 : i32
    return %c0_i32, %c0_i32_0 : i32, i32
  }
  func.func @transform_3(%arg0: i32) -> (i32, i32) {
    %c0_i32 = arith.constant 0 : i32
    %c0_i32_0 = arith.constant 0 : i32
    %c0_i32_1 = arith.constant 0 : i32
    return %c0_i32, %c0_i32_0 : i32, i32
  }
  func.func @transform_4(%arg0: i32) -> (i32, i32) {
    %c0_i32 = arith.constant 0 : i32
    %c0_i32_0 = arith.constant 0 : i32
    %c0_i32_1 = arith.constant 0 : i32
    return %c0_i32, %c0_i32_0 : i32, i32
  }
  func.func @transform_5(%arg0: i32) -> (i32, i32, i32) {
    %c0_i32 = arith.constant 0 : i32
    %c0_i32_0 = arith.constant 0 : i32
    %c0_i32_1 = arith.constant 0 : i32
    return %arg0, %c0_i32, %c0_i32_0 : i32, i32, i32
  }
}

module attributes {stable_mosaic.version = 11 : i64} {
  func.func @_convblock_kernel(%arg0: i32, %arg1: memref<1x4x64xf32, #tpu.memory_space<vmem>>, %arg2: memref<64x16xbf16, #tpu.memory_space<vmem>>, %arg3: memref<1x16xf32, #tpu.memory_space<vmem>>, %arg4: memref<9x16x16xbf16, #tpu.memory_space<vmem>>, %arg5: memref<1x16xf32, #tpu.memory_space<vmem>>, %arg6: memref<1x16xf32, #tpu.memory_space<vmem>>, %arg7: memref<1x16xf32, #tpu.memory_space<vmem>>, %arg8: memref<16x64xbf16, #tpu.memory_space<vmem>>, %arg9: memref<1x64xf32, #tpu.memory_space<vmem>>, %arg10: memref<1x64xf32, #tpu.memory_space<vmem>>, %arg11: memref<1x4x64xf32, #tpu.memory_space<vmem>>, %arg12: memref<10x16xf32, #tpu.memory_space<vmem>>) attributes {dimension_semantics = [#tpu.dimension_semantics<parallel>], iteration_bounds = array<i64: 2>, scalar_prefetch = 0 : i64, scratch_operands = 1 : i64, tpu.core_type = #tpu.core_type<tc>, window_params = [{transform_indices = @transform_0, window_bounds = array<i64: 1, 4, 64>}, {pipeline_mode = #tpu.pipeline_mode<synchronous>, transform_indices = @transform_1, window_bounds = array<i64: 64, 16>}, {pipeline_mode = #tpu.pipeline_mode<synchronous>, transform_indices = @transform_2, window_bounds = array<i64: 1, 16>}, {pipeline_mode = #tpu.pipeline_mode<synchronous>, transform_indices = @transform_3, window_bounds = array<i64: 9, 16, 16>}, {pipeline_mode = #tpu.pipeline_mode<synchronous>, transform_indices = @transform_4, window_bounds = array<i64: 1, 16>}, {pipeline_mode = #tpu.pipeline_mode<synchronous>, transform_indices = @transform_5, window_bounds = array<i64: 1, 16>}, {pipeline_mode = #tpu.pipeline_mode<synchronous>, transform_indices = @transform_6, window_bounds = array<i64: 1, 16>}, {pipeline_mode = #tpu.pipeline_mode<synchronous>, transform_indices = @transform_7, window_bounds = array<i64: 16, 64>}, {pipeline_mode = #tpu.pipeline_mode<synchronous>, transform_indices = @transform_8, window_bounds = array<i64: 1, 64>}, {pipeline_mode = #tpu.pipeline_mode<synchronous>, transform_indices = @transform_9, window_bounds = array<i64: 1, 64>}, {transform_indices = @transform_10, window_bounds = array<i64: 1, 4, 64>}]} {
    %c0 = arith.constant 0 : index
    %c0_0 = arith.constant 0 : index
    %c0_1 = arith.constant 0 : index
    %0 = vector.load %arg1[%c0, %c0_0, %c0_1] : memref<1x4x64xf32, #tpu.memory_space<vmem>>, vector<1x4x64xf32>
    %1 = vector.shape_cast %0 : vector<1x4x64xf32> to vector<4x64xf32>
    %2 = arith.truncf %1 : vector<4x64xf32> to vector<4x64xbf16>
    %c0_2 = arith.constant 0 : index
    %c0_3 = arith.constant 0 : index
    %3 = vector.load %arg2[%c0_2, %c0_3] : memref<64x16xbf16, #tpu.memory_space<vmem>>, vector<64x16xbf16>
    %cst = arith.constant dense<0.000000e+00> : vector<4x16xf32>
    %4 = tpu.matmul %2, %3, %cst {dimension_numbers = #tpu.dot_dimension_numbers<[1], [0], [0], [1], [0, 0, 1, 1], [], []>} : vector<4x64xbf16>, vector<64x16xbf16>, vector<4x16xf32> -> vector<4x16xf32>
    %c0_4 = arith.constant 0 : index
    %c0_5 = arith.constant 0 : index
    %5 = vector.load %arg3[%c0_4, %c0_5] : memref<1x16xf32, #tpu.memory_space<vmem>>, vector<1x16xf32>
    %6 = vector.broadcast %5 : vector<1x16xf32> to vector<4x16xf32>
    %7 = arith.addf %4, %6 : vector<4x16xf32>
    %c0_6 = arith.constant 0 : index
    %c0_7 = arith.constant 0 : index
    %8 = vector.load %arg6[%c0_6, %c0_7] : memref<1x16xf32, #tpu.memory_space<vmem>>, vector<1x16xf32>
    %c0_8 = arith.constant 0 : index
    %c0_9 = arith.constant 0 : index
    %9 = vector.load %arg7[%c0_8, %c0_9] : memref<1x16xf32, #tpu.memory_space<vmem>>, vector<1x16xf32>
    %cst_10 = arith.constant dense<0.000000e+00> : vector<16xf32>
    %10 = vector.multi_reduction <add>, %7, %cst_10 [0] : vector<4x16xf32> to vector<16xf32>
    %11 = vector.shape_cast %10 : vector<16xf32> to vector<1x16xf32>
    %12 = arith.mulf %7, %7 : vector<4x16xf32>
    %cst_11 = arith.constant dense<0.000000e+00> : vector<16xf32>
    %13 = vector.multi_reduction <add>, %12, %cst_11 [0] : vector<4x16xf32> to vector<16xf32>
    %14 = vector.shape_cast %13 : vector<16xf32> to vector<1x16xf32>
    %cst_12 = arith.constant dense<0.000000e+00> : vector<1xf32>
    %15 = vector.multi_reduction <add>, %11, %cst_12 [1] : vector<1x16xf32> to vector<1xf32>
    %16 = vector.shape_cast %15 : vector<1xf32> to vector<1x1xf32>
    %cst_13 = arith.constant 6.400000e+01 : f32
    %17 = vector.broadcast %cst_13 : f32 to vector<1x1xf32>
    %18 = arith.divf %16, %17 : vector<1x1xf32>
    %cst_14 = arith.constant dense<0.000000e+00> : vector<1xf32>
    %19 = vector.multi_reduction <add>, %14, %cst_14 [1] : vector<1x16xf32> to vector<1xf32>
    %20 = vector.shape_cast %19 : vector<1xf32> to vector<1x1xf32>
    %cst_15 = arith.constant 6.400000e+01 : f32
    %21 = vector.broadcast %cst_15 : f32 to vector<1x1xf32>
    %22 = arith.divf %20, %21 : vector<1x1xf32>
    %23 = arith.mulf %18, %18 : vector<1x1xf32>
    %24 = arith.subf %22, %23 : vector<1x1xf32>
    %cst_16 = arith.constant 0.000000e+00 : f32
    %25 = vector.broadcast %cst_16 : f32 to vector<1x1xf32>
    %26 = arith.maximumf %24, %25 : vector<1x1xf32>
    %27 = vector.broadcast %18 : vector<1x1xf32> to vector<4x16xf32>
    %28 = arith.subf %7, %27 : vector<4x16xf32>
    %cst_17 = arith.constant 9.99999974E-6 : f32
    %29 = vector.broadcast %cst_17 : f32 to vector<1x1xf32>
    %30 = arith.addf %26, %29 : vector<1x1xf32>
    %31 = math.rsqrt %30 : vector<1x1xf32>
    %32 = vector.broadcast %31 : vector<1x1xf32> to vector<4x16xf32>
    %33 = arith.mulf %28, %32 : vector<4x16xf32>
    %34 = vector.broadcast %8 : vector<1x16xf32> to vector<4x16xf32>
    %35 = arith.mulf %33, %34 : vector<4x16xf32>
    %36 = vector.broadcast %9 : vector<1x16xf32> to vector<4x16xf32>
    %37 = arith.addf %35, %36 : vector<4x16xf32>
    %cst_18 = arith.constant 5.000000e-01 : f32
    %38 = vector.broadcast %cst_18 : f32 to vector<4x16xf32>
    %39 = arith.mulf %38, %37 : vector<4x16xf32>
    %cst_19 = arith.constant 0.707106769 : f32
    %40 = vector.broadcast %cst_19 : f32 to vector<4x16xf32>
    %41 = arith.mulf %37, %40 : vector<4x16xf32>
    %42 = math.erf %41 : vector<4x16xf32>
    %cst_20 = arith.constant 1.000000e+00 : f32
    %43 = vector.broadcast %cst_20 : f32 to vector<4x16xf32>
    %44 = arith.addf %43, %42 : vector<4x16xf32>
    %45 = arith.mulf %39, %44 : vector<4x16xf32>
    %cst_21 = arith.constant 0.000000e+00 : f32
    %46 = vector.broadcast %cst_21 : f32 to vector<10x16xf32>
    %c0_22 = arith.constant 0 : index
    %c0_23 = arith.constant 0 : index
    %47 = vector.load %arg12[%c0_22, %c0_23] : memref<10x16xf32, #tpu.memory_space<vmem>>, vector<10x16xf32>
    tpu.vector_store %arg12[%c0_22, %c0_23], %46 {strides = array<i32>} : memref<10x16xf32, #tpu.memory_space<vmem>>, vector<10x16xf32>,
    %c3 = arith.constant 3 : index
    %c0_24 = arith.constant 0 : index
    %48 = vector.load %arg12[%c3, %c0_24] : memref<10x16xf32, #tpu.memory_space<vmem>>, vector<4x16xf32>
    tpu.vector_store %arg12[%c3, %c0_24], %45 {strides = array<i32>} : memref<10x16xf32, #tpu.memory_space<vmem>>, vector<4x16xf32>,
    %49 = tpu.iota {dimensions = array<i32: 0>} : vector<4x1xi32>
    %c2_i32 = arith.constant 2 : i32
    %c0_i32 = arith.constant 0 : i32
    %50 = arith.cmpi eq, %c2_i32, %c0_i32 : i32
    %c1_i32 = arith.constant 1 : i32
    %51 = arith.select %50, %c1_i32, %c2_i32 : i32
    %52 = vector.broadcast %51 : i32 to vector<4x1xi32>
    %53 = arith.remsi %49, %52 : vector<4x1xi32>
    %c0_i32_25 = arith.constant 0 : i32
    %54 = vector.broadcast %c0_i32_25 : i32 to vector<4x1xi32>
    %55 = arith.cmpi ne, %53, %54 : vector<4x1xi32>
    %c0_i32_26 = arith.constant 0 : i32
    %56 = vector.broadcast %c0_i32_26 : i32 to vector<4x1xi32>
    %57 = arith.cmpi slt, %53, %56 : vector<4x1xi32>
    %c0_i32_27 = arith.constant 0 : i32
    %58 = arith.cmpi slt, %51, %c0_i32_27 : i32
    %59 = vector.broadcast %58 : i1 to vector<4x1xi1>
    %60 = vector.broadcast %59 : vector<4x1xi1> to vector<4x1xi1>
    %61 = arith.xori %57, %60 : vector<4x1xi1>
    %62 = arith.andi %61, %55 : vector<4x1xi1>
    %63 = vector.broadcast %51 : i32 to vector<4x1xi32>
    %64 = arith.addi %53, %63 : vector<4x1xi32>
    %65 = arith.select %62, %64, %53 : vector<4x1xi1>, vector<4x1xi32>
    %c1_i32_28 = arith.constant 1 : i32
    %66 = vector.broadcast %c1_i32_28 : i32 to vector<4x1xi32>
    %67 = arith.cmpi sge, %65, %66 : vector<4x1xi32>
    %c0_i32_29 = arith.constant 0 : i32
    %68 = vector.broadcast %c0_i32_29 : i32 to vector<4x1xi32>
    %69 = arith.cmpi sle, %65, %68 : vector<4x1xi32>
    %cst_30 = arith.constant 0.000000e+00 : f32
    %70 = vector.broadcast %cst_30 : f32 to vector<4x16xf32>
    %c0_31 = arith.constant 0 : index
    %c0_32 = arith.constant 0 : index
    %71 = vector.load %arg12[%c0_31, %c0_32] : memref<10x16xf32, #tpu.memory_space<vmem>>, vector<4x16xf32>
    %cst_33 = arith.constant 0.000000e+00 : f32
    %72 = vector.broadcast %cst_33 : f32 to vector<4x16xf32>
    %73 = vector.shape_cast %67 : vector<4x1xi1> to vector<4x1xi1>
    %74 = vector.broadcast %73 : vector<4x1xi1> to vector<4x16xi1>
    %75 = arith.select %74, %71, %72 : vector<4x16xi1>, vector<4x16xf32>
    %76 = arith.truncf %75 : vector<4x16xf32> to vector<4x16xbf16>
    %c0_34 = arith.constant 0 : index
    %c0_35 = arith.constant 0 : index
    %c0_36 = arith.constant 0 : index
    %77 = vector.load %arg4[%c0_34, %c0_35, %c0_36] : memref<9x16x16xbf16, #tpu.memory_space<vmem>>, vector<1x16x16xbf16>
    %78 = vector.shape_cast %77 : vector<1x16x16xbf16> to vector<16x16xbf16>
    %cst_37 = arith.constant dense<0.000000e+00> : vector<4x16xf32>
    %79 = tpu.matmul %76, %78, %cst_37 {dimension_numbers = #tpu.dot_dimension_numbers<[1], [0], [0], [1], [0, 0, 1, 1], [], []>} : vector<4x16xbf16>, vector<16x16xbf16>, vector<4x16xf32> -> vector<4x16xf32>
    %80 = arith.addf %70, %79 : vector<4x16xf32>
    %c1 = arith.constant 1 : index
    %c0_38 = arith.constant 0 : index
    %81 = vector.load %arg12[%c1, %c0_38] : memref<10x16xf32, #tpu.memory_space<vmem>>, vector<4x16xf32>
    %82 = arith.truncf %81 : vector<4x16xf32> to vector<4x16xbf16>
    %c1_39 = arith.constant 1 : index
    %c0_40 = arith.constant 0 : index
    %c0_41 = arith.constant 0 : index
    %83 = vector.load %arg4[%c1_39, %c0_40, %c0_41] : memref<9x16x16xbf16, #tpu.memory_space<vmem>>, vector<1x16x16xbf16>
    %84 = vector.shape_cast %83 : vector<1x16x16xbf16> to vector<16x16xbf16>
    %cst_42 = arith.constant dense<0.000000e+00> : vector<4x16xf32>
    %85 = tpu.matmul %82, %84, %cst_42 {dimension_numbers = #tpu.dot_dimension_numbers<[1], [0], [0], [1], [0, 0, 1, 1], [], []>} : vector<4x16xbf16>, vector<16x16xbf16>, vector<4x16xf32> -> vector<4x16xf32>
    %86 = arith.addf %80, %85 : vector<4x16xf32>
    %c2 = arith.constant 2 : index
    %c0_43 = arith.constant 0 : index
    %87 = vector.load %arg12[%c2, %c0_43] : memref<10x16xf32, #tpu.memory_space<vmem>>, vector<4x16xf32>
    %cst_44 = arith.constant 0.000000e+00 : f32
    %88 = vector.broadcast %cst_44 : f32 to vector<4x16xf32>
    %89 = vector.shape_cast %69 : vector<4x1xi1> to vector<4x1xi1>
    %90 = vector.broadcast %89 : vector<4x1xi1> to vector<4x16xi1>
    %91 = arith.select %90, %87, %88 : vector<4x16xi1>, vector<4x16xf32>
    %92 = arith.truncf %91 : vector<4x16xf32> to vector<4x16xbf16>
    %c2_45 = arith.constant 2 : index
    %c0_46 = arith.constant 0 : index
    %c0_47 = arith.constant 0 : index
    %93 = vector.load %arg4[%c2_45, %c0_46, %c0_47] : memref<9x16x16xbf16, #tpu.memory_space<vmem>>, vector<1x16x16xbf16>
    %94 = vector.shape_cast %93 : vector<1x16x16xbf16> to vector<16x16xbf16>
    %cst_48 = arith.constant dense<0.000000e+00> : vector<4x16xf32>
    %95 = tpu.matmul %92, %94, %cst_48 {dimension_numbers = #tpu.dot_dimension_numbers<[1], [0], [0], [1], [0, 0, 1, 1], [], []>} : vector<4x16xbf16>, vector<16x16xbf16>, vector<4x16xf32> -> vector<4x16xf32>
    %96 = arith.addf %86, %95 : vector<4x16xf32>
    %c2_49 = arith.constant 2 : index
    %c0_50 = arith.constant 0 : index
    %97 = vector.load %arg12[%c2_49, %c0_50] : memref<10x16xf32, #tpu.memory_space<vmem>>, vector<4x16xf32>
    %cst_51 = arith.constant 0.000000e+00 : f32
    %98 = vector.broadcast %cst_51 : f32 to vector<4x16xf32>
    %99 = vector.shape_cast %67 : vector<4x1xi1> to vector<4x1xi1>
    %100 = vector.broadcast %99 : vector<4x1xi1> to vector<4x16xi1>
    %101 = arith.select %100, %97, %98 : vector<4x16xi1>, vector<4x16xf32>
    %102 = arith.truncf %101 : vector<4x16xf32> to vector<4x16xbf16>
    %c3_52 = arith.constant 3 : index
    %c0_53 = arith.constant 0 : index
    %c0_54 = arith.constant 0 : index
    %103 = vector.load %arg4[%c3_52, %c0_53, %c0_54] : memref<9x16x16xbf16, #tpu.memory_space<vmem>>, vector<1x16x16xbf16>
    %104 = vector.shape_cast %103 : vector<1x16x16xbf16> to vector<16x16xbf16>
    %cst_55 = arith.constant dense<0.000000e+00> : vector<4x16xf32>
    %105 = tpu.matmul %102, %104, %cst_55 {dimension_numbers = #tpu.dot_dimension_numbers<[1], [0], [0], [1], [0, 0, 1, 1], [], []>} : vector<4x16xbf16>, vector<16x16xbf16>, vector<4x16xf32> -> vector<4x16xf32>
    %106 = arith.addf %96, %105 : vector<4x16xf32>
    %c3_56 = arith.constant 3 : index
    %c0_57 = arith.constant 0 : index
    %107 = vector.load %arg12[%c3_56, %c0_57] : memref<10x16xf32, #tpu.memory_space<vmem>>, vector<4x16xf32>
    %108 = arith.truncf %107 : vector<4x16xf32> to vector<4x16xbf16>
    %c4 = arith.constant 4 : index
    %c0_58 = arith.constant 0 : index
    %c0_59 = arith.constant 0 : index
    %109 = vector.load %arg4[%c4, %c0_58, %c0_59] : memref<9x16x16xbf16, #tpu.memory_space<vmem>>, vector<1x16x16xbf16>
    %110 = vector.shape_cast %109 : vector<1x16x16xbf16> to vector<16x16xbf16>
    %cst_60 = arith.constant dense<0.000000e+00> : vector<4x16xf32>
    %111 = tpu.matmul %108, %110, %cst_60 {dimension_numbers = #tpu.dot_dimension_numbers<[1], [0], [0], [1], [0, 0, 1, 1], [], []>} : vector<4x16xbf16>, vector<16x16xbf16>, vector<4x16xf32> -> vector<4x16xf32>
    %112 = arith.addf %106, %111 : vector<4x16xf32>
    %c4_61 = arith.constant 4 : index
    %c0_62 = arith.constant 0 : index
    %113 = vector.load %arg12[%c4_61, %c0_62] : memref<10x16xf32, #tpu.memory_space<vmem>>, vector<4x16xf32>
    %cst_63 = arith.constant 0.000000e+00 : f32
    %114 = vector.broadcast %cst_63 : f32 to vector<4x16xf32>
    %115 = vector.shape_cast %69 : vector<4x1xi1> to vector<4x1xi1>
    %116 = vector.broadcast %115 : vector<4x1xi1> to vector<4x16xi1>
    %117 = arith.select %116, %113, %114 : vector<4x16xi1>, vector<4x16xf32>
    %118 = arith.truncf %117 : vector<4x16xf32> to vector<4x16xbf16>
    %c5 = arith.constant 5 : index
    %c0_64 = arith.constant 0 : index
    %c0_65 = arith.constant 0 : index
    %119 = vector.load %arg4[%c5, %c0_64, %c0_65] : memref<9x16x16xbf16, #tpu.memory_space<vmem>>, vector<1x16x16xbf16>
    %120 = vector.shape_cast %119 : vector<1x16x16xbf16> to vector<16x16xbf16>
    %cst_66 = arith.constant dense<0.000000e+00> : vector<4x16xf32>
    %121 = tpu.matmul %118, %120, %cst_66 {dimension_numbers = #tpu.dot_dimension_numbers<[1], [0], [0], [1], [0, 0, 1, 1], [], []>} : vector<4x16xbf16>, vector<16x16xbf16>, vector<4x16xf32> -> vector<4x16xf32>
    %122 = arith.addf %112, %121 : vector<4x16xf32>
    %c4_67 = arith.constant 4 : index
    %c0_68 = arith.constant 0 : index
    %123 = vector.load %arg12[%c4_67, %c0_68] : memref<10x16xf32, #tpu.memory_space<vmem>>, vector<4x16xf32>
    %cst_69 = arith.constant 0.000000e+00 : f32
    %124 = vector.broadcast %cst_69 : f32 to vector<4x16xf32>
    %125 = vector.shape_cast %67 : vector<4x1xi1> to vector<4x1xi1>
    %126 = vector.broadcast %125 : vector<4x1xi1> to vector<4x16xi1>
    %127 = arith.select %126, %123, %124 : vector<4x16xi1>, vector<4x16xf32>
    %128 = arith.truncf %127 : vector<4x16xf32> to vector<4x16xbf16>
    %c6 = arith.constant 6 : index
    %c0_70 = arith.constant 0 : index
    %c0_71 = arith.constant 0 : index
    %129 = vector.load %arg4[%c6, %c0_70, %c0_71] : memref<9x16x16xbf16, #tpu.memory_space<vmem>>, vector<1x16x16xbf16>
    %130 = vector.shape_cast %129 : vector<1x16x16xbf16> to vector<16x16xbf16>
    %cst_72 = arith.constant dense<0.000000e+00> : vector<4x16xf32>
    %131 = tpu.matmul %128, %130, %cst_72 {dimension_numbers = #tpu.dot_dimension_numbers<[1], [0], [0], [1], [0, 0, 1, 1], [], []>} : vector<4x16xbf16>, vector<16x16xbf16>, vector<4x16xf32> -> vector<4x16xf32>
    %132 = arith.addf %122, %131 : vector<4x16xf32>
    %c5_73 = arith.constant 5 : index
    %c0_74 = arith.constant 0 : index
    %133 = vector.load %arg12[%c5_73, %c0_74] : memref<10x16xf32, #tpu.memory_space<vmem>>, vector<4x16xf32>
    %134 = arith.truncf %133 : vector<4x16xf32> to vector<4x16xbf16>
    %c7 = arith.constant 7 : index
    %c0_75 = arith.constant 0 : index
    %c0_76 = arith.constant 0 : index
    %135 = vector.load %arg4[%c7, %c0_75, %c0_76] : memref<9x16x16xbf16, #tpu.memory_space<vmem>>, vector<1x16x16xbf16>
    %136 = vector.shape_cast %135 : vector<1x16x16xbf16> to vector<16x16xbf16>
    %cst_77 = arith.constant dense<0.000000e+00> : vector<4x16xf32>
    %137 = tpu.matmul %134, %136, %cst_77 {dimension_numbers = #tpu.dot_dimension_numbers<[1], [0], [0], [1], [0, 0, 1, 1], [], []>} : vector<4x16xbf16>, vector<16x16xbf16>, vector<4x16xf32> -> vector<4x16xf32>
    %138 = arith.addf %132, %137 : vector<4x16xf32>
    %c6_78 = arith.constant 6 : index
    %c0_79 = arith.constant 0 : index
    %139 = vector.load %arg12[%c6_78, %c0_79] : memref<10x16xf32, #tpu.memory_space<vmem>>, vector<4x16xf32>
    %cst_80 = arith.constant 0.000000e+00 : f32
    %140 = vector.broadcast %cst_80 : f32 to vector<4x16xf32>
    %141 = vector.shape_cast %69 : vector<4x1xi1> to vector<4x1xi1>
    %142 = vector.broadcast %141 : vector<4x1xi1> to vector<4x16xi1>
    %143 = arith.select %142, %139, %140 : vector<4x16xi1>, vector<4x16xf32>
    %144 = arith.truncf %143 : vector<4x16xf32> to vector<4x16xbf16>
    %c8 = arith.constant 8 : index
    %c0_81 = arith.constant 0 : index
    %c0_82 = arith.constant 0 : index
    %145 = vector.load %arg4[%c8, %c0_81, %c0_82] : memref<9x16x16xbf16, #tpu.memory_space<vmem>>, vector<1x16x16xbf16>
    %146 = vector.shape_cast %145 : vector<1x16x16xbf16> to vector<16x16xbf16>
    %cst_83 = arith.constant dense<0.000000e+00> : vector<4x16xf32>
    %147 = tpu.matmul %144, %146, %cst_83 {dimension_numbers = #tpu.dot_dimension_numbers<[1], [0], [0], [1], [0, 0, 1, 1], [], []>} : vector<4x16xbf16>, vector<16x16xbf16>, vector<4x16xf32> -> vector<4x16xf32>
    %148 = arith.addf %138, %147 : vector<4x16xf32>
    %c0_84 = arith.constant 0 : index
    %c0_85 = arith.constant 0 : index
    %149 = vector.load %arg5[%c0_84, %c0_85] : memref<1x16xf32, #tpu.memory_space<vmem>>, vector<1x16xf32>
    %150 = vector.broadcast %149 : vector<1x16xf32> to vector<4x16xf32>
    %151 = arith.addf %148, %150 : vector<4x16xf32>
    %c0_86 = arith.constant 0 : index
    %c0_87 = arith.constant 0 : index
    %152 = vector.load %arg6[%c0_86, %c0_87] : memref<1x16xf32, #tpu.memory_space<vmem>>, vector<1x16xf32>
    %c0_88 = arith.constant 0 : index
    %c0_89 = arith.constant 0 : index
    %153 = vector.load %arg7[%c0_88, %c0_89] : memref<1x16xf32, #tpu.memory_space<vmem>>, vector<1x16xf32>
    %cst_90 = arith.constant dense<0.000000e+00> : vector<16xf32>
    %154 = vector.multi_reduction <add>, %151, %cst_90 [0] : vector<4x16xf32> to vector<16xf32>
    %155 = vector.shape_cast %154 : vector<16xf32> to vector<1x16xf32>
    %156 = arith.mulf %151, %151 : vector<4x16xf32>
    %cst_91 = arith.constant dense<0.000000e+00> : vector<16xf32>
    %157 = vector.multi_reduction <add>, %156, %cst_91 [0] : vector<4x16xf32> to vector<16xf32>
    %158 = vector.shape_cast %157 : vector<16xf32> to vector<1x16xf32>
    %cst_92 = arith.constant dense<0.000000e+00> : vector<1xf32>
    %159 = vector.multi_reduction <add>, %155, %cst_92 [1] : vector<1x16xf32> to vector<1xf32>
    %160 = vector.shape_cast %159 : vector<1xf32> to vector<1x1xf32>
    %cst_93 = arith.constant 6.400000e+01 : f32
    %161 = vector.broadcast %cst_93 : f32 to vector<1x1xf32>
    %162 = arith.divf %160, %161 : vector<1x1xf32>
    %cst_94 = arith.constant dense<0.000000e+00> : vector<1xf32>
    %163 = vector.multi_reduction <add>, %158, %cst_94 [1] : vector<1x16xf32> to vector<1xf32>
    %164 = vector.shape_cast %163 : vector<1xf32> to vector<1x1xf32>
    %cst_95 = arith.constant 6.400000e+01 : f32
    %165 = vector.broadcast %cst_95 : f32 to vector<1x1xf32>
    %166 = arith.divf %164, %165 : vector<1x1xf32>
    %167 = arith.mulf %162, %162 : vector<1x1xf32>
    %168 = arith.subf %166, %167 : vector<1x1xf32>
    %cst_96 = arith.constant 0.000000e+00 : f32
    %169 = vector.broadcast %cst_96 : f32 to vector<1x1xf32>
    %170 = arith.maximumf %168, %169 : vector<1x1xf32>
    %171 = vector.broadcast %162 : vector<1x1xf32> to vector<4x16xf32>
    %172 = arith.subf %151, %171 : vector<4x16xf32>
    %cst_97 = arith.constant 9.99999974E-6 : f32
    %173 = vector.broadcast %cst_97 : f32 to vector<1x1xf32>
    %174 = arith.addf %170, %173 : vector<1x1xf32>
    %175 = math.rsqrt %174 : vector<1x1xf32>
    %176 = vector.broadcast %175 : vector<1x1xf32> to vector<4x16xf32>
    %177 = arith.mulf %172, %176 : vector<4x16xf32>
    %178 = vector.broadcast %152 : vector<1x16xf32> to vector<4x16xf32>
    %179 = arith.mulf %177, %178 : vector<4x16xf32>
    %180 = vector.broadcast %153 : vector<1x16xf32> to vector<4x16xf32>
    %181 = arith.addf %179, %180 : vector<4x16xf32>
    %cst_98 = arith.constant 5.000000e-01 : f32
    %182 = vector.broadcast %cst_98 : f32 to vector<4x16xf32>
    %183 = arith.mulf %182, %181 : vector<4x16xf32>
    %cst_99 = arith.constant 0.707106769 : f32
    %184 = vector.broadcast %cst_99 : f32 to vector<4x16xf32>
    %185 = arith.mulf %181, %184 : vector<4x16xf32>
    %186 = math.erf %185 : vector<4x16xf32>
    %cst_100 = arith.constant 1.000000e+00 : f32
    %187 = vector.broadcast %cst_100 : f32 to vector<4x16xf32>
    %188 = arith.addf %187, %186 : vector<4x16xf32>
    %189 = arith.mulf %183, %188 : vector<4x16xf32>
    %190 = arith.truncf %189 : vector<4x16xf32> to vector<4x16xbf16>
    %c0_101 = arith.constant 0 : index
    %c0_102 = arith.constant 0 : index
    %191 = vector.load %arg8[%c0_101, %c0_102] : memref<16x64xbf16, #tpu.memory_space<vmem>>, vector<16x64xbf16>
    %cst_103 = arith.constant dense<0.000000e+00> : vector<4x64xf32>
    %192 = tpu.matmul %190, %191, %cst_103 {dimension_numbers = #tpu.dot_dimension_numbers<[1], [0], [0], [1], [0, 0, 1, 1], [], []>} : vector<4x16xbf16>, vector<16x64xbf16>, vector<4x64xf32> -> vector<4x64xf32>
    %c0_104 = arith.constant 0 : index
    %c0_105 = arith.constant 0 : index
    %193 = vector.load %arg9[%c0_104, %c0_105] : memref<1x64xf32, #tpu.memory_space<vmem>>, vector<1x64xf32>
    %194 = vector.broadcast %193 : vector<1x64xf32> to vector<4x64xf32>
    %195 = arith.addf %192, %194 : vector<4x64xf32>
    %c0_106 = arith.constant 0 : index
    %c0_107 = arith.constant 0 : index
    %196 = vector.load %arg10[%c0_106, %c0_107] : memref<1x64xf32, #tpu.memory_space<vmem>>, vector<1x64xf32>
    %197 = vector.broadcast %196 : vector<1x64xf32> to vector<4x64xf32>
    %198 = arith.mulf %197, %195 : vector<4x64xf32>
    %199 = arith.addf %1, %198 : vector<4x64xf32>
    %c0_108 = arith.constant 0 : index
    %c0_109 = arith.constant 0 : index
    %c0_110 = arith.constant 0 : index
    %200 = vector.load %arg11[%c0_108, %c0_109, %c0_110] : memref<1x4x64xf32, #tpu.memory_space<vmem>>, vector<1x4x64xf32>
    %201 = vector.shape_cast %200 : vector<1x4x64xf32> to vector<4x64xf32>
    %202 = vector.shape_cast %199 : vector<4x64xf32> to vector<1x4x64xf32>
    tpu.vector_store %arg11[%c0_108, %c0_109, %c0_110], %202 {strides = array<i32>} : memref<1x4x64xf32, #tpu.memory_space<vmem>>, vector<1x4x64xf32>,
    return
  }
  func.func @transform_0(%arg0: i32) -> (i32, i32, i32) {
    %c0_i32 = arith.constant 0 : i32
    %c0_i32_0 = arith.constant 0 : i32
    %c0_i32_1 = arith.constant 0 : i32
    return %arg0, %c0_i32, %c0_i32_0 : i32, i32, i32
  }
  func.func @transform_1(%arg0: i32) -> (i32, i32) {
    %c0_i32 = arith.constant 0 : i32
    %c0_i32_0 = arith.constant 0 : i32
    %c0_i32_1 = arith.constant 0 : i32
    return %c0_i32, %c0_i32_0 : i32, i32
  }
  func.func @transform_2(%arg0: i32) -> (i32, i32) {
    %c0_i32 = arith.constant 0 : i32
    %c0_i32_0 = arith.constant 0 : i32
    %c0_i32_1 = arith.constant 0 : i32
    return %c0_i32, %c0_i32_0 : i32, i32
  }
  func.func @transform_3(%arg0: i32) -> (i32, i32, i32) {
    %c0_i32 = arith.constant 0 : i32
    %c0_i32_0 = arith.constant 0 : i32
    %c0_i32_1 = arith.constant 0 : i32
    %c0_i32_2 = arith.constant 0 : i32
    return %c0_i32, %c0_i32_0, %c0_i32_1 : i32, i32, i32
  }
  func.func @transform_4(%arg0: i32) -> (i32, i32) {
    %c0_i32 = arith.constant 0 : i32
    %c0_i32_0 = arith.constant 0 : i32
    %c0_i32_1 = arith.constant 0 : i32
    return %c0_i32, %c0_i32_0 : i32, i32
  }
  func.func @transform_5(%arg0: i32) -> (i32, i32) {
    %c0_i32 = arith.constant 0 : i32
    %c0_i32_0 = arith.constant 0 : i32
    %c0_i32_1 = arith.constant 0 : i32
    return %c0_i32, %c0_i32_0 : i32, i32
  }
  func.func @transform_6(%arg0: i32) -> (i32, i32) {
    %c0_i32 = arith.constant 0 : i32
    %c0_i32_0 = arith.constant 0 : i32
    %c0_i32_1 = arith.constant 0 : i32
    return %c0_i32, %c0_i32_0 : i32, i32
  }
  func.func @transform_7(%arg0: i32) -> (i32, i32) {
    %c0_i32 = arith.constant 0 : i32
    %c0_i32_0 = arith.constant 0 : i32
    %c0_i32_1 = arith.constant 0 : i32
    return %c0_i32, %c0_i32_0 : i32, i32
  }
  func.func @transform_8(%arg0: i32) -> (i32, i32) {
    %c0_i32 = arith.constant 0 : i32
    %c0_i32_0 = arith.constant 0 : i32
    %c0_i32_1 = arith.constant 0 : i32
    return %c0_i32, %c0_i32_0 : i32, i32
  }
  func.func @transform_9(%arg0: i32) -> (i32, i32) {
    %c0_i32 = arith.constant 0 : i32
    %c0_i32_0 = arith.constant 0 : i32
    %c0_i32_1 = arith.constant 0 : i32
    return %c0_i32, %c0_i32_0 : i32, i32
  }
  func.func @transform_10(%arg0: i32) -> (i32, i32, i32) {
    %c0_i32 = arith.constant 0 : i32
    %c0_i32_0 = arith.constant 0 : i32
    %c0_i32_1 = arith.constant 0 : i32
    return %arg0, %c0_i32, %c0_i32_0 : i32, i32, i32
  }
}

</mosaic_0001>

<llo_original>
// kernel: encoder_forward.8
$region0: #{encoder_forward.8}
  #allocation0 [shape = 'u32[]', space=smem, size = 0x4, offset = 0x4, fixed_abs, tag = 'smem constant byte address 0x4 - core index']
  #allocation1 [shape = 'u32[144,128]{1,0:T(1,128)}', space=vmem, size = 0x12000, scoped, tag = 'internal scratch']
  %s0 = inlined_call_operand.vmem [shape: f32[2,16,512], index: 0, kind: input, shape index: {}]
  %s1 = inlined_call_operand.vmem [shape: bf16[512,32], index: 1, kind: input, shape index: {}]
  %s2 = inlined_call_operand.vmem [shape: f32[1,32], index: 2, kind: input, shape index: {}]
  %s3 = inlined_call_operand.vmem [shape: f32[1,32], index: 3, kind: input, shape index: {}]
  %s4 = inlined_call_operand.vmem [shape: f32[1,32], index: 4, kind: input, shape index: {}]
  %s5 = inlined_call_operand.vmem [shape: f32[2,16,32], index: 5, kind: output, shape index: {}]
  %s6 = sld [smem:[#allocation0]]
  $region53: #{encoder_forward.8} parent=0
    _
  %s8 = ssub.s32 1, %s6
  %s9 = scalar_select 0, %s8, %s6
  loop: start=0, step=1, limit=4
  $region2: #{encoder_forward.8} parent=0 // loop_pre_header
    _
  $region3: #{encoder_forward.8} parent=0 // loop_header
    %s11 = sphi 0, %s15
    %p12 = scmp.ge.s32.totalorder %s11, 4
    %s21 = sphi 0, %s23
    %s24 = sphi 0, %s21
    %s25 = sphi 0, %s24
    %s41 = sphi 0, %s25
    %s45 = sphi 0, %s45
    %s47 = sphi 0, %s45
    %s48 = sphi 0, %s47
    %s62 = sphi 0, %s48
    %s66 = sphi 0, %s66
    %s68 = sphi 0, %s66
    %s69 = sphi 0, %s68
    %s83 = sphi 0, %s69
    %s87 = sphi 0, %s87
    %s89 = sphi 0, %s87
    %s90 = sphi 0, %s89
    %s104 = sphi 0, %s90
    %s108 = sphi 0, %s108
    %s110 = sphi 0, %s108
    %s111 = sphi 0, %s110
    %s125 = sphi 0, %s111
    %s131 = sphi 0, %s133
    %s134 = sphi 0, %s131
    %s135 = sphi 0, %s134
    %s151 = sphi 0, %s135
  $region4: #{encoder_forward.8} parent=0 // loop_header_branch
    %14 = sbr.rel (%p12) target = $region8
  $region5: #{encoder_forward.8} parent=0 // loop_body
    %s16 = ssub.s32 %s11, 1
    %s17 = ssub.s32 %s11, 2
    %s18 = sadd.s32 %s11, 1
    %s19 = ssub.s32 %s11, %s18
    %p20 = scmp.eq.s32.totalorder %s19, 0
    %s22 = sadd.s32 %s21, 1
    %s23 = scalar_select %p20, %s21, %s22
    %p26 = pneg %p20
    %p27 = scmp.eq.s32.totalorder %s11, 1
    %p28 = por %p26, %p27
    %p29 = scmp.ne.s32.totalorder %s21, %s24
    %p30 = scmp.eq.s32.totalorder %s11, 0
    %p31 = por %p29, %p30
    %p32 = scmp.ne.s32.totalorder %s21, %s24
    %p33 = scmp.eq.s32.totalorder %s16, 1
    %p34 = por %p32, %p33
    %p35 = scmp.ne.s32.totalorder %s24, %s25
    %p36 = scmp.eq.s32.totalorder %s16, 0
    %p37 = por %p35, %p36
    %p38 = scmp.ne.s32.totalorder %s24, %s25
    %p39 = scmp.eq.s32.totalorder %s17, 1
    %p40 = por %p38, %p39
    %p42 = scmp.ne.s32.totalorder %s25, %s41
    %p43 = scmp.eq.s32.totalorder %s17, 0
    %p44 = por %p42, %p43
    %s46 = sadd.s32 %s45, 1
    %p49 = scmp.eq.s32.totalorder %s11, 1
    %p50 = scmp.ne.s32.totalorder %s45, %s47
    %p51 = scmp.eq.s32.totalorder %s11, 0
    %p52 = por %p50, %p51
    %p53 = scmp.ne.s32.totalorder %s45, %s47
    %p54 = scmp.eq.s32.totalorder %s16, 1
    %p55 = por %p53, %p54
    %p56 = scmp.ne.s32.totalorder %s47, %s48
    %p57 = scmp.eq.s32.totalorder %s16, 0
    %p58 = por %p56, %p57
    %p59 = scmp.ne.s32.totalorder %s47, %s48
    %p60 = scmp.eq.s32.totalorder %s17, 1
    %p61 = por %p59, %p60
    %p63 = scmp.ne.s32.totalorder %s48, %s62
    %p64 = scmp.eq.s32.totalorder %s17, 0
    %p65 = por %p63, %p64
    %s67 = sadd.s32 %s66, 1
    %p70 = scmp.eq.s32.totalorder %s11, 1
    %p71 = scmp.ne.s32.totalorder %s66, %s68
    %p72 = scmp.eq.s32.totalorder %s11, 0
    %p73 = por %p71, %p72
    %p74 = scmp.ne.s32.totalorder %s66, %s68
    %p75 = scmp.eq.s32.totalorder %s16, 1
    %p76 = por %p74, %p75
    %p77 = scmp.ne.s32.totalorder %s68, %s69
    %p78 = scmp.eq.s32.totalorder %s16, 0
    %p79 = por %p77, %p78
    %p80 = scmp.ne.s32.totalorder %s68, %s69
    %p81 = scmp.eq.s32.totalorder %s17, 1
    %p82 = por %p80, %p81
    %p84 = scmp.ne.s32.totalorder %s69, %s83
    %p85 = scmp.eq.s32.totalorder %s17, 0
    %p86 = por %p84, %p85
    %s88 = sadd.s32 %s87, 1
    %p91 = scmp.eq.s32.totalorder %s11, 1
    %p92 = scmp.ne.s32.totalorder %s87, %s89
    %p93 = scmp.eq.s32.totalorder %s11, 0
    %p94 = por %p92, %p93
    %p95 = scmp.ne.s32.totalorder %s87, %s89
    %p96 = scmp.eq.s32.totalorder %s16, 1
    %p97 = por %p95, %p96
    %p98 = scmp.ne.s32.totalorder %s89, %s90
    %p99 = scmp.eq.s32.totalorder %s16, 0
    %p100 = por %p98, %p99
    %p101 = scmp.ne.s32.totalorder %s89, %s90
    %p102 = scmp.eq.s32.totalorder %s17, 1
    %p103 = por %p101, %p102
    %p105 = scmp.ne.s32.totalorder %s90, %s104
    %p106 = scmp.eq.s32.totalorder %s17, 0
    %p107 = por %p105, %p106
    %s109 = sadd.s32 %s108, 1
    %p112 = scmp.eq.s32.totalorder %s11, 1
    %p113 = scmp.ne.s32.totalorder %s108, %s110
    %p114 = scmp.eq.s32.totalorder %s11, 0
    %p115 = por %p113, %p114
    %p116 = scmp.ne.s32.totalorder %s108, %s110
    %p117 = scmp.eq.s32.totalorder %s16, 1
    %p118 = por %p116, %p117
    %p119 = scmp.ne.s32.totalorder %s110, %s111
    %p120 = scmp.eq.s32.totalorder %s16, 0
    %p121 = por %p119, %p120
    %p122 = scmp.ne.s32.totalorder %s110, %s111
    %p123 = scmp.eq.s32.totalorder %s17, 1
    %p124 = por %p122, %p123
    %p126 = scmp.ne.s32.totalorder %s111, %s125
    %p127 = scmp.eq.s32.totalorder %s17, 0
    %p128 = por %p126, %p127
    %s129 = ssub.s32 %s11, %s18
    %p130 = scmp.eq.s32.totalorder %s129, 0
    %s132 = sadd.s32 %s131, 1
    %s133 = scalar_select %p130, %s131, %s132
    %p136 = pneg %p130
    %p137 = scmp.eq.s32.totalorder %s11, 1
    %p138 = por %p136, %p137
    %p139 = scmp.ne.s32.totalorder %s131, %s134
    %p140 = scmp.eq.s32.totalorder %s11, 0
    %p141 = por %p139, %p140
    %p142 = scmp.ne.s32.totalorder %s131, %s134
    %p143 = scmp.eq.s32.totalorder %s16, 1
    %p144 = por %p142, %p143
    %p145 = scmp.ne.s32.totalorder %s134, %s135
    %p146 = scmp.eq.s32.totalorder %s16, 0
    %p147 = por %p145, %p146
    %p148 = scmp.ne.s32.totalorder %s134, %s135
    %p149 = scmp.eq.s32.totalorder %s17, 1
    %p150 = por %p148, %p149
    %p152 = scmp.ne.s32.totalorder %s135, %s151
    %p153 = scmp.eq.s32.totalorder %s17, 0
    %p154 = por %p152, %p153
    %p155 = scmp.le.s32.totalorder 1, %s11
    %p156 = scmp.lt.s32.totalorder %s11, 3
    %p157 = pnand %p155, %p156
    %p158 = pneg %p157
    // Predicated region
    $region9: #{encoder_forward.8} parent=5 // pred_check
      _
    $region10: #{encoder_forward.8} parent=5 // pred_check_branch
      %160 = sbr.rel (%p157) target = $region12
    $region11: #{encoder_forward.8} parent=5 // pred_region
      %s161 = ssub.s32 %s11, 1
      // Predicated region
      $region13: #{encoder_forward.8} parent=11 // pred_check
        %p162 = pneg %p58
      $region14: #{encoder_forward.8} parent=11 // pred_check_branch
        %164 = sbr.rel (%p162) target = $region16
      $region15: #{encoder_forward.8} parent=11 // pred_region
        _
      $region16: #{encoder_forward.8} parent=11 // pred_fallthru
        _
      // Predicated region
      $region17: #{encoder_forward.8} parent=11 // pred_check
        %p165 = pneg %p79
      $region18: #{encoder_forward.8} parent=11 // pred_check_branch
        %167 = sbr.rel (%p165) target = $region20
      $region19: #{encoder_forward.8} parent=11 // pred_region
        _
      $region20: #{encoder_forward.8} parent=11 // pred_fallthru
        _
      // Predicated region
      $region21: #{encoder_forward.8} parent=11 // pred_check
        %p168 = pneg %p100
      $region22: #{encoder_forward.8} parent=11 // pred_check_branch
        %170 = sbr.rel (%p168) target = $region24
      $region23: #{encoder_forward.8} parent=11 // pred_region
        _
      $region24: #{encoder_forward.8} parent=11 // pred_fallthru
        _
      // Predicated region
      $region25: #{encoder_forward.8} parent=11 // pred_check
        %p171 = pneg %p121
      $region26: #{encoder_forward.8} parent=11 // pred_check_branch
        %173 = sbr.rel (%p171) target = $region28
      $region27: #{encoder_forward.8} parent=11 // pred_region
        _
      $region28: #{encoder_forward.8} parent=11 // pred_fallthru
        _
    $region12: #{encoder_forward.8} parent=5 // pred_fallthru
      _
    %p174 = scmp.lt.s32.totalorder %s11, 2
    // Predicated region
    $region29: #{encoder_forward.8} parent=5 // pred_check
      %p175 = pneg %p174
    $region30: #{encoder_forward.8} parent=5 // pred_check_branch
      %177 = sbr.rel (%p175) target = $region32
    $region31: #{encoder_forward.8} parent=5 // pred_region
      // Predicated region
      $region33: #{encoder_forward.8} parent=31 // pred_check
        %p178 = pneg %p31
      $region34: #{encoder_forward.8} parent=31 // pred_check_branch
        %180 = sbr.rel (%p178) target = $region36
      $region35: #{encoder_forward.8} parent=31 // pred_region
        %p181 = scmp.lt.s32.totalorder %s11, 1
        %s182 = scalar_select %p181, %s11, 1
        %s183 = smul.addr %s182, 8
        %s184 = smul.addr %s183, 8
        %s185 = scalar_lea.vmem %s0, %s184
      $region36: #{encoder_forward.8} parent=31 // pred_fallthru
        _
    $region32: #{encoder_forward.8} parent=5 // pred_fallthru
      _
    %p186 = scmp.le.s32.totalorder 1, %s11
    %p187 = scmp.lt.s32.totalorder %s11, 3
    %p188 = pnand %p186, %p187
    %p189 = pneg %p188
    // Predicated region
    $region37: #{encoder_forward.8} parent=5 // pred_check
      _
    $region38: #{encoder_forward.8} parent=5 // pred_check_branch
      %191 = sbr.rel (%p188) target = $region40
    $region39: #{encoder_forward.8} parent=5 // pred_region
      %s192 = ssub.s32 %s11, 1
      %p193 = scmp.lt.s32.totalorder %s16, 1
      %s194 = scalar_select %p193, %s16, 1
      %s195 = smul.addr %s194, 8
      %s196 = smul.addr %s195, 8
      %s197 = scalar_lea.vmem %s0, %s196
      %p198 = pneg %p37
      %p199 = pneg %p34
      %p200 = pneg %p58
      %p201 = pneg %p55
      %p202 = pneg %p79
      %p203 = pneg %p76
      %p204 = pneg %p100
      %p205 = pneg %p97
      %p206 = pneg %p121
      %p207 = pneg %p118
      %p208 = pneg %p147
      %p209 = pneg %p144
      %p210 = scmp.lt.s32.totalorder %s16, 1
      %s211 = scalar_select %p210, %s16, 1
      %s212 = smul.addr %s211, 2
      %s213 = smul.addr %s212, 8
      %s214 = scalar_lea.vmem %s5, %s213
      %p215 = scmp.lt.s32.totalorder %s16, 1
      %s216 = scalar_select %p215, %s16, 1
      %s217 = smul.addr %s216, 8
      %s218 = smul.addr %s217, 8
      %s219 = scalar_lea.vmem %s0, %s218
      %p220 = scmp.lt.s32.totalorder %s16, 1
      %s221 = scalar_select %p220, %s16, 1
      %s222 = smul.addr %s221, 2
      %s223 = smul.addr %s222, 8
      %s224 = scalar_lea.vmem %s5, %s223
      %v226 = vld [vmem:[%s219] sm:$0xff]
      %v227 = vld [vmem:[%s219 + $0x8] sm:$0xff]
      %v228 = vld [vmem:[%s219 + $0x10] sm:$0xff]
      %v229 = vld [vmem:[%s219 + $0x18] sm:$0xff]
      %v230 = vld [vmem:[%s219 + $0x20] sm:$0xff]
      %v231 = vld [vmem:[%s219 + $0x28] sm:$0xff]
      %v232 = vld [vmem:[%s219 + $0x30] sm:$0xff]
      %v233 = vld [vmem:[%s219 + $0x38] sm:$0xff]
      %v234 = vpack.c.bf16 %v230, %v226
      %v235 = vpack.c.bf16 %v231, %v227
      %v236 = vpack.c.bf16 %v232, %v228
      %v237 = vpack.c.bf16 %v233, %v229
      %v238 = vld [vmem:[%s1] sm:$0xf]
      %v239 = vld [vmem:[%s1 + $0x4] sm:$0xf]
      %v240 = vld [vmem:[%s1 + $0x8] sm:$0xf]
      %v241 = vld [vmem:[%s1 + $0xc] sm:$0xf]
      %v242 = vld [vmem:[%s1 + $0x10] sm:$0xf]
      %v243 = vld [vmem:[%s1 + $0x14] sm:$0xf]
      %v244 = vld [vmem:[%s1 + $0x18] sm:$0xf]
      %v245 = vld [vmem:[%s1 + $0x1c] sm:$0xf]
      %v246 = vld [vmem:[%s1 + $0x20] sm:$0xf]
      %v247 = vld [vmem:[%s1 + $0x24] sm:$0xf]
      %v248 = vld [vmem:[%s1 + $0x28] sm:$0xf]
      %v249 = vld [vmem:[%s1 + $0x2c] sm:$0xf]
      %v250 = vld [vmem:[%s1 + $0x30] sm:$0xf]
      %v251 = vld [vmem:[%s1 + $0x34] sm:$0xf]
      %v252 = vld [vmem:[%s1 + $0x38] sm:$0xf]
      %v253 = vld [vmem:[%s1 + $0x3c] sm:$0xf]
      %v254 = vld [vmem:[%s1 + $0x40] sm:$0xf]
      %v255 = vld [vmem:[%s1 + $0x44] sm:$0xf]
      %v256 = vld [vmem:[%s1 + $0x48] sm:$0xf]
      %v257 = vld [vmem:[%s1 + $0x4c] sm:$0xf]
      %v258 = vld [vmem:[%s1 + $0x50] sm:$0xf]
      %v259 = vld [vmem:[%s1 + $0x54] sm:$0xf]
      %v260 = vld [vmem:[%s1 + $0x58] sm:$0xf]
      %v261 = vld [vmem:[%s1 + $0x5c] sm:$0xf]
      %v262 = vld [vmem:[%s1 + $0x60] sm:$0xf]
      %v263 = vld [vmem:[%s1 + $0x64] sm:$0xf]
      %v264 = vld [vmem:[%s1 + $0x68] sm:$0xf]
      %v265 = vld [vmem:[%s1 + $0x6c] sm:$0xf]
      %v266 = vld [vmem:[%s1 + $0x70] sm:$0xf]
      %v267 = vld [vmem:[%s1 + $0x74] sm:$0xf]
      %v268 = vld [vmem:[%s1 + $0x78] sm:$0xf]
      %v269 = vld [vmem:[%s1 + $0x7c] sm:$0xf]
      %v270 = vld [vmem:[%s1 + $0x80] sm:$0xf]
      %v271 = vld [vmem:[%s1 + $0x84] sm:$0xf]
      %v272 = vld [vmem:[%s1 + $0x88] sm:$0xf]
      %v273 = vld [vmem:[%s1 + $0x8c] sm:$0xf]
      %v274 = vld [vmem:[%s1 + $0x90] sm:$0xf]
      %v275 = vld [vmem:[%s1 + $0x94] sm:$0xf]
      %v276 = vld [vmem:[%s1 + $0x98] sm:$0xf]
      %v277 = vld [vmem:[%s1 + $0x9c] sm:$0xf]
      %v278 = vld [vmem:[%s1 + $0xa0] sm:$0xf]
      %v279 = vld [vmem:[%s1 + $0xa4] sm:$0xf]
      %v280 = vld [vmem:[%s1 + $0xa8] sm:$0xf]
      %v281 = vld [vmem:[%s1 + $0xac] sm:$0xf]
      %v282 = vld [vmem:[%s1 + $0xb0] sm:$0xf]
      %v283 = vld [vmem:[%s1 + $0xb4] sm:$0xf]
      %v284 = vld [vmem:[%s1 + $0xb8] sm:$0xf]
      %v285 = vld [vmem:[%s1 + $0xbc] sm:$0xf]
      %v286 = vld [vmem:[%s1 + $0xc0] sm:$0xf]
      %v287 = vld [vmem:[%s1 + $0xc4] sm:$0xf]
      %v288 = vld [vmem:[%s1 + $0xc8] sm:$0xf]
      %v289 = vld [vmem:[%s1 + $0xcc] sm:$0xf]
      %v290 = vld [vmem:[%s1 + $0xd0] sm:$0xf]
      %v291 = vld [vmem:[%s1 + $0xd4] sm:$0xf]
      %v292 = vld [vmem:[%s1 + $0xd8] sm:$0xf]
      %v293 = vld [vmem:[%s1 + $0xdc] sm:$0xf]
      %v294 = vld [vmem:[%s1 + $0xe0] sm:$0xf]
      %v295 = vld [vmem:[%s1 + $0xe4] sm:$0xf]
      %v296 = vld [vmem:[%s1 + $0xe8] sm:$0xf]
      %v297 = vld [vmem:[%s1 + $0xec] sm:$0xf]
      %v298 = vld [vmem:[%s1 + $0xf0] sm:$0xf]
      %v299 = vld [vmem:[%s1 + $0xf4] sm:$0xf]
      %v300 = vld [vmem:[%s1 + $0xf8] sm:$0xf]
      %v301 = vld [vmem:[%s1 + $0xfc] sm:$0xf]
      %v302 = vld [vmem:[%s2] sm:$0x1]
      %v304 = vlaneseq
      %v305 = vshrl.u32 %v304, 7
      %v306 = vsub.s32 0, %v305
      %v307 = vrot.slane %v302, %v306
      %v373 = vunpack.c.l.b16 %v238
      %v374 = vunpack.c.l.b16 %v239
      %v375 = vunpack.c.l.b16 %v240
      %v376 = vunpack.c.l.b16 %v241
      %v377 = vunpack.c.l.b16 %v242
      %v378 = vunpack.c.l.b16 %v243
      %v379 = vunpack.c.l.b16 %v244
      %v380 = vunpack.c.l.b16 %v245
      %v381 = vunpack.c.l.b16 %v246
      %v382 = vunpack.c.l.b16 %v247
      %v383 = vunpack.c.l.b16 %v248
      %v384 = vunpack.c.l.b16 %v249
      %v385 = vunpack.c.l.b16 %v250
      %v386 = vunpack.c.l.b16 %v251
      %v387 = vunpack.c.l.b16 %v252
      %v388 = vunpack.c.l.b16 %v253
      %v389 = vunpack.c.l.b16 %v254
      %v390 = vunpack.c.l.b16 %v255
      %v391 = vunpack.c.l.b16 %v256
      %v392 = vunpack.c.l.b16 %v257
      %v393 = vunpack.c.l.b16 %v258
      %v394 = vunpack.c.l.b16 %v259
      %v395 = vunpack.c.l.b16 %v260
      %v396 = vunpack.c.l.b16 %v261
      %v397 = vunpack.c.l.b16 %v262
      %v398 = vunpack.c.l.b16 %v263
      %v399 = vunpack.c.l.b16 %v264
      %v400 = vunpack.c.l.b16 %v265
      %v401 = vunpack.c.l.b16 %v266
      %v402 = vunpack.c.l.b16 %v267
      %v403 = vunpack.c.l.b16 %v268
      %v404 = vunpack.c.l.b16 %v269
      %v405 = vunpack.c.l.b16 %v270
      %v406 = vunpack.c.l.b16 %v271
      %v407 = vunpack.c.l.b16 %v272
      %v408 = vunpack.c.l.b16 %v273
      %v409 = vunpack.c.l.b16 %v274
      %v410 = vunpack.c.l.b16 %v275
      %v411 = vunpack.c.l.b16 %v276
      %v412 = vunpack.c.l.b16 %v277
      %v413 = vunpack.c.l.b16 %v278
      %v414 = vunpack.c.l.b16 %v279
      %v415 = vunpack.c.l.b16 %v280
      %v416 = vunpack.c.l.b16 %v281
      %v417 = vunpack.c.l.b16 %v282
      %v418 = vunpack.c.l.b16 %v283
      %v419 = vunpack.c.l.b16 %v284
      %v420 = vunpack.c.l.b16 %v285
      %v421 = vunpack.c.l.b16 %v286
      %v422 = vunpack.c.l.b16 %v287
      %v423 = vunpack.c.l.b16 %v288
      %v424 = vunpack.c.l.b16 %v289
      %v425 = vunpack.c.l.b16 %v290
      %v426 = vunpack.c.l.b16 %v291
      %v427 = vunpack.c.l.b16 %v292
      %v428 = vunpack.c.l.b16 %v293
      %v429 = vunpack.c.l.b16 %v294
      %v430 = vunpack.c.l.b16 %v295
      %v431 = vunpack.c.l.b16 %v296
      %v432 = vunpack.c.l.b16 %v297
      %v433 = vunpack.c.l.b16 %v298
      %v434 = vunpack.c.l.b16 %v299
      %v435 = vunpack.c.l.b16 %v300
      %v436 = vunpack.c.l.b16 %v301
      %v437 = vpack.c.b16 %v374, %v373
      %v438 = vpack.c.b16 %v376, %v375
      %v439 = vpack.c.b16 %v378, %v377
      %v440 = vpack.c.b16 %v380, %v379
      %v441 = vpack.c.b16 %v382, %v381
      %v442 = vpack.c.b16 %v384, %v383
      %v443 = vpack.c.b16 %v386, %v385
      %v444 = vpack.c.b16 %v388, %v387
      %v445 = vpack.c.b16 %v390, %v389
      %v446 = vpack.c.b16 %v392, %v391
      %v447 = vpack.c.b16 %v394, %v393
      %v448 = vpack.c.b16 %v396, %v395
      %v449 = vpack.c.b16 %v398, %v397
      %v450 = vpack.c.b16 %v400, %v399
      %v451 = vpack.c.b16 %v402, %v401
      %v452 = vpack.c.b16 %v404, %v403
      %v453 = vpack.c.b16 %v406, %v405
      %v454 = vpack.c.b16 %v408, %v407
      %v455 = vpack.c.b16 %v410, %v409
      %v456 = vpack.c.b16 %v412, %v411
      %v457 = vpack.c.b16 %v414, %v413
      %v458 = vpack.c.b16 %v416, %v415
      %v459 = vpack.c.b16 %v418, %v417
      %v460 = vpack.c.b16 %v420, %v419
      %v461 = vpack.c.b16 %v422, %v421
      %v462 = vpack.c.b16 %v424, %v423
      %v463 = vpack.c.b16 %v426, %v425
      %v464 = vpack.c.b16 %v428, %v427
      %v465 = vpack.c.b16 %v430, %v429
      %v466 = vpack.c.b16 %v432, %v431
      %v467 = vpack.c.b16 %v434, %v433
      %v468 = vpack.c.b16 %v436, %v435
      %501 = vmatprep.subr.bf16.mxu0 0
      %502 = vmatpush1.bf16.msra.mxu0 %v437
      %503 = vmatprep.subr.bf16.mxu0 0
      %504 = vmatpush1.bf16.msra.mxu0 %v438
      %505 = vmatprep.subr.bf16.mxu0 0
      %506 = vmatpush1.bf16.msra.mxu0 %v439
      %507 = vmatprep.subr.bf16.mxu0 0
      %508 = vmatpush1.bf16.msra.mxu0 %v440
      %509 = vmatprep.subr.bf16.mxu0 0
      %510 = vmatpush1.bf16.msra.mxu0 %v441
      %511 = vmatprep.subr.bf16.mxu0 0
      %512 = vmatpush1.bf16.msra.mxu0 %v442
      %513 = vmatprep.subr.bf16.mxu0 0
      %514 = vmatpush1.bf16.msra.mxu0 %v443
      %515 = vmatprep.subr.bf16.mxu0 0
      %516 = vmatpush1.bf16.msra.mxu0 %v444
      %517 = vmatprep.subr.bf16.mxu0 0
      %518 = vmatpush1.bf16.msra.mxu0 %v445
      %519 = vmatprep.subr.bf16.mxu0 0
      %520 = vmatpush1.bf16.msra.mxu0 %v446
      %521 = vmatprep.subr.bf16.mxu0 0
      %522 = vmatpush1.bf16.msra.mxu0 %v447
      %523 = vmatprep.subr.bf16.mxu0 0
      %524 = vmatpush1.bf16.msra.mxu0 %v448
      %525 = vmatprep.subr.bf16.mxu0 0
      %526 = vmatpush1.bf16.msra.mxu0 %v449
      %527 = vmatprep.subr.bf16.mxu0 0
      %528 = vmatpush1.bf16.msra.mxu0 %v450
      %529 = vmatprep.subr.bf16.mxu0 0
      %530 = vmatpush1.bf16.msra.mxu0 %v451
      %531 = vmatprep.subr.bf16.mxu0 0
      %532 = vmatpush1.bf16.msra.mxu0 %v452
      %533 = vmatprep.mubr.bf16.mxu0 %v235
      %534 = vmatmul.mubr.bf16.gmra.mrb[0].mxu0 %v234
      %v535 = vpop.f32.mrb[0].mxu0
      %v536 = vadd.f32 %v307, %v535
      %v537 = vpop.f32.mrb[0].mxu0
      %v538 = vpop.f32.mrb[0].mxu0
      %v539 = vadd.f32 %v307, %v538
      %v540 = vpop.f32.mrb[0].mxu0
      %541 = vdwg.mxu0
      %542 = vmatprep.subr.bf16.mxu0 0
      %543 = vmatpush1.bf16.msra.mxu0 %v453
      %544 = vmatprep.subr.bf16.mxu0 0
      %545 = vmatpush1.bf16.msra.mxu0 %v454
      %546 = vmatprep.subr.bf16.mxu0 0
      %547 = vmatpush1.bf16.msra.mxu0 %v455
      %548 = vmatprep.subr.bf16.mxu0 0
      %549 = vmatpush1.bf16.msra.mxu0 %v456
      %550 = vmatprep.subr.bf16.mxu0 0
      %551 = vmatpush1.bf16.msra.mxu0 %v457
      %552 = vmatprep.subr.bf16.mxu0 0
      %553 = vmatpush1.bf16.msra.mxu0 %v458
      %554 = vmatprep.subr.bf16.mxu0 0
      %555 = vmatpush1.bf16.msra.mxu0 %v459
      %556 = vmatprep.subr.bf16.mxu0 0
      %557 = vmatpush1.bf16.msra.mxu0 %v460
      %558 = vmatprep.subr.bf16.mxu0 0
      %559 = vmatpush1.bf16.msra.mxu0 %v461
      %560 = vmatprep.subr.bf16.mxu0 0
      %561 = vmatpush1.bf16.msra.mxu0 %v462
      %562 = vmatprep.subr.bf16.mxu0 0
      %563 = vmatpush1.bf16.msra.mxu0 %v463
      %564 = vmatprep.subr.bf16.mxu0 0
      %565 = vmatpush1.bf16.msra.mxu0 %v464
      %566 = vmatprep.subr.bf16.mxu0 0
      %567 = vmatpush1.bf16.msra.mxu0 %v465
      %568 = vmatprep.subr.bf16.mxu0 0
      %569 = vmatpush1.bf16.msra.mxu0 %v466
      %570 = vmatprep.subr.bf16.mxu0 0
      %571 = vmatpush1.bf16.msra.mxu0 %v467
      %572 = vmatprep.subr.bf16.mxu0 0
      %573 = vmatpush1.bf16.msra.mxu0 %v468
      %574 = vmatprep.mubr.bf16.mxu0 %v237
      %575 = vmatmul.mubr.bf16.gmra.mrb[0].mxu0 %v236
      %v576 = vpop.f32.mrb[0].mxu0
      %v577 = vadd.f32 %v536, %v576
      %v578 = vpop.f32.mrb[0].mxu0
      %v579 = vpop.f32.mrb[0].mxu0
      %v580 = vadd.f32 %v539, %v579
      %v581 = vpop.f32.mrb[0].mxu0
      %582 = vdwg.mxu0
      %v583 = vld [vmem:[%s3] sm:$0x1]
      %v584 = vld [vmem:[%s4] sm:$0x1]
      %vm585 = vcmask 261120
      %v586 = vsel %vm585, %v577, 0.0
      %v587 = vsel %vm585, %v580, 0.0
      %v588 = vadd.f32 %v586, %v587
      %v589 = vrot.slane %v588, 4
      %v590 = vadd.f32 %v588, %v589
      %v591 = vrot.slane %v590, 2
      %v592 = vadd.f32 %v590, %v591
      %v593 = vrot.slane %v592, 1
      %v594 = vadd.f32 %v592, %v593
      %v595 = vmul.f32 %v577, %v577
      %v596 = vmul.f32 %v580, %v580
      %v597 = vsel %vm585, %v595, 0.0
      %v598 = vsel %vm585, %v596, 0.0
      %v599 = vadd.f32 %v597, %v598
      %v600 = vrot.slane %v599, 4
      %v601 = vadd.f32 %v599, %v600
      %v602 = vrot.slane %v601, 2
      %v603 = vadd.f32 %v601, %v602
      %v604 = vrot.slane %v603, 1
      %v605 = vadd.f32 %v603, %v604
      %v606 = vsel %vm585, %v594, 0.0
      %607 = vadd.xlane.f32.xlu0 %v606
      %v608 = vpop.xlane.xlu0 %607
      %v609 = vrcp.pop 512.0
      %v610 = vmul.f32 %v608, %v609
      %v611 = vsel %vm585, %v605, 0.0
      %612 = vadd.xlane.f32.xlu0 %v611
      %v613 = vpop.xlane.xlu0 %612
      %v614 = vmul.f32 %v613, %v609
      %v615 = vmul.f32 %v610, %v610
      %v616 = vsub.f32 %v614, %v615
      %v617 = vmax.f32 %v616, 0.0
      %v618 = vsub.f32 %v577, %v610
      %v619 = vsub.f32 %v580, %v610
      %v620 = vadd.f32 %v617, 1e-05
      %v621 = vrsqrt.pop %v620
      %v622 = vmul.f32 %v618, %v621
      %v623 = vmul.f32 %v619, %v621
      %v625 = vlaneseq
      %v626 = vshrl.u32 %v625, 7
      %v627 = vsub.s32 0, %v626
      %v628 = vrot.slane %v583, %v627
      %v630 = vmul.f32 %v622, %v628
      %v631 = vmul.f32 %v623, %v628
      %v633 = vlaneseq
      %v634 = vshrl.u32 %v633, 7
      %v635 = vsub.s32 0, %v634
      %v636 = vrot.slane %v584, %v635
      %v638 = vadd.f32 %v630, %v636
      %v639 = vadd.f32 %v631, %v636
      %640 = vst.msk [vmem:[%s224] sm:$0xff] %vm585, %v638
      %641 = vst.msk [vmem:[%s224 + $0x8] sm:$0xff] %vm585, %v639
      %p642 = scmp.lt.s32.totalorder %s16, 1
      %s643 = scalar_select %p642, %s16, 1
      %s644 = smul.addr %s643, 2
      %s645 = smul.addr %s644, 8
      %s646 = scalar_lea.vmem %s5, %s645
      // Predicated region
      $region41: #{encoder_forward.8} parent=39 // pred_check
        %p647 = pneg %p144
      $region42: #{encoder_forward.8} parent=39 // pred_check_branch
        %649 = sbr.rel (%p647) target = $region44
      $region43: #{encoder_forward.8} parent=39 // pred_region
        _
      $region44: #{encoder_forward.8} parent=39 // pred_fallthru
        _
    $region40: #{encoder_forward.8} parent=5 // pred_fallthru
      _
    %p650 = scmp.le.s32.totalorder 2, %s11
    // Predicated region
    $region45: #{encoder_forward.8} parent=5 // pred_check
      %p651 = pneg %p650
    $region46: #{encoder_forward.8} parent=5 // pred_check_branch
      %653 = sbr.rel (%p651) target = $region48
    $region47: #{encoder_forward.8} parent=5 // pred_region
      %s654 = ssub.s32 %s11, 2
      // Predicated region
      $region49: #{encoder_forward.8} parent=47 // pred_check
        %p655 = pneg %p150
      $region50: #{encoder_forward.8} parent=47 // pred_check_branch
        %657 = sbr.rel (%p655) target = $region52
      $region51: #{encoder_forward.8} parent=47 // pred_region
        %p658 = scmp.lt.s32.totalorder %s17, 1
        %s659 = scalar_select %p658, %s17, 1
        %s660 = smul.addr %s659, 2
        %s661 = smul.addr %s660, 8
        %s662 = scalar_lea.vmem %s5, %s661
      $region52: #{encoder_forward.8} parent=47 // pred_fallthru
        _
    $region48: #{encoder_forward.8} parent=5 // pred_fallthru
      _
  $region6: #{encoder_forward.8} parent=0 // loop_footer
    %s15 = sadd.s32 1, %s11
  $region7: #{encoder_forward.8} parent=0 // loop_footer_branch
    %10 = sbr.rel target = $region3
  $region8: #{encoder_forward.8} parent=0 // loop_exit
    _

// kernel: tile.13
$region0: #{tile.13}
  #allocation0 [shape = 's32[1]{0}', space=sflag, size = 0x4, scoped, tag = 'scoped memory for tile.13']
  %s0 = inlined_call_operand.vmem [shape: f32[32], index: 0, kind: input, shape index: {}]
  %s1 = inlined_call_operand.vmem [shape: f32[4,32], index: 1, kind: output, shape index: {}]
  // Predicated region
  $region2: #{tile.13} parent=0 // pred_check
    _
  $region3: #{tile.13} parent=0 // pred_check_branch
    %3 = sbr.rel (0) target = $region5
  $region4: #{tile.13} parent=0 // pred_region
    _
  $region5: #{tile.13} parent=0 // pred_fallthru
    _
  %v4 = vld [vmem:[%s0] ss:$0 sm:$0xff]
  %5 = vst [vmem:[%s1] sm:$0xf] %v4

// kernel: tile.14
$region0: #{tile.14}
  %s0 = inlined_call_operand.vmem [shape: f32[4,32], index: 0, kind: input, shape index: {}]
  %s1 = inlined_call_operand.vmem [shape: f32[1,128], index: 1, kind: output, shape index: {}]
  $region1: #{tile.14} parent=0
    #allocation0 [shape = 'u8[4096]{0}', space=vmem, size = 0x1000, scoped, tag = 'scoped mem for output reshape']
    #allocation1 [shape = 'u8[4096]{0}', space=vmem, size = 0x1000, scoped, tag = 'scoped mem for input reshape']
    %s3 = sshllo.u32 0, 4
    %v4 = vld [vmem:[%s0] sm:%s3]
    %5 = vst [vmem:[#allocation1] sm:%s3] %v4
    %v6 = vld [vmem:[#allocation1] sm:$0x1]
    %vm7 = vcmask 261120
    %8 = vst.msk [vmem:[#allocation0] sm:$0x1] %vm7, %v6
    %s9 = scalar_lea.vmem [#allocation1], 3
    %v10 = vld [vmem:[%s9] sm:$0x1]
    %11 = vrot.lane.b32.xlu0 %v10, 96
    %v12 = vpop.permute.xlu0 %11
    %vm13 = vcmask 1048320
    %14 = vst.msk [vmem:[#allocation0] sm:$0x1] %vm13, %v12
    %s15 = scalar_lea.vmem [#allocation1], 2
    %v16 = vld [vmem:[%s15] sm:$0x1]
    %17 = vrot.lane.b32.xlu0 %v16, 64
    %v18 = vpop.permute.xlu0 %17
    %vm19 = vcmask 785920
    %20 = vst.msk [vmem:[#allocation0] sm:$0x1] %vm19, %v18
    %s21 = scalar_lea.vmem [#allocation1], 1
    %v22 = vld [vmem:[%s21] sm:$0x1]
    %23 = vrot.lane.b32.xlu0 %v22, 32
    %v24 = vpop.permute.xlu0 %23
    %vm25 = vcmask 523520
    %26 = vst.msk [vmem:[#allocation0] sm:$0x1] %vm25, %v24
    %s28 = sshllo.u32 0, 1
    %v30 = vld [vmem:[#allocation0] sm:%s28]
    %s31 = sshllo.u32 0, 1
    %32 = vst [vmem:[%s1] sm:%s31] %v30

// kernel: encoder_forward.9
$region0: #{encoder_forward.9}
  #allocation0 [shape = 'u32[]', space=smem, size = 0x4, offset = 0x4, fixed_abs, tag = 'smem constant byte address 0x4 - core index']
  #allocation1 [shape = 'u32[144,128]{1,0:T(1,128)}', space=vmem, size = 0x12000, scoped, tag = 'internal scratch']
  #allocation2 [shape = 'f32[26,8]{1,0:T(8,128)}', space=vmem, size = 0x4000, scoped, tag = 'scratch operand']
  %s0 = inlined_call_operand.vmem [shape: f32[2,16,32], index: 0, kind: input, shape index: {}, may-alias: {0,10}]
  %s1 = inlined_call_operand.vmem [shape: bf16[32,8], index: 1, kind: input, shape index: {}]
  %s2 = inlined_call_operand.vmem [shape: f32[1,8], index: 2, kind: input, shape index: {}]
  %s3 = inlined_call_operand.vmem [shape: bf16[9,8,8], index: 3, kind: input, shape index: {}]
  %s4 = inlined_call_operand.vmem [shape: f32[1,8], index: 4, kind: input, shape index: {}]
  %s5 = inlined_call_operand.vmem [shape: f32[1,8], index: 5, kind: input, shape index: {}]
  %s6 = inlined_call_operand.vmem [shape: f32[1,8], index: 6, kind: input, shape index: {}]
  %s7 = inlined_call_operand.vmem [shape: bf16[8,32], index: 7, kind: input, shape index: {}]
  %s8 = inlined_call_operand.vmem [shape: f32[1,32], index: 8, kind: input, shape index: {}]
  %s9 = inlined_call_operand.vmem [shape: f32[1,32], index: 9, kind: input, shape index: {}]
  %s10 = inlined_call_operand.vmem [shape: f32[2,16,32], index: 10, kind: output, shape index: {}, may-alias: {0,10}]
  %s11 = sld [smem:[#allocation0]]
  $region73: #{encoder_forward.9} parent=0
    _
  %s13 = ssub.s32 1, %s11
  %s14 = scalar_select 0, %s13, %s11
  loop: start=0, step=1, limit=4
  $region2: #{encoder_forward.9} parent=0 // loop_pre_header
    _
  $region3: #{encoder_forward.9} parent=0 // loop_header
    %s16 = sphi 0, %s20
    %p17 = scmp.ge.s32.totalorder %s16, 4
    %s26 = sphi 0, %s28
    %s29 = sphi 0, %s26
    %s30 = sphi 0, %s29
    %s46 = sphi 0, %s30
    %s50 = sphi 0, %s50
    %s52 = sphi 0, %s50
    %s53 = sphi 0, %s52
    %s67 = sphi 0, %s53
    %s71 = sphi 0, %s71
    %s73 = sphi 0, %s71
    %s74 = sphi 0, %s73
    %s88 = sphi 0, %s74
    %s92 = sphi 0, %s92
    %s94 = sphi 0, %s92
    %s95 = sphi 0, %s94
    %s109 = sphi 0, %s95
    %s113 = sphi 0, %s113
    %s115 = sphi 0, %s113
    %s116 = sphi 0, %s115
    %s130 = sphi 0, %s116
    %s134 = sphi 0, %s134
    %s136 = sphi 0, %s134
    %s137 = sphi 0, %s136
    %s151 = sphi 0, %s137
    %s155 = sphi 0, %s155
    %s157 = sphi 0, %s155
    %s158 = sphi 0, %s157
    %s172 = sphi 0, %s158
    %s176 = sphi 0, %s176
    %s178 = sphi 0, %s176
    %s179 = sphi 0, %s178
    %s193 = sphi 0, %s179
    %s197 = sphi 0, %s197
    %s199 = sphi 0, %s197
    %s200 = sphi 0, %s199
    %s214 = sphi 0, %s200
    %s218 = sphi 0, %s218
    %s220 = sphi 0, %s218
    %s221 = sphi 0, %s220
    %s235 = sphi 0, %s221
    %s241 = sphi 0, %s243
    %s244 = sphi 0, %s241
    %s245 = sphi 0, %s244
    %s261 = sphi 0, %s245
  $region4: #{encoder_forward.9} parent=0 // loop_header_branch
    %19 = sbr.rel (%p17) target = $region8
  $region5: #{encoder_forward.9} parent=0 // loop_body
    %s21 = ssub.s32 %s16, 1
    %s22 = ssub.s32 %s16, 2
    %s23 = sadd.s32 %s16, 1
    %s24 = ssub.s32 %s16, %s23
    %p25 = scmp.eq.s32.totalorder %s24, 0
    %s27 = sadd.s32 %s26, 1
    %s28 = scalar_select %p25, %s26, %s27
    %p31 = pneg %p25
    %p32 = scmp.eq.s32.totalorder %s16, 1
    %p33 = por %p31, %p32
    %p34 = scmp.ne.s32.totalorder %s26, %s29
    %p35 = scmp.eq.s32.totalorder %s16, 0
    %p36 = por %p34, %p35
    %p37 = scmp.ne.s32.totalorder %s26, %s29
    %p38 = scmp.eq.s32.totalorder %s21, 1
    %p39 = por %p37, %p38
    %p40 = scmp.ne.s32.totalorder %s29, %s30
    %p41 = scmp.eq.s32.totalorder %s21, 0
    %p42 = por %p40, %p41
    %p43 = scmp.ne.s32.totalorder %s29, %s30
    %p44 = scmp.eq.s32.totalorder %s22, 1
    %p45 = por %p43, %p44
    %p47 = scmp.ne.s32.totalorder %s30, %s46
    %p48 = scmp.eq.s32.totalorder %s22, 0
    %p49 = por %p47, %p48
    %s51 = sadd.s32 %s50, 1
    %p54 = scmp.eq.s32.totalorder %s16, 1
    %p55 = scmp.ne.s32.totalorder %s50, %s52
    %p56 = scmp.eq.s32.totalorder %s16, 0
    %p57 = por %p55, %p56
    %p58 = scmp.ne.s32.totalorder %s50, %s52
    %p59 = scmp.eq.s32.totalorder %s21, 1
    %p60 = por %p58, %p59
    %p61 = scmp.ne.s32.totalorder %s52, %s53
    %p62 = scmp.eq.s32.totalorder %s21, 0
    %p63 = por %p61, %p62
    %p64 = scmp.ne.s32.totalorder %s52, %s53
    %p65 = scmp.eq.s32.totalorder %s22, 1
    %p66 = por %p64, %p65
    %p68 = scmp.ne.s32.totalorder %s53, %s67
    %p69 = scmp.eq.s32.totalorder %s22, 0
    %p70 = por %p68, %p69
    %s72 = sadd.s32 %s71, 1
    %p75 = scmp.eq.s32.totalorder %s16, 1
    %p76 = scmp.ne.s32.totalorder %s71, %s73
    %p77 = scmp.eq.s32.totalorder %s16, 0
    %p78 = por %p76, %p77
    %p79 = scmp.ne.s32.totalorder %s71, %s73
    %p80 = scmp.eq.s32.totalorder %s21, 1
    %p81 = por %p79, %p80
    %p82 = scmp.ne.s32.totalorder %s73, %s74
    %p83 = scmp.eq.s32.totalorder %s21, 0
    %p84 = por %p82, %p83
    %p85 = scmp.ne.s32.totalorder %s73, %s74
    %p86 = scmp.eq.s32.totalorder %s22, 1
    %p87 = por %p85, %p86
    %p89 = scmp.ne.s32.totalorder %s74, %s88
    %p90 = scmp.eq.s32.totalorder %s22, 0
    %p91 = por %p89, %p90
    %s93 = sadd.s32 %s92, 1
    %p96 = scmp.eq.s32.totalorder %s16, 1
    %p97 = scmp.ne.s32.totalorder %s92, %s94
    %p98 = scmp.eq.s32.totalorder %s16, 0
    %p99 = por %p97, %p98
    %p100 = scmp.ne.s32.totalorder %s92, %s94
    %p101 = scmp.eq.s32.totalorder %s21, 1
    %p102 = por %p100, %p101
    %p103 = scmp.ne.s32.totalorder %s94, %s95
    %p104 = scmp.eq.s32.totalorder %s21, 0
    %p105 = por %p103, %p104
    %p106 = scmp.ne.s32.totalorder %s94, %s95
    %p107 = scmp.eq.s32.totalorder %s22, 1
    %p108 = por %p106, %p107
    %p110 = scmp.ne.s32.totalorder %s95, %s109
    %p111 = scmp.eq.s32.totalorder %s22, 0
    %p112 = por %p110, %p111
    %s114 = sadd.s32 %s113, 1
    %p117 = scmp.eq.s32.totalorder %s16, 1
    %p118 = scmp.ne.s32.totalorder %s113, %s115
    %p119 = scmp.eq.s32.totalorder %s16, 0
    %p120 = por %p118, %p119
    %p121 = scmp.ne.s32.totalorder %s113, %s115
    %p122 = scmp.eq.s32.totalorder %s21, 1
    %p123 = por %p121, %p122
    %p124 = scmp.ne.s32.totalorder %s115, %s116
    %p125 = scmp.eq.s32.totalorder %s21, 0
    %p126 = por %p124, %p125
    %p127 = scmp.ne.s32.totalorder %s115, %s116
    %p128 = scmp.eq.s32.totalorder %s22, 1
    %p129 = por %p127, %p128
    %p131 = scmp.ne.s32.totalorder %s116, %s130
    %p132 = scmp.eq.s32.totalorder %s22, 0
    %p133 = por %p131, %p132
    %s135 = sadd.s32 %s134, 1
    %p138 = scmp.eq.s32.totalorder %s16, 1
    %p139 = scmp.ne.s32.totalorder %s134, %s136
    %p140 = scmp.eq.s32.totalorder %s16, 0
    %p141 = por %p139, %p140
    %p142 = scmp.ne.s32.totalorder %s134, %s136
    %p143 = scmp.eq.s32.totalorder %s21, 1
    %p144 = por %p142, %p143
    %p145 = scmp.ne.s32.totalorder %s136, %s137
    %p146 = scmp.eq.s32.totalorder %s21, 0
    %p147 = por %p145, %p146
    %p148 = scmp.ne.s32.totalorder %s136, %s137
    %p149 = scmp.eq.s32.totalorder %s22, 1
    %p150 = por %p148, %p149
    %p152 = scmp.ne.s32.totalorder %s137, %s151
    %p153 = scmp.eq.s32.totalorder %s22, 0
    %p154 = por %p152, %p153
    %s156 = sadd.s32 %s155, 1
    %p159 = scmp.eq.s32.totalorder %s16, 1
    %p160 = scmp.ne.s32.totalorder %s155, %s157
    %p161 = scmp.eq.s32.totalorder %s16, 0
    %p162 = por %p160, %p161
    %p163 = scmp.ne.s32.totalorder %s155, %s157
    %p164 = scmp.eq.s32.totalorder %s21, 1
    %p165 = por %p163, %p164
    %p166 = scmp.ne.s32.totalorder %s157, %s158
    %p167 = scmp.eq.s32.totalorder %s21, 0
    %p168 = por %p166, %p167
    %p169 = scmp.ne.s32.totalorder %s157, %s158
    %p170 = scmp.eq.s32.totalorder %s22, 1
    %p171 = por %p169, %p170
    %p173 = scmp.ne.s32.totalorder %s158, %s172
    %p174 = scmp.eq.s32.totalorder %s22, 0
    %p175 = por %p173, %p174
    %s177 = sadd.s32 %s176, 1
    %p180 = scmp.eq.s32.totalorder %s16, 1
    %p181 = scmp.ne.s32.totalorder %s176, %s178
    %p182 = scmp.eq.s32.totalorder %s16, 0
    %p183 = por %p181, %p182
    %p184 = scmp.ne.s32.totalorder %s176, %s178
    %p185 = scmp.eq.s32.totalorder %s21, 1
    %p186 = por %p184, %p185
    %p187 = scmp.ne.s32.totalorder %s178, %s179
    %p188 = scmp.eq.s32.totalorder %s21, 0
    %p189 = por %p187, %p188
    %p190 = scmp.ne.s32.totalorder %s178, %s179
    %p191 = scmp.eq.s32.totalorder %s22, 1
    %p192 = por %p190, %p191
    %p194 = scmp.ne.s32.totalorder %s179, %s193
    %p195 = scmp.eq.s32.totalorder %s22, 0
    %p196 = por %p194, %p195
    %s198 = sadd.s32 %s197, 1
    %p201 = scmp.eq.s32.totalorder %s16, 1
    %p202 = scmp.ne.s32.totalorder %s197, %s199
    %p203 = scmp.eq.s32.totalorder %s16, 0
    %p204 = por %p202, %p203
    %p205 = scmp.ne.s32.totalorder %s197, %s199
    %p206 = scmp.eq.s32.totalorder %s21, 1
    %p207 = por %p205, %p206
    %p208 = scmp.ne.s32.totalorder %s199, %s200
    %p209 = scmp.eq.s32.totalorder %s21, 0
    %p210 = por %p208, %p209
    %p211 = scmp.ne.s32.totalorder %s199, %s200
    %p212 = scmp.eq.s32.totalorder %s22, 1
    %p213 = por %p211, %p212
    %p215 = scmp.ne.s32.totalorder %s200, %s214
    %p216 = scmp.eq.s32.totalorder %s22, 0
    %p217 = por %p215, %p216
    %s219 = sadd.s32 %s218, 1
    %p222 = scmp.eq.s32.totalorder %s16, 1
    %p223 = scmp.ne.s32.totalorder %s218, %s220
    %p224 = scmp.eq.s32.totalorder %s16, 0
    %p225 = por %p223, %p224
    %p226 = scmp.ne.s32.totalorder %s218, %s220
    %p227 = scmp.eq.s32.totalorder %s21, 1
    %p228 = por %p226, %p227
    %p229 = scmp.ne.s32.totalorder %s220, %s221
    %p230 = scmp.eq.s32.totalorder %s21, 0
    %p231 = por %p229, %p230
    %p232 = scmp.ne.s32.totalorder %s220, %s221
    %p233 = scmp.eq.s32.totalorder %s22, 1
    %p234 = por %p232, %p233
    %p236 = scmp.ne.s32.totalorder %s221, %s235
    %p237 = scmp.eq.s32.totalorder %s22, 0
    %p238 = por %p236, %p237
    %s239 = ssub.s32 %s16, %s23
    %p240 = scmp.eq.s32.totalorder %s239, 0
    %s242 = sadd.s32 %s241, 1
    %s243 = scalar_select %p240, %s241, %s242
    %p246 = pneg %p240
    %p247 = scmp.eq.s32.totalorder %s16, 1
    %p248 = por %p246, %p247
    %p249 = scmp.ne.s32.totalorder %s241, %s244
    %p250 = scmp.eq.s32.totalorder %s16, 0
    %p251 = por %p249, %p250
    %p252 = scmp.ne.s32.totalorder %s241, %s244
    %p253 = scmp.eq.s32.totalorder %s21, 1
    %p254 = por %p252, %p253
    %p255 = scmp.ne.s32.totalorder %s244, %s245
    %p256 = scmp.eq.s32.totalorder %s21, 0
    %p257 = por %p255, %p256
    %p258 = scmp.ne.s32.totalorder %s244, %s245
    %p259 = scmp.eq.s32.totalorder %s22, 1
    %p260 = por %p258, %p259
    %p262 = scmp.ne.s32.totalorder %s245, %s261
    %p263 = scmp.eq.s32.totalorder %s22, 0
    %p264 = por %p262, %p263
    %p265 = scmp.le.s32.totalorder 1, %s16
    %p266 = scmp.lt.s32.totalorder %s16, 3
    %p267 = pnand %p265, %p266
    %p268 = pneg %p267
    // Predicated region
    $region9: #{encoder_forward.9} parent=5 // pred_check
      _
    $region10: #{encoder_forward.9} parent=5 // pred_check_branch
      %270 = sbr.rel (%p267) target = $region12
    $region11: #{encoder_forward.9} parent=5 // pred_region
      %s271 = ssub.s32 %s16, 1
      // Predicated region
      $region13: #{encoder_forward.9} parent=11 // pred_check
        %p272 = pneg %p63
      $region14: #{encoder_forward.9} parent=11 // pred_check_branch
        %274 = sbr.rel (%p272) target = $region16
      $region15: #{encoder_forward.9} parent=11 // pred_region
        _
      $region16: #{encoder_forward.9} parent=11 // pred_fallthru
        _
      // Predicated region
      $region17: #{encoder_forward.9} parent=11 // pred_check
        %p275 = pneg %p84
      $region18: #{encoder_forward.9} parent=11 // pred_check_branch
        %277 = sbr.rel (%p275) target = $region20
      $region19: #{encoder_forward.9} parent=11 // pred_region
        _
      $region20: #{encoder_forward.9} parent=11 // pred_fallthru
        _
      // Predicated region
      $region21: #{encoder_forward.9} parent=11 // pred_check
        %p278 = pneg %p105
      $region22: #{encoder_forward.9} parent=11 // pred_check_branch
        %280 = sbr.rel (%p278) target = $region24
      $region23: #{encoder_forward.9} parent=11 // pred_region
        _
      $region24: #{encoder_forward.9} parent=11 // pred_fallthru
        _
      // Predicated region
      $region25: #{encoder_forward.9} parent=11 // pred_check
        %p281 = pneg %p126
      $region26: #{encoder_forward.9} parent=11 // pred_check_branch
        %283 = sbr.rel (%p281) target = $region28
      $region27: #{encoder_forward.9} parent=11 // pred_region
        _
      $region28: #{encoder_forward.9} parent=11 // pred_fallthru
        _
      // Predicated region
      $region29: #{encoder_forward.9} parent=11 // pred_check
        %p284 = pneg %p147
      $region30: #{encoder_forward.9} parent=11 // pred_check_branch
        %286 = sbr.rel (%p284) target = $region32
      $region31: #{encoder_forward.9} parent=11 // pred_region
        _
      $region32: #{encoder_forward.9} parent=11 // pred_fallthru
        _
      // Predicated region
      $region33: #{encoder_forward.9} parent=11 // pred_check
        %p287 = pneg %p168
      $region34: #{encoder_forward.9} parent=11 // pred_check_branch
        %289 = sbr.rel (%p287) target = $region36
      $region35: #{encoder_forward.9} parent=11 // pred_region
        _
      $region36: #{encoder_forward.9} parent=11 // pred_fallthru
        _
      // Predicated region
      $region37: #{encoder_forward.9} parent=11 // pred_check
        %p290 = pneg %p189
      $region38: #{encoder_forward.9} parent=11 // pred_check_branch
        %292 = sbr.rel (%p290) target = $region40
      $region39: #{encoder_forward.9} parent=11 // pred_region
        _
      $region40: #{encoder_forward.9} parent=11 // pred_fallthru
        _
      // Predicated region
      $region41: #{encoder_forward.9} parent=11 // pred_check
        %p293 = pneg %p210
      $region42: #{encoder_forward.9} parent=11 // pred_check_branch
        %295 = sbr.rel (%p293) target = $region44
      $region43: #{encoder_forward.9} parent=11 // pred_region
        _
      $region44: #{encoder_forward.9} parent=11 // pred_fallthru
        _
      // Predicated region
      $region45: #{encoder_forward.9} parent=11 // pred_check
        %p296 = pneg %p231
      $region46: #{encoder_forward.9} parent=11 // pred_check_branch
        %298 = sbr.rel (%p296) target = $region48
      $region47: #{encoder_forward.9} parent=11 // pred_region
        _
      $region48: #{encoder_forward.9} parent=11 // pred_fallthru
        _
    $region12: #{encoder_forward.9} parent=5 // pred_fallthru
      _
    %p299 = scmp.lt.s32.totalorder %s16, 2
    // Predicated region
    $region49: #{encoder_forward.9} parent=5 // pred_check
      %p300 = pneg %p299
    $region50: #{encoder_forward.9} parent=5 // pred_check_branch
      %302 = sbr.rel (%p300) target = $region52
    $region51: #{encoder_forward.9} parent=5 // pred_region
      // Predicated region
      $region53: #{encoder_forward.9} parent=51 // pred_check
        %p303 = pneg %p36
      $region54: #{encoder_forward.9} parent=51 // pred_check_branch
        %305 = sbr.rel (%p303) target = $region56
      $region55: #{encoder_forward.9} parent=51 // pred_region
        %p306 = scmp.lt.s32.totalorder %s16, 1
        %s307 = scalar_select %p306, %s16, 1
        %s308 = smul.addr %s307, 2
        %s309 = smul.addr %s308, 8
        %s310 = scalar_lea.vmem %s0, %s309
      $region56: #{encoder_forward.9} parent=51 // pred_fallthru
        _
    $region52: #{encoder_forward.9} parent=5 // pred_fallthru
      _
    %p311 = scmp.le.s32.totalorder 1, %s16
    %p312 = scmp.lt.s32.totalorder %s16, 3
    %p313 = pnand %p311, %p312
    %p314 = pneg %p313
    // Predicated region
    $region57: #{encoder_forward.9} parent=5 // pred_check
      _
    $region58: #{encoder_forward.9} parent=5 // pred_check_branch
      %316 = sbr.rel (%p313) target = $region60
    $region59: #{encoder_forward.9} parent=5 // pred_region
      %s317 = ssub.s32 %s16, 1
      %p318 = scmp.lt.s32.totalorder %s21, 1
      %s319 = scalar_select %p318, %s21, 1
      %s320 = smul.addr %s319, 2
      %s321 = smul.addr %s320, 8
      %s322 = scalar_lea.vmem %s0, %s321
      %p323 = pneg %p42
      %p324 = pneg %p39
      %p325 = pneg %p63
      %p326 = pneg %p60
      %p327 = pneg %p84
      %p328 = pneg %p81
      %p329 = pneg %p105
      %p330 = pneg %p102
      %p331 = pneg %p126
      %p332 = pneg %p123
      %p333 = pneg %p147
      %p334 = pneg %p144
      %p335 = pneg %p168
      %p336 = pneg %p165
      %p337 = pneg %p189
      %p338 = pneg %p186
      %p339 = pneg %p210
      %p340 = pneg %p207
      %p341 = pneg %p231
      %p342 = pneg %p228
      %p343 = pneg %p257
      %p344 = pneg %p254
      %p345 = scmp.lt.s32.totalorder %s21, 1
      %s346 = scalar_select %p345, %s21, 1
      %s347 = smul.addr %s346, 2
      %s348 = smul.addr %s347, 8
      %s349 = scalar_lea.vmem %s10, %s348
      %p350 = scmp.lt.s32.totalorder %s21, 1
      %s351 = scalar_select %p350, %s21, 1
      %s352 = smul.addr %s351, 2
      %s353 = smul.addr %s352, 8
      %s354 = scalar_lea.vmem %s0, %s353
      %p355 = scmp.lt.s32.totalorder %s21, 1
      %s356 = scalar_select %p355, %s21, 1
      %s357 = smul.addr %s356, 2
      %s358 = smul.addr %s357, 8
      %s359 = scalar_lea.vmem %s10, %s358
      %v361 = vld [vmem:[%s354] sm:$0xff]
      %v362 = vld [vmem:[%s354 + $0x8] sm:$0xff]
      %v363 = vpack.c.bf16 %v362, %v361
      %v364 = vld [vmem:[%s1] sm:$0xf]
      %v365 = vld [vmem:[%s1 + $0x4] sm:$0xf]
      %v366 = vld [vmem:[%s1 + $0x8] sm:$0xf]
      %v367 = vld [vmem:[%s1 + $0xc] sm:$0xf]
      %v368 = vld [vmem:[%s2] sm:$0x1]
      %v370 = vlaneseq
      %v371 = vshrl.u32 %v370, 7
      %v372 = vsub.s32 0, %v371
      %v373 = vrot.slane %v368, %v372
      %v379 = vunpack.c.l.b16 %v364
      %v380 = vunpack.c.l.b16 %v365
      %v381 = vunpack.c.l.b16 %v366
      %v382 = vunpack.c.l.b16 %v367
      %v383 = vpack.c.b16 %v380, %v379
      %v384 = vpack.c.b16 %v382, %v381
      %vm387 = vcmask 261120
      %v389 = vsel %vm387, %v363, 0
      %391 = vmatprep.subr.bf16.mxu0 0
      %392 = vmatpush1.bf16.msra.mxu0 %v383
      %393 = vmatprep.subr.bf16.mxu0 0
      %394 = vmatpush1.bf16.msra.mxu0 %v384
      %395 = vmatprep.subr.bf16.mxu0 0
      %396 = vmatpush1.bf16.msra.mxu0 0
      %397 = vmatprep.subr.bf16.mxu0 0
      %398 = vmatpush1.bf16.msra.mxu0 0
      %399 = vmatprep.subr.bf16.mxu0 0
      %400 = vmatpush1.bf16.msra.mxu0 0
      %401 = vmatprep.subr.bf16.mxu0 0
      %402 = vmatpush1.bf16.msra.mxu0 0
      %403 = vmatprep.subr.bf16.mxu0 0
      %404 = vmatpush1.bf16.msra.mxu0 0
      %405 = vmatprep.subr.bf16.mxu0 0
      %406 = vmatpush1.bf16.msra.mxu0 0
      %407 = vmatprep.subr.bf16.mxu0 0
      %408 = vmatpush1.bf16.msra.mxu0 0
      %409 = vmatprep.subr.bf16.mxu0 0
      %410 = vmatpush1.bf16.msra.mxu0 0
      %411 = vmatprep.subr.bf16.mxu0 0
      %412 = vmatpush1.bf16.msra.mxu0 0
      %413 = vmatprep.subr.bf16.mxu0 0
      %414 = vmatpush1.bf16.msra.mxu0 0
      %415 = vmatprep.subr.bf16.mxu0 0
      %416 = vmatpush1.bf16.msra.mxu0 0
      %417 = vmatprep.subr.bf16.mxu0 0
      %418 = vmatpush1.bf16.msra.mxu0 0
      %419 = vmatprep.subr.bf16.mxu0 0
      %420 = vmatpush1.bf16.msra.mxu0 0
      %421 = vmatprep.subr.bf16.mxu0 0
      %422 = vmatpush1.bf16.msra.mxu0 0
      %423 = vmatprep.mubr.bf16.mxu0 0
      %424 = vmatmul.mubr.bf16.gmra.mrb[0].mxu0 %v389
      %v425 = vpop.f32.mrb[0].mxu0
      %v426 = vadd.f32 %v373, %v425
      %v427 = vpop.f32.mrb[0].mxu0
      %v428 = vpop.f32.mrb[0].mxu0
      %v429 = vadd.f32 %v373, %v428
      %v430 = vpop.f32.mrb[0].mxu0
      %431 = vdwg.mxu0
      %v432 = vld [vmem:[%s5] sm:$0x1]
      %v433 = vld [vmem:[%s6] sm:$0x1]
      %vm434 = vcmask 64512
      %v435 = vsel %vm434, %v426, 0.0
      %v436 = vsel %vm434, %v429, 0.0
      %v437 = vadd.f32 %v435, %v436
      %v438 = vrot.slane %v437, 4
      %v439 = vadd.f32 %v437, %v438
      %v440 = vrot.slane %v439, 2
      %v441 = vadd.f32 %v439, %v440
      %v442 = vrot.slane %v441, 1
      %v443 = vadd.f32 %v441, %v442
      %v444 = vmul.f32 %v426, %v426
      %v445 = vmul.f32 %v429, %v429
      %v446 = vsel %vm434, %v444, 0.0
      %v447 = vsel %vm434, %v445, 0.0
      %v448 = vadd.f32 %v446, %v447
      %v449 = vrot.slane %v448, 4
      %v450 = vadd.f32 %v448, %v449
      %v451 = vrot.slane %v450, 2
      %v452 = vadd.f32 %v450, %v451
      %v453 = vrot.slane %v452, 1
      %v454 = vadd.f32 %v452, %v453
      %v455 = vsel %vm434, %v443, 0.0
      %456 = vadd.xlane.f32.xlu0 %v455
      %v457 = vpop.xlane.xlu0 %456
      %v458 = vrcp.pop 128.0
      %v459 = vmul.f32 %v457, %v458
      %v460 = vsel %vm434, %v454, 0.0
      %461 = vadd.xlane.f32.xlu0 %v460
      %v462 = vpop.xlane.xlu0 %461
      %v463 = vmul.f32 %v462, %v458
      %v464 = vmul.f32 %v459, %v459
      %v465 = vsub.f32 %v463, %v464
      %v466 = vmax.f32 %v465, 0.0
      %v467 = vsub.f32 %v426, %v459
      %v468 = vsub.f32 %v429, %v459
      %v469 = vadd.f32 %v466, 1e-05
      %v470 = vrsqrt.pop %v469
      %v471 = vmul.f32 %v467, %v470
      %v472 = vmul.f32 %v468, %v470
      %v474 = vlaneseq
      %v475 = vshrl.u32 %v474, 7
      %v476 = vsub.s32 0, %v475
      %v477 = vrot.slane %v432, %v476
      %v479 = vmul.f32 %v471, %v477
      %v480 = vmul.f32 %v472, %v477
      %v482 = vlaneseq
      %v483 = vshrl.u32 %v482, 7
      %v484 = vsub.s32 0, %v483
      %v485 = vrot.slane %v433, %v484
      %v487 = vadd.f32 %v479, %v485
      %v488 = vadd.f32 %v480, %v485
      %v489 = vmul.f32 %v487, 0.5
      %v490 = vmul.f32 %v488, 0.5
      %v491 = vmul.f32 %v487, 0.70710677
      %v492 = vmul.f32 %v488, 0.70710677
      %v493 = verf.f32.pop %v491
      %v494 = verf.f32.pop %v492
      %v495 = vadd.f32 %v493, 1.0
      %v496 = vadd.f32 %v494, 1.0
      %v497 = vmul.f32 %v489, %v495
      %v498 = vmul.f32 %v490, %v496
      %499 = vst.msk [vmem:[#allocation2] sm:$0xff] %vm434, 0.0
      %500 = vst.msk [vmem:[#allocation2 + $0x8] sm:$0xff] %vm434, 0.0
      %501 = vst.msk [vmem:[#allocation2 + $0x10] sm:$0xff] %vm434, 0.0
      %vm502 = vcmask 58368
      %503 = vst.msk [vmem:[#allocation2 + $0x18] sm:$0x3] %vm502, 0.0
      %504 = vst.msk [vmem:[#allocation2 + $0x5] sm:$0xff] %vm434, %v497
      %505 = vst.msk [vmem:[#allocation2 + $0xd] sm:$0xff] %vm434, %v498
      %v506 = vlaneseq
      %v507 = vshrl.u32 %v506, 7
      %v508 = vadd.s32 %v507, 8
      %vm509 = vcmp.lt.s32.totalorder %v507, 0
      %v510 = vsub.s32 0, %v507
      %v511 = vsel %vm509, %v510, %v507
      %v512 = vshrl.u32 %v511, 2
      %v513 = vand.u32 %v511, 3
      %v514 = vsub.s32 0, %v513
      %v515 = vsel %vm509, %v514, %v513
      %vm516 = vcmp.lt.s32.totalorder %v508, 0
      %v517 = vsub.s32 0, %v508
      %v518 = vsel %vm516, %v517, %v508
      %v519 = vshrl.u32 %v518, 2
      %v520 = vand.u32 %v518, 3
      %v521 = vsub.s32 0, %v520
      %v522 = vsel %vm516, %v521, %v520
      %vm523 = vcmp.ne.s32.totalorder %v515, 0
      %vm524 = vcmp.ne.s32.totalorder %v522, 0
      %vm525 = vcmp.lt.s32.totalorder %v515, 0
      %vm526 = vcmp.lt.s32.totalorder %v522, 0
      %vm527 = vmand %vm525, %vm523
      %vm528 = vmand %vm526, %vm524
      %v529 = vadd.s32 %v515, 4
      %v530 = vadd.s32 %v522, 4
      %v531 = vsel %vm527, %v529, %v515
      %v532 = vsel %vm528, %v530, %v522
      %vm533 = vcmp.ge.s32.totalorder %v531, 1
      %vm534 = vcmp.ge.s32.totalorder %v532, 1
      %vm535 = vcmp.le.s32.totalorder %v531, 2
      %vm536 = vcmp.le.s32.totalorder %v532, 2
      %v537 = vld [vmem:[#allocation2] sm:$0xff]
      %v538 = vld [vmem:[#allocation2 + $0x8] sm:$0xff]
      %v539 = vsel %vm533, 1, 0
      %v540 = vsel %vm534, 1, 0
      %vm541 = vcmp.eq.s32.totalorder %v539, 1
      %vm542 = vcmp.eq.s32.totalorder %v540, 1
      %v543 = vsel %vm541, %v537, 0.0
      %v544 = vsel %vm542, %v538, 0.0
      %v545 = vpack.c.bf16 %v544, %v543
      %v546 = vld [vmem:[%s3] sm:$0xf]
      %v547 = vld [vmem:[#allocation2 + $0x1] sm:$0xff]
      %v548 = vld [vmem:[#allocation2 + $0x9] sm:$0xff]
      %v549 = vpack.c.bf16 %v548, %v547
      %s550 = scalar_lea.vmem %s3, 4
      %v551 = vld [vmem:[%s550] sm:$0xf]
      %v553 = vsel %vm434, %v549, 0
      %vm555 = vcmask 1043456
      %v557 = vsel %vm555, %v551, 0
      %559 = vmatprep.subr.bf16.mxu0 0
      %560 = vmatpush1.bf16.msra.mxu0 %v557
      %561 = vmatprep.subr.bf16.mxu0 0
      %562 = vmatpush1.bf16.msra.mxu0 0
      %563 = vmatprep.subr.bf16.mxu0 0
      %564 = vmatpush1.bf16.msra.mxu0 0
      %565 = vmatprep.subr.bf16.mxu0 0
      %566 = vmatpush1.bf16.msra.mxu0 0
      %567 = vmatprep.subr.bf16.mxu0 0
      %568 = vmatpush1.bf16.msra.mxu0 0
      %569 = vmatprep.subr.bf16.mxu0 0
      %570 = vmatpush1.bf16.msra.mxu0 0
      %571 = vmatprep.subr.bf16.mxu0 0
      %572 = vmatpush1.bf16.msra.mxu0 0
      %573 = vmatprep.subr.bf16.mxu0 0
      %574 = vmatpush1.bf16.msra.mxu0 0
      %575 = vmatprep.subr.bf16.mxu0 0
      %576 = vmatpush1.bf16.msra.mxu0 0
      %577 = vmatprep.subr.bf16.mxu0 0
      %578 = vmatpush1.bf16.msra.mxu0 0
      %579 = vmatprep.subr.bf16.mxu0 0
      %580 = vmatpush1.bf16.msra.mxu0 0
      %581 = vmatprep.subr.bf16.mxu0 0
      %582 = vmatpush1.bf16.msra.mxu0 0
      %583 = vmatprep.subr.bf16.mxu0 0
      %584 = vmatpush1.bf16.msra.mxu0 0
      %585 = vmatprep.subr.bf16.mxu0 0
      %586 = vmatpush1.bf16.msra.mxu0 0
      %587 = vmatprep.subr.bf16.mxu0 0
      %588 = vmatpush1.bf16.msra.mxu0 0
      %589 = vmatprep.subr.bf16.mxu0 0
      %590 = vmatpush1.bf16.msra.mxu0 0
      %591 = vmatprep.mubr.bf16.mxu0 0
      %592 = vmatmul.mubr.bf16.gmra.mrb[0].mxu0 %v553
      %v593 = vpop.f32.mrb[0].mxu0
      %v594 = vadd.f32 0.0, %v593
      %v595 = vpop.f32.mrb[0].mxu0
      %v596 = vpop.f32.mrb[0].mxu0
      %v597 = vadd.f32 0.0, %v596
      %v598 = vpop.f32.mrb[0].mxu0
      %599 = vdwg.mxu0
      %v601 = vsel %vm434, %v545, 0
      %v604 = vsel %vm555, %v546, 0
      %606 = vmatprep.subr.bf16.mxu0 0
      %607 = vmatpush1.bf16.msra.mxu0 %v604
      %608 = vmatprep.subr.bf16.mxu0 0
      %609 = vmatpush1.bf16.msra.mxu0 0
      %610 = vmatprep.subr.bf16.mxu0 0
      %611 = vmatpush1.bf16.msra.mxu0 0
      %612 = vmatprep.subr.bf16.mxu0 0
      %613 = vmatpush1.bf16.msra.mxu0 0
      %614 = vmatprep.subr.bf16.mxu0 0
      %615 = vmatpush1.bf16.msra.mxu0 0
      %616 = vmatprep.subr.bf16.mxu0 0
      %617 = vmatpush1.bf16.msra.mxu0 0
      %618 = vmatprep.subr.bf16.mxu0 0
      %619 = vmatpush1.bf16.msra.mxu0 0
      %620 = vmatprep.subr.bf16.mxu0 0
      %621 = vmatpush1.bf16.msra.mxu0 0
      %622 = vmatprep.subr.bf16.mxu0 0
      %623 = vmatpush1.bf16.msra.mxu0 0
      %624 = vmatprep.subr.bf16.mxu0 0
      %625 = vmatpush1.bf16.msra.mxu0 0
      %626 = vmatprep.subr.bf16.mxu0 0
      %627 = vmatpush1.bf16.msra.mxu0 0
      %628 = vmatprep.subr.bf16.mxu0 0
      %629 = vmatpush1.bf16.msra.mxu0 0
      %630 = vmatprep.subr.bf16.mxu0 0
      %631 = vmatpush1.bf16.msra.mxu0 0
      %632 = vmatprep.subr.bf16.mxu0 0
      %633 = vmatpush1.bf16.msra.mxu0 0
      %634 = vmatprep.subr.bf16.mxu0 0
      %635 = vmatpush1.bf16.msra.mxu0 0
      %636 = vmatprep.subr.bf16.mxu0 0
      %637 = vmatpush1.bf16.msra.mxu0 0
      %638 = vmatprep.mubr.bf16.mxu0 0
      %639 = vmatmul.mubr.bf16.gmra.mrb[0].mxu0 %v601
      %v640 = vpop.f32.mrb[0].mxu0
      %v641 = vadd.f32 %v594, %v640
      %v642 = vpop.f32.mrb[0].mxu0
      %v643 = vpop.f32.mrb[0].mxu0
      %v644 = vadd.f32 %v597, %v643
      %v645 = vpop.f32.mrb[0].mxu0
      %646 = vdwg.mxu0
      %v647 = vld [vmem:[#allocation2 + $0x2] sm:$0xff]
      %v648 = vld [vmem:[#allocation2 + $0xa] sm:$0xff]
      %v649 = vsel %vm535, 1, 0
      %v650 = vsel %vm536, 1, 0
      %vm651 = vcmp.eq.s32.totalorder %v649, 1
      %vm652 = vcmp.eq.s32.totalorder %v650, 1
      %v653 = vsel %vm651, %v647, 0.0
      %v654 = vsel %vm652, %v648, 0.0
      %v655 = vpack.c.bf16 %v654, %v653
      %s656 = scalar_lea.vmem %s3, 8
      %v657 = vld [vmem:[%s656] sm:$0xf]
      %v659 = vsel %vm434, %v655, 0
      %v662 = vsel %vm555, %v657, 0
      %664 = vmatprep.subr.bf16.mxu0 0
      %665 = vmatpush1.bf16.msra.mxu0 %v662
      %666 = vmatprep.subr.bf16.mxu0 0
      %667 = vmatpush1.bf16.msra.mxu0 0
      %668 = vmatprep.subr.bf16.mxu0 0
      %669 = vmatpush1.bf16.msra.mxu0 0
      %670 = vmatprep.subr.bf16.mxu0 0
      %671 = vmatpush1.bf16.msra.mxu0 0
      %672 = vmatprep.subr.bf16.mxu0 0
      %673 = vmatpush1.bf16.msra.mxu0 0
      %674 = vmatprep.subr.bf16.mxu0 0
      %675 = vmatpush1.bf16.msra.mxu0 0
      %676 = vmatprep.subr.bf16.mxu0 0
      %677 = vmatpush1.bf16.msra.mxu0 0
      %678 = vmatprep.subr.bf16.mxu0 0
      %679 = vmatpush1.bf16.msra.mxu0 0
      %680 = vmatprep.subr.bf16.mxu0 0
      %681 = vmatpush1.bf16.msra.mxu0 0
      %682 = vmatprep.subr.bf16.mxu0 0
      %683 = vmatpush1.bf16.msra.mxu0 0
      %684 = vmatprep.subr.bf16.mxu0 0
      %685 = vmatpush1.bf16.msra.mxu0 0
      %686 = vmatprep.subr.bf16.mxu0 0
      %687 = vmatpush1.bf16.msra.mxu0 0
      %688 = vmatprep.subr.bf16.mxu0 0
      %689 = vmatpush1.bf16.msra.mxu0 0
      %690 = vmatprep.subr.bf16.mxu0 0
      %691 = vmatpush1.bf16.msra.mxu0 0
      %692 = vmatprep.subr.bf16.mxu0 0
      %693 = vmatpush1.bf16.msra.mxu0 0
      %694 = vmatprep.subr.bf16.mxu0 0
      %695 = vmatpush1.bf16.msra.mxu0 0
      %696 = vmatprep.mubr.bf16.mxu0 0
      %697 = vmatmul.mubr.bf16.gmra.mrb[0].mxu0 %v659
      %v698 = vpop.f32.mrb[0].mxu0
      %v699 = vadd.f32 0.0, %v698
      %v700 = vpop.f32.mrb[0].mxu0
      %v701 = vpop.f32.mrb[0].mxu0
      %v702 = vadd.f32 0.0, %v701
      %v703 = vpop.f32.mrb[0].mxu0
      %704 = vdwg.mxu0
      %v705 = vadd.f32 %v641, %v699
      %v706 = vadd.f32 %v644, %v702
      %v707 = vld [vmem:[#allocation2 + $0x4] sm:$0xff]
      %v708 = vld [vmem:[#allocation2 + $0xc] sm:$0xff]
      %v709 = vsel %vm541, %v707, 0.0
      %v710 = vsel %vm542, %v708, 0.0
      %v711 = vpack.c.bf16 %v710, %v709
      %s712 = scalar_lea.vmem %s3, 12
      %v713 = vld [vmem:[%s712] sm:$0xf]
      %v715 = vsel %vm434, %v711, 0
      %v718 = vsel %vm555, %v713, 0
      %720 = vmatprep.subr.bf16.mxu0 0
      %721 = vmatpush1.bf16.msra.mxu0 %v718
      %722 = vmatprep.subr.bf16.mxu0 0
      %723 = vmatpush1.bf16.msra.mxu0 0
      %724 = vmatprep.subr.bf16.mxu0 0
      %725 = vmatpush1.bf16.msra.mxu0 0
      %726 = vmatprep.subr.bf16.mxu0 0
      %727 = vmatpush1.bf16.msra.mxu0 0
      %728 = vmatprep.subr.bf16.mxu0 0
      %729 = vmatpush1.bf16.msra.mxu0 0
      %730 = vmatprep.subr.bf16.mxu0 0
      %731 = vmatpush1.bf16.msra.mxu0 0
      %732 = vmatprep.subr.bf16.mxu0 0
      %733 = vmatpush1.bf16.msra.mxu0 0
      %734 = vmatprep.subr.bf16.mxu0 0
      %735 = vmatpush1.bf16.msra.mxu0 0
      %736 = vmatprep.subr.bf16.mxu0 0
      %737 = vmatpush1.bf16.msra.mxu0 0
      %738 = vmatprep.subr.bf16.mxu0 0
      %739 = vmatpush1.bf16.msra.mxu0 0
      %740 = vmatprep.subr.bf16.mxu0 0
      %741 = vmatpush1.bf16.msra.mxu0 0
      %742 = vmatprep.subr.bf16.mxu0 0
      %743 = vmatpush1.bf16.msra.mxu0 0
      %744 = vmatprep.subr.bf16.mxu0 0
      %745 = vmatpush1.bf16.msra.mxu0 0
      %746 = vmatprep.subr.bf16.mxu0 0
      %747 = vmatpush1.bf16.msra.mxu0 0
      %748 = vmatprep.subr.bf16.mxu0 0
      %749 = vmatpush1.bf16.msra.mxu0 0
      %750 = vmatprep.subr.bf16.mxu0 0
      %751 = vmatpush1.bf16.msra.mxu0 0
      %752 = vmatprep.mubr.bf16.mxu0 0
      %753 = vmatmul.mubr.bf16.gmra.mrb[0].mxu0 %v715
      %v754 = vpop.f32.mrb[0].mxu0
      %v755 = vadd.f32 0.0, %v754
      %v756 = vpop.f32.mrb[0].mxu0
      %v757 = vpop.f32.mrb[0].mxu0
      %v758 = vadd.f32 0.0, %v757
      %v759 = vpop.f32.mrb[0].mxu0
      %760 = vdwg.mxu0
      %v761 = vadd.f32 %v705, %v755
      %v762 = vadd.f32 %v706, %v758
      %v763 = vld [vmem:[#allocation2 + $0x5] sm:$0xff]
      %v764 = vld [vmem:[#allocation2 + $0xd] sm:$0xff]
      %v765 = vpack.c.bf16 %v764, %v763
      %s766 = scalar_lea.vmem %s3, 16
      %v767 = vld [vmem:[%s766] sm:$0xf]
      %v769 = vsel %vm434, %v765, 0
      %v772 = vsel %vm555, %v767, 0
      %774 = vmatprep.subr.bf16.mxu0 0
      %775 = vmatpush1.bf16.msra.mxu0 %v772
      %776 = vmatprep.subr.bf16.mxu0 0
      %777 = vmatpush1.bf16.msra.mxu0 0
      %778 = vmatprep.subr.bf16.mxu0 0
      %779 = vmatpush1.bf16.msra.mxu0 0
      %780 = vmatprep.subr.bf16.mxu0 0
      %781 = vmatpush1.bf16.msra.mxu0 0
      %782 = vmatprep.subr.bf16.mxu0 0
      %783 = vmatpush1.bf16.msra.mxu0 0
      %784 = vmatprep.subr.bf16.mxu0 0
      %785 = vmatpush1.bf16.msra.mxu0 0
      %786 = vmatprep.subr.bf16.mxu0 0
      %787 = vmatpush1.bf16.msra.mxu0 0
      %788 = vmatprep.subr.bf16.mxu0 0
      %789 = vmatpush1.bf16.msra.mxu0 0
      %790 = vmatprep.subr.bf16.mxu0 0
      %791 = vmatpush1.bf16.msra.mxu0 0
      %792 = vmatprep.subr.bf16.mxu0 0
      %793 = vmatpush1.bf16.msra.mxu0 0
      %794 = vmatprep.subr.bf16.mxu0 0
      %795 = vmatpush1.bf16.msra.mxu0 0
      %796 = vmatprep.subr.bf16.mxu0 0
      %797 = vmatpush1.bf16.msra.mxu0 0
      %798 = vmatprep.subr.bf16.mxu0 0
      %799 = vmatpush1.bf16.msra.mxu0 0
      %800 = vmatprep.subr.bf16.mxu0 0
      %801 = vmatpush1.bf16.msra.mxu0 0
      %802 = vmatprep.subr.bf16.mxu0 0
      %803 = vmatpush1.bf16.msra.mxu0 0
      %804 = vmatprep.subr.bf16.mxu0 0
      %805 = vmatpush1.bf16.msra.mxu0 0
      %806 = vmatprep.mubr.bf16.mxu0 0
      %807 = vmatmul.mubr.bf16.gmra.mrb[0].mxu0 %v769
      %v808 = vpop.f32.mrb[0].mxu0
      %v809 = vadd.f32 0.0, %v808
      %v810 = vpop.f32.mrb[0].mxu0
      %v811 = vpop.f32.mrb[0].mxu0
      %v812 = vadd.f32 0.0, %v811
      %v813 = vpop.f32.mrb[0].mxu0
      %814 = vdwg.mxu0
      %v815 = vadd.f32 %v761, %v809
      %v816 = vadd.f32 %v762, %v812
      %v817 = vld [vmem:[#allocation2 + $0x6] sm:$0xff]
      %v818 = vld [vmem:[#allocation2 + $0xe] sm:$0xff]
      %v819 = vsel %vm651, %v817, 0.0
      %v820 = vsel %vm652, %v818, 0.0
      %v821 = vpack.c.bf16 %v820, %v819
      %s822 = scalar_lea.vmem %s3, 20
      %v823 = vld [vmem:[%s822] sm:$0xf]
      %v825 = vsel %vm434, %v821, 0
      %v828 = vsel %vm555, %v823, 0
      %830 = vmatprep.subr.bf16.mxu0 0
      %831 = vmatpush1.bf16.msra.mxu0 %v828
      %832 = vmatprep.subr.bf16.mxu0 0
      %833 = vmatpush1.bf16.msra.mxu0 0
      %834 = vmatprep.subr.bf16.mxu0 0
      %835 = vmatpush1.bf16.msra.mxu0 0
      %836 = vmatprep.subr.bf16.mxu0 0
      %837 = vmatpush1.bf16.msra.mxu0 0
      %838 = vmatprep.subr.bf16.mxu0 0
      %839 = vmatpush1.bf16.msra.mxu0 0
      %840 = vmatprep.subr.bf16.mxu0 0
      %841 = vmatpush1.bf16.msra.mxu0 0
      %842 = vmatprep.subr.bf16.mxu0 0
      %843 = vmatpush1.bf16.msra.mxu0 0
      %844 = vmatprep.subr.bf16.mxu0 0
      %845 = vmatpush1.bf16.msra.mxu0 0
      %846 = vmatprep.subr.bf16.mxu0 0
      %847 = vmatpush1.bf16.msra.mxu0 0
      %848 = vmatprep.subr.bf16.mxu0 0
      %849 = vmatpush1.bf16.msra.mxu0 0
      %850 = vmatprep.subr.bf16.mxu0 0
      %851 = vmatpush1.bf16.msra.mxu0 0
      %852 = vmatprep.subr.bf16.mxu0 0
      %853 = vmatpush1.bf16.msra.mxu0 0
      %854 = vmatprep.subr.bf16.mxu0 0
      %855 = vmatpush1.bf16.msra.mxu0 0
      %856 = vmatprep.subr.bf16.mxu0 0
      %857 = vmatpush1.bf16.msra.mxu0 0
      %858 = vmatprep.subr.bf16.mxu0 0
      %859 = vmatpush1.bf16.msra.mxu0 0
      %860 = vmatprep.subr.bf16.mxu0 0
      %861 = vmatpush1.bf16.msra.mxu0 0
      %862 = vmatprep.mubr.bf16.mxu0 0
      %863 = vmatmul.mubr.bf16.gmra.mrb[0].mxu0 %v825
      %v864 = vpop.f32.mrb[0].mxu0
      %v865 = vadd.f32 0.0, %v864
      %v866 = vpop.f32.mrb[0].mxu0
      %v867 = vpop.f32.mrb[0].mxu0
      %v868 = vadd.f32 0.0, %v867
      %v869 = vpop.f32.mrb[0].mxu0
      %870 = vdwg.mxu0
      %v871 = vadd.f32 %v815, %v865
      %v872 = vadd.f32 %v816, %v868
      %v873 = vld [vmem:[#allocation2 + $0x8] sm:$0xff]
      %v874 = vld [vmem:[#allocation2 + $0x10] sm:$0xff]
      %v875 = vsel %vm541, %v873, 0.0
      %v876 = vsel %vm542, %v874, 0.0
      %v877 = vpack.c.bf16 %v876, %v875
      %s878 = scalar_lea.vmem %s3, 24
      %v879 = vld [vmem:[%s878] sm:$0xf]
      %v881 = vsel %vm434, %v877, 0
      %v884 = vsel %vm555, %v879, 0
      %886 = vmatprep.subr.bf16.mxu0 0
      %887 = vmatpush1.bf16.msra.mxu0 %v884
      %888 = vmatprep.subr.bf16.mxu0 0
      %889 = vmatpush1.bf16.msra.mxu0 0
      %890 = vmatprep.subr.bf16.mxu0 0
      %891 = vmatpush1.bf16.msra.mxu0 0
      %892 = vmatprep.subr.bf16.mxu0 0
      %893 = vmatpush1.bf16.msra.mxu0 0
      %894 = vmatprep.subr.bf16.mxu0 0
      %895 = vmatpush1.bf16.msra.mxu0 0
      %896 = vmatprep.subr.bf16.mxu0 0
      %897 = vmatpush1.bf16.msra.mxu0 0
      %898 = vmatprep.subr.bf16.mxu0 0
      %899 = vmatpush1.bf16.msra.mxu0 0
      %900 = vmatprep.subr.bf16.mxu0 0
      %901 = vmatpush1.bf16.msra.mxu0 0
      %902 = vmatprep.subr.bf16.mxu0 0
      %903 = vmatpush1.bf16.msra.mxu0 0
      %904 = vmatprep.subr.bf16.mxu0 0
      %905 = vmatpush1.bf16.msra.mxu0 0
      %906 = vmatprep.subr.bf16.mxu0 0
      %907 = vmatpush1.bf16.msra.mxu0 0
      %908 = vmatprep.subr.bf16.mxu0 0
      %909 = vmatpush1.bf16.msra.mxu0 0
      %910 = vmatprep.subr.bf16.mxu0 0
      %911 = vmatpush1.bf16.msra.mxu0 0
      %912 = vmatprep.subr.bf16.mxu0 0
      %913 = vmatpush1.bf16.msra.mxu0 0
      %914 = vmatprep.subr.bf16.mxu0 0
      %915 = vmatpush1.bf16.msra.mxu0 0
      %916 = vmatprep.subr.bf16.mxu0 0
      %917 = vmatpush1.bf16.msra.mxu0 0
      %918 = vmatprep.mubr.bf16.mxu0 0
      %919 = vmatmul.mubr.bf16.gmra.mrb[0].mxu0 %v881
      %v920 = vpop.f32.mrb[0].mxu0
      %v921 = vadd.f32 0.0, %v920
      %v922 = vpop.f32.mrb[0].mxu0
      %v923 = vpop.f32.mrb[0].mxu0
      %v924 = vadd.f32 0.0, %v923
      %v925 = vpop.f32.mrb[0].mxu0
      %926 = vdwg.mxu0
      %v927 = vadd.f32 %v871, %v921
      %v928 = vadd.f32 %v872, %v924
      %v929 = vld [vmem:[#allocation2 + $0x9] sm:$0xff]
      %v930 = vld [vmem:[#allocation2 + $0x11] sm:$0xff]
      %v931 = vpack.c.bf16 %v930, %v929
      %s932 = scalar_lea.vmem %s3, 28
      %v933 = vld [vmem:[%s932] sm:$0xf]
      %v935 = vsel %vm434, %v931, 0
      %v938 = vsel %vm555, %v933, 0
      %940 = vmatprep.subr.bf16.mxu0 0
      %941 = vmatpush1.bf16.msra.mxu0 %v938
      %942 = vmatprep.subr.bf16.mxu0 0
      %943 = vmatpush1.bf16.msra.mxu0 0
      %944 = vmatprep.subr.bf16.mxu0 0
      %945 = vmatpush1.bf16.msra.mxu0 0
      %946 = vmatprep.subr.bf16.mxu0 0
      %947 = vmatpush1.bf16.msra.mxu0 0
      %948 = vmatprep.subr.bf16.mxu0 0
      %949 = vmatpush1.bf16.msra.mxu0 0
      %950 = vmatprep.subr.bf16.mxu0 0
      %951 = vmatpush1.bf16.msra.mxu0 0
      %952 = vmatprep.subr.bf16.mxu0 0
      %953 = vmatpush1.bf16.msra.mxu0 0
      %954 = vmatprep.subr.bf16.mxu0 0
      %955 = vmatpush1.bf16.msra.mxu0 0
      %956 = vmatprep.subr.bf16.mxu0 0
      %957 = vmatpush1.bf16.msra.mxu0 0
      %958 = vmatprep.subr.bf16.mxu0 0
      %959 = vmatpush1.bf16.msra.mxu0 0
      %960 = vmatprep.subr.bf16.mxu0 0
      %961 = vmatpush1.bf16.msra.mxu0 0
      %962 = vmatprep.subr.bf16.mxu0 0
      %963 = vmatpush1.bf16.msra.mxu0 0
      %964 = vmatprep.subr.bf16.mxu0 0
      %965 = vmatpush1.bf16.msra.mxu0 0
      %966 = vmatprep.subr.bf16.mxu0 0
      %967 = vmatpush1.bf16.msra.mxu0 0
      %968 = vmatprep.subr.bf16.mxu0 0
      %969 = vmatpush1.bf16.msra.mxu0 0
      %970 = vmatprep.subr.bf16.mxu0 0
      %971 = vmatpush1.bf16.msra.mxu0 0
      %972 = vmatprep.mubr.bf16.mxu0 0
      %973 = vmatmul.mubr.bf16.gmra.mrb[0].mxu0 %v935
      %v974 = vpop.f32.mrb[0].mxu0
      %v975 = vadd.f32 0.0, %v974
      %v976 = vpop.f32.mrb[0].mxu0
      %v977 = vpop.f32.mrb[0].mxu0
      %v978 = vadd.f32 0.0, %v977
      %v979 = vpop.f32.mrb[0].mxu0
      %980 = vdwg.mxu0
      %v981 = vadd.f32 %v927, %v975
      %v982 = vadd.f32 %v928, %v978
      %v983 = vld [vmem:[#allocation2 + $0xa] sm:$0xff]
      %v984 = vld [vmem:[#allocation2 + $0x12] sm:$0xff]
      %v985 = vsel %vm651, %v983, 0.0
      %v986 = vsel %vm652, %v984, 0.0
      %v987 = vpack.c.bf16 %v986, %v985
      %s988 = scalar_lea.vmem %s3, 32
      %v989 = vld [vmem:[%s988] sm:$0xf]
      %v991 = vsel %vm434, %v987, 0
      %v994 = vsel %vm555, %v989, 0
      %996 = vmatprep.subr.bf16.mxu0 0
      %997 = vmatpush1.bf16.msra.mxu0 %v994
      %998 = vmatprep.subr.bf16.mxu0 0
      %999 = vmatpush1.bf16.msra.mxu0 0
      %1000 = vmatprep.subr.bf16.mxu0 0
      %1001 = vmatpush1.bf16.msra.mxu0 0
      %1002 = vmatprep.subr.bf16.mxu0 0
      %1003 = vmatpush1.bf16.msra.mxu0 0
      %1004 = vmatprep.subr.bf16.mxu0 0
      %1005 = vmatpush1.bf16.msra.mxu0 0
      %1006 = vmatprep.subr.bf16.mxu0 0
      %1007 = vmatpush1.bf16.msra.mxu0 0
      %1008 = vmatprep.subr.bf16.mxu0 0
      %1009 = vmatpush1.bf16.msra.mxu0 0
      %1010 = vmatprep.subr.bf16.mxu0 0
      %1011 = vmatpush1.bf16.msra.mxu0 0
      %1012 = vmatprep.subr.bf16.mxu0 0
      %1013 = vmatpush1.bf16.msra.mxu0 0
      %1014 = vmatprep.subr.bf16.mxu0 0
      %1015 = vmatpush1.bf16.msra.mxu0 0
      %1016 = vmatprep.subr.bf16.mxu0 0
      %1017 = vmatpush1.bf16.msra.mxu0 0
      %1018 = vmatprep.subr.bf16.mxu0 0
      %1019 = vmatpush1.bf16.msra.mxu0 0
      %1020 = vmatprep.subr.bf16.mxu0 0
      %1021 = vmatpush1.bf16.msra.mxu0 0
      %1022 = vmatprep.subr.bf16.mxu0 0
      %1023 = vmatpush1.bf16.msra.mxu0 0
      %1024 = vmatprep.subr.bf16.mxu0 0
      %1025 = vmatpush1.bf16.msra.mxu0 0
      %1026 = vmatprep.subr.bf16.mxu0 0
      %1027 = vmatpush1.bf16.msra.mxu0 0
      %1028 = vmatprep.mubr.bf16.mxu0 0
      %1029 = vmatmul.mubr.bf16.gmra.mrb[0].mxu0 %v991
      %v1030 = vpop.f32.mrb[0].mxu0
      %v1031 = vadd.f32 0.0, %v1030
      %v1032 = vpop.f32.mrb[0].mxu0
      %v1033 = vpop.f32.mrb[0].mxu0
      %v1034 = vadd.f32 0.0, %v1033
      %v1035 = vpop.f32.mrb[0].mxu0
      %1036 = vdwg.mxu0
      %v1037 = vadd.f32 %v981, %v1031
      %v1038 = vadd.f32 %v982, %v1034
      %v1039 = vld [vmem:[%s4] sm:$0x1]
      %v1041 = vlaneseq
      %v1042 = vshrl.u32 %v1041, 7
      %v1043 = vsub.s32 0, %v1042
      %v1044 = vrot.slane %v1039, %v1043
      %v1046 = vadd.f32 %v1037, %v1044
      %v1047 = vadd.f32 %v1038, %v1044
      %v1048 = vld [vmem:[%s5] sm:$0x1]
      %v1049 = vld [vmem:[%s6] sm:$0x1]
      %v1050 = vsel %vm434, %v1046, 0.0
      %v1051 = vsel %vm434, %v1047, 0.0
      %v1052 = vadd.f32 %v1050, %v1051
      %v1053 = vrot.slane %v1052, 4
      %v1054 = vadd.f32 %v1052, %v1053
      %v1055 = vrot.slane %v1054, 2
      %v1056 = vadd.f32 %v1054, %v1055
      %v1057 = vrot.slane %v1056, 1
      %v1058 = vadd.f32 %v1056, %v1057
      %v1059 = vmul.f32 %v1046, %v1046
      %v1060 = vmul.f32 %v1047, %v1047
      %v1061 = vsel %vm434, %v1059, 0.0
      %v1062 = vsel %vm434, %v1060, 0.0
      %v1063 = vadd.f32 %v1061, %v1062
      %v1064 = vrot.slane %v1063, 4
      %v1065 = vadd.f32 %v1063, %v1064
      %v1066 = vrot.slane %v1065, 2
      %v1067 = vadd.f32 %v1065, %v1066
      %v1068 = vrot.slane %v1067, 1
      %v1069 = vadd.f32 %v1067, %v1068
      %v1070 = vsel %vm434, %v1058, 0.0
      %1071 = vadd.xlane.f32.xlu0 %v1070
      %v1072 = vpop.xlane.xlu0 %1071
      %v1073 = vmul.f32 %v1072, %v458
      %v1074 = vsel %vm434, %v1069, 0.0
      %1075 = vadd.xlane.f32.xlu0 %v1074
      %v1076 = vpop.xlane.xlu0 %1075
      %v1077 = vmul.f32 %v1076, %v458
      %v1078 = vmul.f32 %v1073, %v1073
      %v1079 = vsub.f32 %v1077, %v1078
      %v1080 = vmax.f32 %v1079, 0.0
      %v1081 = vsub.f32 %v1046, %v1073
      %v1082 = vsub.f32 %v1047, %v1073
      %v1083 = vadd.f32 %v1080, 1e-05
      %v1084 = vrsqrt.pop %v1083
      %v1085 = vmul.f32 %v1081, %v1084
      %v1086 = vmul.f32 %v1082, %v1084
      %v1088 = vlaneseq
      %v1089 = vshrl.u32 %v1088, 7
      %v1090 = vsub.s32 0, %v1089
      %v1091 = vrot.slane %v1048, %v1090
      %v1093 = vmul.f32 %v1085, %v1091
      %v1094 = vmul.f32 %v1086, %v1091
      %v1096 = vlaneseq
      %v1097 = vshrl.u32 %v1096, 7
      %v1098 = vsub.s32 0, %v1097
      %v1099 = vrot.slane %v1049, %v1098
      %v1101 = vadd.f32 %v1093, %v1099
      %v1102 = vadd.f32 %v1094, %v1099
      %v1103 = vmul.f32 %v1101, 0.5
      %v1104 = vmul.f32 %v1102, 0.5
      %v1105 = vmul.f32 %v1101, 0.70710677
      %v1106 = vmul.f32 %v1102, 0.70710677
      %v1107 = verf.f32.pop %v1105
      %v1108 = verf.f32.pop %v1106
      %v1109 = vadd.f32 %v1107, 1.0
      %v1110 = vadd.f32 %v1108, 1.0
      %v1111 = vmul.f32 %v1103, %v1109
      %v1112 = vmul.f32 %v1104, %v1110
      %v1113 = vpack.c.bf16 %v1112, %v1111
      %v1114 = vld [vmem:[%s7] sm:$0xf]
      %v1115 = vld [vmem:[%s8] sm:$0x1]
      %v1117 = vlaneseq
      %v1118 = vshrl.u32 %v1117, 7
      %v1119 = vsub.s32 0, %v1118
      %v1120 = vrot.slane %v1115, %v1119
      %v1123 = vsel %vm434, %v1113, 0
      %v1126 = vsel %vm555, %v1114, 0
      %1128 = vmatprep.subr.bf16.mxu0 0
      %1129 = vmatpush1.bf16.msra.mxu0 %v1126
      %1130 = vmatprep.subr.bf16.mxu0 0
      %1131 = vmatpush1.bf16.msra.mxu0 0
      %1132 = vmatprep.subr.bf16.mxu0 0
      %1133 = vmatpush1.bf16.msra.mxu0 0
      %1134 = vmatprep.subr.bf16.mxu0 0
      %1135 = vmatpush1.bf16.msra.mxu0 0
      %1136 = vmatprep.subr.bf16.mxu0 0
      %1137 = vmatpush1.bf16.msra.mxu0 0
      %1138 = vmatprep.subr.bf16.mxu0 0
      %1139 = vmatpush1.bf16.msra.mxu0 0
      %1140 = vmatprep.subr.bf16.mxu0 0
      %1141 = vmatpush1.bf16.msra.mxu0 0
      %1142 = vmatprep.subr.bf16.mxu0 0
      %1143 = vmatpush1.bf16.msra.mxu0 0
      %1144 = vmatprep.subr.bf16.mxu0 0
      %1145 = vmatpush1.bf16.msra.mxu0 0
      %1146 = vmatprep.subr.bf16.mxu0 0
      %1147 = vmatpush1.bf16.msra.mxu0 0
      %1148 = vmatprep.subr.bf16.mxu0 0
      %1149 = vmatpush1.bf16.msra.mxu0 0
      %1150 = vmatprep.subr.bf16.mxu0 0
      %1151 = vmatpush1.bf16.msra.mxu0 0
      %1152 = vmatprep.subr.bf16.mxu0 0
      %1153 = vmatpush1.bf16.msra.mxu0 0
      %1154 = vmatprep.subr.bf16.mxu0 0
      %1155 = vmatpush1.bf16.msra.mxu0 0
      %1156 = vmatprep.subr.bf16.mxu0 0
      %1157 = vmatpush1.bf16.msra.mxu0 0
      %1158 = vmatprep.subr.bf16.mxu0 0
      %1159 = vmatpush1.bf16.msra.mxu0 0
      %1160 = vmatprep.mubr.bf16.mxu0 0
      %1161 = vmatmul.mubr.bf16.gmra.mrb[0].mxu0 %v1123
      %v1162 = vpop.f32.mrb[0].mxu0
      %v1163 = vadd.f32 %v1120, %v1162
      %v1164 = vpop.f32.mrb[0].mxu0
      %v1165 = vpop.f32.mrb[0].mxu0
      %v1166 = vadd.f32 %v1120, %v1165
      %v1167 = vpop.f32.mrb[0].mxu0
      %1168 = vdwg.mxu0
      %v1169 = vld [vmem:[%s9] sm:$0x1]
      %v1171 = vlaneseq
      %v1172 = vshrl.u32 %v1171, 7
      %v1173 = vsub.s32 0, %v1172
      %v1174 = vrot.slane %v1169, %v1173
      %v1176 = vmul.f32 %v1174, %v1163
      %v1177 = vmul.f32 %v1174, %v1166
      %v1178 = vadd.f32 %v361, %v1176
      %v1179 = vadd.f32 %v362, %v1177
      %1180 = vst.msk [vmem:[%s359] sm:$0xff] %vm387, %v1178
      %1181 = vst.msk [vmem:[%s359 + $0x8] sm:$0xff] %vm387, %v1179
      %p1182 = scmp.lt.s32.totalorder %s21, 1
      %s1183 = scalar_select %p1182, %s21, 1
      %s1184 = smul.addr %s1183, 2
      %s1185 = smul.addr %s1184, 8
      %s1186 = scalar_lea.vmem %s10, %s1185
      // Predicated region
      $region61: #{encoder_forward.9} parent=59 // pred_check
        %p1187 = pneg %p254
      $region62: #{encoder_forward.9} parent=59 // pred_check_branch
        %1189 = sbr.rel (%p1187) target = $region64
      $region63: #{encoder_forward.9} parent=59 // pred_region
        _
      $region64: #{encoder_forward.9} parent=59 // pred_fallthru
        _
    $region60: #{encoder_forward.9} parent=5 // pred_fallthru
      _
    %p1190 = scmp.le.s32.totalorder 2, %s16
    // Predicated region
    $region65: #{encoder_forward.9} parent=5 // pred_check
      %p1191 = pneg %p1190
    $region66: #{encoder_forward.9} parent=5 // pred_check_branch
      %1193 = sbr.rel (%p1191) target = $region68
    $region67: #{encoder_forward.9} parent=5 // pred_region
      %s1194 = ssub.s32 %s16, 2
      // Predicated region
      $region69: #{encoder_forward.9} parent=67 // pred_check
        %p1195 = pneg %p260
      $region70: #{encoder_forward.9} parent=67 // pred_check_branch
        %1197 = sbr.rel (%p1195) target = $region72
      $region71: #{encoder_forward.9} parent=67 // pred_region
        %p1198 = scmp.lt.s32.totalorder %s22, 1
        %s1199 = scalar_select %p1198, %s22, 1
        %s1200 = smul.addr %s1199, 2
        %s1201 = smul.addr %s1200, 8
        %s1202 = scalar_lea.vmem %s10, %s1201
      $region72: #{encoder_forward.9} parent=67 // pred_fallthru
        _
    $region68: #{encoder_forward.9} parent=5 // pred_fallthru
      _
  $region6: #{encoder_forward.9} parent=0 // loop_footer
    %s20 = sadd.s32 1, %s16
  $region7: #{encoder_forward.9} parent=0 // loop_footer_branch
    %15 = sbr.rel target = $region3
  $region8: #{encoder_forward.9} parent=0 // loop_exit
    _

// kernel: encoder_forward.7
$region0: #{encoder_forward.7}
  #allocation0 [shape = 'u32[]', space=smem, size = 0x4, offset = 0x4, fixed_abs, tag = 'smem constant byte address 0x4 - core index']
  #allocation1 [shape = 'u32[144,128]{1,0:T(1,128)}', space=vmem, size = 0x12000, scoped, tag = 'internal scratch']
  #allocation2 [shape = 'f32[290,3]{1,0:T(8,128)}', space=vmem, size = 0x25000, scoped, tag = 'scratch operand']
  %s0 = inlined_call_operand.vmem [shape: f32[2,256,3], index: 0, kind: input, shape index: {}]
  %s1 = inlined_call_operand.vmem [shape: bf16[9,3,32], index: 1, kind: input, shape index: {}]
  %s2 = inlined_call_operand.vmem [shape: f32[1,32], index: 2, kind: input, shape index: {}]
  %s3 = inlined_call_operand.vmem [shape: f32[2,256,32], index: 3, kind: output, shape index: {}]
  %s4 = sld [smem:[#allocation0]]
  $region45: #{encoder_forward.7} parent=0
    _
  %s6 = ssub.s32 1, %s4
  %s7 = scalar_select 0, %s6, %s4
  loop: start=0, step=1, limit=4
  $region2: #{encoder_forward.7} parent=0 // loop_pre_header
    _
  $region3: #{encoder_forward.7} parent=0 // loop_header
    %s9 = sphi 0, %s13
    %p10 = scmp.ge.s32.totalorder %s9, 4
    %s19 = sphi 0, %s21
    %s22 = sphi 0, %s19
    %s23 = sphi 0, %s22
    %s39 = sphi 0, %s23
    %s43 = sphi 0, %s43
    %s45 = sphi 0, %s43
    %s46 = sphi 0, %s45
    %s60 = sphi 0, %s46
    %s64 = sphi 0, %s64
    %s66 = sphi 0, %s64
    %s67 = sphi 0, %s66
    %s81 = sphi 0, %s67
    %s87 = sphi 0, %s89
    %s90 = sphi 0, %s87
    %s91 = sphi 0, %s90
    %s107 = sphi 0, %s91
  $region4: #{encoder_forward.7} parent=0 // loop_header_branch
    %12 = sbr.rel (%p10) target = $region8
  $region5: #{encoder_forward.7} parent=0 // loop_body
    %s14 = ssub.s32 %s9, 1
    %s15 = ssub.s32 %s9, 2
    %s16 = sadd.s32 %s9, 1
    %s17 = ssub.s32 %s9, %s16
    %p18 = scmp.eq.s32.totalorder %s17, 0
    %s20 = sadd.s32 %s19, 1
    %s21 = scalar_select %p18, %s19, %s20
    %p24 = pneg %p18
    %p25 = scmp.eq.s32.totalorder %s9, 1
    %p26 = por %p24, %p25
    %p27 = scmp.ne.s32.totalorder %s19, %s22
    %p28 = scmp.eq.s32.totalorder %s9, 0
    %p29 = por %p27, %p28
    %p30 = scmp.ne.s32.totalorder %s19, %s22
    %p31 = scmp.eq.s32.totalorder %s14, 1
    %p32 = por %p30, %p31
    %p33 = scmp.ne.s32.totalorder %s22, %s23
    %p34 = scmp.eq.s32.totalorder %s14, 0
    %p35 = por %p33, %p34
    %p36 = scmp.ne.s32.totalorder %s22, %s23
    %p37 = scmp.eq.s32.totalorder %s15, 1
    %p38 = por %p36, %p37
    %p40 = scmp.ne.s32.totalorder %s23, %s39
    %p41 = scmp.eq.s32.totalorder %s15, 0
    %p42 = por %p40, %p41
    %s44 = sadd.s32 %s43, 1
    %p47 = scmp.eq.s32.totalorder %s9, 1
    %p48 = scmp.ne.s32.totalorder %s43, %s45
    %p49 = scmp.eq.s32.totalorder %s9, 0
    %p50 = por %p48, %p49
    %p51 = scmp.ne.s32.totalorder %s43, %s45
    %p52 = scmp.eq.s32.totalorder %s14, 1
    %p53 = por %p51, %p52
    %p54 = scmp.ne.s32.totalorder %s45, %s46
    %p55 = scmp.eq.s32.totalorder %s14, 0
    %p56 = por %p54, %p55
    %p57 = scmp.ne.s32.totalorder %s45, %s46
    %p58 = scmp.eq.s32.totalorder %s15, 1
    %p59 = por %p57, %p58
    %p61 = scmp.ne.s32.totalorder %s46, %s60
    %p62 = scmp.eq.s32.totalorder %s15, 0
    %p63 = por %p61, %p62
    %s65 = sadd.s32 %s64, 1
    %p68 = scmp.eq.s32.totalorder %s9, 1
    %p69 = scmp.ne.s32.totalorder %s64, %s66
    %p70 = scmp.eq.s32.totalorder %s9, 0
    %p71 = por %p69, %p70
    %p72 = scmp.ne.s32.totalorder %s64, %s66
    %p73 = scmp.eq.s32.totalorder %s14, 1
    %p74 = por %p72, %p73
    %p75 = scmp.ne.s32.totalorder %s66, %s67
    %p76 = scmp.eq.s32.totalorder %s14, 0
    %p77 = por %p75, %p76
    %p78 = scmp.ne.s32.totalorder %s66, %s67
    %p79 = scmp.eq.s32.totalorder %s15, 1
    %p80 = por %p78, %p79
    %p82 = scmp.ne.s32.totalorder %s67, %s81
    %p83 = scmp.eq.s32.totalorder %s15, 0
    %p84 = por %p82, %p83
    %s85 = ssub.s32 %s9, %s16
    %p86 = scmp.eq.s32.totalorder %s85, 0
    %s88 = sadd.s32 %s87, 1
    %s89 = scalar_select %p86, %s87, %s88
    %p92 = pneg %p86
    %p93 = scmp.eq.s32.totalorder %s9, 1
    %p94 = por %p92, %p93
    %p95 = scmp.ne.s32.totalorder %s87, %s90
    %p96 = scmp.eq.s32.totalorder %s9, 0
    %p97 = por %p95, %p96
    %p98 = scmp.ne.s32.totalorder %s87, %s90
    %p99 = scmp.eq.s32.totalorder %s14, 1
    %p100 = por %p98, %p99
    %p101 = scmp.ne.s32.totalorder %s90, %s91
    %p102 = scmp.eq.s32.totalorder %s14, 0
    %p103 = por %p101, %p102
    %p104 = scmp.ne.s32.totalorder %s90, %s91
    %p105 = scmp.eq.s32.totalorder %s15, 1
    %p106 = por %p104, %p105
    %p108 = scmp.ne.s32.totalorder %s91, %s107
    %p109 = scmp.eq.s32.totalorder %s15, 0
    %p110 = por %p108, %p109
    %p111 = scmp.le.s32.totalorder 1, %s9
    %p112 = scmp.lt.s32.totalorder %s9, 3
    %p113 = pnand %p111, %p112
    %p114 = pneg %p113
    // Predicated region
    $region9: #{encoder_forward.7} parent=5 // pred_check
      _
    $region10: #{encoder_forward.7} parent=5 // pred_check_branch
      %116 = sbr.rel (%p113) target = $region12
    $region11: #{encoder_forward.7} parent=5 // pred_region
      %s117 = ssub.s32 %s9, 1
      // Predicated region
      $region13: #{encoder_forward.7} parent=11 // pred_check
        %p118 = pneg %p56
      $region14: #{encoder_forward.7} parent=11 // pred_check_branch
        %120 = sbr.rel (%p118) target = $region16
      $region15: #{encoder_forward.7} parent=11 // pred_region
        _
      $region16: #{encoder_forward.7} parent=11 // pred_fallthru
        _
      // Predicated region
      $region17: #{encoder_forward.7} parent=11 // pred_check
        %p121 = pneg %p77
      $region18: #{encoder_forward.7} parent=11 // pred_check_branch
        %123 = sbr.rel (%p121) target = $region20
      $region19: #{encoder_forward.7} parent=11 // pred_region
        _
      $region20: #{encoder_forward.7} parent=11 // pred_fallthru
        _
    $region12: #{encoder_forward.7} parent=5 // pred_fallthru
      _
    %p124 = scmp.lt.s32.totalorder %s9, 2
    // Predicated region
    $region21: #{encoder_forward.7} parent=5 // pred_check
      %p125 = pneg %p124
    $region22: #{encoder_forward.7} parent=5 // pred_check_branch
      %127 = sbr.rel (%p125) target = $region24
    $region23: #{encoder_forward.7} parent=5 // pred_region
      // Predicated region
      $region25: #{encoder_forward.7} parent=23 // pred_check
        %p128 = pneg %p29
      $region26: #{encoder_forward.7} parent=23 // pred_check_branch
        %130 = sbr.rel (%p128) target = $region28
      $region27: #{encoder_forward.7} parent=23 // pred_region
        %p131 = scmp.lt.s32.totalorder %s9, 1
        %s132 = scalar_select %p131, %s9, 1
        %s133 = smul.addr %s132, 32
        %s134 = smul.addr %s133, 8
        %s135 = scalar_lea.vmem %s0, %s134
      $region28: #{encoder_forward.7} parent=23 // pred_fallthru
        _
    $region24: #{encoder_forward.7} parent=5 // pred_fallthru
      _
    %p136 = scmp.le.s32.totalorder 1, %s9
    %p137 = scmp.lt.s32.totalorder %s9, 3
    %p138 = pnand %p136, %p137
    %p139 = pneg %p138
    // Predicated region
    $region29: #{encoder_forward.7} parent=5 // pred_check
      _
    $region30: #{encoder_forward.7} parent=5 // pred_check_branch
      %141 = sbr.rel (%p138) target = $region32
    $region31: #{encoder_forward.7} parent=5 // pred_region
      %s142 = ssub.s32 %s9, 1
      %p143 = scmp.lt.s32.totalorder %s14, 1
      %s144 = scalar_select %p143, %s14, 1
      %s145 = smul.addr %s144, 32
      %s146 = smul.addr %s145, 8
      %s147 = scalar_lea.vmem %s0, %s146
      %p148 = pneg %p35
      %p149 = pneg %p32
      %p150 = pneg %p56
      %p151 = pneg %p53
      %p152 = pneg %p77
      %p153 = pneg %p74
      %p154 = pneg %p103
      %p155 = pneg %p100
      %p156 = scmp.lt.s32.totalorder %s14, 1
      %s157 = scalar_select %p156, %s14, 1
      %s158 = smul.addr %s157, 32
      %s159 = smul.addr %s158, 8
      %s160 = scalar_lea.vmem %s3, %s159
      %p161 = scmp.lt.s32.totalorder %s14, 1
      %s162 = scalar_select %p161, %s14, 1
      %s163 = smul.addr %s162, 32
      %s164 = smul.addr %s163, 8
      %s165 = scalar_lea.vmem %s0, %s164
      %p166 = scmp.lt.s32.totalorder %s14, 1
      %s167 = scalar_select %p166, %s14, 1
      %s168 = smul.addr %s167, 32
      %s169 = smul.addr %s168, 8
      %s170 = scalar_lea.vmem %s3, %s169
      %vm172 = vcmask 23552
      %173 = vst.msk [vmem:[#allocation2] sm:$0xff] %vm172, 0.0
      %174 = vst.msk [vmem:[#allocation2 + $0x8] sm:$0xff] %vm172, 0.0
      %175 = vst.msk [vmem:[#allocation2 + $0x10] sm:$0xff] %vm172, 0.0
      %176 = vst.msk [vmem:[#allocation2 + $0x18] sm:$0xff] %vm172, 0.0
      %177 = vst.msk [vmem:[#allocation2 + $0x20] sm:$0xff] %vm172, 0.0
      %178 = vst.msk [vmem:[#allocation2 + $0x28] sm:$0xff] %vm172, 0.0
      %179 = vst.msk [vmem:[#allocation2 + $0x30] sm:$0xff] %vm172, 0.0
      %180 = vst.msk [vmem:[#allocation2 + $0x38] sm:$0xff] %vm172, 0.0
      %181 = vst.msk [vmem:[#allocation2 + $0x40] sm:$0xff] %vm172, 0.0
      %182 = vst.msk [vmem:[#allocation2 + $0x48] sm:$0xff] %vm172, 0.0
      %183 = vst.msk [vmem:[#allocation2 + $0x50] sm:$0xff] %vm172, 0.0
      %184 = vst.msk [vmem:[#allocation2 + $0x58] sm:$0xff] %vm172, 0.0
      %185 = vst.msk [vmem:[#allocation2 + $0x60] sm:$0xff] %vm172, 0.0
      %186 = vst.msk [vmem:[#allocation2 + $0x68] sm:$0xff] %vm172, 0.0
      %187 = vst.msk [vmem:[#allocation2 + $0x70] sm:$0xff] %vm172, 0.0
      %188 = vst.msk [vmem:[#allocation2 + $0x78] sm:$0xff] %vm172, 0.0
      %189 = vst.msk [vmem:[#allocation2 + $0x80] sm:$0xff] %vm172, 0.0
      %190 = vst.msk [vmem:[#allocation2 + $0x88] sm:$0xff] %vm172, 0.0
      %191 = vst.msk [vmem:[#allocation2 + $0x90] sm:$0xff] %vm172, 0.0
      %192 = vst.msk [vmem:[#allocation2 + $0x98] sm:$0xff] %vm172, 0.0
      %193 = vst.msk [vmem:[#allocation2 + $0xa0] sm:$0xff] %vm172, 0.0
      %194 = vst.msk [vmem:[#allocation2 + $0xa8] sm:$0xff] %vm172, 0.0
      %195 = vst.msk [vmem:[#allocation2 + $0xb0] sm:$0xff] %vm172, 0.0
      %196 = vst.msk [vmem:[#allocation2 + $0xb8] sm:$0xff] %vm172, 0.0
      %197 = vst.msk [vmem:[#allocation2 + $0xc0] sm:$0xff] %vm172, 0.0
      %198 = vst.msk [vmem:[#allocation2 + $0xc8] sm:$0xff] %vm172, 0.0
      %199 = vst.msk [vmem:[#allocation2 + $0xd0] sm:$0xff] %vm172, 0.0
      %200 = vst.msk [vmem:[#allocation2 + $0xd8] sm:$0xff] %vm172, 0.0
      %201 = vst.msk [vmem:[#allocation2 + $0xe0] sm:$0xff] %vm172, 0.0
      %202 = vst.msk [vmem:[#allocation2 + $0xe8] sm:$0xff] %vm172, 0.0
      %203 = vst.msk [vmem:[#allocation2 + $0xf0] sm:$0xff] %vm172, 0.0
      %204 = vst.msk [vmem:[#allocation2 + $0xf8] sm:$0xff] %vm172, 0.0
      %205 = vst.msk [vmem:[#allocation2 + $0x100] sm:$0xff] %vm172, 0.0
      %206 = vst.msk [vmem:[#allocation2 + $0x108] sm:$0xff] %vm172, 0.0
      %207 = vst.msk [vmem:[#allocation2 + $0x110] sm:$0xff] %vm172, 0.0
      %208 = vst.msk [vmem:[#allocation2 + $0x118] sm:$0xff] %vm172, 0.0
      %vm209 = vcmask 17408
      %210 = vst.msk [vmem:[#allocation2 + $0x120] sm:$0x3] %vm209, 0.0
      %v211 = vld [vmem:[%s165] sm:$0xff]
      %v212 = vld [vmem:[%s165 + $0x8] sm:$0xff]
      %v213 = vld [vmem:[%s165 + $0x10] sm:$0xff]
      %v214 = vld [vmem:[%s165 + $0x18] sm:$0xff]
      %v215 = vld [vmem:[%s165 + $0x20] sm:$0xff]
      %v216 = vld [vmem:[%s165 + $0x28] sm:$0xff]
      %v217 = vld [vmem:[%s165 + $0x30] sm:$0xff]
      %v218 = vld [vmem:[%s165 + $0x38] sm:$0xff]
      %v219 = vld [vmem:[%s165 + $0x40] sm:$0xff]
      %v220 = vld [vmem:[%s165 + $0x48] sm:$0xff]
      %v221 = vld [vmem:[%s165 + $0x50] sm:$0xff]
      %v222 = vld [vmem:[%s165 + $0x58] sm:$0xff]
      %v223 = vld [vmem:[%s165 + $0x60] sm:$0xff]
      %v224 = vld [vmem:[%s165 + $0x68] sm:$0xff]
      %v225 = vld [vmem:[%s165 + $0x70] sm:$0xff]
      %v226 = vld [vmem:[%s165 + $0x78] sm:$0xff]
      %v227 = vld [vmem:[%s165 + $0x80] sm:$0xff]
      %v228 = vld [vmem:[%s165 + $0x88] sm:$0xff]
      %v229 = vld [vmem:[%s165 + $0x90] sm:$0xff]
      %v230 = vld [vmem:[%s165 + $0x98] sm:$0xff]
      %v231 = vld [vmem:[%s165 + $0xa0] sm:$0xff]
      %v232 = vld [vmem:[%s165 + $0xa8] sm:$0xff]
      %v233 = vld [vmem:[%s165 + $0xb0] sm:$0xff]
      %v234 = vld [vmem:[%s165 + $0xb8] sm:$0xff]
      %v235 = vld [vmem:[%s165 + $0xc0] sm:$0xff]
      %v236 = vld [vmem:[%s165 + $0xc8] sm:$0xff]
      %v237 = vld [vmem:[%s165 + $0xd0] sm:$0xff]
      %v238 = vld [vmem:[%s165 + $0xd8] sm:$0xff]
      %v239 = vld [vmem:[%s165 + $0xe0] sm:$0xff]
      %v240 = vld [vmem:[%s165 + $0xe8] sm:$0xff]
      %v241 = vld [vmem:[%s165 + $0xf0] sm:$0xff]
      %v242 = vld [vmem:[%s165 + $0xf8] sm:$0xff]
      %243 = vst.msk [vmem:[#allocation2 + $0x11] sm:$0xff] %vm172, %v211
      %244 = vst.msk [vmem:[#allocation2 + $0x19] sm:$0xff] %vm172, %v212
      %245 = vst.msk [vmem:[#allocation2 + $0x21] sm:$0xff] %vm172, %v213
      %246 = vst.msk [vmem:[#allocation2 + $0x29] sm:$0xff] %vm172, %v214
      %247 = vst.msk [vmem:[#allocation2 + $0x31] sm:$0xff] %vm172, %v215
      %248 = vst.msk [vmem:[#allocation2 + $0x39] sm:$0xff] %vm172, %v216
      %249 = vst.msk [vmem:[#allocation2 + $0x41] sm:$0xff] %vm172, %v217
      %250 = vst.msk [vmem:[#allocation2 + $0x49] sm:$0xff] %vm172, %v218
      %251 = vst.msk [vmem:[#allocation2 + $0x51] sm:$0xff] %vm172, %v219
      %252 = vst.msk [vmem:[#allocation2 + $0x59] sm:$0xff] %vm172, %v220
      %253 = vst.msk [vmem:[#allocation2 + $0x61] sm:$0xff] %vm172, %v221
      %254 = vst.msk [vmem:[#allocation2 + $0x69] sm:$0xff] %vm172, %v222
      %255 = vst.msk [vmem:[#allocation2 + $0x71] sm:$0xff] %vm172, %v223
      %256 = vst.msk [vmem:[#allocation2 + $0x79] sm:$0xff] %vm172, %v224
      %257 = vst.msk [vmem:[#allocation2 + $0x81] sm:$0xff] %vm172, %v225
      %258 = vst.msk [vmem:[#allocation2 + $0x89] sm:$0xff] %vm172, %v226
      %259 = vst.msk [vmem:[#allocation2 + $0x91] sm:$0xff] %vm172, %v227
      %260 = vst.msk [vmem:[#allocation2 + $0x99] sm:$0xff] %vm172, %v228
      %261 = vst.msk [vmem:[#allocation2 + $0xa1] sm:$0xff] %vm172, %v229
      %262 = vst.msk [vmem:[#allocation2 + $0xa9] sm:$0xff] %vm172, %v230
      %263 = vst.msk [vmem:[#allocation2 + $0xb1] sm:$0xff] %vm172, %v231
      %264 = vst.msk [vmem:[#allocation2 + $0xb9] sm:$0xff] %vm172, %v232
      %265 = vst.msk [vmem:[#allocation2 + $0xc1] sm:$0xff] %vm172, %v233
      %266 = vst.msk [vmem:[#allocation2 + $0xc9] sm:$0xff] %vm172, %v234
      %267 = vst.msk [vmem:[#allocation2 + $0xd1] sm:$0xff] %vm172, %v235
      %268 = vst.msk [vmem:[#allocation2 + $0xd9] sm:$0xff] %vm172, %v236
      %269 = vst.msk [vmem:[#allocation2 + $0xe1] sm:$0xff] %vm172, %v237
      %270 = vst.msk [vmem:[#allocation2 + $0xe9] sm:$0xff] %vm172, %v238
      %271 = vst.msk [vmem:[#allocation2 + $0xf1] sm:$0xff] %vm172, %v239
      %272 = vst.msk [vmem:[#allocation2 + $0xf9] sm:$0xff] %vm172, %v240
      %273 = vst.msk [vmem:[#allocation2 + $0x101] sm:$0xff] %vm172, %v241
      %274 = vst.msk [vmem:[#allocation2 + $0x109] sm:$0xff] %vm172, %v242
      %v275 = vlaneseq
      %v276 = vshrl.u32 %v275, 7
      %v277 = vadd.s32 %v276, 8
      %v278 = vadd.s32 %v276, 16
      %v279 = vadd.s32 %v276, 24
      %v280 = vadd.s32 %v276, 32
      %v281 = vadd.s32 %v276, 40
      %v282 = vadd.s32 %v276, 48
      %v283 = vadd.s32 %v276, 56
      %v284 = vadd.s32 %v276, 64
      %v285 = vadd.s32 %v276, 72
      %v286 = vadd.s32 %v276, 80
      %v287 = vadd.s32 %v276, 88
      %v288 = vadd.s32 %v276, 96
      %v289 = vadd.s32 %v276, 104
      %v290 = vadd.s32 %v276, 112
      %v291 = vadd.s32 %v276, 120
      %v292 = vadd.s32 %v276, 128
      %v293 = vadd.s32 %v276, 136
      %v294 = vadd.s32 %v276, 144
      %v295 = vadd.s32 %v276, 152
      %v296 = vadd.s32 %v276, 160
      %v297 = vadd.s32 %v276, 168
      %v298 = vadd.s32 %v276, 176
      %v299 = vadd.s32 %v276, 184
      %v300 = vadd.s32 %v276, 192
      %v301 = vadd.s32 %v276, 200
      %v302 = vadd.s32 %v276, 208
      %v303 = vadd.s32 %v276, 216
      %v304 = vadd.s32 %v276, 224
      %v305 = vadd.s32 %v276, 232
      %v306 = vadd.s32 %v276, 240
      %v307 = vadd.s32 %v276, 248
      %vm308 = vcmp.lt.s32.totalorder %v276, 0
      %v309 = vsub.s32 0, %v276
      %v310 = vsel %vm308, %v309, %v276
      %v311 = vshrl.u32 %v310, 4
      %v312 = vand.u32 %v310, 15
      %v313 = vsub.s32 0, %v312
      %v314 = vsel %vm308, %v313, %v312
      %vm315 = vcmp.lt.s32.totalorder %v277, 0
      %v316 = vsub.s32 0, %v277
      %v317 = vsel %vm315, %v316, %v277
      %v318 = vshrl.u32 %v317, 4
      %v319 = vand.u32 %v317, 15
      %v320 = vsub.s32 0, %v319
      %v321 = vsel %vm315, %v320, %v319
      %vm322 = vcmp.lt.s32.totalorder %v278, 0
      %v323 = vsub.s32 0, %v278
      %v324 = vsel %vm322, %v323, %v278
      %v325 = vshrl.u32 %v324, 4
      %v326 = vand.u32 %v324, 15
      %v327 = vsub.s32 0, %v326
      %v328 = vsel %vm322, %v327, %v326
      %vm329 = vcmp.lt.s32.totalorder %v279, 0
      %v330 = vsub.s32 0, %v279
      %v331 = vsel %vm329, %v330, %v279
      %v332 = vshrl.u32 %v331, 4
      %v333 = vand.u32 %v331, 15
      %v334 = vsub.s32 0, %v333
      %v335 = vsel %vm329, %v334, %v333
      %vm336 = vcmp.lt.s32.totalorder %v280, 0
      %v337 = vsub.s32 0, %v280
      %v338 = vsel %vm336, %v337, %v280
      %v339 = vshrl.u32 %v338, 4
      %v340 = vand.u32 %v338, 15
      %v341 = vsub.s32 0, %v340
      %v342 = vsel %vm336, %v341, %v340
      %vm343 = vcmp.lt.s32.totalorder %v281, 0
      %v344 = vsub.s32 0, %v281
      %v345 = vsel %vm343, %v344, %v281
      %v346 = vshrl.u32 %v345, 4
      %v347 = vand.u32 %v345, 15
      %v348 = vsub.s32 0, %v347
      %v349 = vsel %vm343, %v348, %v347
      %vm350 = vcmp.lt.s32.totalorder %v282, 0
      %v351 = vsub.s32 0, %v282
      %v352 = vsel %vm350, %v351, %v282
      %v353 = vshrl.u32 %v352, 4
      %v354 = vand.u32 %v352, 15
      %v355 = vsub.s32 0, %v354
      %v356 = vsel %vm350, %v355, %v354
      %vm357 = vcmp.lt.s32.totalorder %v283, 0
      %v358 = vsub.s32 0, %v283
      %v359 = vsel %vm357, %v358, %v283
      %v360 = vshrl.u32 %v359, 4
      %v361 = vand.u32 %v359, 15
      %v362 = vsub.s32 0, %v361
      %v363 = vsel %vm357, %v362, %v361
      %vm364 = vcmp.lt.s32.totalorder %v284, 0
      %v365 = vsub.s32 0, %v284
      %v366 = vsel %vm364, %v365, %v284
      %v367 = vshrl.u32 %v366, 4
      %v368 = vand.u32 %v366, 15
      %v369 = vsub.s32 0, %v368
      %v370 = vsel %vm364, %v369, %v368
      %vm371 = vcmp.lt.s32.totalorder %v285, 0
      %v372 = vsub.s32 0, %v285
      %v373 = vsel %vm371, %v372, %v285
      %v374 = vshrl.u32 %v373, 4
      %v375 = vand.u32 %v373, 15
      %v376 = vsub.s32 0, %v375
      %v377 = vsel %vm371, %v376, %v375
      %vm378 = vcmp.lt.s32.totalorder %v286, 0
      %v379 = vsub.s32 0, %v286
      %v380 = vsel %vm378, %v379, %v286
      %v381 = vshrl.u32 %v380, 4
      %v382 = vand.u32 %v380, 15
      %v383 = vsub.s32 0, %v382
      %v384 = vsel %vm378, %v383, %v382
      %vm385 = vcmp.lt.s32.totalorder %v287, 0
      %v386 = vsub.s32 0, %v287
      %v387 = vsel %vm385, %v386, %v287
      %v388 = vshrl.u32 %v387, 4
      %v389 = vand.u32 %v387, 15
      %v390 = vsub.s32 0, %v389
      %v391 = vsel %vm385, %v390, %v389
      %vm392 = vcmp.lt.s32.totalorder %v288, 0
      %v393 = vsub.s32 0, %v288
      %v394 = vsel %vm392, %v393, %v288
      %v395 = vshrl.u32 %v394, 4
      %v396 = vand.u32 %v394, 15
      %v397 = vsub.s32 0, %v396
      %v398 = vsel %vm392, %v397, %v396
      %vm399 = vcmp.lt.s32.totalorder %v289, 0
      %v400 = vsub.s32 0, %v289
      %v401 = vsel %vm399, %v400, %v289
      %v402 = vshrl.u32 %v401, 4
      %v403 = vand.u32 %v401, 15
      %v404 = vsub.s32 0, %v403
      %v405 = vsel %vm399, %v404, %v403
      %vm406 = vcmp.lt.s32.totalorder %v290, 0
      %v407 = vsub.s32 0, %v290
      %v408 = vsel %vm406, %v407, %v290
      %v409 = vshrl.u32 %v408, 4
      %v410 = vand.u32 %v408, 15
      %v411 = vsub.s32 0, %v410
      %v412 = vsel %vm406, %v411, %v410
      %vm413 = vcmp.lt.s32.totalorder %v291, 0
      %v414 = vsub.s32 0, %v291
      %v415 = vsel %vm413, %v414, %v291
      %v416 = vshrl.u32 %v415, 4
      %v417 = vand.u32 %v415, 15
      %v418 = vsub.s32 0, %v417
      %v419 = vsel %vm413, %v418, %v417
      %vm420 = vcmp.lt.s32.totalorder %v292, 0
      %v421 = vsub.s32 0, %v292
      %v422 = vsel %vm420, %v421, %v292
      %v423 = vshrl.u32 %v422, 4
      %v424 = vand.u32 %v422, 15
      %v425 = vsub.s32 0, %v424
      %v426 = vsel %vm420, %v425, %v424
      %vm427 = vcmp.lt.s32.totalorder %v293, 0
      %v428 = vsub.s32 0, %v293
      %v429 = vsel %vm427, %v428, %v293
      %v430 = vshrl.u32 %v429, 4
      %v431 = vand.u32 %v429, 15
      %v432 = vsub.s32 0, %v431
      %v433 = vsel %vm427, %v432, %v431
      %vm434 = vcmp.lt.s32.totalorder %v294, 0
      %v435 = vsub.s32 0, %v294
      %v436 = vsel %vm434, %v435, %v294
      %v437 = vshrl.u32 %v436, 4
      %v438 = vand.u32 %v436, 15
      %v439 = vsub.s32 0, %v438
      %v440 = vsel %vm434, %v439, %v438
      %vm441 = vcmp.lt.s32.totalorder %v295, 0
      %v442 = vsub.s32 0, %v295
      %v443 = vsel %vm441, %v442, %v295
      %v444 = vshrl.u32 %v443, 4
      %v445 = vand.u32 %v443, 15
      %v446 = vsub.s32 0, %v445
      %v447 = vsel %vm441, %v446, %v445
      %vm448 = vcmp.lt.s32.totalorder %v296, 0
      %v449 = vsub.s32 0, %v296
      %v450 = vsel %vm448, %v449, %v296
      %v451 = vshrl.u32 %v450, 4
      %v452 = vand.u32 %v450, 15
      %v453 = vsub.s32 0, %v452
      %v454 = vsel %vm448, %v453, %v452
      %vm455 = vcmp.lt.s32.totalorder %v297, 0
      %v456 = vsub.s32 0, %v297
      %v457 = vsel %vm455, %v456, %v297
      %v458 = vshrl.u32 %v457, 4
      %v459 = vand.u32 %v457, 15
      %v460 = vsub.s32 0, %v459
      %v461 = vsel %vm455, %v460, %v459
      %vm462 = vcmp.lt.s32.totalorder %v298, 0
      %v463 = vsub.s32 0, %v298
      %v464 = vsel %vm462, %v463, %v298
      %v465 = vshrl.u32 %v464, 4
      %v466 = vand.u32 %v464, 15
      %v467 = vsub.s32 0, %v466
      %v468 = vsel %vm462, %v467, %v466
      %vm469 = vcmp.lt.s32.totalorder %v299, 0
      %v470 = vsub.s32 0, %v299
      %v471 = vsel %vm469, %v470, %v299
      %v472 = vshrl.u32 %v471, 4
      %v473 = vand.u32 %v471, 15
      %v474 = vsub.s32 0, %v473
      %v475 = vsel %vm469, %v474, %v473
      %vm476 = vcmp.lt.s32.totalorder %v300, 0
      %v477 = vsub.s32 0, %v300
      %v478 = vsel %vm476, %v477, %v300
      %v479 = vshrl.u32 %v478, 4
      %v480 = vand.u32 %v478, 15
      %v481 = vsub.s32 0, %v480
      %v482 = vsel %vm476, %v481, %v480
      %vm483 = vcmp.lt.s32.totalorder %v301, 0
      %v484 = vsub.s32 0, %v301
      %v485 = vsel %vm483, %v484, %v301
      %v486 = vshrl.u32 %v485, 4
      %v487 = vand.u32 %v485, 15
      %v488 = vsub.s32 0, %v487
      %v489 = vsel %vm483, %v488, %v487
      %vm490 = vcmp.lt.s32.totalorder %v302, 0
      %v491 = vsub.s32 0, %v302
      %v492 = vsel %vm490, %v491, %v302
      %v493 = vshrl.u32 %v492, 4
      %v494 = vand.u32 %v492, 15
      %v495 = vsub.s32 0, %v494
      %v496 = vsel %vm490, %v495, %v494
      %vm497 = vcmp.lt.s32.totalorder %v303, 0
      %v498 = vsub.s32 0, %v303
      %v499 = vsel %vm497, %v498, %v303
      %v500 = vshrl.u32 %v499, 4
      %v501 = vand.u32 %v499, 15
      %v502 = vsub.s32 0, %v501
      %v503 = vsel %vm497, %v502, %v501
      %vm504 = vcmp.lt.s32.totalorder %v304, 0
      %v505 = vsub.s32 0, %v304
      %v506 = vsel %vm504, %v505, %v304
      %v507 = vshrl.u32 %v506, 4
      %v508 = vand.u32 %v506, 15
      %v509 = vsub.s32 0, %v508
      %v510 = vsel %vm504, %v509, %v508
      %vm511 = vcmp.lt.s32.totalorder %v305, 0
      %v512 = vsub.s32 0, %v305
      %v513 = vsel %vm511, %v512, %v305
      %v514 = vshrl.u32 %v513, 4
      %v515 = vand.u32 %v513, 15
      %v516 = vsub.s32 0, %v515
      %v517 = vsel %vm511, %v516, %v515
      %vm518 = vcmp.lt.s32.totalorder %v306, 0
      %v519 = vsub.s32 0, %v306
      %v520 = vsel %vm518, %v519, %v306
      %v521 = vshrl.u32 %v520, 4
      %v522 = vand.u32 %v520, 15
      %v523 = vsub.s32 0, %v522
      %v524 = vsel %vm518, %v523, %v522
      %vm525 = vcmp.lt.s32.totalorder %v307, 0
      %v526 = vsub.s32 0, %v307
      %v527 = vsel %vm525, %v526, %v307
      %v528 = vshrl.u32 %v527, 4
      %v529 = vand.u32 %v527, 15
      %v530 = vsub.s32 0, %v529
      %v531 = vsel %vm525, %v530, %v529
      %vm532 = vcmp.ne.s32.totalorder %v314, 0
      %vm533 = vcmp.ne.s32.totalorder %v321, 0
      %vm534 = vcmp.ne.s32.totalorder %v328, 0
      %vm535 = vcmp.ne.s32.totalorder %v335, 0
      %vm536 = vcmp.ne.s32.totalorder %v342, 0
      %vm537 = vcmp.ne.s32.totalorder %v349, 0
      %vm538 = vcmp.ne.s32.totalorder %v356, 0
      %vm539 = vcmp.ne.s32.totalorder %v363, 0
      %vm540 = vcmp.ne.s32.totalorder %v370, 0
      %vm541 = vcmp.ne.s32.totalorder %v377, 0
      %vm542 = vcmp.ne.s32.totalorder %v384, 0
      %vm543 = vcmp.ne.s32.totalorder %v391, 0
      %vm544 = vcmp.ne.s32.totalorder %v398, 0
      %vm545 = vcmp.ne.s32.totalorder %v405, 0
      %vm546 = vcmp.ne.s32.totalorder %v412, 0
      %vm547 = vcmp.ne.s32.totalorder %v419, 0
      %vm548 = vcmp.ne.s32.totalorder %v426, 0
      %vm549 = vcmp.ne.s32.totalorder %v433, 0
      %vm550 = vcmp.ne.s32.totalorder %v440, 0
      %vm551 = vcmp.ne.s32.totalorder %v447, 0
      %vm552 = vcmp.ne.s32.totalorder %v454, 0
      %vm553 = vcmp.ne.s32.totalorder %v461, 0
      %vm554 = vcmp.ne.s32.totalorder %v468, 0
      %vm555 = vcmp.ne.s32.totalorder %v475, 0
      %vm556 = vcmp.ne.s32.totalorder %v482, 0
      %vm557 = vcmp.ne.s32.totalorder %v489, 0
      %vm558 = vcmp.ne.s32.totalorder %v496, 0
      %vm559 = vcmp.ne.s32.totalorder %v503, 0
      %vm560 = vcmp.ne.s32.totalorder %v510, 0
      %vm561 = vcmp.ne.s32.totalorder %v517, 0
      %vm562 = vcmp.ne.s32.totalorder %v524, 0
      %vm563 = vcmp.ne.s32.totalorder %v531, 0
      %vm564 = vcmp.lt.s32.totalorder %v314, 0
      %vm565 = vcmp.lt.s32.totalorder %v321, 0
      %vm566 = vcmp.lt.s32.totalorder %v328, 0
      %vm567 = vcmp.lt.s32.totalorder %v335, 0
      %vm568 = vcmp.lt.s32.totalorder %v342, 0
      %vm569 = vcmp.lt.s32.totalorder %v349, 0
      %vm570 = vcmp.lt.s32.totalorder %v356, 0
      %vm571 = vcmp.lt.s32.totalorder %v363, 0
      %vm572 = vcmp.lt.s32.totalorder %v370, 0
      %vm573 = vcmp.lt.s32.totalorder %v377, 0
      %vm574 = vcmp.lt.s32.totalorder %v384, 0
      %vm575 = vcmp.lt.s32.totalorder %v391, 0
      %vm576 = vcmp.lt.s32.totalorder %v398, 0
      %vm577 = vcmp.lt.s32.totalorder %v405, 0
      %vm578 = vcmp.lt.s32.totalorder %v412, 0
      %vm579 = vcmp.lt.s32.totalorder %v419, 0
      %vm580 = vcmp.lt.s32.totalorder %v426, 0
      %vm581 = vcmp.lt.s32.totalorder %v433, 0
      %vm582 = vcmp.lt.s32.totalorder %v440, 0
      %vm583 = vcmp.lt.s32.totalorder %v447, 0
      %vm584 = vcmp.lt.s32.totalorder %v454, 0
      %vm585 = vcmp.lt.s32.totalorder %v461, 0
      %vm586 = vcmp.lt.s32.totalorder %v468, 0
      %vm587 = vcmp.lt.s32.totalorder %v475, 0
      %vm588 = vcmp.lt.s32.totalorder %v482, 0
      %vm589 = vcmp.lt.s32.totalorder %v489, 0
      %vm590 = vcmp.lt.s32.totalorder %v496, 0
      %vm591 = vcmp.lt.s32.totalorder %v503, 0
      %vm592 = vcmp.lt.s32.totalorder %v510, 0
      %vm593 = vcmp.lt.s32.totalorder %v517, 0
      %vm594 = vcmp.lt.s32.totalorder %v524, 0
      %vm595 = vcmp.lt.s32.totalorder %v531, 0
      %vm596 = vmand %vm564, %vm532
      %vm597 = vmand %vm565, %vm533
      %vm598 = vmand %vm566, %vm534
      %vm599 = vmand %vm567, %vm535
      %vm600 = vmand %vm568, %vm536
      %vm601 = vmand %vm569, %vm537
      %vm602 = vmand %vm570, %vm538
      %vm603 = vmand %vm571, %vm539
      %vm604 = vmand %vm572, %vm540
      %vm605 = vmand %vm573, %vm541
      %vm606 = vmand %vm574, %vm542
      %vm607 = vmand %vm575, %vm543
      %vm608 = vmand %vm576, %vm544
      %vm609 = vmand %vm577, %vm545
      %vm610 = vmand %vm578, %vm546
      %vm611 = vmand %vm579, %vm547
      %vm612 = vmand %vm580, %vm548
      %vm613 = vmand %vm581, %vm549
      %vm614 = vmand %vm582, %vm550
      %vm615 = vmand %vm583, %vm551
      %vm616 = vmand %vm584, %vm552
      %vm617 = vmand %vm585, %vm553
      %vm618 = vmand %vm586, %vm554
      %vm619 = vmand %vm587, %vm555
      %vm620 = vmand %vm588, %vm556
      %vm621 = vmand %vm589, %vm557
      %vm622 = vmand %vm590, %vm558
      %vm623 = vmand %vm591, %vm559
      %vm624 = vmand %vm592, %vm560
      %vm625 = vmand %vm593, %vm561
      %vm626 = vmand %vm594, %vm562
      %vm627 = vmand %vm595, %vm563
      %v628 = vadd.s32 %v314, 16
      %v629 = vadd.s32 %v321, 16
      %v630 = vadd.s32 %v328, 16
      %v631 = vadd.s32 %v335, 16
      %v632 = vadd.s32 %v342, 16
      %v633 = vadd.s32 %v349, 16
      %v634 = vadd.s32 %v356, 16
      %v635 = vadd.s32 %v363, 16
      %v636 = vadd.s32 %v370, 16
      %v637 = vadd.s32 %v377, 16
      %v638 = vadd.s32 %v384, 16
      %v639 = vadd.s32 %v391, 16
      %v640 = vadd.s32 %v398, 16
      %v641 = vadd.s32 %v405, 16
      %v642 = vadd.s32 %v412, 16
      %v643 = vadd.s32 %v419, 16
      %v644 = vadd.s32 %v426, 16
      %v645 = vadd.s32 %v433, 16
      %v646 = vadd.s32 %v440, 16
      %v647 = vadd.s32 %v447, 16
      %v648 = vadd.s32 %v454, 16
      %v649 = vadd.s32 %v461, 16
      %v650 = vadd.s32 %v468, 16
      %v651 = vadd.s32 %v475, 16
      %v652 = vadd.s32 %v482, 16
      %v653 = vadd.s32 %v489, 16
      %v654 = vadd.s32 %v496, 16
      %v655 = vadd.s32 %v503, 16
      %v656 = vadd.s32 %v510, 16
      %v657 = vadd.s32 %v517, 16
      %v658 = vadd.s32 %v524, 16
      %v659 = vadd.s32 %v531, 16
      %v660 = vsel %vm596, %v628, %v314
      %v661 = vsel %vm597, %v629, %v321
      %v662 = vsel %vm598, %v630, %v328
      %v663 = vsel %vm599, %v631, %v335
      %v664 = vsel %vm600, %v632, %v342
      %v665 = vsel %vm601, %v633, %v349
      %v666 = vsel %vm602, %v634, %v356
      %v667 = vsel %vm603, %v635, %v363
      %v668 = vsel %vm604, %v636, %v370
      %v669 = vsel %vm605, %v637, %v377
      %v670 = vsel %vm606, %v638, %v384
      %v671 = vsel %vm607, %v639, %v391
      %v672 = vsel %vm608, %v640, %v398
      %v673 = vsel %vm609, %v641, %v405
      %v674 = vsel %vm610, %v642, %v412
      %v675 = vsel %vm611, %v643, %v419
      %v676 = vsel %vm612, %v644, %v426
      %v677 = vsel %vm613, %v645, %v433
      %v678 = vsel %vm614, %v646, %v440
      %v679 = vsel %vm615, %v647, %v447
      %v680 = vsel %vm616, %v648, %v454
      %v681 = vsel %vm617, %v649, %v461
      %v682 = vsel %vm618, %v650, %v468
      %v683 = vsel %vm619, %v651, %v475
      %v684 = vsel %vm620, %v652, %v482
      %v685 = vsel %vm621, %v653, %v489
      %v686 = vsel %vm622, %v654, %v496
      %v687 = vsel %vm623, %v655, %v503
      %v688 = vsel %vm624, %v656, %v510
      %v689 = vsel %vm625, %v657, %v517
      %v690 = vsel %vm626, %v658, %v524
      %v691 = vsel %vm627, %v659, %v531
      %vm692 = vcmp.ge.s32.totalorder %v660, 1
      %vm693 = vcmp.ge.s32.totalorder %v661, 1
      %vm694 = vcmp.ge.s32.totalorder %v662, 1
      %vm695 = vcmp.ge.s32.totalorder %v663, 1
      %vm696 = vcmp.ge.s32.totalorder %v664, 1
      %vm697 = vcmp.ge.s32.totalorder %v665, 1
      %vm698 = vcmp.ge.s32.totalorder %v666, 1
      %vm699 = vcmp.ge.s32.totalorder %v667, 1
      %vm700 = vcmp.ge.s32.totalorder %v668, 1
      %vm701 = vcmp.ge.s32.totalorder %v669, 1
      %vm702 = vcmp.ge.s32.totalorder %v670, 1
      %vm703 = vcmp.ge.s32.totalorder %v671, 1
      %vm704 = vcmp.ge.s32.totalorder %v672, 1
      %vm705 = vcmp.ge.s32.totalorder %v673, 1
      %vm706 = vcmp.ge.s32.totalorder %v674, 1
      %vm707 = vcmp.ge.s32.totalorder %v675, 1
      %vm708 = vcmp.ge.s32.totalorder %v676, 1
      %vm709 = vcmp.ge.s32.totalorder %v677, 1
      %vm710 = vcmp.ge.s32.totalorder %v678, 1
      %vm711 = vcmp.ge.s32.totalorder %v679, 1
      %vm712 = vcmp.ge.s32.totalorder %v680, 1
      %vm713 = vcmp.ge.s32.totalorder %v681, 1
      %vm714 = vcmp.ge.s32.totalorder %v682, 1
      %vm715 = vcmp.ge.s32.totalorder %v683, 1
      %vm716 = vcmp.ge.s32.totalorder %v684, 1
      %vm717 = vcmp.ge.s32.totalorder %v685, 1
      %vm718 = vcmp.ge.s32.totalorder %v686, 1
      %vm719 = vcmp.ge.s32.totalorder %v687, 1
      %vm720 = vcmp.ge.s32.totalorder %v688, 1
      %vm721 = vcmp.ge.s32.totalorder %v689, 1
      %vm722 = vcmp.ge.s32.totalorder %v690, 1
      %vm723 = vcmp.ge.s32.totalorder %v691, 1
      %vm724 = vcmp.le.s32.totalorder %v660, 14
      %vm725 = vcmp.le.s32.totalorder %v661, 14
      %vm726 = vcmp.le.s32.totalorder %v662, 14
      %vm727 = vcmp.le.s32.totalorder %v663, 14
      %vm728 = vcmp.le.s32.totalorder %v664, 14
      %vm729 = vcmp.le.s32.totalorder %v665, 14
      %vm730 = vcmp.le.s32.totalorder %v666, 14
      %vm731 = vcmp.le.s32.totalorder %v667, 14
      %vm732 = vcmp.le.s32.totalorder %v668, 14
      %vm733 = vcmp.le.s32.totalorder %v669, 14
      %vm734 = vcmp.le.s32.totalorder %v670, 14
      %vm735 = vcmp.le.s32.totalorder %v671, 14
      %vm736 = vcmp.le.s32.totalorder %v672, 14
      %vm737 = vcmp.le.s32.totalorder %v673, 14
      %vm738 = vcmp.le.s32.totalorder %v674, 14
      %vm739 = vcmp.le.s32.totalorder %v675, 14
      %vm740 = vcmp.le.s32.totalorder %v676, 14
      %vm741 = vcmp.le.s32.totalorder %v677, 14
      %vm742 = vcmp.le.s32.totalorder %v678, 14
      %vm743 = vcmp.le.s32.totalorder %v679, 14
      %vm744 = vcmp.le.s32.totalorder %v680, 14
      %vm745 = vcmp.le.s32.totalorder %v681, 14
      %vm746 = vcmp.le.s32.totalorder %v682, 14
      %vm747 = vcmp.le.s32.totalorder %v683, 14
      %vm748 = vcmp.le.s32.totalorder %v684, 14
      %vm749 = vcmp.le.s32.totalorder %v685, 14
      %vm750 = vcmp.le.s32.totalorder %v686, 14
      %vm751 = vcmp.le.s32.totalorder %v687, 14
      %vm752 = vcmp.le.s32.totalorder %v688, 14
      %vm753 = vcmp.le.s32.totalorder %v689, 14
      %vm754 = vcmp.le.s32.totalorder %v690, 14
      %vm755 = vcmp.le.s32.totalorder %v691, 14
      %v756 = vld [vmem:[#allocation2] sm:$0xff]
      %v757 = vld [vmem:[#allocation2 + $0x8] sm:$0xff]
      %v758 = vld [vmem:[#allocation2 + $0x10] sm:$0xff]
      %v759 = vld [vmem:[#allocation2 + $0x18] sm:$0xff]
      %v760 = vld [vmem:[#allocation2 + $0x20] sm:$0xff]
      %v761 = vld [vmem:[#allocation2 + $0x28] sm:$0xff]
      %v762 = vld [vmem:[#allocation2 + $0x30] sm:$0xff]
      %v763 = vld [vmem:[#allocation2 + $0x38] sm:$0xff]
      %v764 = vld [vmem:[#allocation2 + $0x40] sm:$0xff]
      %v765 = vld [vmem:[#allocation2 + $0x48] sm:$0xff]
      %v766 = vld [vmem:[#allocation2 + $0x50] sm:$0xff]
      %v767 = vld [vmem:[#allocation2 + $0x58] sm:$0xff]
      %v768 = vld [vmem:[#allocation2 + $0x60] sm:$0xff]
      %v769 = vld [vmem:[#allocation2 + $0x68] sm:$0xff]
      %v770 = vld [vmem:[#allocation2 + $0x70] sm:$0xff]
      %v771 = vld [vmem:[#allocation2 + $0x78] sm:$0xff]
      %v772 = vld [vmem:[#allocation2 + $0x80] sm:$0xff]
      %v773 = vld [vmem:[#allocation2 + $0x88] sm:$0xff]
      %v774 = vld [vmem:[#allocation2 + $0x90] sm:$0xff]
      %v775 = vld [vmem:[#allocation2 + $0x98] sm:$0xff]
      %v776 = vld [vmem:[#allocation2 + $0xa0] sm:$0xff]
      %v777 = vld [vmem:[#allocation2 + $0xa8] sm:$0xff]
      %v778 = vld [vmem:[#allocation2 + $0xb0] sm:$0xff]
      %v779 = vld [vmem:[#allocation2 + $0xb8] sm:$0xff]
      %v780 = vld [vmem:[#allocation2 + $0xc0] sm:$0xff]
      %v781 = vld [vmem:[#allocation2 + $0xc8] sm:$0xff]
      %v782 = vld [vmem:[#allocation2 + $0xd0] sm:$0xff]
      %v783 = vld [vmem:[#allocation2 + $0xd8] sm:$0xff]
      %v784 = vld [vmem:[#allocation2 + $0xe0] sm:$0xff]
      %v785 = vld [vmem:[#allocation2 + $0xe8] sm:$0xff]
      %v786 = vld [vmem:[#allocation2 + $0xf0] sm:$0xff]
      %v787 = vld [vmem:[#allocation2 + $0xf8] sm:$0xff]
      %v788 = vsel %vm692, 1, 0
      %v789 = vsel %vm693, 1, 0
      %v790 = vsel %vm694, 1, 0
      %v791 = vsel %vm695, 1, 0
      %v792 = vsel %vm696, 1, 0
      %v793 = vsel %vm697, 1, 0
      %v794 = vsel %vm698, 1, 0
      %v795 = vsel %vm699, 1, 0
      %v796 = vsel %vm700, 1, 0
      %v797 = vsel %vm701, 1, 0
      %v798 = vsel %vm702, 1, 0
      %v799 = vsel %vm703, 1, 0
      %v800 = vsel %vm704, 1, 0
      %v801 = vsel %vm705, 1, 0
      %v802 = vsel %vm706, 1, 0
      %v803 = vsel %vm707, 1, 0
      %v804 = vsel %vm708, 1, 0
      %v805 = vsel %vm709, 1, 0
      %v806 = vsel %vm710, 1, 0
      %v807 = vsel %vm711, 1, 0
      %v808 = vsel %vm712, 1, 0
      %v809 = vsel %vm713, 1, 0
      %v810 = vsel %vm714, 1, 0
      %v811 = vsel %vm715, 1, 0
      %v812 = vsel %vm716, 1, 0
      %v813 = vsel %vm717, 1, 0
      %v814 = vsel %vm718, 1, 0
      %v815 = vsel %vm719, 1, 0
      %v816 = vsel %vm720, 1, 0
      %v817 = vsel %vm721, 1, 0
      %v818 = vsel %vm722, 1, 0
      %v819 = vsel %vm723, 1, 0
      %vm820 = vcmp.eq.s32.totalorder %v788, 1
      %vm821 = vcmp.eq.s32.totalorder %v789, 1
      %vm822 = vcmp.eq.s32.totalorder %v790, 1
      %vm823 = vcmp.eq.s32.totalorder %v791, 1
      %vm824 = vcmp.eq.s32.totalorder %v792, 1
      %vm825 = vcmp.eq.s32.totalorder %v793, 1
      %vm826 = vcmp.eq.s32.totalorder %v794, 1
      %vm827 = vcmp.eq.s32.totalorder %v795, 1
      %vm828 = vcmp.eq.s32.totalorder %v796, 1
      %vm829 = vcmp.eq.s32.totalorder %v797, 1
      %vm830 = vcmp.eq.s32.totalorder %v798, 1
      %vm831 = vcmp.eq.s32.totalorder %v799, 1
      %vm832 = vcmp.eq.s32.totalorder %v800, 1
      %vm833 = vcmp.eq.s32.totalorder %v801, 1
      %vm834 = vcmp.eq.s32.totalorder %v802, 1
      %vm835 = vcmp.eq.s32.totalorder %v803, 1
      %vm836 = vcmp.eq.s32.totalorder %v804, 1
      %vm837 = vcmp.eq.s32.totalorder %v805, 1
      %vm838 = vcmp.eq.s32.totalorder %v806, 1
      %vm839 = vcmp.eq.s32.totalorder %v807, 1
      %vm840 = vcmp.eq.s32.totalorder %v808, 1
      %vm841 = vcmp.eq.s32.totalorder %v809, 1
      %vm842 = vcmp.eq.s32.totalorder %v810, 1
      %vm843 = vcmp.eq.s32.totalorder %v811, 1
      %vm844 = vcmp.eq.s32.totalorder %v812, 1
      %vm845 = vcmp.eq.s32.totalorder %v813, 1
      %vm846 = vcmp.eq.s32.totalorder %v814, 1
      %vm847 = vcmp.eq.s32.totalorder %v815, 1
      %vm848 = vcmp.eq.s32.totalorder %v816, 1
      %vm849 = vcmp.eq.s32.totalorder %v817, 1
      %vm850 = vcmp.eq.s32.totalorder %v818, 1
      %vm851 = vcmp.eq.s32.totalorder %v819, 1
      %v852 = vsel %vm820, %v756, 0.0
      %v853 = vsel %vm821, %v757, 0.0
      %v854 = vsel %vm822, %v758, 0.0
      %v855 = vsel %vm823, %v759, 0.0
      %v856 = vsel %vm824, %v760, 0.0
      %v857 = vsel %vm825, %v761, 0.0
      %v858 = vsel %vm826, %v762, 0.0
      %v859 = vsel %vm827, %v763, 0.0
      %v860 = vsel %vm828, %v764, 0.0
      %v861 = vsel %vm829, %v765, 0.0
      %v862 = vsel %vm830, %v766, 0.0
      %v863 = vsel %vm831, %v767, 0.0
      %v864 = vsel %vm832, %v768, 0.0
      %v865 = vsel %vm833, %v769, 0.0
      %v866 = vsel %vm834, %v770, 0.0
      %v867 = vsel %vm835, %v771, 0.0
      %v868 = vsel %vm836, %v772, 0.0
      %v869 = vsel %vm837, %v773, 0.0
      %v870 = vsel %vm838, %v774, 0.0
      %v871 = vsel %vm839, %v775, 0.0
      %v872 = vsel %vm840, %v776, 0.0
      %v873 = vsel %vm841, %v777, 0.0
      %v874 = vsel %vm842, %v778, 0.0
      %v875 = vsel %vm843, %v779, 0.0
      %v876 = vsel %vm844, %v780, 0.0
      %v877 = vsel %vm845, %v781, 0.0
      %v878 = vsel %vm846, %v782, 0.0
      %v879 = vsel %vm847, %v783, 0.0
      %v880 = vsel %vm848, %v784, 0.0
      %v881 = vsel %vm849, %v785, 0.0
      %v882 = vsel %vm850, %v786, 0.0
      %v883 = vsel %vm851, %v787, 0.0
      %v884 = vpack.c.bf16 %v853, %v852
      %v885 = vpack.c.bf16 %v855, %v854
      %v886 = vpack.c.bf16 %v857, %v856
      %v887 = vpack.c.bf16 %v859, %v858
      %v888 = vpack.c.bf16 %v861, %v860
      %v889 = vpack.c.bf16 %v863, %v862
      %v890 = vpack.c.bf16 %v865, %v864
      %v891 = vpack.c.bf16 %v867, %v866
      %v892 = vpack.c.bf16 %v869, %v868
      %v893 = vpack.c.bf16 %v871, %v870
      %v894 = vpack.c.bf16 %v873, %v872
      %v895 = vpack.c.bf16 %v875, %v874
      %v896 = vpack.c.bf16 %v877, %v876
      %v897 = vpack.c.bf16 %v879, %v878
      %v898 = vpack.c.bf16 %v881, %v880
      %v899 = vpack.c.bf16 %v883, %v882
      %v900 = vld [vmem:[%s1] sm:$0x3]
      %v901 = vld [vmem:[#allocation2 + $0x1] sm:$0xff]
      %v902 = vld [vmem:[#allocation2 + $0x9] sm:$0xff]
      %v903 = vld [vmem:[#allocation2 + $0x11] sm:$0xff]
      %v904 = vld [vmem:[#allocation2 + $0x19] sm:$0xff]
      %v905 = vld [vmem:[#allocation2 + $0x21] sm:$0xff]
      %v906 = vld [vmem:[#allocation2 + $0x29] sm:$0xff]
      %v907 = vld [vmem:[#allocation2 + $0x31] sm:$0xff]
      %v908 = vld [vmem:[#allocation2 + $0x39] sm:$0xff]
      %v909 = vld [vmem:[#allocation2 + $0x41] sm:$0xff]
      %v910 = vld [vmem:[#allocation2 + $0x49] sm:$0xff]
      %v911 = vld [vmem:[#allocation2 + $0x51] sm:$0xff]
      %v912 = vld [vmem:[#allocation2 + $0x59] sm:$0xff]
      %v913 = vld [vmem:[#allocation2 + $0x61] sm:$0xff]
      %v914 = vld [vmem:[#allocation2 + $0x69] sm:$0xff]
      %v915 = vld [vmem:[#allocation2 + $0x71] sm:$0xff]
      %v916 = vld [vmem:[#allocation2 + $0x79] sm:$0xff]
      %v917 = vld [vmem:[#allocation2 + $0x81] sm:$0xff]
      %v918 = vld [vmem:[#allocation2 + $0x89] sm:$0xff]
      %v919 = vld [vmem:[#allocation2 + $0x91] sm:$0xff]
      %v920 = vld [vmem:[#allocation2 + $0x99] sm:$0xff]
      %v921 = vld [vmem:[#allocation2 + $0xa1] sm:$0xff]
      %v922 = vld [vmem:[#allocation2 + $0xa9] sm:$0xff]
      %v923 = vld [vmem:[#allocation2 + $0xb1] sm:$0xff]
      %v924 = vld [vmem:[#allocation2 + $0xb9] sm:$0xff]
      %v925 = vld [vmem:[#allocation2 + $0xc1] sm:$0xff]
      %v926 = vld [vmem:[#allocation2 + $0xc9] sm:$0xff]
      %v927 = vld [vmem:[#allocation2 + $0xd1] sm:$0xff]
      %v928 = vld [vmem:[#allocation2 + $0xd9] sm:$0xff]
      %v929 = vld [vmem:[#allocation2 + $0xe1] sm:$0xff]
      %v930 = vld [vmem:[#allocation2 + $0xe9] sm:$0xff]
      %v931 = vld [vmem:[#allocation2 + $0xf1] sm:$0xff]
      %v932 = vld [vmem:[#allocation2 + $0xf9] sm:$0xff]
      %v933 = vpack.c.bf16 %v902, %v901
      %v934 = vpack.c.bf16 %v904, %v903
      %v935 = vpack.c.bf16 %v906, %v905
      %v936 = vpack.c.bf16 %v908, %v907
      %v937 = vpack.c.bf16 %v910, %v909
      %v938 = vpack.c.bf16 %v912, %v911
      %v939 = vpack.c.bf16 %v914, %v913
      %v940 = vpack.c.bf16 %v916, %v915
      %v941 = vpack.c.bf16 %v918, %v917
      %v942 = vpack.c.bf16 %v920, %v919
      %v943 = vpack.c.bf16 %v922, %v921
      %v944 = vpack.c.bf16 %v924, %v923
      %v945 = vpack.c.bf16 %v926, %v925
      %v946 = vpack.c.bf16 %v928, %v927
      %v947 = vpack.c.bf16 %v930, %v929
      %v948 = vpack.c.bf16 %v932, %v931
      %s949 = scalar_lea.vmem %s1, 2
      %v950 = vld [vmem:[%s949] sm:$0x3]
      %v952 = vsel %vm172, %v933, 0
      %v955 = vsel %vm172, %v934, 0
      %v958 = vsel %vm172, %v935, 0
      %v961 = vsel %vm172, %v936, 0
      %v964 = vsel %vm172, %v937, 0
      %v967 = vsel %vm172, %v938, 0
      %v970 = vsel %vm172, %v939, 0
      %v973 = vsel %vm172, %v940, 0
      %v976 = vsel %vm172, %v941, 0
      %v979 = vsel %vm172, %v942, 0
      %v982 = vsel %vm172, %v943, 0
      %v985 = vsel %vm172, %v944, 0
      %v988 = vsel %vm172, %v945, 0
      %v991 = vsel %vm172, %v946, 0
      %v994 = vsel %vm172, %v947, 0
      %v997 = vsel %vm172, %v948, 0
      %vm999 = vcmask 1040384
      %vm1000 = vcmask 1041408
      %v1001 = vsel %vm999, 4294967295, 65535
      %v1002 = vsel %vm1000, %v1001, 0
      %v1004 = vand.u32 %v950, %v1002
      %1006 = vmatprep.subr.bf16.mxu0 0
      %1007 = vmatpush1.bf16.msra.mxu0 %v1004
      %1008 = vmatprep.subr.bf16.mxu0 0
      %1009 = vmatpush1.bf16.msra.mxu0 0
      %1010 = vmatprep.subr.bf16.mxu0 0
      %1011 = vmatpush1.bf16.msra.mxu0 0
      %1012 = vmatprep.subr.bf16.mxu0 0
      %1013 = vmatpush1.bf16.msra.mxu0 0
      %1014 = vmatprep.subr.bf16.mxu0 0
      %1015 = vmatpush1.bf16.msra.mxu0 0
      %1016 = vmatprep.subr.bf16.mxu0 0
      %1017 = vmatpush1.bf16.msra.mxu0 0
      %1018 = vmatprep.subr.bf16.mxu0 0
      %1019 = vmatpush1.bf16.msra.mxu0 0
      %1020 = vmatprep.subr.bf16.mxu0 0
      %1021 = vmatpush1.bf16.msra.mxu0 0
      %1022 = vmatprep.subr.bf16.mxu0 0
      %1023 = vmatpush1.bf16.msra.mxu0 0
      %1024 = vmatprep.subr.bf16.mxu0 0
      %1025 = vmatpush1.bf16.msra.mxu0 0
      %1026 = vmatprep.subr.bf16.mxu0 0
      %1027 = vmatpush1.bf16.msra.mxu0 0
      %1028 = vmatprep.subr.bf16.mxu0 0
      %1029 = vmatpush1.bf16.msra.mxu0 0
      %1030 = vmatprep.subr.bf16.mxu0 0
      %1031 = vmatpush1.bf16.msra.mxu0 0
      %1032 = vmatprep.subr.bf16.mxu0 0
      %1033 = vmatpush1.bf16.msra.mxu0 0
      %1034 = vmatprep.subr.bf16.mxu0 0
      %1035 = vmatpush1.bf16.msra.mxu0 0
      %1036 = vmatprep.subr.bf16.mxu0 0
      %1037 = vmatpush1.bf16.msra.mxu0 0
      %1038 = vmatprep.mubr.bf16.mxu0 0
      %1039 = vmatmul.mubr.bf16.gmra.mrb[0].mxu0 %v952
      %v1040 = vpop.f32.mrb[0].mxu0
      %v1041 = vadd.f32 0.0, %v1040
      %v1042 = vpop.f32.mrb[0].mxu0
      %v1043 = vpop.f32.mrb[0].mxu0
      %v1044 = vadd.f32 0.0, %v1043
      %v1045 = vpop.f32.mrb[0].mxu0
      %1046 = vmatprep.mubr.bf16.mxu0 0
      %1047 = vmatmul.mubr.bf16.gmra.mrb[0].mxu0 %v955
      %v1048 = vpop.f32.mrb[0].mxu0
      %v1049 = vadd.f32 0.0, %v1048
      %v1050 = vpop.f32.mrb[0].mxu0
      %v1051 = vpop.f32.mrb[0].mxu0
      %v1052 = vadd.f32 0.0, %v1051
      %v1053 = vpop.f32.mrb[0].mxu0
      %1054 = vmatprep.mubr.bf16.mxu0 0
      %1055 = vmatmul.mubr.bf16.gmra.mrb[0].mxu0 %v958
      %v1056 = vpop.f32.mrb[0].mxu0
      %v1057 = vadd.f32 0.0, %v1056
      %v1058 = vpop.f32.mrb[0].mxu0
      %v1059 = vpop.f32.mrb[0].mxu0
      %v1060 = vadd.f32 0.0, %v1059
      %v1061 = vpop.f32.mrb[0].mxu0
      %1062 = vmatprep.mubr.bf16.mxu0 0
      %1063 = vmatmul.mubr.bf16.gmra.mrb[0].mxu0 %v961
      %v1064 = vpop.f32.mrb[0].mxu0
      %v1065 = vadd.f32 0.0, %v1064
      %v1066 = vpop.f32.mrb[0].mxu0
      %v1067 = vpop.f32.mrb[0].mxu0
      %v1068 = vadd.f32 0.0, %v1067
      %v1069 = vpop.f32.mrb[0].mxu0
      %1070 = vmatprep.mubr.bf16.mxu0 0
      %1071 = vmatmul.mubr.bf16.gmra.mrb[0].mxu0 %v964
      %v1072 = vpop.f32.mrb[0].mxu0
      %v1073 = vadd.f32 0.0, %v1072
      %v1074 = vpop.f32.mrb[0].mxu0
      %v1075 = vpop.f32.mrb[0].mxu0
      %v1076 = vadd.f32 0.0, %v1075
      %v1077 = vpop.f32.mrb[0].mxu0
      %1078 = vmatprep.mubr.bf16.mxu0 0
      %1079 = vmatmul.mubr.bf16.gmra.mrb[0].mxu0 %v967
      %v1080 = vpop.f32.mrb[0].mxu0
      %v1081 = vadd.f32 0.0, %v1080
      %v1082 = vpop.f32.mrb[0].mxu0
      %v1083 = vpop.f32.mrb[0].mxu0
      %v1084 = vadd.f32 0.0, %v1083
      %v1085 = vpop.f32.mrb[0].mxu0
      %1086 = vmatprep.mubr.bf16.mxu0 0
      %1087 = vmatmul.mubr.bf16.gmra.mrb[0].mxu0 %v970
      %v1088 = vpop.f32.mrb[0].mxu0
      %v1089 = vadd.f32 0.0, %v1088
      %v1090 = vpop.f32.mrb[0].mxu0
      %v1091 = vpop.f32.mrb[0].mxu0
      %v1092 = vadd.f32 0.0, %v1091
      %v1093 = vpop.f32.mrb[0].mxu0
      %1094 = vmatprep.mubr.bf16.mxu0 0
      %1095 = vmatmul.mubr.bf16.gmra.mrb[0].mxu0 %v973
      %v1096 = vpop.f32.mrb[0].mxu0
      %v1097 = vadd.f32 0.0, %v1096
      %v1098 = vpop.f32.mrb[0].mxu0
      %v1099 = vpop.f32.mrb[0].mxu0
      %v1100 = vadd.f32 0.0, %v1099
      %v1101 = vpop.f32.mrb[0].mxu0
      %1102 = vmatprep.mubr.bf16.mxu0 0
      %1103 = vmatmul.mubr.bf16.gmra.mrb[0].mxu0 %v976
      %v1104 = vpop.f32.mrb[0].mxu0
      %v1105 = vadd.f32 0.0, %v1104
      %v1106 = vpop.f32.mrb[0].mxu0
      %v1107 = vpop.f32.mrb[0].mxu0
      %v1108 = vadd.f32 0.0, %v1107
      %v1109 = vpop.f32.mrb[0].mxu0
      %1110 = vmatprep.mubr.bf16.mxu0 0
      %1111 = vmatmul.mubr.bf16.gmra.mrb[0].mxu0 %v979
      %v1112 = vpop.f32.mrb[0].mxu0
      %v1113 = vadd.f32 0.0, %v1112
      %v1114 = vpop.f32.mrb[0].mxu0
      %v1115 = vpop.f32.mrb[0].mxu0
      %v1116 = vadd.f32 0.0, %v1115
      %v1117 = vpop.f32.mrb[0].mxu0
      %1118 = vmatprep.mubr.bf16.mxu0 0
      %1119 = vmatmul.mubr.bf16.gmra.mrb[0].mxu0 %v982
      %v1120 = vpop.f32.mrb[0].mxu0
      %v1121 = vadd.f32 0.0, %v1120
      %v1122 = vpop.f32.mrb[0].mxu0
      %v1123 = vpop.f32.mrb[0].mxu0
      %v1124 = vadd.f32 0.0, %v1123
      %v1125 = vpop.f32.mrb[0].mxu0
      %1126 = vmatprep.mubr.bf16.mxu0 0
      %1127 = vmatmul.mubr.bf16.gmra.mrb[0].mxu0 %v985
      %v1128 = vpop.f32.mrb[0].mxu0
      %v1129 = vadd.f32 0.0, %v1128
      %v1130 = vpop.f32.mrb[0].mxu0
      %v1131 = vpop.f32.mrb[0].mxu0
      %v1132 = vadd.f32 0.0, %v1131
      %v1133 = vpop.f32.mrb[0].mxu0
      %1134 = vmatprep.mubr.bf16.mxu0 0
      %1135 = vmatmul.mubr.bf16.gmra.mrb[0].mxu0 %v988
      %v1136 = vpop.f32.mrb[0].mxu0
      %v1137 = vadd.f32 0.0, %v1136
      %v1138 = vpop.f32.mrb[0].mxu0
      %v1139 = vpop.f32.mrb[0].mxu0
      %v1140 = vadd.f32 0.0, %v1139
      %v1141 = vpop.f32.mrb[0].mxu0
      %1142 = vmatprep.mubr.bf16.mxu0 0
      %1143 = vmatmul.mubr.bf16.gmra.mrb[0].mxu0 %v991
      %v1144 = vpop.f32.mrb[0].mxu0
      %v1145 = vadd.f32 0.0, %v1144
      %v1146 = vpop.f32.mrb[0].mxu0
      %v1147 = vpop.f32.mrb[0].mxu0
      %v1148 = vadd.f32 0.0, %v1147
      %v1149 = vpop.f32.mrb[0].mxu0
      %1150 = vmatprep.mubr.bf16.mxu0 0
      %1151 = vmatmul.mubr.bf16.gmra.mrb[0].mxu0 %v994
      %v1152 = vpop.f32.mrb[0].mxu0
      %v1153 = vadd.f32 0.0, %v1152
      %v1154 = vpop.f32.mrb[0].mxu0
      %v1155 = vpop.f32.mrb[0].mxu0
      %v1156 = vadd.f32 0.0, %v1155
      %v1157 = vpop.f32.mrb[0].mxu0
      %1158 = vmatprep.mubr.bf16.mxu0 0
      %1159 = vmatmul.mubr.bf16.gmra.mrb[0].mxu0 %v997
      %v1160 = vpop.f32.mrb[0].mxu0
      %v1161 = vadd.f32 0.0, %v1160
      %v1162 = vpop.f32.mrb[0].mxu0
      %v1163 = vpop.f32.mrb[0].mxu0
      %v1164 = vadd.f32 0.0, %v1163
      %v1165 = vpop.f32.mrb[0].mxu0
      %1166 = vdwg.mxu0
      %v1168 = vsel %vm172, %v884, 0
      %v1171 = vsel %vm172, %v885, 0
      %v1174 = vsel %vm172, %v886, 0
      %v1177 = vsel %vm172, %v887, 0
      %v1180 = vsel %vm172, %v888, 0
      %v1183 = vsel %vm172, %v889, 0
      %v1186 = vsel %vm172, %v890, 0
      %v1189 = vsel %vm172, %v891, 0
      %v1192 = vsel %vm172, %v892, 0
      %v1195 = vsel %vm172, %v893, 0
      %v1198 = vsel %vm172, %v894, 0
      %v1201 = vsel %vm172, %v895, 0
      %v1204 = vsel %vm172, %v896, 0
      %v1207 = vsel %vm172, %v897, 0
      %v1210 = vsel %vm172, %v898, 0
      %v1213 = vsel %vm172, %v899, 0
      %v1216 = vand.u32 %v900, %v1002
      %1218 = vmatprep.subr.bf16.mxu0 0
      %1219 = vmatpush1.bf16.msra.mxu0 %v1216
      %1220 = vmatprep.subr.bf16.mxu0 0
      %1221 = vmatpush1.bf16.msra.mxu0 0
      %1222 = vmatprep.subr.bf16.mxu0 0
      %1223 = vmatpush1.bf16.msra.mxu0 0
      %1224 = vmatprep.subr.bf16.mxu0 0
      %1225 = vmatpush1.bf16.msra.mxu0 0
      %1226 = vmatprep.subr.bf16.mxu0 0
      %1227 = vmatpush1.bf16.msra.mxu0 0
      %1228 = vmatprep.subr.bf16.mxu0 0
      %1229 = vmatpush1.bf16.msra.mxu0 0
      %1230 = vmatprep.subr.bf16.mxu0 0
      %1231 = vmatpush1.bf16.msra.mxu0 0
      %1232 = vmatprep.subr.bf16.mxu0 0
      %1233 = vmatpush1.bf16.msra.mxu0 0
      %1234 = vmatprep.subr.bf16.mxu0 0
      %1235 = vmatpush1.bf16.msra.mxu0 0
      %1236 = vmatprep.subr.bf16.mxu0 0
      %1237 = vmatpush1.bf16.msra.mxu0 0
      %1238 = vmatprep.subr.bf16.mxu0 0
      %1239 = vmatpush1.bf16.msra.mxu0 0
      %1240 = vmatprep.subr.bf16.mxu0 0
      %1241 = vmatpush1.bf16.msra.mxu0 0
      %1242 = vmatprep.subr.bf16.mxu0 0
      %1243 = vmatpush1.bf16.msra.mxu0 0
      %1244 = vmatprep.subr.bf16.mxu0 0
      %1245 = vmatpush1.bf16.msra.mxu0 0
      %1246 = vmatprep.subr.bf16.mxu0 0
      %1247 = vmatpush1.bf16.msra.mxu0 0
      %1248 = vmatprep.subr.bf16.mxu0 0
      %1249 = vmatpush1.bf16.msra.mxu0 0
      %1250 = vmatprep.mubr.bf16.mxu0 0
      %1251 = vmatmul.mubr.bf16.gmra.mrb[0].mxu0 %v1168
      %v1252 = vpop.f32.mrb[0].mxu0
      %v1253 = vadd.f32 %v1041, %v1252
      %v1254 = vpop.f32.mrb[0].mxu0
      %v1255 = vpop.f32.mrb[0].mxu0
      %v1256 = vadd.f32 %v1044, %v1255
      %v1257 = vpop.f32.mrb[0].mxu0
      %1258 = vmatprep.mubr.bf16.mxu0 0
      %1259 = vmatmul.mubr.bf16.gmra.mrb[0].mxu0 %v1171
      %v1260 = vpop.f32.mrb[0].mxu0
      %v1261 = vadd.f32 %v1049, %v1260
      %v1262 = vpop.f32.mrb[0].mxu0
      %v1263 = vpop.f32.mrb[0].mxu0
      %v1264 = vadd.f32 %v1052, %v1263
      %v1265 = vpop.f32.mrb[0].mxu0
      %1266 = vmatprep.mubr.bf16.mxu0 0
      %1267 = vmatmul.mubr.bf16.gmra.mrb[0].mxu0 %v1174
      %v1268 = vpop.f32.mrb[0].mxu0
      %v1269 = vadd.f32 %v1057, %v1268
      %v1270 = vpop.f32.mrb[0].mxu0
      %v1271 = vpop.f32.mrb[0].mxu0
      %v1272 = vadd.f32 %v1060, %v1271
      %v1273 = vpop.f32.mrb[0].mxu0
      %1274 = vmatprep.mubr.bf16.mxu0 0
      %1275 = vmatmul.mubr.bf16.gmra.mrb[0].mxu0 %v1177
      %v1276 = vpop.f32.mrb[0].mxu0
      %v1277 = vadd.f32 %v1065, %v1276
      %v1278 = vpop.f32.mrb[0].mxu0
      %v1279 = vpop.f32.mrb[0].mxu0
      %v1280 = vadd.f32 %v1068, %v1279
      %v1281 = vpop.f32.mrb[0].mxu0
      %1282 = vmatprep.mubr.bf16.mxu0 0
      %1283 = vmatmul.mubr.bf16.gmra.mrb[0].mxu0 %v1180
      %v1284 = vpop.f32.mrb[0].mxu0
      %v1285 = vadd.f32 %v1073, %v1284
      %v1286 = vpop.f32.mrb[0].mxu0
      %v1287 = vpop.f32.mrb[0].mxu0
      %v1288 = vadd.f32 %v1076, %v1287
      %v1289 = vpop.f32.mrb[0].mxu0
      %1290 = vmatprep.mubr.bf16.mxu0 0
      %1291 = vmatmul.mubr.bf16.gmra.mrb[0].mxu0 %v1183
      %v1292 = vpop.f32.mrb[0].mxu0
      %v1293 = vadd.f32 %v1081, %v1292
      %v1294 = vpop.f32.mrb[0].mxu0
      %v1295 = vpop.f32.mrb[0].mxu0
      %v1296 = vadd.f32 %v1084, %v1295
      %v1297 = vpop.f32.mrb[0].mxu0
      %1298 = vmatprep.mubr.bf16.mxu0 0
      %1299 = vmatmul.mubr.bf16.gmra.mrb[0].mxu0 %v1186
      %v1300 = vpop.f32.mrb[0].mxu0
      %v1301 = vadd.f32 %v1089, %v1300
      %v1302 = vpop.f32.mrb[0].mxu0
      %v1303 = vpop.f32.mrb[0].mxu0
      %v1304 = vadd.f32 %v1092, %v1303
      %v1305 = vpop.f32.mrb[0].mxu0
      %1306 = vmatprep.mubr.bf16.mxu0 0
      %1307 = vmatmul.mubr.bf16.gmra.mrb[0].mxu0 %v1189
      %v1308 = vpop.f32.mrb[0].mxu0
      %v1309 = vadd.f32 %v1097, %v1308
      %v1310 = vpop.f32.mrb[0].mxu0
      %v1311 = vpop.f32.mrb[0].mxu0
      %v1312 = vadd.f32 %v1100, %v1311
      %v1313 = vpop.f32.mrb[0].mxu0
      %1314 = vmatprep.mubr.bf16.mxu0 0
      %1315 = vmatmul.mubr.bf16.gmra.mrb[0].mxu0 %v1192
      %v1316 = vpop.f32.mrb[0].mxu0
      %v1317 = vadd.f32 %v1105, %v1316
      %v1318 = vpop.f32.mrb[0].mxu0
      %v1319 = vpop.f32.mrb[0].mxu0
      %v1320 = vadd.f32 %v1108, %v1319
      %v1321 = vpop.f32.mrb[0].mxu0
      %1322 = vmatprep.mubr.bf16.mxu0 0
      %1323 = vmatmul.mubr.bf16.gmra.mrb[0].mxu0 %v1195
      %v1324 = vpop.f32.mrb[0].mxu0
      %v1325 = vadd.f32 %v1113, %v1324
      %v1326 = vpop.f32.mrb[0].mxu0
      %v1327 = vpop.f32.mrb[0].mxu0
      %v1328 = vadd.f32 %v1116, %v1327
      %v1329 = vpop.f32.mrb[0].mxu0
      %1330 = vmatprep.mubr.bf16.mxu0 0
      %1331 = vmatmul.mubr.bf16.gmra.mrb[0].mxu0 %v1198
      %v1332 = vpop.f32.mrb[0].mxu0
      %v1333 = vadd.f32 %v1121, %v1332
      %v1334 = vpop.f32.mrb[0].mxu0
      %v1335 = vpop.f32.mrb[0].mxu0
      %v1336 = vadd.f32 %v1124, %v1335
      %v1337 = vpop.f32.mrb[0].mxu0
      %1338 = vmatprep.mubr.bf16.mxu0 0
      %1339 = vmatmul.mubr.bf16.gmra.mrb[0].mxu0 %v1201
      %v1340 = vpop.f32.mrb[0].mxu0
      %v1341 = vadd.f32 %v1129, %v1340
      %v1342 = vpop.f32.mrb[0].mxu0
      %v1343 = vpop.f32.mrb[0].mxu0
      %v1344 = vadd.f32 %v1132, %v1343
      %v1345 = vpop.f32.mrb[0].mxu0
      %1346 = vmatprep.mubr.bf16.mxu0 0
      %1347 = vmatmul.mubr.bf16.gmra.mrb[0].mxu0 %v1204
      %v1348 = vpop.f32.mrb[0].mxu0
      %v1349 = vadd.f32 %v1137, %v1348
      %v1350 = vpop.f32.mrb[0].mxu0
      %v1351 = vpop.f32.mrb[0].mxu0
      %v1352 = vadd.f32 %v1140, %v1351
      %v1353 = vpop.f32.mrb[0].mxu0
      %1354 = vmatprep.mubr.bf16.mxu0 0
      %1355 = vmatmul.mubr.bf16.gmra.mrb[0].mxu0 %v1207
      %v1356 = vpop.f32.mrb[0].mxu0
      %v1357 = vadd.f32 %v1145, %v1356
      %v1358 = vpop.f32.mrb[0].mxu0
      %v1359 = vpop.f32.mrb[0].mxu0
      %v1360 = vadd.f32 %v1148, %v1359
      %v1361 = vpop.f32.mrb[0].mxu0
      %1362 = vmatprep.mubr.bf16.mxu0 0
      %1363 = vmatmul.mubr.bf16.gmra.mrb[0].mxu0 %v1210
      %v1364 = vpop.f32.mrb[0].mxu0
      %v1365 = vadd.f32 %v1153, %v1364
      %v1366 = vpop.f32.mrb[0].mxu0
      %v1367 = vpop.f32.mrb[0].mxu0
      %v1368 = vadd.f32 %v1156, %v1367
      %v1369 = vpop.f32.mrb[0].mxu0
      %1370 = vmatprep.mubr.bf16.mxu0 0
      %1371 = vmatmul.mubr.bf16.gmra.mrb[0].mxu0 %v1213
      %v1372 = vpop.f32.mrb[0].mxu0
      %v1373 = vadd.f32 %v1161, %v1372
      %v1374 = vpop.f32.mrb[0].mxu0
      %v1375 = vpop.f32.mrb[0].mxu0
      %v1376 = vadd.f32 %v1164, %v1375
      %v1377 = vpop.f32.mrb[0].mxu0
      %1378 = vdwg.mxu0
      %v1379 = vld [vmem:[#allocation2 + $0x2] sm:$0xff]
      %v1380 = vld [vmem:[#allocation2 + $0xa] sm:$0xff]
      %v1381 = vld [vmem:[#allocation2 + $0x12] sm:$0xff]
      %v1382 = vld [vmem:[#allocation2 + $0x1a] sm:$0xff]
      %v1383 = vld [vmem:[#allocation2 + $0x22] sm:$0xff]
      %v1384 = vld [vmem:[#allocation2 + $0x2a] sm:$0xff]
      %v1385 = vld [vmem:[#allocation2 + $0x32] sm:$0xff]
      %v1386 = vld [vmem:[#allocation2 + $0x3a] sm:$0xff]
      %v1387 = vld [vmem:[#allocation2 + $0x42] sm:$0xff]
      %v1388 = vld [vmem:[#allocation2 + $0x4a] sm:$0xff]
      %v1389 = vld [vmem:[#allocation2 + $0x52] sm:$0xff]
      %v1390 = vld [vmem:[#allocation2 + $0x5a] sm:$0xff]
      %v1391 = vld [vmem:[#allocation2 + $0x62] sm:$0xff]
      %v1392 = vld [vmem:[#allocation2 + $0x6a] sm:$0xff]
      %v1393 = vld [vmem:[#allocation2 + $0x72] sm:$0xff]
      %v1394 = vld [vmem:[#allocation2 + $0x7a] sm:$0xff]
      %v1395 = vld [vmem:[#allocation2 + $0x82] sm:$0xff]
      %v1396 = vld [vmem:[#allocation2 + $0x8a] sm:$0xff]
      %v1397 = vld [vmem:[#allocation2 + $0x92] sm:$0xff]
      %v1398 = vld [vmem:[#allocation2 + $0x9a] sm:$0xff]
      %v1399 = vld [vmem:[#allocation2 + $0xa2] sm:$0xff]
      %v1400 = vld [vmem:[#allocation2 + $0xaa] sm:$0xff]
      %v1401 = vld [vmem:[#allocation2 + $0xb2] sm:$0xff]
      %v1402 = vld [vmem:[#allocation2 + $0xba] sm:$0xff]
      %v1403 = vld [vmem:[#allocation2 + $0xc2] sm:$0xff]
      %v1404 = vld [vmem:[#allocation2 + $0xca] sm:$0xff]
      %v1405 = vld [vmem:[#allocation2 + $0xd2] sm:$0xff]
      %v1406 = vld [vmem:[#allocation2 + $0xda] sm:$0xff]
      %v1407 = vld [vmem:[#allocation2 + $0xe2] sm:$0xff]
      %v1408 = vld [vmem:[#allocation2 + $0xea] sm:$0xff]
      %v1409 = vld [vmem:[#allocation2 + $0xf2] sm:$0xff]
      %v1410 = vld [vmem:[#allocation2 + $0xfa] sm:$0xff]
      %v1411 = vsel %vm724, 1, 0
      %v1412 = vsel %vm725, 1, 0
      %v1413 = vsel %vm726, 1, 0
      %v1414 = vsel %vm727, 1, 0
      %v1415 = vsel %vm728, 1, 0
      %v1416 = vsel %vm729, 1, 0
      %v1417 = vsel %vm730, 1, 0
      %v1418 = vsel %vm731, 1, 0
      %v1419 = vsel %vm732, 1, 0
      %v1420 = vsel %vm733, 1, 0
      %v1421 = vsel %vm734, 1, 0
      %v1422 = vsel %vm735, 1, 0
      %v1423 = vsel %vm736, 1, 0
      %v1424 = vsel %vm737, 1, 0
      %v1425 = vsel %vm738, 1, 0
      %v1426 = vsel %vm739, 1, 0
      %v1427 = vsel %vm740, 1, 0
      %v1428 = vsel %vm741, 1, 0
      %v1429 = vsel %vm742, 1, 0
      %v1430 = vsel %vm743, 1, 0
      %v1431 = vsel %vm744, 1, 0
      %v1432 = vsel %vm745, 1, 0
      %v1433 = vsel %vm746, 1, 0
      %v1434 = vsel %vm747, 1, 0
      %v1435 = vsel %vm748, 1, 0
      %v1436 = vsel %vm749, 1, 0
      %v1437 = vsel %vm750, 1, 0
      %v1438 = vsel %vm751, 1, 0
      %v1439 = vsel %vm752, 1, 0
      %v1440 = vsel %vm753, 1, 0
      %v1441 = vsel %vm754, 1, 0
      %v1442 = vsel %vm755, 1, 0
      %vm1443 = vcmp.eq.s32.totalorder %v1411, 1
      %vm1444 = vcmp.eq.s32.totalorder %v1412, 1
      %vm1445 = vcmp.eq.s32.totalorder %v1413, 1
      %vm1446 = vcmp.eq.s32.totalorder %v1414, 1
      %vm1447 = vcmp.eq.s32.totalorder %v1415, 1
      %vm1448 = vcmp.eq.s32.totalorder %v1416, 1
      %vm1449 = vcmp.eq.s32.totalorder %v1417, 1
      %vm1450 = vcmp.eq.s32.totalorder %v1418, 1
      %vm1451 = vcmp.eq.s32.totalorder %v1419, 1
      %vm1452 = vcmp.eq.s32.totalorder %v1420, 1
      %vm1453 = vcmp.eq.s32.totalorder %v1421, 1
      %vm1454 = vcmp.eq.s32.totalorder %v1422, 1
      %vm1455 = vcmp.eq.s32.totalorder %v1423, 1
      %vm1456 = vcmp.eq.s32.totalorder %v1424, 1
      %vm1457 = vcmp.eq.s32.totalorder %v1425, 1
      %vm1458 = vcmp.eq.s32.totalorder %v1426, 1
      %vm1459 = vcmp.eq.s32.totalorder %v1427, 1
      %vm1460 = vcmp.eq.s32.totalorder %v1428, 1
      %vm1461 = vcmp.eq.s32.totalorder %v1429, 1
      %vm1462 = vcmp.eq.s32.totalorder %v1430, 1
      %vm1463 = vcmp.eq.s32.totalorder %v1431, 1
      %vm1464 = vcmp.eq.s32.totalorder %v1432, 1
      %vm1465 = vcmp.eq.s32.totalorder %v1433, 1
      %vm1466 = vcmp.eq.s32.totalorder %v1434, 1
      %vm1467 = vcmp.eq.s32.totalorder %v1435, 1
      %vm1468 = vcmp.eq.s32.totalorder %v1436, 1
      %vm1469 = vcmp.eq.s32.totalorder %v1437, 1
      %vm1470 = vcmp.eq.s32.totalorder %v1438, 1
      %vm1471 = vcmp.eq.s32.totalorder %v1439, 1
      %vm1472 = vcmp.eq.s32.totalorder %v1440, 1
      %vm1473 = vcmp.eq.s32.totalorder %v1441, 1
      %vm1474 = vcmp.eq.s32.totalorder %v1442, 1
      %v1475 = vsel %vm1443, %v1379, 0.0
      %v1476 = vsel %vm1444, %v1380, 0.0
      %v1477 = vsel %vm1445, %v1381, 0.0
      %v1478 = vsel %vm1446, %v1382, 0.0
      %v1479 = vsel %vm1447, %v1383, 0.0
      %v1480 = vsel %vm1448, %v1384, 0.0
      %v1481 = vsel %vm1449, %v1385, 0.0
      %v1482 = vsel %vm1450, %v1386, 0.0
      %v1483 = vsel %vm1451, %v1387, 0.0
      %v1484 = vsel %vm1452, %v1388, 0.0
      %v1485 = vsel %vm1453, %v1389, 0.0
      %v1486 = vsel %vm1454, %v1390, 0.0
      %v1487 = vsel %vm1455, %v1391, 0.0
      %v1488 = vsel %vm1456, %v1392, 0.0
      %v1489 = vsel %vm1457, %v1393, 0.0
      %v1490 = vsel %vm1458, %v1394, 0.0
      %v1491 = vsel %vm1459, %v1395, 0.0
      %v1492 = vsel %vm1460, %v1396, 0.0
      %v1493 = vsel %vm1461, %v1397, 0.0
      %v1494 = vsel %vm1462, %v1398, 0.0
      %v1495 = vsel %vm1463, %v1399, 0.0
      %v1496 = vsel %vm1464, %v1400, 0.0
      %v1497 = vsel %vm1465, %v1401, 0.0
      %v1498 = vsel %vm1466, %v1402, 0.0
      %v1499 = vsel %vm1467, %v1403, 0.0
      %v1500 = vsel %vm1468, %v1404, 0.0
      %v1501 = vsel %vm1469, %v1405, 0.0
      %v1502 = vsel %vm1470, %v1406, 0.0
      %v1503 = vsel %vm1471, %v1407, 0.0
      %v1504 = vsel %vm1472, %v1408, 0.0
      %v1505 = vsel %vm1473, %v1409, 0.0
      %v1506 = vsel %vm1474, %v1410, 0.0
      %v1507 = vpack.c.bf16 %v1476, %v1475
      %v1508 = vpack.c.bf16 %v1478, %v1477
      %v1509 = vpack.c.bf16 %v1480, %v1479
      %v1510 = vpack.c.bf16 %v1482, %v1481
      %v1511 = vpack.c.bf16 %v1484, %v1483
      %v1512 = vpack.c.bf16 %v1486, %v1485
      %v1513 = vpack.c.bf16 %v1488, %v1487
      %v1514 = vpack.c.bf16 %v1490, %v1489
      %v1515 = vpack.c.bf16 %v1492, %v1491
      %v1516 = vpack.c.bf16 %v1494, %v1493
      %v1517 = vpack.c.bf16 %v1496, %v1495
      %v1518 = vpack.c.bf16 %v1498, %v1497
      %v1519 = vpack.c.bf16 %v1500, %v1499
      %v1520 = vpack.c.bf16 %v1502, %v1501
      %v1521 = vpack.c.bf16 %v1504, %v1503
      %v1522 = vpack.c.bf16 %v1506, %v1505
      %s1523 = scalar_lea.vmem %s1, 4
      %v1524 = vld [vmem:[%s1523] sm:$0x3]
      %v1526 = vsel %vm172, %v1507, 0
      %v1529 = vsel %vm172, %v1508, 0
      %v1532 = vsel %vm172, %v1509, 0
      %v1535 = vsel %vm172, %v1510, 0
      %v1538 = vsel %vm172, %v1511, 0
      %v1541 = vsel %vm172, %v1512, 0
      %v1544 = vsel %vm172, %v1513, 0
      %v1547 = vsel %vm172, %v1514, 0
      %v1550 = vsel %vm172, %v1515, 0
      %v1553 = vsel %vm172, %v1516, 0
      %v1556 = vsel %vm172, %v1517, 0
      %v1559 = vsel %vm172, %v1518, 0
      %v1562 = vsel %vm172, %v1519, 0
      %v1565 = vsel %vm172, %v1520, 0
      %v1568 = vsel %vm172, %v1521, 0
      %v1571 = vsel %vm172, %v1522, 0
      %v1574 = vand.u32 %v1524, %v1002
      %1576 = vmatprep.subr.bf16.mxu0 0
      %1577 = vmatpush1.bf16.msra.mxu0 %v1574
      %1578 = vmatprep.subr.bf16.mxu0 0
      %1579 = vmatpush1.bf16.msra.mxu0 0
      %1580 = vmatprep.subr.bf16.mxu0 0
      %1581 = vmatpush1.bf16.msra.mxu0 0
      %1582 = vmatprep.subr.bf16.mxu0 0
      %1583 = vmatpush1.bf16.msra.mxu0 0
      %1584 = vmatprep.subr.bf16.mxu0 0
      %1585 = vmatpush1.bf16.msra.mxu0 0
      %1586 = vmatprep.subr.bf16.mxu0 0
      %1587 = vmatpush1.bf16.msra.mxu0 0
      %1588 = vmatprep.subr.bf16.mxu0 0
      %1589 = vmatpush1.bf16.msra.mxu0 0
      %1590 = vmatprep.subr.bf16.mxu0 0
      %1591 = vmatpush1.bf16.msra.mxu0 0
      %1592 = vmatprep.subr.bf16.mxu0 0
      %1593 = vmatpush1.bf16.msra.mxu0 0
      %1594 = vmatprep.subr.bf16.mxu0 0
      %1595 = vmatpush1.bf16.msra.mxu0 0
      %1596 = vmatprep.subr.bf16.mxu0 0
      %1597 = vmatpush1.bf16.msra.mxu0 0
      %1598 = vmatprep.subr.bf16.mxu0 0
      %1599 = vmatpush1.bf16.msra.mxu0 0
      %1600 = vmatprep.subr.bf16.mxu0 0
      %1601 = vmatpush1.bf16.msra.mxu0 0
      %1602 = vmatprep.subr.bf16.mxu0 0
      %1603 = vmatpush1.bf16.msra.mxu0 0
      %1604 = vmatprep.subr.bf16.mxu0 0
      %1605 = vmatpush1.bf16.msra.mxu0 0
      %1606 = vmatprep.subr.bf16.mxu0 0
      %1607 = vmatpush1.bf16.msra.mxu0 0
      %1608 = vmatprep.mubr.bf16.mxu0 0
      %1609 = vmatmul.mubr.bf16.gmra.mrb[0].mxu0 %v1526
      %v1610 = vpop.f32.mrb[0].mxu0
      %v1611 = vadd.f32 0.0, %v1610
      %v1612 = vpop.f32.mrb[0].mxu0
      %v1613 = vpop.f32.mrb[0].mxu0
      %v1614 = vadd.f32 0.0, %v1613
      %v1615 = vpop.f32.mrb[0].mxu0
      %1616 = vmatprep.mubr.bf16.mxu0 0
      %1617 = vmatmul.mubr.bf16.gmra.mrb[0].mxu0 %v1529
      %v1618 = vpop.f32.mrb[0].mxu0
      %v1619 = vadd.f32 0.0, %v1618
      %v1620 = vpop.f32.mrb[0].mxu0
      %v1621 = vpop.f32.mrb[0].mxu0
      %v1622 = vadd.f32 0.0, %v1621
      %v1623 = vpop.f32.mrb[0].mxu0
      %1624 = vmatprep.mubr.bf16.mxu0 0
      %1625 = vmatmul.mubr.bf16.gmra.mrb[0].mxu0 %v1532
      %v1626 = vpop.f32.mrb[0].mxu0
      %v1627 = vadd.f32 0.0, %v1626
      %v1628 = vpop.f32.mrb[0].mxu0
      %v1629 = vpop.f32.mrb[0].mxu0
      %v1630 = vadd.f32 0.0, %v1629
      %v1631 = vpop.f32.mrb[0].mxu0
      %1632 = vmatprep.mubr.bf16.mxu0 0
      %1633 = vmatmul.mubr.bf16.gmra.mrb[0].mxu0 %v1535
      %v1634 = vpop.f32.mrb[0].mxu0
      %v1635 = vadd.f32 0.0, %v1634
      %v1636 = vpop.f32.mrb[0].mxu0
      %v1637 = vpop.f32.mrb[0].mxu0
      %v1638 = vadd.f32 0.0, %v1637
      %v1639 = vpop.f32.mrb[0].mxu0
      %1640 = vmatprep.mubr.bf16.mxu0 0
      %1641 = vmatmul.mubr.bf16.gmra.mrb[0].mxu0 %v1538
      %v1642 = vpop.f32.mrb[0].mxu0
      %v1643 = vadd.f32 0.0, %v1642
      %v1644 = vpop.f32.mrb[0].mxu0
      %v1645 = vpop.f32.mrb[0].mxu0
      %v1646 = vadd.f32 0.0, %v1645
      %v1647 = vpop.f32.mrb[0].mxu0
      %1648 = vmatprep.mubr.bf16.mxu0 0
      %1649 = vmatmul.mubr.bf16.gmra.mrb[0].mxu0 %v1541
      %v1650 = vpop.f32.mrb[0].mxu0
      %v1651 = vadd.f32 0.0, %v1650
      %v1652 = vpop.f32.mrb[0].mxu0
      %v1653 = vpop.f32.mrb[0].mxu0
      %v1654 = vadd.f32 0.0, %v1653
      %v1655 = vpop.f32.mrb[0].mxu0
      %1656 = vmatprep.mubr.bf16.mxu0 0
      %1657 = vmatmul.mubr.bf16.gmra.mrb[0].mxu0 %v1544
      %v1658 = vpop.f32.mrb[0].mxu0
      %v1659 = vadd.f32 0.0, %v1658
      %v1660 = vpop.f32.mrb[0].mxu0
      %v1661 = vpop.f32.mrb[0].mxu0
      %v1662 = vadd.f32 0.0, %v1661
      %v1663 = vpop.f32.mrb[0].mxu0
      %1664 = vmatprep.mubr.bf16.mxu0 0
      %1665 = vmatmul.mubr.bf16.gmra.mrb[0].mxu0 %v1547
      %v1666 = vpop.f32.mrb[0].mxu0
      %v1667 = vadd.f32 0.0, %v1666
      %v1668 = vpop.f32.mrb[0].mxu0
      %v1669 = vpop.f32.mrb[0].mxu0
      %v1670 = vadd.f32 0.0, %v1669
      %v1671 = vpop.f32.mrb[0].mxu0
      %1672 = vmatprep.mubr.bf16.mxu0 0
      %1673 = vmatmul.mubr.bf16.gmra.mrb[0].mxu0 %v1550
      %v1674 = vpop.f32.mrb[0].mxu0
      %v1675 = vadd.f32 0.0, %v1674
      %v1676 = vpop.f32.mrb[0].mxu0
      %v1677 = vpop.f32.mrb[0].mxu0
      %v1678 = vadd.f32 0.0, %v1677
      %v1679 = vpop.f32.mrb[0].mxu0
      %1680 = vmatprep.mubr.bf16.mxu0 0
      %1681 = vmatmul.mubr.bf16.gmra.mrb[0].mxu0 %v1553
      %v1682 = vpop.f32.mrb[0].mxu0
      %v1683 = vadd.f32 0.0, %v1682
      %v1684 = vpop.f32.mrb[0].mxu0
      %v1685 = vpop.f32.mrb[0].mxu0
      %v1686 = vadd.f32 0.0, %v1685
      %v1687 = vpop.f32.mrb[0].mxu0
      %1688 = vmatprep.mubr.bf16.mxu0 0
      %1689 = vmatmul.mubr.bf16.gmra.mrb[0].mxu0 %v1556
      %v1690 = vpop.f32.mrb[0].mxu0
      %v1691 = vadd.f32 0.0, %v1690
      %v1692 = vpop.f32.mrb[0].mxu0
      %v1693 = vpop.f32.mrb[0].mxu0
      %v1694 = vadd.f32 0.0, %v1693
      %v1695 = vpop.f32.mrb[0].mxu0
      %1696 = vmatprep.mubr.bf16.mxu0 0
      %1697 = vmatmul.mubr.bf16.gmra.mrb[0].mxu0 %v1559
      %v1698 = vpop.f32.mrb[0].mxu0
      %v1699 = vadd.f32 0.0, %v1698
      %v1700 = vpop.f32.mrb[0].mxu0
      %v1701 = vpop.f32.mrb[0].mxu0
      %v1702 = vadd.f32 0.0, %v1701
      %v1703 = vpop.f32.mrb[0].mxu0
      %1704 = vmatprep.mubr.bf16.mxu0 0
      %1705 = vmatmul.mubr.bf16.gmra.mrb[0].mxu0 %v1562
      %v1706 = vpop.f32.mrb[0].mxu0
      %v1707 = vadd.f32 0.0, %v1706
      %v1708 = vpop.f32.mrb[0].mxu0
      %v1709 = vpop.f32.mrb[0].mxu0
      %v1710 = vadd.f32 0.0, %v1709
      %v1711 = vpop.f32.mrb[0].mxu0
      %1712 = vmatprep.mubr.bf16.mxu0 0
      %1713 = vmatmul.mubr.bf16.gmra.mrb[0].mxu0 %v1565
      %v1714 = vpop.f32.mrb[0].mxu0
      %v1715 = vadd.f32 0.0, %v1714
      %v1716 = vpop.f32.mrb[0].mxu0
      %v1717 = vpop.f32.mrb[0].mxu0
      %v1718 = vadd.f32 0.0, %v1717
      %v1719 = vpop.f32.mrb[0].mxu0
      %1720 = vmatprep.mubr.bf16.mxu0 0
      %1721 = vmatmul.mubr.bf16.gmra.mrb[0].mxu0 %v1568
      %v1722 = vpop.f32.mrb[0].mxu0
      %v1723 = vadd.f32 0.0, %v1722
      %v1724 = vpop.f32.mrb[0].mxu0
      %v1725 = vpop.f32.mrb[0].mxu0
      %v1726 = vadd.f32 0.0, %v1725
      %v1727 = vpop.f32.mrb[0].mxu0
      %1728 = vmatprep.mubr.bf16.mxu0 0
      %1729 = vmatmul.mubr.bf16.gmra.mrb[0].mxu0 %v1571
      %v1730 = vpop.f32.mrb[0].mxu0
      %v1731 = vadd.f32 0.0, %v1730
      %v1732 = vpop.f32.mrb[0].mxu0
      %v1733 = vpop.f32.mrb[0].mxu0
      %v1734 = vadd.f32 0.0, %v1733
      %v1735 = vpop.f32.mrb[0].mxu0
      %1736 = vdwg.mxu0
      %v1737 = vadd.f32 %v1253, %v1611
      %v1738 = vadd.f32 %v1256, %v1614
      %v1739 = vadd.f32 %v1261, %v1619
      %v1740 = vadd.f32 %v1264, %v1622
      %v1741 = vadd.f32 %v1269, %v1627
      %v1742 = vadd.f32 %v1272, %v1630
      %v1743 = vadd.f32 %v1277, %v1635
      %v1744 = vadd.f32 %v1280, %v1638
      %v1745 = vadd.f32 %v1285, %v1643
      %v1746 = vadd.f32 %v1288, %v1646
      %v1747 = vadd.f32 %v1293, %v1651
      %v1748 = vadd.f32 %v1296, %v1654
      %v1749 = vadd.f32 %v1301, %v1659
      %v1750 = vadd.f32 %v1304, %v1662
      %v1751 = vadd.f32 %v1309, %v1667
      %v1752 = vadd.f32 %v1312, %v1670
      %v1753 = vadd.f32 %v1317, %v1675
      %v1754 = vadd.f32 %v1320, %v1678
      %v1755 = vadd.f32 %v1325, %v1683
      %v1756 = vadd.f32 %v1328, %v1686
      %v1757 = vadd.f32 %v1333, %v1691
      %v1758 = vadd.f32 %v1336, %v1694
      %v1759 = vadd.f32 %v1341, %v1699
      %v1760 = vadd.f32 %v1344, %v1702
      %v1761 = vadd.f32 %v1349, %v1707
      %v1762 = vadd.f32 %v1352, %v1710
      %v1763 = vadd.f32 %v1357, %v1715
      %v1764 = vadd.f32 %v1360, %v1718
      %v1765 = vadd.f32 %v1365, %v1723
      %v1766 = vadd.f32 %v1368, %v1726
      %v1767 = vadd.f32 %v1373, %v1731
      %v1768 = vadd.f32 %v1376, %v1734
      %v1769 = vld [vmem:[#allocation2 + $0x10] sm:$0xff]
      %v1770 = vld [vmem:[#allocation2 + $0x18] sm:$0xff]
      %v1771 = vld [vmem:[#allocation2 + $0x20] sm:$0xff]
      %v1772 = vld [vmem:[#allocation2 + $0x28] sm:$0xff]
      %v1773 = vld [vmem:[#allocation2 + $0x30] sm:$0xff]
      %v1774 = vld [vmem:[#allocation2 + $0x38] sm:$0xff]
      %v1775 = vld [vmem:[#allocation2 + $0x40] sm:$0xff]
      %v1776 = vld [vmem:[#allocation2 + $0x48] sm:$0xff]
      %v1777 = vld [vmem:[#allocation2 + $0x50] sm:$0xff]
      %v1778 = vld [vmem:[#allocation2 + $0x58] sm:$0xff]
      %v1779 = vld [vmem:[#allocation2 + $0x60] sm:$0xff]
      %v1780 = vld [vmem:[#allocation2 + $0x68] sm:$0xff]
      %v1781 = vld [vmem:[#allocation2 + $0x70] sm:$0xff]
      %v1782 = vld [vmem:[#allocation2 + $0x78] sm:$0xff]
      %v1783 = vld [vmem:[#allocation2 + $0x80] sm:$0xff]
      %v1784 = vld [vmem:[#allocation2 + $0x88] sm:$0xff]
      %v1785 = vld [vmem:[#allocation2 + $0x90] sm:$0xff]
      %v1786 = vld [vmem:[#allocation2 + $0x98] sm:$0xff]
      %v1787 = vld [vmem:[#allocation2 + $0xa0] sm:$0xff]
      %v1788 = vld [vmem:[#allocation2 + $0xa8] sm:$0xff]
      %v1789 = vld [vmem:[#allocation2 + $0xb0] sm:$0xff]
      %v1790 = vld [vmem:[#allocation2 + $0xb8] sm:$0xff]
      %v1791 = vld [vmem:[#allocation2 + $0xc0] sm:$0xff]
      %v1792 = vld [vmem:[#allocation2 + $0xc8] sm:$0xff]
      %v1793 = vld [vmem:[#allocation2 + $0xd0] sm:$0xff]
      %v1794 = vld [vmem:[#allocation2 + $0xd8] sm:$0xff]
      %v1795 = vld [vmem:[#allocation2 + $0xe0] sm:$0xff]
      %v1796 = vld [vmem:[#allocation2 + $0xe8] sm:$0xff]
      %v1797 = vld [vmem:[#allocation2 + $0xf0] sm:$0xff]
      %v1798 = vld [vmem:[#allocation2 + $0xf8] sm:$0xff]
      %v1799 = vld [vmem:[#allocation2 + $0x100] sm:$0xff]
      %v1800 = vld [vmem:[#allocation2 + $0x108] sm:$0xff]
      %v1801 = vsel %vm820, %v1769, 0.0
      %v1802 = vsel %vm821, %v1770, 0.0
      %v1803 = vsel %vm822, %v1771, 0.0
      %v1804 = vsel %vm823, %v1772, 0.0
      %v1805 = vsel %vm824, %v1773, 0.0
      %v1806 = vsel %vm825, %v1774, 0.0
      %v1807 = vsel %vm826, %v1775, 0.0
      %v1808 = vsel %vm827, %v1776, 0.0
      %v1809 = vsel %vm828, %v1777, 0.0
      %v1810 = vsel %vm829, %v1778, 0.0
      %v1811 = vsel %vm830, %v1779, 0.0
      %v1812 = vsel %vm831, %v1780, 0.0
      %v1813 = vsel %vm832, %v1781, 0.0
      %v1814 = vsel %vm833, %v1782, 0.0
      %v1815 = vsel %vm834, %v1783, 0.0
      %v1816 = vsel %vm835, %v1784, 0.0
      %v1817 = vsel %vm836, %v1785, 0.0
      %v1818 = vsel %vm837, %v1786, 0.0
      %v1819 = vsel %vm838, %v1787, 0.0
      %v1820 = vsel %vm839, %v1788, 0.0
      %v1821 = vsel %vm840, %v1789, 0.0
      %v1822 = vsel %vm841, %v1790, 0.0
      %v1823 = vsel %vm842, %v1791, 0.0
      %v1824 = vsel %vm843, %v1792, 0.0
      %v1825 = vsel %vm844, %v1793, 0.0
      %v1826 = vsel %vm845, %v1794, 0.0
      %v1827 = vsel %vm846, %v1795, 0.0
      %v1828 = vsel %vm847, %v1796, 0.0
      %v1829 = vsel %vm848, %v1797, 0.0
      %v1830 = vsel %vm849, %v1798, 0.0
      %v1831 = vsel %vm850, %v1799, 0.0
      %v1832 = vsel %vm851, %v1800, 0.0
      %v1833 = vpack.c.bf16 %v1802, %v1801
      %v1834 = vpack.c.bf16 %v1804, %v1803
      %v1835 = vpack.c.bf16 %v1806, %v1805
      %v1836 = vpack.c.bf16 %v1808, %v1807
      %v1837 = vpack.c.bf16 %v1810, %v1809
      %v1838 = vpack.c.bf16 %v1812, %v1811
      %v1839 = vpack.c.bf16 %v1814, %v1813
      %v1840 = vpack.c.bf16 %v1816, %v1815
      %v1841 = vpack.c.bf16 %v1818, %v1817
      %v1842 = vpack.c.bf16 %v1820, %v1819
      %v1843 = vpack.c.bf16 %v1822, %v1821
      %v1844 = vpack.c.bf16 %v1824, %v1823
      %v1845 = vpack.c.bf16 %v1826, %v1825
      %v1846 = vpack.c.bf16 %v1828, %v1827
      %v1847 = vpack.c.bf16 %v1830, %v1829
      %v1848 = vpack.c.bf16 %v1832, %v1831
      %s1849 = scalar_lea.vmem %s1, 6
      %v1850 = vld [vmem:[%s1849] sm:$0x3]
      %v1852 = vsel %vm172, %v1833, 0
      %v1855 = vsel %vm172, %v1834, 0
      %v1858 = vsel %vm172, %v1835, 0
      %v1861 = vsel %vm172, %v1836, 0
      %v1864 = vsel %vm172, %v1837, 0
      %v1867 = vsel %vm172, %v1838, 0
      %v1870 = vsel %vm172, %v1839, 0
      %v1873 = vsel %vm172, %v1840, 0
      %v1876 = vsel %vm172, %v1841, 0
      %v1879 = vsel %vm172, %v1842, 0
      %v1882 = vsel %vm172, %v1843, 0
      %v1885 = vsel %vm172, %v1844, 0
      %v1888 = vsel %vm172, %v1845, 0
      %v1891 = vsel %vm172, %v1846, 0
      %v1894 = vsel %vm172, %v1847, 0
      %v1897 = vsel %vm172, %v1848, 0
      %v1900 = vand.u32 %v1850, %v1002
      %1902 = vmatprep.subr.bf16.mxu0 0
      %1903 = vmatpush1.bf16.msra.mxu0 %v1900
      %1904 = vmatprep.subr.bf16.mxu0 0
      %1905 = vmatpush1.bf16.msra.mxu0 0
      %1906 = vmatprep.subr.bf16.mxu0 0
      %1907 = vmatpush1.bf16.msra.mxu0 0
      %1908 = vmatprep.subr.bf16.mxu0 0
      %1909 = vmatpush1.bf16.msra.mxu0 0
      %1910 = vmatprep.subr.bf16.mxu0 0
      %1911 = vmatpush1.bf16.msra.mxu0 0
      %1912 = vmatprep.subr.bf16.mxu0 0
      %1913 = vmatpush1.bf16.msra.mxu0 0
      %1914 = vmatprep.subr.bf16.mxu0 0
      %1915 = vmatpush1.bf16.msra.mxu0 0
      %1916 = vmatprep.subr.bf16.mxu0 0
      %1917 = vmatpush1.bf16.msra.mxu0 0
      %1918 = vmatprep.subr.bf16.mxu0 0
      %1919 = vmatpush1.bf16.msra.mxu0 0
      %1920 = vmatprep.subr.bf16.mxu0 0
      %1921 = vmatpush1.bf16.msra.mxu0 0
      %1922 = vmatprep.subr.bf16.mxu0 0
      %1923 = vmatpush1.bf16.msra.mxu0 0
      %1924 = vmatprep.subr.bf16.mxu0 0
      %1925 = vmatpush1.bf16.msra.mxu0 0
      %1926 = vmatprep.subr.bf16.mxu0 0
      %1927 = vmatpush1.bf16.msra.mxu0 0
      %1928 = vmatprep.subr.bf16.mxu0 0
      %1929 = vmatpush1.bf16.msra.mxu0 0
      %1930 = vmatprep.subr.bf16.mxu0 0
      %1931 = vmatpush1.bf16.msra.mxu0 0
      %1932 = vmatprep.subr.bf16.mxu0 0
      %1933 = vmatpush1.bf16.msra.mxu0 0
      %1934 = vmatprep.mubr.bf16.mxu0 0
      %1935 = vmatmul.mubr.bf16.gmra.mrb[0].mxu0 %v1852
      %v1936 = vpop.f32.mrb[0].mxu0
      %v1937 = vadd.f32 0.0, %v1936
      %v1938 = vpop.f32.mrb[0].mxu0
      %v1939 = vpop.f32.mrb[0].mxu0
      %v1940 = vadd.f32 0.0, %v1939
      %v1941 = vpop.f32.mrb[0].mxu0
      %1942 = vmatprep.mubr.bf16.mxu0 0
      %1943 = vmatmul.mubr.bf16.gmra.mrb[0].mxu0 %v1855
      %v1944 = vpop.f32.mrb[0].mxu0
      %v1945 = vadd.f32 0.0, %v1944
      %v1946 = vpop.f32.mrb[0].mxu0
      %v1947 = vpop.f32.mrb[0].mxu0
      %v1948 = vadd.f32 0.0, %v1947
      %v1949 = vpop.f32.mrb[0].mxu0
      %1950 = vmatprep.mubr.bf16.mxu0 0
      %1951 = vmatmul.mubr.bf16.gmra.mrb[0].mxu0 %v1858
      %v1952 = vpop.f32.mrb[0].mxu0
      %v1953 = vadd.f32 0.0, %v1952
      %v1954 = vpop.f32.mrb[0].mxu0
      %v1955 = vpop.f32.mrb[0].mxu0
      %v1956 = vadd.f32 0.0, %v1955
      %v1957 = vpop.f32.mrb[0].mxu0
      %1958 = vmatprep.mubr.bf16.mxu0 0
      %1959 = vmatmul.mubr.bf16.gmra.mrb[0].mxu0 %v1861
      %v1960 = vpop.f32.mrb[0].mxu0
      %v1961 = vadd.f32 0.0, %v1960
      %v1962 = vpop.f32.mrb[0].mxu0
      %v1963 = vpop.f32.mrb[0].mxu0
      %v1964 = vadd.f32 0.0, %v1963
      %v1965 = vpop.f32.mrb[0].mxu0
      %1966 = vmatprep.mubr.bf16.mxu0 0
      %1967 = vmatmul.mubr.bf16.gmra.mrb[0].mxu0 %v1864
      %v1968 = vpop.f32.mrb[0].mxu0
      %v1969 = vadd.f32 0.0, %v1968
      %v1970 = vpop.f32.mrb[0].mxu0
      %v1971 = vpop.f32.mrb[0].mxu0
      %v1972 = vadd.f32 0.0, %v1971
      %v1973 = vpop.f32.mrb[0].mxu0
      %1974 = vmatprep.mubr.bf16.mxu0 0
      %1975 = vmatmul.mubr.bf16.gmra.mrb[0].mxu0 %v1867
      %v1976 = vpop.f32.mrb[0].mxu0
      %v1977 = vadd.f32 0.0, %v1976
      %v1978 = vpop.f32.mrb[0].mxu0
      %v1979 = vpop.f32.mrb[0].mxu0
      %v1980 = vadd.f32 0.0, %v1979
      %v1981 = vpop.f32.mrb[0].mxu0
      %1982 = vmatprep.mubr.bf16.mxu0 0
      %1983 = vmatmul.mubr.bf16.gmra.mrb[0].mxu0 %v1870
      %v1984 = vpop.f32.mrb[0].mxu0
      %v1985 = vadd.f32 0.0, %v1984
      %v1986 = vpop.f32.mrb[0].mxu0
      %v1987 = vpop.f32.mrb[0].mxu0
      %v1988 = vadd.f32 0.0, %v1987
      %v1989 = vpop.f32.mrb[0].mxu0
      %1990 = vmatprep.mubr.bf16.mxu0 0
      %1991 = vmatmul.mubr.bf16.gmra.mrb[0].mxu0 %v1873
      %v1992 = vpop.f32.mrb[0].mxu0
      %v1993 = vadd.f32 0.0, %v1992
      %v1994 = vpop.f32.mrb[0].mxu0
      %v1995 = vpop.f32.mrb[0].mxu0
      %v1996 = vadd.f32 0.0, %v1995
      %v1997 = vpop.f32.mrb[0].mxu0
      %1998 = vmatprep.mubr.bf16.mxu0 0
      %1999 = vmatmul.mubr.bf16.gmra.mrb[0].mxu0 %v1876
      %v2000 = vpop.f32.mrb[0].mxu0
      %v2001 = vadd.f32 0.0, %v2000
      %v2002 = vpop.f32.mrb[0].mxu0
      %v2003 = vpop.f32.mrb[0].mxu0
      %v2004 = vadd.f32 0.0, %v2003
      %v2005 = vpop.f32.mrb[0].mxu0
      %2006 = vmatprep.mubr.bf16.mxu0 0
      %2007 = vmatmul.mubr.bf16.gmra.mrb[0].mxu0 %v1879
      %v2008 = vpop.f32.mrb[0].mxu0
      %v2009 = vadd.f32 0.0, %v2008
      %v2010 = vpop.f32.mrb[0].mxu0
      %v2011 = vpop.f32.mrb[0].mxu0
      %v2012 = vadd.f32 0.0, %v2011
      %v2013 = vpop.f32.mrb[0].mxu0
      %2014 = vmatprep.mubr.bf16.mxu0 0
      %2015 = vmatmul.mubr.bf16.gmra.mrb[0].mxu0 %v1882
      %v2016 = vpop.f32.mrb[0].mxu0
      %v2017 = vadd.f32 0.0, %v2016
      %v2018 = vpop.f32.mrb[0].mxu0
      %v2019 = vpop.f32.mrb[0].mxu0
      %v2020 = vadd.f32 0.0, %v2019
      %v2021 = vpop.f32.mrb[0].mxu0
      %2022 = vmatprep.mubr.bf16.mxu0 0
      %2023 = vmatmul.mubr.bf16.gmra.mrb[0].mxu0 %v1885
      %v2024 = vpop.f32.mrb[0].mxu0
      %v2025 = vadd.f32 0.0, %v2024
      %v2026 = vpop.f32.mrb[0].mxu0
      %v2027 = vpop.f32.mrb[0].mxu0
      %v2028 = vadd.f32 0.0, %v2027
      %v2029 = vpop.f32.mrb[0].mxu0
      %2030 = vmatprep.mubr.bf16.mxu0 0
      %2031 = vmatmul.mubr.bf16.gmra.mrb[0].mxu0 %v1888
      %v2032 = vpop.f32.mrb[0].mxu0
      %v2033 = vadd.f32 0.0, %v2032
      %v2034 = vpop.f32.mrb[0].mxu0
      %v2035 = vpop.f32.mrb[0].mxu0
      %v2036 = vadd.f32 0.0, %v2035
      %v2037 = vpop.f32.mrb[0].mxu0
      %2038 = vmatprep.mubr.bf16.mxu0 0
      %2039 = vmatmul.mubr.bf16.gmra.mrb[0].mxu0 %v1891
      %v2040 = vpop.f32.mrb[0].mxu0
      %v2041 = vadd.f32 0.0, %v2040
      %v2042 = vpop.f32.mrb[0].mxu0
      %v2043 = vpop.f32.mrb[0].mxu0
      %v2044 = vadd.f32 0.0, %v2043
      %v2045 = vpop.f32.mrb[0].mxu0
      %2046 = vmatprep.mubr.bf16.mxu0 0
      %2047 = vmatmul.mubr.bf16.gmra.mrb[0].mxu0 %v1894
      %v2048 = vpop.f32.mrb[0].mxu0
      %v2049 = vadd.f32 0.0, %v2048
      %v2050 = vpop.f32.mrb[0].mxu0
      %v2051 = vpop.f32.mrb[0].mxu0
      %v2052 = vadd.f32 0.0, %v2051
      %v2053 = vpop.f32.mrb[0].mxu0
      %2054 = vmatprep.mubr.bf16.mxu0 0
      %2055 = vmatmul.mubr.bf16.gmra.mrb[0].mxu0 %v1897
      %v2056 = vpop.f32.mrb[0].mxu0
      %v2057 = vadd.f32 0.0, %v2056
      %v2058 = vpop.f32.mrb[0].mxu0
      %v2059 = vpop.f32.mrb[0].mxu0
      %v2060 = vadd.f32 0.0, %v2059
      %v2061 = vpop.f32.mrb[0].mxu0
      %2062 = vdwg.mxu0
      %v2063 = vadd.f32 %v1737, %v1937
      %v2064 = vadd.f32 %v1738, %v1940
      %v2065 = vadd.f32 %v1739, %v1945
      %v2066 = vadd.f32 %v1740, %v1948
      %v2067 = vadd.f32 %v1741, %v1953
      %v2068 = vadd.f32 %v1742, %v1956
      %v2069 = vadd.f32 %v1743, %v1961
      %v2070 = vadd.f32 %v1744, %v1964
      %v2071 = vadd.f32 %v1745, %v1969
      %v2072 = vadd.f32 %v1746, %v1972
      %v2073 = vadd.f32 %v1747, %v1977
      %v2074 = vadd.f32 %v1748, %v1980
      %v2075 = vadd.f32 %v1749, %v1985
      %v2076 = vadd.f32 %v1750, %v1988
      %v2077 = vadd.f32 %v1751, %v1993
      %v2078 = vadd.f32 %v1752, %v1996
      %v2079 = vadd.f32 %v1753, %v2001
      %v2080 = vadd.f32 %v1754, %v2004
      %v2081 = vadd.f32 %v1755, %v2009
      %v2082 = vadd.f32 %v1756, %v2012
      %v2083 = vadd.f32 %v1757, %v2017
      %v2084 = vadd.f32 %v1758, %v2020
      %v2085 = vadd.f32 %v1759, %v2025
      %v2086 = vadd.f32 %v1760, %v2028
      %v2087 = vadd.f32 %v1761, %v2033
      %v2088 = vadd.f32 %v1762, %v2036
      %v2089 = vadd.f32 %v1763, %v2041
      %v2090 = vadd.f32 %v1764, %v2044
      %v2091 = vadd.f32 %v1765, %v2049
      %v2092 = vadd.f32 %v1766, %v2052
      %v2093 = vadd.f32 %v1767, %v2057
      %v2094 = vadd.f32 %v1768, %v2060
      %v2095 = vld [vmem:[#allocation2 + $0x11] sm:$0xff]
      %v2096 = vld [vmem:[#allocation2 + $0x19] sm:$0xff]
      %v2097 = vld [vmem:[#allocation2 + $0x21] sm:$0xff]
      %v2098 = vld [vmem:[#allocation2 + $0x29] sm:$0xff]
      %v2099 = vld [vmem:[#allocation2 + $0x31] sm:$0xff]
      %v2100 = vld [vmem:[#allocation2 + $0x39] sm:$0xff]
      %v2101 = vld [vmem:[#allocation2 + $0x41] sm:$0xff]
      %v2102 = vld [vmem:[#allocation2 + $0x49] sm:$0xff]
      %v2103 = vld [vmem:[#allocation2 + $0x51] sm:$0xff]
      %v2104 = vld [vmem:[#allocation2 + $0x59] sm:$0xff]
      %v2105 = vld [vmem:[#allocation2 + $0x61] sm:$0xff]
      %v2106 = vld [vmem:[#allocation2 + $0x69] sm:$0xff]
      %v2107 = vld [vmem:[#allocation2 + $0x71] sm:$0xff]
      %v2108 = vld [vmem:[#allocation2 + $0x79] sm:$0xff]
      %v2109 = vld [vmem:[#allocation2 + $0x81] sm:$0xff]
      %v2110 = vld [vmem:[#allocation2 + $0x89] sm:$0xff]
      %v2111 = vld [vmem:[#allocation2 + $0x91] sm:$0xff]
      %v2112 = vld [vmem:[#allocation2 + $0x99] sm:$0xff]
      %v2113 = vld [vmem:[#allocation2 + $0xa1] sm:$0xff]
      %v2114 = vld [vmem:[#allocation2 + $0xa9] sm:$0xff]
      %v2115 = vld [vmem:[#allocation2 + $0xb1] sm:$0xff]
      %v2116 = vld [vmem:[#allocation2 + $0xb9] sm:$0xff]
      %v2117 = vld [vmem:[#allocation2 + $0xc1] sm:$0xff]
      %v2118 = vld [vmem:[#allocation2 + $0xc9] sm:$0xff]
      %v2119 = vld [vmem:[#allocation2 + $0xd1] sm:$0xff]
      %v2120 = vld [vmem:[#allocation2 + $0xd9] sm:$0xff]
      %v2121 = vld [vmem:[#allocation2 + $0xe1] sm:$0xff]
      %v2122 = vld [vmem:[#allocation2 + $0xe9] sm:$0xff]
      %v2123 = vld [vmem:[#allocation2 + $0xf1] sm:$0xff]
      %v2124 = vld [vmem:[#allocation2 + $0xf9] sm:$0xff]
      %v2125 = vld [vmem:[#allocation2 + $0x101] sm:$0xff]
      %v2126 = vld [vmem:[#allocation2 + $0x109] sm:$0xff]
      %v2127 = vpack.c.bf16 %v2096, %v2095
      %v2128 = vpack.c.bf16 %v2098, %v2097
      %v2129 = vpack.c.bf16 %v2100, %v2099
      %v2130 = vpack.c.bf16 %v2102, %v2101
      %v2131 = vpack.c.bf16 %v2104, %v2103
      %v2132 = vpack.c.bf16 %v2106, %v2105
      %v2133 = vpack.c.bf16 %v2108, %v2107
      %v2134 = vpack.c.bf16 %v2110, %v2109
      %v2135 = vpack.c.bf16 %v2112, %v2111
      %v2136 = vpack.c.bf16 %v2114, %v2113
      %v2137 = vpack.c.bf16 %v2116, %v2115
      %v2138 = vpack.c.bf16 %v2118, %v2117
      %v2139 = vpack.c.bf16 %v2120, %v2119
      %v2140 = vpack.c.bf16 %v2122, %v2121
      %v2141 = vpack.c.bf16 %v2124, %v2123
      %v2142 = vpack.c.bf16 %v2126, %v2125
      %s2143 = scalar_lea.vmem %s1, 8
      %v2144 = vld [vmem:[%s2143] sm:$0x3]
      %v2146 = vsel %vm172, %v2127, 0
      %v2149 = vsel %vm172, %v2128, 0
      %v2152 = vsel %vm172, %v2129, 0
      %v2155 = vsel %vm172, %v2130, 0
      %v2158 = vsel %vm172, %v2131, 0
      %v2161 = vsel %vm172, %v2132, 0
      %v2164 = vsel %vm172, %v2133, 0
      %v2167 = vsel %vm172, %v2134, 0
      %v2170 = vsel %vm172, %v2135, 0
      %v2173 = vsel %vm172, %v2136, 0
      %v2176 = vsel %vm172, %v2137, 0
      %v2179 = vsel %vm172, %v2138, 0
      %v2182 = vsel %vm172, %v2139, 0
      %v2185 = vsel %vm172, %v2140, 0
      %v2188 = vsel %vm172, %v2141, 0
      %v2191 = vsel %vm172, %v2142, 0
      %v2194 = vand.u32 %v2144, %v1002
      %2196 = vmatprep.subr.bf16.mxu0 0
      %2197 = vmatpush1.bf16.msra.mxu0 %v2194
      %2198 = vmatprep.subr.bf16.mxu0 0
      %2199 = vmatpush1.bf16.msra.mxu0 0
      %2200 = vmatprep.subr.bf16.mxu0 0
      %2201 = vmatpush1.bf16.msra.mxu0 0
      %2202 = vmatprep.subr.bf16.mxu0 0
      %2203 = vmatpush1.bf16.msra.mxu0 0
      %2204 = vmatprep.subr.bf16.mxu0 0
      %2205 = vmatpush1.bf16.msra.mxu0 0
      %2206 = vmatprep.subr.bf16.mxu0 0
      %2207 = vmatpush1.bf16.msra.mxu0 0
      %2208 = vmatprep.subr.bf16.mxu0 0
      %2209 = vmatpush1.bf16.msra.mxu0 0
      %2210 = vmatprep.subr.bf16.mxu0 0
      %2211 = vmatpush1.bf16.msra.mxu0 0
      %2212 = vmatprep.subr.bf16.mxu0 0
      %2213 = vmatpush1.bf16.msra.mxu0 0
      %2214 = vmatprep.subr.bf16.mxu0 0
      %2215 = vmatpush1.bf16.msra.mxu0 0
      %2216 = vmatprep.subr.bf16.mxu0 0
      %2217 = vmatpush1.bf16.msra.mxu0 0
      %2218 = vmatprep.subr.bf16.mxu0 0
      %2219 = vmatpush1.bf16.msra.mxu0 0
      %2220 = vmatprep.subr.bf16.mxu0 0
      %2221 = vmatpush1.bf16.msra.mxu0 0
      %2222 = vmatprep.subr.bf16.mxu0 0
      %2223 = vmatpush1.bf16.msra.mxu0 0
      %2224 = vmatprep.subr.bf16.mxu0 0
      %2225 = vmatpush1.bf16.msra.mxu0 0
      %2226 = vmatprep.subr.bf16.mxu0 0
      %2227 = vmatpush1.bf16.msra.mxu0 0
      %2228 = vmatprep.mubr.bf16.mxu0 0
      %2229 = vmatmul.mubr.bf16.gmra.mrb[0].mxu0 %v2146
      %v2230 = vpop.f32.mrb[0].mxu0
      %v2231 = vadd.f32 0.0, %v2230
      %v2232 = vpop.f32.mrb[0].mxu0
      %v2233 = vpop.f32.mrb[0].mxu0
      %v2234 = vadd.f32 0.0, %v2233
      %v2235 = vpop.f32.mrb[0].mxu0
      %2236 = vmatprep.mubr.bf16.mxu0 0
      %2237 = vmatmul.mubr.bf16.gmra.mrb[0].mxu0 %v2149
      %v2238 = vpop.f32.mrb[0].mxu0
      %v2239 = vadd.f32 0.0, %v2238
      %v2240 = vpop.f32.mrb[0].mxu0
      %v2241 = vpop.f32.mrb[0].mxu0
      %v2242 = vadd.f32 0.0, %v2241
      %v2243 = vpop.f32.mrb[0].mxu0
      %2244 = vmatprep.mubr.bf16.mxu0 0
      %2245 = vmatmul.mubr.bf16.gmra.mrb[0].mxu0 %v2152
      %v2246 = vpop.f32.mrb[0].mxu0
      %v2247 = vadd.f32 0.0, %v2246
      %v2248 = vpop.f32.mrb[0].mxu0
      %v2249 = vpop.f32.mrb[0].mxu0
      %v2250 = vadd.f32 0.0, %v2249
      %v2251 = vpop.f32.mrb[0].mxu0
      %2252 = vmatprep.mubr.bf16.mxu0 0
      %2253 = vmatmul.mubr.bf16.gmra.mrb[0].mxu0 %v2155
      %v2254 = vpop.f32.mrb[0].mxu0
      %v2255 = vadd.f32 0.0, %v2254
      %v2256 = vpop.f32.mrb[0].mxu0
      %v2257 = vpop.f32.mrb[0].mxu0
      %v2258 = vadd.f32 0.0, %v2257
      %v2259 = vpop.f32.mrb[0].mxu0
      %2260 = vmatprep.mubr.bf16.mxu0 0
      %2261 = vmatmul.mubr.bf16.gmra.mrb[0].mxu0 %v2158
      %v2262 = vpop.f32.mrb[0].mxu0
      %v2263 = vadd.f32 0.0, %v2262
      %v2264 = vpop.f32.mrb[0].mxu0
      %v2265 = vpop.f32.mrb[0].mxu0
      %v2266 = vadd.f32 0.0, %v2265
      %v2267 = vpop.f32.mrb[0].mxu0
      %2268 = vmatprep.mubr.bf16.mxu0 0
      %2269 = vmatmul.mubr.bf16.gmra.mrb[0].mxu0 %v2161
      %v2270 = vpop.f32.mrb[0].mxu0
      %v2271 = vadd.f32 0.0, %v2270
      %v2272 = vpop.f32.mrb[0].mxu0
      %v2273 = vpop.f32.mrb[0].mxu0
      %v2274 = vadd.f32 0.0, %v2273
      %v2275 = vpop.f32.mrb[0].mxu0
      %2276 = vmatprep.mubr.bf16.mxu0 0
      %2277 = vmatmul.mubr.bf16.gmra.mrb[0].mxu0 %v2164
      %v2278 = vpop.f32.mrb[0].mxu0
      %v2279 = vadd.f32 0.0, %v2278
      %v2280 = vpop.f32.mrb[0].mxu0
      %v2281 = vpop.f32.mrb[0].mxu0
      %v2282 = vadd.f32 0.0, %v2281
      %v2283 = vpop.f32.mrb[0].mxu0
      %2284 = vmatprep.mubr.bf16.mxu0 0
      %2285 = vmatmul.mubr.bf16.gmra.mrb[0].mxu0 %v2167
      %v2286 = vpop.f32.mrb[0].mxu0
      %v2287 = vadd.f32 0.0, %v2286
      %v2288 = vpop.f32.mrb[0].mxu0
      %v2289 = vpop.f32.mrb[0].mxu0
      %v2290 = vadd.f32 0.0, %v2289
      %v2291 = vpop.f32.mrb[0].mxu0
      %2292 = vmatprep.mubr.bf16.mxu0 0
      %2293 = vmatmul.mubr.bf16.gmra.mrb[0].mxu0 %v2170
      %v2294 = vpop.f32.mrb[0].mxu0
      %v2295 = vadd.f32 0.0, %v2294
      %v2296 = vpop.f32.mrb[0].mxu0
      %v2297 = vpop.f32.mrb[0].mxu0
      %v2298 = vadd.f32 0.0, %v2297
      %v2299 = vpop.f32.mrb[0].mxu0
      %2300 = vmatprep.mubr.bf16.mxu0 0
      %2301 = vmatmul.mubr.bf16.gmra.mrb[0].mxu0 %v2173
      %v2302 = vpop.f32.mrb[0].mxu0
      %v2303 = vadd.f32 0.0, %v2302
      %v2304 = vpop.f32.mrb[0].mxu0
      %v2305 = vpop.f32.mrb[0].mxu0
      %v2306 = vadd.f32 0.0, %v2305
      %v2307 = vpop.f32.mrb[0].mxu0
      %2308 = vmatprep.mubr.bf16.mxu0 0
      %2309 = vmatmul.mubr.bf16.gmra.mrb[0].mxu0 %v2176
      %v2310 = vpop.f32.mrb[0].mxu0
      %v2311 = vadd.f32 0.0, %v2310
      %v2312 = vpop.f32.mrb[0].mxu0
      %v2313 = vpop.f32.mrb[0].mxu0
      %v2314 = vadd.f32 0.0, %v2313
      %v2315 = vpop.f32.mrb[0].mxu0
      %2316 = vmatprep.mubr.bf16.mxu0 0
      %2317 = vmatmul.mubr.bf16.gmra.mrb[0].mxu0 %v2179
      %v2318 = vpop.f32.mrb[0].mxu0
      %v2319 = vadd.f32 0.0, %v2318
      %v2320 = vpop.f32.mrb[0].mxu0
      %v2321 = vpop.f32.mrb[0].mxu0
      %v2322 = vadd.f32 0.0, %v2321
      %v2323 = vpop.f32.mrb[0].mxu0
      %2324 = vmatprep.mubr.bf16.mxu0 0
      %2325 = vmatmul.mubr.bf16.gmra.mrb[0].mxu0 %v2182
      %v2326 = vpop.f32.mrb[0].mxu0
      %v2327 = vadd.f32 0.0, %v2326
      %v2328 = vpop.f32.mrb[0].mxu0
      %v2329 = vpop.f32.mrb[0].mxu0
      %v2330 = vadd.f32 0.0, %v2329
      %v2331 = vpop.f32.mrb[0].mxu0
      %2332 = vmatprep.mubr.bf16.mxu0 0
      %2333 = vmatmul.mubr.bf16.gmra.mrb[0].mxu0 %v2185
      %v2334 = vpop.f32.mrb[0].mxu0
      %v2335 = vadd.f32 0.0, %v2334
      %v2336 = vpop.f32.mrb[0].mxu0
      %v2337 = vpop.f32.mrb[0].mxu0
      %v2338 = vadd.f32 0.0, %v2337
      %v2339 = vpop.f32.mrb[0].mxu0
      %2340 = vmatprep.mubr.bf16.mxu0 0
      %2341 = vmatmul.mubr.bf16.gmra.mrb[0].mxu0 %v2188
      %v2342 = vpop.f32.mrb[0].mxu0
      %v2343 = vadd.f32 0.0, %v2342
      %v2344 = vpop.f32.mrb[0].mxu0
      %v2345 = vpop.f32.mrb[0].mxu0
      %v2346 = vadd.f32 0.0, %v2345
      %v2347 = vpop.f32.mrb[0].mxu0
      %2348 = vmatprep.mubr.bf16.mxu0 0
      %2349 = vmatmul.mubr.bf16.gmra.mrb[0].mxu0 %v2191
      %v2350 = vpop.f32.mrb[0].mxu0
      %v2351 = vadd.f32 0.0, %v2350
      %v2352 = vpop.f32.mrb[0].mxu0
      %v2353 = vpop.f32.mrb[0].mxu0
      %v2354 = vadd.f32 0.0, %v2353
      %v2355 = vpop.f32.mrb[0].mxu0
      %2356 = vdwg.mxu0
      %v2357 = vadd.f32 %v2063, %v2231
      %v2358 = vadd.f32 %v2064, %v2234
      %v2359 = vadd.f32 %v2065, %v2239
      %v2360 = vadd.f32 %v2066, %v2242
      %v2361 = vadd.f32 %v2067, %v2247
      %v2362 = vadd.f32 %v2068, %v2250
      %v2363 = vadd.f32 %v2069, %v2255
      %v2364 = vadd.f32 %v2070, %v2258
      %v2365 = vadd.f32 %v2071, %v2263
      %v2366 = vadd.f32 %v2072, %v2266
      %v2367 = vadd.f32 %v2073, %v2271
      %v2368 = vadd.f32 %v2074, %v2274
      %v2369 = vadd.f32 %v2075, %v2279
      %v2370 = vadd.f32 %v2076, %v2282
      %v2371 = vadd.f32 %v2077, %v2287
      %v2372 = vadd.f32 %v2078, %v2290
      %v2373 = vadd.f32 %v2079, %v2295
      %v2374 = vadd.f32 %v2080, %v2298
      %v2375 = vadd.f32 %v2081, %v2303
      %v2376 = vadd.f32 %v2082, %v2306
      %v2377 = vadd.f32 %v2083, %v2311
      %v2378 = vadd.f32 %v2084, %v2314
      %v2379 = vadd.f32 %v2085, %v2319
      %v2380 = vadd.f32 %v2086, %v2322
      %v2381 = vadd.f32 %v2087, %v2327
      %v2382 = vadd.f32 %v2088, %v2330
      %v2383 = vadd.f32 %v2089, %v2335
      %v2384 = vadd.f32 %v2090, %v2338
      %v2385 = vadd.f32 %v2091, %v2343
      %v2386 = vadd.f32 %v2092, %v2346
      %v2387 = vadd.f32 %v2093, %v2351
      %v2388 = vadd.f32 %v2094, %v2354
      %v2389 = vld [vmem:[#allocation2 + $0x12] sm:$0xff]
      %v2390 = vld [vmem:[#allocation2 + $0x1a] sm:$0xff]
      %v2391 = vld [vmem:[#allocation2 + $0x22] sm:$0xff]
      %v2392 = vld [vmem:[#allocation2 + $0x2a] sm:$0xff]
      %v2393 = vld [vmem:[#allocation2 + $0x32] sm:$0xff]
      %v2394 = vld [vmem:[#allocation2 + $0x3a] sm:$0xff]
      %v2395 = vld [vmem:[#allocation2 + $0x42] sm:$0xff]
      %v2396 = vld [vmem:[#allocation2 + $0x4a] sm:$0xff]
      %v2397 = vld [vmem:[#allocation2 + $0x52] sm:$0xff]
      %v2398 = vld [vmem:[#allocation2 + $0x5a] sm:$0xff]
      %v2399 = vld [vmem:[#allocation2 + $0x62] sm:$0xff]
      %v2400 = vld [vmem:[#allocation2 + $0x6a] sm:$0xff]
      %v2401 = vld [vmem:[#allocation2 + $0x72] sm:$0xff]
      %v2402 = vld [vmem:[#allocation2 + $0x7a] sm:$0xff]
      %v2403 = vld [vmem:[#allocation2 + $0x82] sm:$0xff]
      %v2404 = vld [vmem:[#allocation2 + $0x8a] sm:$0xff]
      %v2405 = vld [vmem:[#allocation2 + $0x92] sm:$0xff]
      %v2406 = vld [vmem:[#allocation2 + $0x9a] sm:$0xff]
      %v2407 = vld [vmem:[#allocation2 + $0xa2] sm:$0xff]
      %v2408 = vld [vmem:[#allocation2 + $0xaa] sm:$0xff]
      %v2409 = vld [vmem:[#allocation2 + $0xb2] sm:$0xff]
      %v2410 = vld [vmem:[#allocation2 + $0xba] sm:$0xff]
      %v2411 = vld [vmem:[#allocation2 + $0xc2] sm:$0xff]
      %v2412 = vld [vmem:[#allocation2 + $0xca] sm:$0xff]
      %v2413 = vld [vmem:[#allocation2 + $0xd2] sm:$0xff]
      %v2414 = vld [vmem:[#allocation2 + $0xda] sm:$0xff]
      %v2415 = vld [vmem:[#allocation2 + $0xe2] sm:$0xff]
      %v2416 = vld [vmem:[#allocation2 + $0xea] sm:$0xff]
      %v2417 = vld [vmem:[#allocation2 + $0xf2] sm:$0xff]
      %v2418 = vld [vmem:[#allocation2 + $0xfa] sm:$0xff]
      %v2419 = vld [vmem:[#allocation2 + $0x102] sm:$0xff]
      %v2420 = vld [vmem:[#allocation2 + $0x10a] sm:$0xff]
      %v2421 = vsel %vm1443, %v2389, 0.0
      %v2422 = vsel %vm1444, %v2390, 0.0
      %v2423 = vsel %vm1445, %v2391, 0.0
      %v2424 = vsel %vm1446, %v2392, 0.0
      %v2425 = vsel %vm1447, %v2393, 0.0
      %v2426 = vsel %vm1448, %v2394, 0.0
      %v2427 = vsel %vm1449, %v2395, 0.0
      %v2428 = vsel %vm1450, %v2396, 0.0
      %v2429 = vsel %vm1451, %v2397, 0.0
      %v2430 = vsel %vm1452, %v2398, 0.0
      %v2431 = vsel %vm1453, %v2399, 0.0
      %v2432 = vsel %vm1454, %v2400, 0.0
      %v2433 = vsel %vm1455, %v2401, 0.0
      %v2434 = vsel %vm1456, %v2402, 0.0
      %v2435 = vsel %vm1457, %v2403, 0.0
      %v2436 = vsel %vm1458, %v2404, 0.0
      %v2437 = vsel %vm1459, %v2405, 0.0
      %v2438 = vsel %vm1460, %v2406, 0.0
      %v2439 = vsel %vm1461, %v2407, 0.0
      %v2440 = vsel %vm1462, %v2408, 0.0
      %v2441 = vsel %vm1463, %v2409, 0.0
      %v2442 = vsel %vm1464, %v2410, 0.0
      %v2443 = vsel %vm1465, %v2411, 0.0
      %v2444 = vsel %vm1466, %v2412, 0.0
      %v2445 = vsel %vm1467, %v2413, 0.0
      %v2446 = vsel %vm1468, %v2414, 0.0
      %v2447 = vsel %vm1469, %v2415, 0.0
      %v2448 = vsel %vm1470, %v2416, 0.0
      %v2449 = vsel %vm1471, %v2417, 0.0
      %v2450 = vsel %vm1472, %v2418, 0.0
      %v2451 = vsel %vm1473, %v2419, 0.0
      %v2452 = vsel %vm1474, %v2420, 0.0
      %v2453 = vpack.c.bf16 %v2422, %v2421
      %v2454 = vpack.c.bf16 %v2424, %v2423
      %v2455 = vpack.c.bf16 %v2426, %v2425
      %v2456 = vpack.c.bf16 %v2428, %v2427
      %v2457 = vpack.c.bf16 %v2430, %v2429
      %v2458 = vpack.c.bf16 %v2432, %v2431
      %v2459 = vpack.c.bf16 %v2434, %v2433
      %v2460 = vpack.c.bf16 %v2436, %v2435
      %v2461 = vpack.c.bf16 %v2438, %v2437
      %v2462 = vpack.c.bf16 %v2440, %v2439
      %v2463 = vpack.c.bf16 %v2442, %v2441
      %v2464 = vpack.c.bf16 %v2444, %v2443
      %v2465 = vpack.c.bf16 %v2446, %v2445
      %v2466 = vpack.c.bf16 %v2448, %v2447
      %v2467 = vpack.c.bf16 %v2450, %v2449
      %v2468 = vpack.c.bf16 %v2452, %v2451
      %s2469 = scalar_lea.vmem %s1, 10
      %v2470 = vld [vmem:[%s2469] sm:$0x3]
      %v2472 = vsel %vm172, %v2453, 0
      %v2475 = vsel %vm172, %v2454, 0
      %v2478 = vsel %vm172, %v2455, 0
      %v2481 = vsel %vm172, %v2456, 0
      %v2484 = vsel %vm172, %v2457, 0
      %v2487 = vsel %vm172, %v2458, 0
      %v2490 = vsel %vm172, %v2459, 0
      %v2493 = vsel %vm172, %v2460, 0
      %v2496 = vsel %vm172, %v2461, 0
      %v2499 = vsel %vm172, %v2462, 0
      %v2502 = vsel %vm172, %v2463, 0
      %v2505 = vsel %vm172, %v2464, 0
      %v2508 = vsel %vm172, %v2465, 0
      %v2511 = vsel %vm172, %v2466, 0
      %v2514 = vsel %vm172, %v2467, 0
      %v2517 = vsel %vm172, %v2468, 0
      %v2520 = vand.u32 %v2470, %v1002
      %2522 = vmatprep.subr.bf16.mxu0 0
      %2523 = vmatpush1.bf16.msra.mxu0 %v2520
      %2524 = vmatprep.subr.bf16.mxu0 0
      %2525 = vmatpush1.bf16.msra.mxu0 0
      %2526 = vmatprep.subr.bf16.mxu0 0
      %2527 = vmatpush1.bf16.msra.mxu0 0
      %2528 = vmatprep.subr.bf16.mxu0 0
      %2529 = vmatpush1.bf16.msra.mxu0 0
      %2530 = vmatprep.subr.bf16.mxu0 0
      %2531 = vmatpush1.bf16.msra.mxu0 0
      %2532 = vmatprep.subr.bf16.mxu0 0
      %2533 = vmatpush1.bf16.msra.mxu0 0
      %2534 = vmatprep.subr.bf16.mxu0 0
      %2535 = vmatpush1.bf16.msra.mxu0 0
      %2536 = vmatprep.subr.bf16.mxu0 0
      %2537 = vmatpush1.bf16.msra.mxu0 0
      %2538 = vmatprep.subr.bf16.mxu0 0
      %2539 = vmatpush1.bf16.msra.mxu0 0
      %2540 = vmatprep.subr.bf16.mxu0 0
      %2541 = vmatpush1.bf16.msra.mxu0 0
      %2542 = vmatprep.subr.bf16.mxu0 0
      %2543 = vmatpush1.bf16.msra.mxu0 0
      %2544 = vmatprep.subr.bf16.mxu0 0
      %2545 = vmatpush1.bf16.msra.mxu0 0
      %2546 = vmatprep.subr.bf16.mxu0 0
      %2547 = vmatpush1.bf16.msra.mxu0 0
      %2548 = vmatprep.subr.bf16.mxu0 0
      %2549 = vmatpush1.bf16.msra.mxu0 0
      %2550 = vmatprep.subr.bf16.mxu0 0
      %2551 = vmatpush1.bf16.msra.mxu0 0
      %2552 = vmatprep.subr.bf16.mxu0 0
      %2553 = vmatpush1.bf16.msra.mxu0 0
      %2554 = vmatprep.mubr.bf16.mxu0 0
      %2555 = vmatmul.mubr.bf16.gmra.mrb[0].mxu0 %v2472
      %v2556 = vpop.f32.mrb[0].mxu0
      %v2557 = vadd.f32 0.0, %v2556
      %v2558 = vpop.f32.mrb[0].mxu0
      %v2559 = vpop.f32.mrb[0].mxu0
      %v2560 = vadd.f32 0.0, %v2559
      %v2561 = vpop.f32.mrb[0].mxu0
      %2562 = vmatprep.mubr.bf16.mxu0 0
      %2563 = vmatmul.mubr.bf16.gmra.mrb[0].mxu0 %v2475
      %v2564 = vpop.f32.mrb[0].mxu0
      %v2565 = vadd.f32 0.0, %v2564
      %v2566 = vpop.f32.mrb[0].mxu0
      %v2567 = vpop.f32.mrb[0].mxu0
      %v2568 = vadd.f32 0.0, %v2567
      %v2569 = vpop.f32.mrb[0].mxu0
      %2570 = vmatprep.mubr.bf16.mxu0 0
      %2571 = vmatmul.mubr.bf16.gmra.mrb[0].mxu0 %v2478
      %v2572 = vpop.f32.mrb[0].mxu0
      %v2573 = vadd.f32 0.0, %v2572
      %v2574 = vpop.f32.mrb[0].mxu0
      %v2575 = vpop.f32.mrb[0].mxu0
      %v2576 = vadd.f32 0.0, %v2575
      %v2577 = vpop.f32.mrb[0].mxu0
      %2578 = vmatprep.mubr.bf16.mxu0 0
      %2579 = vmatmul.mubr.bf16.gmra.mrb[0].mxu0 %v2481
      %v2580 = vpop.f32.mrb[0].mxu0
      %v2581 = vadd.f32 0.0, %v2580
      %v2582 = vpop.f32.mrb[0].mxu0
      %v2583 = vpop.f32.mrb[0].mxu0
      %v2584 = vadd.f32 0.0, %v2583
      %v2585 = vpop.f32.mrb[0].mxu0
      %2586 = vmatprep.mubr.bf16.mxu0 0
      %2587 = vmatmul.mubr.bf16.gmra.mrb[0].mxu0 %v2484
      %v2588 = vpop.f32.mrb[0].mxu0
      %v2589 = vadd.f32 0.0, %v2588
      %v2590 = vpop.f32.mrb[0].mxu0
      %v2591 = vpop.f32.mrb[0].mxu0
      %v2592 = vadd.f32 0.0, %v2591
      %v2593 = vpop.f32.mrb[0].mxu0
      %2594 = vmatprep.mubr.bf16.mxu0 0
      %2595 = vmatmul.mubr.bf16.gmra.mrb[0].mxu0 %v2487
      %v2596 = vpop.f32.mrb[0].mxu0
      %v2597 = vadd.f32 0.0, %v2596
      %v2598 = vpop.f32.mrb[0].mxu0
      %v2599 = vpop.f32.mrb[0].mxu0
      %v2600 = vadd.f32 0.0, %v2599
      %v2601 = vpop.f32.mrb[0].mxu0
      %2602 = vmatprep.mubr.bf16.mxu0 0
      %2603 = vmatmul.mubr.bf16.gmra.mrb[0].mxu0 %v2490
      %v2604 = vpop.f32.mrb[0].mxu0
      %v2605 = vadd.f32 0.0, %v2604
      %v2606 = vpop.f32.mrb[0].mxu0
      %v2607 = vpop.f32.mrb[0].mxu0
      %v2608 = vadd.f32 0.0, %v2607
      %v2609 = vpop.f32.mrb[0].mxu0
      %2610 = vmatprep.mubr.bf16.mxu0 0
      %2611 = vmatmul.mubr.bf16.gmra.mrb[0].mxu0 %v2493
      %v2612 = vpop.f32.mrb[0].mxu0
      %v2613 = vadd.f32 0.0, %v2612
      %v2614 = vpop.f32.mrb[0].mxu0
      %v2615 = vpop.f32.mrb[0].mxu0
      %v2616 = vadd.f32 0.0, %v2615
      %v2617 = vpop.f32.mrb[0].mxu0
      %2618 = vmatprep.mubr.bf16.mxu0 0
      %2619 = vmatmul.mubr.bf16.gmra.mrb[0].mxu0 %v2496
      %v2620 = vpop.f32.mrb[0].mxu0
      %v2621 = vadd.f32 0.0, %v2620
      %v2622 = vpop.f32.mrb[0].mxu0
      %v2623 = vpop.f32.mrb[0].mxu0
      %v2624 = vadd.f32 0.0, %v2623
      %v2625 = vpop.f32.mrb[0].mxu0
      %2626 = vmatprep.mubr.bf16.mxu0 0
      %2627 = vmatmul.mubr.bf16.gmra.mrb[0].mxu0 %v2499
      %v2628 = vpop.f32.mrb[0].mxu0
      %v2629 = vadd.f32 0.0, %v2628
      %v2630 = vpop.f32.mrb[0].mxu0
      %v2631 = vpop.f32.mrb[0].mxu0
      %v2632 = vadd.f32 0.0, %v2631
      %v2633 = vpop.f32.mrb[0].mxu0
      %2634 = vmatprep.mubr.bf16.mxu0 0
      %2635 = vmatmul.mubr.bf16.gmra.mrb[0].mxu0 %v2502
      %v2636 = vpop.f32.mrb[0].mxu0
      %v2637 = vadd.f32 0.0, %v2636
      %v2638 = vpop.f32.mrb[0].mxu0
      %v2639 = vpop.f32.mrb[0].mxu0
      %v2640 = vadd.f32 0.0, %v2639
      %v2641 = vpop.f32.mrb[0].mxu0
      %2642 = vmatprep.mubr.bf16.mxu0 0
      %2643 = vmatmul.mubr.bf16.gmra.mrb[0].mxu0 %v2505
      %v2644 = vpop.f32.mrb[0].mxu0
      %v2645 = vadd.f32 0.0, %v2644
      %v2646 = vpop.f32.mrb[0].mxu0
      %v2647 = vpop.f32.mrb[0].mxu0
      %v2648 = vadd.f32 0.0, %v2647
      %v2649 = vpop.f32.mrb[0].mxu0
      %2650 = vmatprep.mubr.bf16.mxu0 0
      %2651 = vmatmul.mubr.bf16.gmra.mrb[0].mxu0 %v2508
      %v2652 = vpop.f32.mrb[0].mxu0
      %v2653 = vadd.f32 0.0, %v2652
      %v2654 = vpop.f32.mrb[0].mxu0
      %v2655 = vpop.f32.mrb[0].mxu0
      %v2656 = vadd.f32 0.0, %v2655
      %v2657 = vpop.f32.mrb[0].mxu0
      %2658 = vmatprep.mubr.bf16.mxu0 0
      %2659 = vmatmul.mubr.bf16.gmra.mrb[0].mxu0 %v2511
      %v2660 = vpop.f32.mrb[0].mxu0
      %v2661 = vadd.f32 0.0, %v2660
      %v2662 = vpop.f32.mrb[0].mxu0
      %v2663 = vpop.f32.mrb[0].mxu0
      %v2664 = vadd.f32 0.0, %v2663
      %v2665 = vpop.f32.mrb[0].mxu0
      %2666 = vmatprep.mubr.bf16.mxu0 0
      %2667 = vmatmul.mubr.bf16.gmra.mrb[0].mxu0 %v2514
      %v2668 = vpop.f32.mrb[0].mxu0
      %v2669 = vadd.f32 0.0, %v2668
      %v2670 = vpop.f32.mrb[0].mxu0
      %v2671 = vpop.f32.mrb[0].mxu0
      %v2672 = vadd.f32 0.0, %v2671
      %v2673 = vpop.f32.mrb[0].mxu0
      %2674 = vmatprep.mubr.bf16.mxu0 0
      %2675 = vmatmul.mubr.bf16.gmra.mrb[0].mxu0 %v2517
      %v2676 = vpop.f32.mrb[0].mxu0
      %v2677 = vadd.f32 0.0, %v2676
      %v2678 = vpop.f32.mrb[0].mxu0
      %v2679 = vpop.f32.mrb[0].mxu0
      %v2680 = vadd.f32 0.0, %v2679
      %v2681 = vpop.f32.mrb[0].mxu0
      %2682 = vdwg.mxu0
      %v2683 = vadd.f32 %v2357, %v2557
      %v2684 = vadd.f32 %v2358, %v2560
      %v2685 = vadd.f32 %v2359, %v2565
      %v2686 = vadd.f32 %v2360, %v2568
      %v2687 = vadd.f32 %v2361, %v2573
      %v2688 = vadd.f32 %v2362, %v2576
      %v2689 = vadd.f32 %v2363, %v2581
      %v2690 = vadd.f32 %v2364, %v2584
      %v2691 = vadd.f32 %v2365, %v2589
      %v2692 = vadd.f32 %v2366, %v2592
      %v2693 = vadd.f32 %v2367, %v2597
      %v2694 = vadd.f32 %v2368, %v2600
      %v2695 = vadd.f32 %v2369, %v2605
      %v2696 = vadd.f32 %v2370, %v2608
      %v2697 = vadd.f32 %v2371, %v2613
      %v2698 = vadd.f32 %v2372, %v2616
      %v2699 = vadd.f32 %v2373, %v2621
      %v2700 = vadd.f32 %v2374, %v2624
      %v2701 = vadd.f32 %v2375, %v2629
      %v2702 = vadd.f32 %v2376, %v2632
      %v2703 = vadd.f32 %v2377, %v2637
      %v2704 = vadd.f32 %v2378, %v2640
      %v2705 = vadd.f32 %v2379, %v2645
      %v2706 = vadd.f32 %v2380, %v2648
      %v2707 = vadd.f32 %v2381, %v2653
      %v2708 = vadd.f32 %v2382, %v2656
      %v2709 = vadd.f32 %v2383, %v2661
      %v2710 = vadd.f32 %v2384, %v2664
      %v2711 = vadd.f32 %v2385, %v2669
      %v2712 = vadd.f32 %v2386, %v2672
      %v2713 = vadd.f32 %v2387, %v2677
      %v2714 = vadd.f32 %v2388, %v2680
      %v2715 = vld [vmem:[#allocation2 + $0x20] sm:$0xff]
      %v2716 = vld [vmem:[#allocation2 + $0x28] sm:$0xff]
      %v2717 = vld [vmem:[#allocation2 + $0x30] sm:$0xff]
      %v2718 = vld [vmem:[#allocation2 + $0x38] sm:$0xff]
      %v2719 = vld [vmem:[#allocation2 + $0x40] sm:$0xff]
      %v2720 = vld [vmem:[#allocation2 + $0x48] sm:$0xff]
      %v2721 = vld [vmem:[#allocation2 + $0x50] sm:$0xff]
      %v2722 = vld [vmem:[#allocation2 + $0x58] sm:$0xff]
      %v2723 = vld [vmem:[#allocation2 + $0x60] sm:$0xff]
      %v2724 = vld [vmem:[#allocation2 + $0x68] sm:$0xff]
      %v2725 = vld [vmem:[#allocation2 + $0x70] sm:$0xff]
      %v2726 = vld [vmem:[#allocation2 + $0x78] sm:$0xff]
      %v2727 = vld [vmem:[#allocation2 + $0x80] sm:$0xff]
      %v2728 = vld [vmem:[#allocation2 + $0x88] sm:$0xff]
      %v2729 = vld [vmem:[#allocation2 + $0x90] sm:$0xff]
      %v2730 = vld [vmem:[#allocation2 + $0x98] sm:$0xff]
      %v2731 = vld [vmem:[#allocation2 + $0xa0] sm:$0xff]
      %v2732 = vld [vmem:[#allocation2 + $0xa8] sm:$0xff]
      %v2733 = vld [vmem:[#allocation2 + $0xb0] sm:$0xff]
      %v2734 = vld [vmem:[#allocation2 + $0xb8] sm:$0xff]
      %v2735 = vld [vmem:[#allocation2 + $0xc0] sm:$0xff]
      %v2736 = vld [vmem:[#allocation2 + $0xc8] sm:$0xff]
      %v2737 = vld [vmem:[#allocation2 + $0xd0] sm:$0xff]
      %v2738 = vld [vmem:[#allocation2 + $0xd8] sm:$0xff]
      %v2739 = vld [vmem:[#allocation2 + $0xe0] sm:$0xff]
      %v2740 = vld [vmem:[#allocation2 + $0xe8] sm:$0xff]
      %v2741 = vld [vmem:[#allocation2 + $0xf0] sm:$0xff]
      %v2742 = vld [vmem:[#allocation2 + $0xf8] sm:$0xff]
      %v2743 = vld [vmem:[#allocation2 + $0x100] sm:$0xff]
      %v2744 = vld [vmem:[#allocation2 + $0x108] sm:$0xff]
      %v2745 = vld [vmem:[#allocation2 + $0x110] sm:$0xff]
      %v2746 = vld [vmem:[#allocation2 + $0x118] sm:$0xff]
      %v2747 = vsel %vm820, %v2715, 0.0
      %v2748 = vsel %vm821, %v2716, 0.0
      %v2749 = vsel %vm822, %v2717, 0.0
      %v2750 = vsel %vm823, %v2718, 0.0
      %v2751 = vsel %vm824, %v2719, 0.0
      %v2752 = vsel %vm825, %v2720, 0.0
      %v2753 = vsel %vm826, %v2721, 0.0
      %v2754 = vsel %vm827, %v2722, 0.0
      %v2755 = vsel %vm828, %v2723, 0.0
      %v2756 = vsel %vm829, %v2724, 0.0
      %v2757 = vsel %vm830, %v2725, 0.0
      %v2758 = vsel %vm831, %v2726, 0.0
      %v2759 = vsel %vm832, %v2727, 0.0
      %v2760 = vsel %vm833, %v2728, 0.0
      %v2761 = vsel %vm834, %v2729, 0.0
      %v2762 = vsel %vm835, %v2730, 0.0
      %v2763 = vsel %vm836, %v2731, 0.0
      %v2764 = vsel %vm837, %v2732, 0.0
      %v2765 = vsel %vm838, %v2733, 0.0
      %v2766 = vsel %vm839, %v2734, 0.0
      %v2767 = vsel %vm840, %v2735, 0.0
      %v2768 = vsel %vm841, %v2736, 0.0
      %v2769 = vsel %vm842, %v2737, 0.0
      %v2770 = vsel %vm843, %v2738, 0.0
      %v2771 = vsel %vm844, %v2739, 0.0
      %v2772 = vsel %vm845, %v2740, 0.0
      %v2773 = vsel %vm846, %v2741, 0.0
      %v2774 = vsel %vm847, %v2742, 0.0
      %v2775 = vsel %vm848, %v2743, 0.0
      %v2776 = vsel %vm849, %v2744, 0.0
      %v2777 = vsel %vm850, %v2745, 0.0
      %v2778 = vsel %vm851, %v2746, 0.0
      %v2779 = vpack.c.bf16 %v2748, %v2747
      %v2780 = vpack.c.bf16 %v2750, %v2749
      %v2781 = vpack.c.bf16 %v2752, %v2751
      %v2782 = vpack.c.bf16 %v2754, %v2753
      %v2783 = vpack.c.bf16 %v2756, %v2755
      %v2784 = vpack.c.bf16 %v2758, %v2757
      %v2785 = vpack.c.bf16 %v2760, %v2759
      %v2786 = vpack.c.bf16 %v2762, %v2761
      %v2787 = vpack.c.bf16 %v2764, %v2763
      %v2788 = vpack.c.bf16 %v2766, %v2765
      %v2789 = vpack.c.bf16 %v2768, %v2767
      %v2790 = vpack.c.bf16 %v2770, %v2769
      %v2791 = vpack.c.bf16 %v2772, %v2771
      %v2792 = vpack.c.bf16 %v2774, %v2773
      %v2793 = vpack.c.bf16 %v2776, %v2775
      %v2794 = vpack.c.bf16 %v2778, %v2777
      %s2795 = scalar_lea.vmem %s1, 12
      %v2796 = vld [vmem:[%s2795] sm:$0x3]
      %v2798 = vsel %vm172, %v2779, 0
      %v2801 = vsel %vm172, %v2780, 0
      %v2804 = vsel %vm172, %v2781, 0
      %v2807 = vsel %vm172, %v2782, 0
      %v2810 = vsel %vm172, %v2783, 0
      %v2813 = vsel %vm172, %v2784, 0
      %v2816 = vsel %vm172, %v2785, 0
      %v2819 = vsel %vm172, %v2786, 0
      %v2822 = vsel %vm172, %v2787, 0
      %v2825 = vsel %vm172, %v2788, 0
      %v2828 = vsel %vm172, %v2789, 0
      %v2831 = vsel %vm172, %v2790, 0
      %v2834 = vsel %vm172, %v2791, 0
      %v2837 = vsel %vm172, %v2792, 0
      %v2840 = vsel %vm172, %v2793, 0
      %v2843 = vsel %vm172, %v2794, 0
      %v2846 = vand.u32 %v2796, %v1002
      %2848 = vmatprep.subr.bf16.mxu0 0
      %2849 = vmatpush1.bf16.msra.mxu0 %v2846
      %2850 = vmatprep.subr.bf16.mxu0 0
      %2851 = vmatpush1.bf16.msra.mxu0 0
      %2852 = vmatprep.subr.bf16.mxu0 0
      %2853 = vmatpush1.bf16.msra.mxu0 0
      %2854 = vmatprep.subr.bf16.mxu0 0
      %2855 = vmatpush1.bf16.msra.mxu0 0
      %2856 = vmatprep.subr.bf16.mxu0 0
      %2857 = vmatpush1.bf16.msra.mxu0 0
      %2858 = vmatprep.subr.bf16.mxu0 0
      %2859 = vmatpush1.bf16.msra.mxu0 0
      %2860 = vmatprep.subr.bf16.mxu0 0
      %2861 = vmatpush1.bf16.msra.mxu0 0
      %2862 = vmatprep.subr.bf16.mxu0 0
      %2863 = vmatpush1.bf16.msra.mxu0 0
      %2864 = vmatprep.subr.bf16.mxu0 0
      %2865 = vmatpush1.bf16.msra.mxu0 0
      %2866 = vmatprep.subr.bf16.mxu0 0
      %2867 = vmatpush1.bf16.msra.mxu0 0
      %2868 = vmatprep.subr.bf16.mxu0 0
      %2869 = vmatpush1.bf16.msra.mxu0 0
      %2870 = vmatprep.subr.bf16.mxu0 0
      %2871 = vmatpush1.bf16.msra.mxu0 0
      %2872 = vmatprep.subr.bf16.mxu0 0
      %2873 = vmatpush1.bf16.msra.mxu0 0
      %2874 = vmatprep.subr.bf16.mxu0 0
      %2875 = vmatpush1.bf16.msra.mxu0 0
      %2876 = vmatprep.subr.bf16.mxu0 0
      %2877 = vmatpush1.bf16.msra.mxu0 0
      %2878 = vmatprep.subr.bf16.mxu0 0
      %2879 = vmatpush1.bf16.msra.mxu0 0
      %2880 = vmatprep.mubr.bf16.mxu0 0
      %2881 = vmatmul.mubr.bf16.gmra.mrb[0].mxu0 %v2798
      %v2882 = vpop.f32.mrb[0].mxu0
      %v2883 = vadd.f32 0.0, %v2882
      %v2884 = vpop.f32.mrb[0].mxu0
      %v2885 = vpop.f32.mrb[0].mxu0
      %v2886 = vadd.f32 0.0, %v2885
      %v2887 = vpop.f32.mrb[0].mxu0
      %2888 = vmatprep.mubr.bf16.mxu0 0
      %2889 = vmatmul.mubr.bf16.gmra.mrb[0].mxu0 %v2801
      %v2890 = vpop.f32.mrb[0].mxu0
      %v2891 = vadd.f32 0.0, %v2890
      %v2892 = vpop.f32.mrb[0].mxu0
      %v2893 = vpop.f32.mrb[0].mxu0
      %v2894 = vadd.f32 0.0, %v2893
      %v2895 = vpop.f32.mrb[0].mxu0
      %2896 = vmatprep.mubr.bf16.mxu0 0
      %2897 = vmatmul.mubr.bf16.gmra.mrb[0].mxu0 %v2804
      %v2898 = vpop.f32.mrb[0].mxu0
      %v2899 = vadd.f32 0.0, %v2898
      %v2900 = vpop.f32.mrb[0].mxu0
      %v2901 = vpop.f32.mrb[0].mxu0
      %v2902 = vadd.f32 0.0, %v2901
      %v2903 = vpop.f32.mrb[0].mxu0
      %2904 = vmatprep.mubr.bf16.mxu0 0
      %2905 = vmatmul.mubr.bf16.gmra.mrb[0].mxu0 %v2807
      %v2906 = vpop.f32.mrb[0].mxu0
      %v2907 = vadd.f32 0.0, %v2906
      %v2908 = vpop.f32.mrb[0].mxu0
      %v2909 = vpop.f32.mrb[0].mxu0
      %v2910 = vadd.f32 0.0, %v2909
      %v2911 = vpop.f32.mrb[0].mxu0
      %2912 = vmatprep.mubr.bf16.mxu0 0
      %2913 = vmatmul.mubr.bf16.gmra.mrb[0].mxu0 %v2810
      %v2914 = vpop.f32.mrb[0].mxu0
      %v2915 = vadd.f32 0.0, %v2914
      %v2916 = vpop.f32.mrb[0].mxu0
      %v2917 = vpop.f32.mrb[0].mxu0
      %v2918 = vadd.f32 0.0, %v2917
      %v2919 = vpop.f32.mrb[0].mxu0
      %2920 = vmatprep.mubr.bf16.mxu0 0
      %2921 = vmatmul.mubr.bf16.gmra.mrb[0].mxu0 %v2813
      %v2922 = vpop.f32.mrb[0].mxu0
      %v2923 = vadd.f32 0.0, %v2922
      %v2924 = vpop.f32.mrb[0].mxu0
      %v2925 = vpop.f32.mrb[0].mxu0
      %v2926 = vadd.f32 0.0, %v2925
      %v2927 = vpop.f32.mrb[0].mxu0
      %2928 = vmatprep.mubr.bf16.mxu0 0
      %2929 = vmatmul.mubr.bf16.gmra.mrb[0].mxu0 %v2816
      %v2930 = vpop.f32.mrb[0].mxu0
      %v2931 = vadd.f32 0.0, %v2930
      %v2932 = vpop.f32.mrb[0].mxu0
      %v2933 = vpop.f32.mrb[0].mxu0
      %v2934 = vadd.f32 0.0, %v2933
      %v2935 = vpop.f32.mrb[0].mxu0
      %2936 = vmatprep.mubr.bf16.mxu0 0
      %2937 = vmatmul.mubr.bf16.gmra.mrb[0].mxu0 %v2819
      %v2938 = vpop.f32.mrb[0].mxu0
      %v2939 = vadd.f32 0.0, %v2938
      %v2940 = vpop.f32.mrb[0].mxu0
      %v2941 = vpop.f32.mrb[0].mxu0
      %v2942 = vadd.f32 0.0, %v2941
      %v2943 = vpop.f32.mrb[0].mxu0
      %2944 = vmatprep.mubr.bf16.mxu0 0
      %2945 = vmatmul.mubr.bf16.gmra.mrb[0].mxu0 %v2822
      %v2946 = vpop.f32.mrb[0].mxu0
      %v2947 = vadd.f32 0.0, %v2946
      %v2948 = vpop.f32.mrb[0].mxu0
      %v2949 = vpop.f32.mrb[0].mxu0
      %v2950 = vadd.f32 0.0, %v2949
      %v2951 = vpop.f32.mrb[0].mxu0
      %2952 = vmatprep.mubr.bf16.mxu0 0
      %2953 = vmatmul.mubr.bf16.gmra.mrb[0].mxu0 %v2825
      %v2954 = vpop.f32.mrb[0].mxu0
      %v2955 = vadd.f32 0.0, %v2954
      %v2956 = vpop.f32.mrb[0].mxu0
      %v2957 = vpop.f32.mrb[0].mxu0
      %v2958 = vadd.f32 0.0, %v2957
      %v2959 = vpop.f32.mrb[0].mxu0
      %2960 = vmatprep.mubr.bf16.mxu0 0
      %2961 = vmatmul.mubr.bf16.gmra.mrb[0].mxu0 %v2828
      %v2962 = vpop.f32.mrb[0].mxu0
      %v2963 = vadd.f32 0.0, %v2962
      %v2964 = vpop.f32.mrb[0].mxu0
      %v2965 = vpop.f32.mrb[0].mxu0
      %v2966 = vadd.f32 0.0, %v2965
      %v2967 = vpop.f32.mrb[0].mxu0
      %2968 = vmatprep.mubr.bf16.mxu0 0
      %2969 = vmatmul.mubr.bf16.gmra.mrb[0].mxu0 %v2831
      %v2970 = vpop.f32.mrb[0].mxu0
      %v2971 = vadd.f32 0.0, %v2970
      %v2972 = vpop.f32.mrb[0].mxu0
      %v2973 = vpop.f32.mrb[0].mxu0
      %v2974 = vadd.f32 0.0, %v2973
      %v2975 = vpop.f32.mrb[0].mxu0
      %2976 = vmatprep.mubr.bf16.mxu0 0
      %2977 = vmatmul.mubr.bf16.gmra.mrb[0].mxu0 %v2834
      %v2978 = vpop.f32.mrb[0].mxu0
      %v2979 = vadd.f32 0.0, %v2978
      %v2980 = vpop.f32.mrb[0].mxu0
      %v2981 = vpop.f32.mrb[0].mxu0
      %v2982 = vadd.f32 0.0, %v2981
      %v2983 = vpop.f32.mrb[0].mxu0
      %2984 = vmatprep.mubr.bf16.mxu0 0
      %2985 = vmatmul.mubr.bf16.gmra.mrb[0].mxu0 %v2837
      %v2986 = vpop.f32.mrb[0].mxu0
      %v2987 = vadd.f32 0.0, %v2986
      %v2988 = vpop.f32.mrb[0].mxu0
      %v2989 = vpop.f32.mrb[0].mxu0
      %v2990 = vadd.f32 0.0, %v2989
      %v2991 = vpop.f32.mrb[0].mxu0
      %2992 = vmatprep.mubr.bf16.mxu0 0
      %2993 = vmatmul.mubr.bf16.gmra.mrb[0].mxu0 %v2840
      %v2994 = vpop.f32.mrb[0].mxu0
      %v2995 = vadd.f32 0.0, %v2994
      %v2996 = vpop.f32.mrb[0].mxu0
      %v2997 = vpop.f32.mrb[0].mxu0
      %v2998 = vadd.f32 0.0, %v2997
      %v2999 = vpop.f32.mrb[0].mxu0
      %3000 = vmatprep.mubr.bf16.mxu0 0
      %3001 = vmatmul.mubr.bf16.gmra.mrb[0].mxu0 %v2843
      %v3002 = vpop.f32.mrb[0].mxu0
      %v3003 = vadd.f32 0.0, %v3002
      %v3004 = vpop.f32.mrb[0].mxu0
      %v3005 = vpop.f32.mrb[0].mxu0
      %v3006 = vadd.f32 0.0, %v3005
      %v3007 = vpop.f32.mrb[0].mxu0
      %3008 = vdwg.mxu0
      %v3009 = vadd.f32 %v2683, %v2883
      %v3010 = vadd.f32 %v2684, %v2886
      %v3011 = vadd.f32 %v2685, %v2891
      %v3012 = vadd.f32 %v2686, %v2894
      %v3013 = vadd.f32 %v2687, %v2899
      %v3014 = vadd.f32 %v2688, %v2902
      %v3015 = vadd.f32 %v2689, %v2907
      %v3016 = vadd.f32 %v2690, %v2910
      %v3017 = vadd.f32 %v2691, %v2915
      %v3018 = vadd.f32 %v2692, %v2918
      %v3019 = vadd.f32 %v2693, %v2923
      %v3020 = vadd.f32 %v2694, %v2926
      %v3021 = vadd.f32 %v2695, %v2931
      %v3022 = vadd.f32 %v2696, %v2934
      %v3023 = vadd.f32 %v2697, %v2939
      %v3024 = vadd.f32 %v2698, %v2942
      %v3025 = vadd.f32 %v2699, %v2947
      %v3026 = vadd.f32 %v2700, %v2950
      %v3027 = vadd.f32 %v2701, %v2955
      %v3028 = vadd.f32 %v2702, %v2958
      %v3029 = vadd.f32 %v2703, %v2963
      %v3030 = vadd.f32 %v2704, %v2966
      %v3031 = vadd.f32 %v2705, %v2971
      %v3032 = vadd.f32 %v2706, %v2974
      %v3033 = vadd.f32 %v2707, %v2979
      %v3034 = vadd.f32 %v2708, %v2982
      %v3035 = vadd.f32 %v2709, %v2987
      %v3036 = vadd.f32 %v2710, %v2990
      %v3037 = vadd.f32 %v2711, %v2995
      %v3038 = vadd.f32 %v2712, %v2998
      %v3039 = vadd.f32 %v2713, %v3003
      %v3040 = vadd.f32 %v2714, %v3006
      %v3041 = vld [vmem:[#allocation2 + $0x21] sm:$0xff]
      %v3042 = vld [vmem:[#allocation2 + $0x29] sm:$0xff]
      %v3043 = vld [vmem:[#allocation2 + $0x31] sm:$0xff]
      %v3044 = vld [vmem:[#allocation2 + $0x39] sm:$0xff]
      %v3045 = vld [vmem:[#allocation2 + $0x41] sm:$0xff]
      %v3046 = vld [vmem:[#allocation2 + $0x49] sm:$0xff]
      %v3047 = vld [vmem:[#allocation2 + $0x51] sm:$0xff]
      %v3048 = vld [vmem:[#allocation2 + $0x59] sm:$0xff]
      %v3049 = vld [vmem:[#allocation2 + $0x61] sm:$0xff]
      %v3050 = vld [vmem:[#allocation2 + $0x69] sm:$0xff]
      %v3051 = vld [vmem:[#allocation2 + $0x71] sm:$0xff]
      %v3052 = vld [vmem:[#allocation2 + $0x79] sm:$0xff]
      %v3053 = vld [vmem:[#allocation2 + $0x81] sm:$0xff]
      %v3054 = vld [vmem:[#allocation2 + $0x89] sm:$0xff]
      %v3055 = vld [vmem:[#allocation2 + $0x91] sm:$0xff]
      %v3056 = vld [vmem:[#allocation2 + $0x99] sm:$0xff]
      %v3057 = vld [vmem:[#allocation2 + $0xa1] sm:$0xff]
      %v3058 = vld [vmem:[#allocation2 + $0xa9] sm:$0xff]
      %v3059 = vld [vmem:[#allocation2 + $0xb1] sm:$0xff]
      %v3060 = vld [vmem:[#allocation2 + $0xb9] sm:$0xff]
      %v3061 = vld [vmem:[#allocation2 + $0xc1] sm:$0xff]
      %v3062 = vld [vmem:[#allocation2 + $0xc9] sm:$0xff]
      %v3063 = vld [vmem:[#allocation2 + $0xd1] sm:$0xff]
      %v3064 = vld [vmem:[#allocation2 + $0xd9] sm:$0xff]
      %v3065 = vld [vmem:[#allocation2 + $0xe1] sm:$0xff]
      %v3066 = vld [vmem:[#allocation2 + $0xe9] sm:$0xff]
      %v3067 = vld [vmem:[#allocation2 + $0xf1] sm:$0xff]
      %v3068 = vld [vmem:[#allocation2 + $0xf9] sm:$0xff]
      %v3069 = vld [vmem:[#allocation2 + $0x101] sm:$0xff]
      %v3070 = vld [vmem:[#allocation2 + $0x109] sm:$0xff]
      %v3071 = vld [vmem:[#allocation2 + $0x111] sm:$0xff]
      %v3072 = vld [vmem:[#allocation2 + $0x119] sm:$0xff]
      %v3073 = vpack.c.bf16 %v3042, %v3041
      %v3074 = vpack.c.bf16 %v3044, %v3043
      %v3075 = vpack.c.bf16 %v3046, %v3045
      %v3076 = vpack.c.bf16 %v3048, %v3047
      %v3077 = vpack.c.bf16 %v3050, %v3049
      %v3078 = vpack.c.bf16 %v3052, %v3051
      %v3079 = vpack.c.bf16 %v3054, %v3053
      %v3080 = vpack.c.bf16 %v3056, %v3055
      %v3081 = vpack.c.bf16 %v3058, %v3057
      %v3082 = vpack.c.bf16 %v3060, %v3059
      %v3083 = vpack.c.bf16 %v3062, %v3061
      %v3084 = vpack.c.bf16 %v3064, %v3063
      %v3085 = vpack.c.bf16 %v3066, %v3065
      %v3086 = vpack.c.bf16 %v3068, %v3067
      %v3087 = vpack.c.bf16 %v3070, %v3069
      %v3088 = vpack.c.bf16 %v3072, %v3071
      %s3089 = scalar_lea.vmem %s1, 14
      %v3090 = vld [vmem:[%s3089] sm:$0x3]
      %v3092 = vsel %vm172, %v3073, 0
      %v3095 = vsel %vm172, %v3074, 0
      %v3098 = vsel %vm172, %v3075, 0
      %v3101 = vsel %vm172, %v3076, 0
      %v3104 = vsel %vm172, %v3077, 0
      %v3107 = vsel %vm172, %v3078, 0
      %v3110 = vsel %vm172, %v3079, 0
      %v3113 = vsel %vm172, %v3080, 0
      %v3116 = vsel %vm172, %v3081, 0
      %v3119 = vsel %vm172, %v3082, 0
      %v3122 = vsel %vm172, %v3083, 0
      %v3125 = vsel %vm172, %v3084, 0
      %v3128 = vsel %vm172, %v3085, 0
      %v3131 = vsel %vm172, %v3086, 0
      %v3134 = vsel %vm172, %v3087, 0
      %v3137 = vsel %vm172, %v3088, 0
      %v3140 = vand.u32 %v3090, %v1002
      %3142 = vmatprep.subr.bf16.mxu0 0
      %3143 = vmatpush1.bf16.msra.mxu0 %v3140
      %3144 = vmatprep.subr.bf16.mxu0 0
      %3145 = vmatpush1.bf16.msra.mxu0 0
      %3146 = vmatprep.subr.bf16.mxu0 0
      %3147 = vmatpush1.bf16.msra.mxu0 0
      %3148 = vmatprep.subr.bf16.mxu0 0
      %3149 = vmatpush1.bf16.msra.mxu0 0
      %3150 = vmatprep.subr.bf16.mxu0 0
      %3151 = vmatpush1.bf16.msra.mxu0 0
      %3152 = vmatprep.subr.bf16.mxu0 0
      %3153 = vmatpush1.bf16.msra.mxu0 0
      %3154 = vmatprep.subr.bf16.mxu0 0
      %3155 = vmatpush1.bf16.msra.mxu0 0
      %3156 = vmatprep.subr.bf16.mxu0 0
      %3157 = vmatpush1.bf16.msra.mxu0 0
      %3158 = vmatprep.subr.bf16.mxu0 0
      %3159 = vmatpush1.bf16.msra.mxu0 0
      %3160 = vmatprep.subr.bf16.mxu0 0
      %3161 = vmatpush1.bf16.msra.mxu0 0
      %3162 = vmatprep.subr.bf16.mxu0 0
      %3163 = vmatpush1.bf16.msra.mxu0 0
      %3164 = vmatprep.subr.bf16.mxu0 0
      %3165 = vmatpush1.bf16.msra.mxu0 0
      %3166 = vmatprep.subr.bf16.mxu0 0
      %3167 = vmatpush1.bf16.msra.mxu0 0
      %3168 = vmatprep.subr.bf16.mxu0 0
      %3169 = vmatpush1.bf16.msra.mxu0 0
      %3170 = vmatprep.subr.bf16.mxu0 0
      %3171 = vmatpush1.bf16.msra.mxu0 0
      %3172 = vmatprep.subr.bf16.mxu0 0
      %3173 = vmatpush1.bf16.msra.mxu0 0
      %3174 = vmatprep.mubr.bf16.mxu0 0
      %3175 = vmatmul.mubr.bf16.gmra.mrb[0].mxu0 %v3092
      %v3176 = vpop.f32.mrb[0].mxu0
      %v3177 = vadd.f32 0.0, %v3176
      %v3178 = vpop.f32.mrb[0].mxu0
      %v3179 = vpop.f32.mrb[0].mxu0
      %v3180 = vadd.f32 0.0, %v3179
      %v3181 = vpop.f32.mrb[0].mxu0
      %3182 = vmatprep.mubr.bf16.mxu0 0
      %3183 = vmatmul.mubr.bf16.gmra.mrb[0].mxu0 %v3095
      %v3184 = vpop.f32.mrb[0].mxu0
      %v3185 = vadd.f32 0.0, %v3184
      %v3186 = vpop.f32.mrb[0].mxu0
      %v3187 = vpop.f32.mrb[0].mxu0
      %v3188 = vadd.f32 0.0, %v3187
      %v3189 = vpop.f32.mrb[0].mxu0
      %3190 = vmatprep.mubr.bf16.mxu0 0
      %3191 = vmatmul.mubr.bf16.gmra.mrb[0].mxu0 %v3098
      %v3192 = vpop.f32.mrb[0].mxu0
      %v3193 = vadd.f32 0.0, %v3192
      %v3194 = vpop.f32.mrb[0].mxu0
      %v3195 = vpop.f32.mrb[0].mxu0
      %v3196 = vadd.f32 0.0, %v3195
      %v3197 = vpop.f32.mrb[0].mxu0
      %3198 = vmatprep.mubr.bf16.mxu0 0
      %3199 = vmatmul.mubr.bf16.gmra.mrb[0].mxu0 %v3101
      %v3200 = vpop.f32.mrb[0].mxu0
      %v3201 = vadd.f32 0.0, %v3200
      %v3202 = vpop.f32.mrb[0].mxu0
      %v3203 = vpop.f32.mrb[0].mxu0
      %v3204 = vadd.f32 0.0, %v3203
      %v3205 = vpop.f32.mrb[0].mxu0
      %3206 = vmatprep.mubr.bf16.mxu0 0
      %3207 = vmatmul.mubr.bf16.gmra.mrb[0].mxu0 %v3104
      %v3208 = vpop.f32.mrb[0].mxu0
      %v3209 = vadd.f32 0.0, %v3208
      %v3210 = vpop.f32.mrb[0].mxu0
      %v3211 = vpop.f32.mrb[0].mxu0
      %v3212 = vadd.f32 0.0, %v3211
      %v3213 = vpop.f32.mrb[0].mxu0
      %3214 = vmatprep.mubr.bf16.mxu0 0
      %3215 = vmatmul.mubr.bf16.gmra.mrb[0].mxu0 %v3107
      %v3216 = vpop.f32.mrb[0].mxu0
      %v3217 = vadd.f32 0.0, %v3216
      %v3218 = vpop.f32.mrb[0].mxu0
      %v3219 = vpop.f32.mrb[0].mxu0
      %v3220 = vadd.f32 0.0, %v3219
      %v3221 = vpop.f32.mrb[0].mxu0
      %3222 = vmatprep.mubr.bf16.mxu0 0
      %3223 = vmatmul.mubr.bf16.gmra.mrb[0].mxu0 %v3110
      %v3224 = vpop.f32.mrb[0].mxu0
      %v3225 = vadd.f32 0.0, %v3224
      %v3226 = vpop.f32.mrb[0].mxu0
      %v3227 = vpop.f32.mrb[0].mxu0
      %v3228 = vadd.f32 0.0, %v3227
      %v3229 = vpop.f32.mrb[0].mxu0
      %3230 = vmatprep.mubr.bf16.mxu0 0
      %3231 = vmatmul.mubr.bf16.gmra.mrb[0].mxu0 %v3113
      %v3232 = vpop.f32.mrb[0].mxu0
      %v3233 = vadd.f32 0.0, %v3232
      %v3234 = vpop.f32.mrb[0].mxu0
      %v3235 = vpop.f32.mrb[0].mxu0
      %v3236 = vadd.f32 0.0, %v3235
      %v3237 = vpop.f32.mrb[0].mxu0
      %3238 = vmatprep.mubr.bf16.mxu0 0
      %3239 = vmatmul.mubr.bf16.gmra.mrb[0].mxu0 %v3116
      %v3240 = vpop.f32.mrb[0].mxu0
      %v3241 = vadd.f32 0.0, %v3240
      %v3242 = vpop.f32.mrb[0].mxu0
      %v3243 = vpop.f32.mrb[0].mxu0
      %v3244 = vadd.f32 0.0, %v3243
      %v3245 = vpop.f32.mrb[0].mxu0
      %3246 = vmatprep.mubr.bf16.mxu0 0
      %3247 = vmatmul.mubr.bf16.gmra.mrb[0].mxu0 %v3119
      %v3248 = vpop.f32.mrb[0].mxu0
      %v3249 = vadd.f32 0.0, %v3248
      %v3250 = vpop.f32.mrb[0].mxu0
      %v3251 = vpop.f32.mrb[0].mxu0
      %v3252 = vadd.f32 0.0, %v3251
      %v3253 = vpop.f32.mrb[0].mxu0
      %3254 = vmatprep.mubr.bf16.mxu0 0
      %3255 = vmatmul.mubr.bf16.gmra.mrb[0].mxu0 %v3122
      %v3256 = vpop.f32.mrb[0].mxu0
      %v3257 = vadd.f32 0.0, %v3256
      %v3258 = vpop.f32.mrb[0].mxu0
      %v3259 = vpop.f32.mrb[0].mxu0
      %v3260 = vadd.f32 0.0, %v3259
      %v3261 = vpop.f32.mrb[0].mxu0
      %3262 = vmatprep.mubr.bf16.mxu0 0
      %3263 = vmatmul.mubr.bf16.gmra.mrb[0].mxu0 %v3125
      %v3264 = vpop.f32.mrb[0].mxu0
      %v3265 = vadd.f32 0.0, %v3264
      %v3266 = vpop.f32.mrb[0].mxu0
      %v3267 = vpop.f32.mrb[0].mxu0
      %v3268 = vadd.f32 0.0, %v3267
      %v3269 = vpop.f32.mrb[0].mxu0
      %3270 = vmatprep.mubr.bf16.mxu0 0
      %3271 = vmatmul.mubr.bf16.gmra.mrb[0].mxu0 %v3128
      %v3272 = vpop.f32.mrb[0].mxu0
      %v3273 = vadd.f32 0.0, %v3272
      %v3274 = vpop.f32.mrb[0].mxu0
      %v3275 = vpop.f32.mrb[0].mxu0
      %v3276 = vadd.f32 0.0, %v3275
      %v3277 = vpop.f32.mrb[0].mxu0
      %3278 = vmatprep.mubr.bf16.mxu0 0
      %3279 = vmatmul.mubr.bf16.gmra.mrb[0].mxu0 %v3131
      %v3280 = vpop.f32.mrb[0].mxu0
      %v3281 = vadd.f32 0.0, %v3280
      %v3282 = vpop.f32.mrb[0].mxu0
      %v3283 = vpop.f32.mrb[0].mxu0
      %v3284 = vadd.f32 0.0, %v3283
      %v3285 = vpop.f32.mrb[0].mxu0
      %3286 = vmatprep.mubr.bf16.mxu0 0
      %3287 = vmatmul.mubr.bf16.gmra.mrb[0].mxu0 %v3134
      %v3288 = vpop.f32.mrb[0].mxu0
      %v3289 = vadd.f32 0.0, %v3288
      %v3290 = vpop.f32.mrb[0].mxu0
      %v3291 = vpop.f32.mrb[0].mxu0
      %v3292 = vadd.f32 0.0, %v3291
      %v3293 = vpop.f32.mrb[0].mxu0
      %3294 = vmatprep.mubr.bf16.mxu0 0
      %3295 = vmatmul.mubr.bf16.gmra.mrb[0].mxu0 %v3137
      %v3296 = vpop.f32.mrb[0].mxu0
      %v3297 = vadd.f32 0.0, %v3296
      %v3298 = vpop.f32.mrb[0].mxu0
      %v3299 = vpop.f32.mrb[0].mxu0
      %v3300 = vadd.f32 0.0, %v3299
      %v3301 = vpop.f32.mrb[0].mxu0
      %3302 = vdwg.mxu0
      %v3303 = vadd.f32 %v3009, %v3177
      %v3304 = vadd.f32 %v3010, %v3180
      %v3305 = vadd.f32 %v3011, %v3185
      %v3306 = vadd.f32 %v3012, %v3188
      %v3307 = vadd.f32 %v3013, %v3193
      %v3308 = vadd.f32 %v3014, %v3196
      %v3309 = vadd.f32 %v3015, %v3201
      %v3310 = vadd.f32 %v3016, %v3204
      %v3311 = vadd.f32 %v3017, %v3209
      %v3312 = vadd.f32 %v3018, %v3212
      %v3313 = vadd.f32 %v3019, %v3217
      %v3314 = vadd.f32 %v3020, %v3220
      %v3315 = vadd.f32 %v3021, %v3225
      %v3316 = vadd.f32 %v3022, %v3228
      %v3317 = vadd.f32 %v3023, %v3233
      %v3318 = vadd.f32 %v3024, %v3236
      %v3319 = vadd.f32 %v3025, %v3241
      %v3320 = vadd.f32 %v3026, %v3244
      %v3321 = vadd.f32 %v3027, %v3249
      %v3322 = vadd.f32 %v3028, %v3252
      %v3323 = vadd.f32 %v3029, %v3257
      %v3324 = vadd.f32 %v3030, %v3260
      %v3325 = vadd.f32 %v3031, %v3265
      %v3326 = vadd.f32 %v3032, %v3268
      %v3327 = vadd.f32 %v3033, %v3273
      %v3328 = vadd.f32 %v3034, %v3276
      %v3329 = vadd.f32 %v3035, %v3281
      %v3330 = vadd.f32 %v3036, %v3284
      %v3331 = vadd.f32 %v3037, %v3289
      %v3332 = vadd.f32 %v3038, %v3292
      %v3333 = vadd.f32 %v3039, %v3297
      %v3334 = vadd.f32 %v3040, %v3300
      %v3335 = vld [vmem:[#allocation2 + $0x22] sm:$0xff]
      %v3336 = vld [vmem:[#allocation2 + $0x2a] sm:$0xff]
      %v3337 = vld [vmem:[#allocation2 + $0x32] sm:$0xff]
      %v3338 = vld [vmem:[#allocation2 + $0x3a] sm:$0xff]
      %v3339 = vld [vmem:[#allocation2 + $0x42] sm:$0xff]
      %v3340 = vld [vmem:[#allocation2 + $0x4a] sm:$0xff]
      %v3341 = vld [vmem:[#allocation2 + $0x52] sm:$0xff]
      %v3342 = vld [vmem:[#allocation2 + $0x5a] sm:$0xff]
      %v3343 = vld [vmem:[#allocation2 + $0x62] sm:$0xff]
      %v3344 = vld [vmem:[#allocation2 + $0x6a] sm:$0xff]
      %v3345 = vld [vmem:[#allocation2 + $0x72] sm:$0xff]
      %v3346 = vld [vmem:[#allocation2 + $0x7a] sm:$0xff]
      %v3347 = vld [vmem:[#allocation2 + $0x82] sm:$0xff]
      %v3348 = vld [vmem:[#allocation2 + $0x8a] sm:$0xff]
      %v3349 = vld [vmem:[#allocation2 + $0x92] sm:$0xff]
      %v3350 = vld [vmem:[#allocation2 + $0x9a] sm:$0xff]
      %v3351 = vld [vmem:[#allocation2 + $0xa2] sm:$0xff]
      %v3352 = vld [vmem:[#allocation2 + $0xaa] sm:$0xff]
      %v3353 = vld [vmem:[#allocation2 + $0xb2] sm:$0xff]
      %v3354 = vld [vmem:[#allocation2 + $0xba] sm:$0xff]
      %v3355 = vld [vmem:[#allocation2 + $0xc2] sm:$0xff]
      %v3356 = vld [vmem:[#allocation2 + $0xca] sm:$0xff]
      %v3357 = vld [vmem:[#allocation2 + $0xd2] sm:$0xff]
      %v3358 = vld [vmem:[#allocation2 + $0xda] sm:$0xff]
      %v3359 = vld [vmem:[#allocation2 + $0xe2] sm:$0xff]
      %v3360 = vld [vmem:[#allocation2 + $0xea] sm:$0xff]
      %v3361 = vld [vmem:[#allocation2 + $0xf2] sm:$0xff]
      %v3362 = vld [vmem:[#allocation2 + $0xfa] sm:$0xff]
      %v3363 = vld [vmem:[#allocation2 + $0x102] sm:$0xff]
      %v3364 = vld [vmem:[#allocation2 + $0x10a] sm:$0xff]
      %v3365 = vld [vmem:[#allocation2 + $0x112] sm:$0xff]
      %v3366 = vld [vmem:[#allocation2 + $0x11a] sm:$0xff]
      %v3367 = vsel %vm1443, %v3335, 0.0
      %v3368 = vsel %vm1444, %v3336, 0.0
      %v3369 = vsel %vm1445, %v3337, 0.0
      %v3370 = vsel %vm1446, %v3338, 0.0
      %v3371 = vsel %vm1447, %v3339, 0.0
      %v3372 = vsel %vm1448, %v3340, 0.0
      %v3373 = vsel %vm1449, %v3341, 0.0
      %v3374 = vsel %vm1450, %v3342, 0.0
      %v3375 = vsel %vm1451, %v3343, 0.0
      %v3376 = vsel %vm1452, %v3344, 0.0
      %v3377 = vsel %vm1453, %v3345, 0.0
      %v3378 = vsel %vm1454, %v3346, 0.0
      %v3379 = vsel %vm1455, %v3347, 0.0
      %v3380 = vsel %vm1456, %v3348, 0.0
      %v3381 = vsel %vm1457, %v3349, 0.0
      %v3382 = vsel %vm1458, %v3350, 0.0
      %v3383 = vsel %vm1459, %v3351, 0.0
      %v3384 = vsel %vm1460, %v3352, 0.0
      %v3385 = vsel %vm1461, %v3353, 0.0
      %v3386 = vsel %vm1462, %v3354, 0.0
      %v3387 = vsel %vm1463, %v3355, 0.0
      %v3388 = vsel %vm1464, %v3356, 0.0
      %v3389 = vsel %vm1465, %v3357, 0.0
      %v3390 = vsel %vm1466, %v3358, 0.0
      %v3391 = vsel %vm1467, %v3359, 0.0
      %v3392 = vsel %vm1468, %v3360, 0.0
      %v3393 = vsel %vm1469, %v3361, 0.0
      %v3394 = vsel %vm1470, %v3362, 0.0
      %v3395 = vsel %vm1471, %v3363, 0.0
      %v3396 = vsel %vm1472, %v3364, 0.0
      %v3397 = vsel %vm1473, %v3365, 0.0
      %v3398 = vsel %vm1474, %v3366, 0.0
      %v3399 = vpack.c.bf16 %v3368, %v3367
      %v3400 = vpack.c.bf16 %v3370, %v3369
      %v3401 = vpack.c.bf16 %v3372, %v3371
      %v3402 = vpack.c.bf16 %v3374, %v3373
      %v3403 = vpack.c.bf16 %v3376, %v3375
      %v3404 = vpack.c.bf16 %v3378, %v3377
      %v3405 = vpack.c.bf16 %v3380, %v3379
      %v3406 = vpack.c.bf16 %v3382, %v3381
      %v3407 = vpack.c.bf16 %v3384, %v3383
      %v3408 = vpack.c.bf16 %v3386, %v3385
      %v3409 = vpack.c.bf16 %v3388, %v3387
      %v3410 = vpack.c.bf16 %v3390, %v3389
      %v3411 = vpack.c.bf16 %v3392, %v3391
      %v3412 = vpack.c.bf16 %v3394, %v3393
      %v3413 = vpack.c.bf16 %v3396, %v3395
      %v3414 = vpack.c.bf16 %v3398, %v3397
      %s3415 = scalar_lea.vmem %s1, 16
      %v3416 = vld [vmem:[%s3415] sm:$0x3]
      %v3418 = vsel %vm172, %v3399, 0
      %v3421 = vsel %vm172, %v3400, 0
      %v3424 = vsel %vm172, %v3401, 0
      %v3427 = vsel %vm172, %v3402, 0
      %v3430 = vsel %vm172, %v3403, 0
      %v3433 = vsel %vm172, %v3404, 0
      %v3436 = vsel %vm172, %v3405, 0
      %v3439 = vsel %vm172, %v3406, 0
      %v3442 = vsel %vm172, %v3407, 0
      %v3445 = vsel %vm172, %v3408, 0
      %v3448 = vsel %vm172, %v3409, 0
      %v3451 = vsel %vm172, %v3410, 0
      %v3454 = vsel %vm172, %v3411, 0
      %v3457 = vsel %vm172, %v3412, 0
      %v3460 = vsel %vm172, %v3413, 0
      %v3463 = vsel %vm172, %v3414, 0
      %v3466 = vand.u32 %v3416, %v1002
      %3468 = vmatprep.subr.bf16.mxu0 0
      %3469 = vmatpush1.bf16.msra.mxu0 %v3466
      %3470 = vmatprep.subr.bf16.mxu0 0
      %3471 = vmatpush1.bf16.msra.mxu0 0
      %3472 = vmatprep.subr.bf16.mxu0 0
      %3473 = vmatpush1.bf16.msra.mxu0 0
      %3474 = vmatprep.subr.bf16.mxu0 0
      %3475 = vmatpush1.bf16.msra.mxu0 0
      %3476 = vmatprep.subr.bf16.mxu0 0
      %3477 = vmatpush1.bf16.msra.mxu0 0
      %3478 = vmatprep.subr.bf16.mxu0 0
      %3479 = vmatpush1.bf16.msra.mxu0 0
      %3480 = vmatprep.subr.bf16.mxu0 0
      %3481 = vmatpush1.bf16.msra.mxu0 0
      %3482 = vmatprep.subr.bf16.mxu0 0
      %3483 = vmatpush1.bf16.msra.mxu0 0
      %3484 = vmatprep.subr.bf16.mxu0 0
      %3485 = vmatpush1.bf16.msra.mxu0 0
      %3486 = vmatprep.subr.bf16.mxu0 0
      %3487 = vmatpush1.bf16.msra.mxu0 0
      %3488 = vmatprep.subr.bf16.mxu0 0
      %3489 = vmatpush1.bf16.msra.mxu0 0
      %3490 = vmatprep.subr.bf16.mxu0 0
      %3491 = vmatpush1.bf16.msra.mxu0 0
      %3492 = vmatprep.subr.bf16.mxu0 0
      %3493 = vmatpush1.bf16.msra.mxu0 0
      %3494 = vmatprep.subr.bf16.mxu0 0
      %3495 = vmatpush1.bf16.msra.mxu0 0
      %3496 = vmatprep.subr.bf16.mxu0 0
      %3497 = vmatpush1.bf16.msra.mxu0 0
      %3498 = vmatprep.subr.bf16.mxu0 0
      %3499 = vmatpush1.bf16.msra.mxu0 0
      %3500 = vmatprep.mubr.bf16.mxu0 0
      %3501 = vmatmul.mubr.bf16.gmra.mrb[0].mxu0 %v3418
      %v3502 = vpop.f32.mrb[0].mxu0
      %v3503 = vadd.f32 0.0, %v3502
      %v3504 = vpop.f32.mrb[0].mxu0
      %v3505 = vpop.f32.mrb[0].mxu0
      %v3506 = vadd.f32 0.0, %v3505
      %v3507 = vpop.f32.mrb[0].mxu0
      %3508 = vmatprep.mubr.bf16.mxu0 0
      %3509 = vmatmul.mubr.bf16.gmra.mrb[0].mxu0 %v3421
      %v3510 = vpop.f32.mrb[0].mxu0
      %v3511 = vadd.f32 0.0, %v3510
      %v3512 = vpop.f32.mrb[0].mxu0
      %v3513 = vpop.f32.mrb[0].mxu0
      %v3514 = vadd.f32 0.0, %v3513
      %v3515 = vpop.f32.mrb[0].mxu0
      %3516 = vmatprep.mubr.bf16.mxu0 0
      %3517 = vmatmul.mubr.bf16.gmra.mrb[0].mxu0 %v3424
      %v3518 = vpop.f32.mrb[0].mxu0
      %v3519 = vadd.f32 0.0, %v3518
      %v3520 = vpop.f32.mrb[0].mxu0
      %v3521 = vpop.f32.mrb[0].mxu0
      %v3522 = vadd.f32 0.0, %v3521
      %v3523 = vpop.f32.mrb[0].mxu0
      %3524 = vmatprep.mubr.bf16.mxu0 0
      %3525 = vmatmul.mubr.bf16.gmra.mrb[0].mxu0 %v3427
      %v3526 = vpop.f32.mrb[0].mxu0
      %v3527 = vadd.f32 0.0, %v3526
      %v3528 = vpop.f32.mrb[0].mxu0
      %v3529 = vpop.f32.mrb[0].mxu0
      %v3530 = vadd.f32 0.0, %v3529
      %v3531 = vpop.f32.mrb[0].mxu0
      %3532 = vmatprep.mubr.bf16.mxu0 0
      %3533 = vmatmul.mubr.bf16.gmra.mrb[0].mxu0 %v3430
      %v3534 = vpop.f32.mrb[0].mxu0
      %v3535 = vadd.f32 0.0, %v3534
      %v3536 = vpop.f32.mrb[0].mxu0
      %v3537 = vpop.f32.mrb[0].mxu0
      %v3538 = vadd.f32 0.0, %v3537
      %v3539 = vpop.f32.mrb[0].mxu0
      %3540 = vmatprep.mubr.bf16.mxu0 0
      %3541 = vmatmul.mubr.bf16.gmra.mrb[0].mxu0 %v3433
      %v3542 = vpop.f32.mrb[0].mxu0
      %v3543 = vadd.f32 0.0, %v3542
      %v3544 = vpop.f32.mrb[0].mxu0
      %v3545 = vpop.f32.mrb[0].mxu0
      %v3546 = vadd.f32 0.0, %v3545
      %v3547 = vpop.f32.mrb[0].mxu0
      %3548 = vmatprep.mubr.bf16.mxu0 0
      %3549 = vmatmul.mubr.bf16.gmra.mrb[0].mxu0 %v3436
      %v3550 = vpop.f32.mrb[0].mxu0
      %v3551 = vadd.f32 0.0, %v3550
      %v3552 = vpop.f32.mrb[0].mxu0
      %v3553 = vpop.f32.mrb[0].mxu0
      %v3554 = vadd.f32 0.0, %v3553
      %v3555 = vpop.f32.mrb[0].mxu0
      %3556 = vmatprep.mubr.bf16.mxu0 0
      %3557 = vmatmul.mubr.bf16.gmra.mrb[0].mxu0 %v3439
      %v3558 = vpop.f32.mrb[0].mxu0
      %v3559 = vadd.f32 0.0, %v3558
      %v3560 = vpop.f32.mrb[0].mxu0
      %v3561 = vpop.f32.mrb[0].mxu0
      %v3562 = vadd.f32 0.0, %v3561
      %v3563 = vpop.f32.mrb[0].mxu0
      %3564 = vmatprep.mubr.bf16.mxu0 0
      %3565 = vmatmul.mubr.bf16.gmra.mrb[0].mxu0 %v3442
      %v3566 = vpop.f32.mrb[0].mxu0
      %v3567 = vadd.f32 0.0, %v3566
      %v3568 = vpop.f32.mrb[0].mxu0
      %v3569 = vpop.f32.mrb[0].mxu0
      %v3570 = vadd.f32 0.0, %v3569
      %v3571 = vpop.f32.mrb[0].mxu0
      %3572 = vmatprep.mubr.bf16.mxu0 0
      %3573 = vmatmul.mubr.bf16.gmra.mrb[0].mxu0 %v3445
      %v3574 = vpop.f32.mrb[0].mxu0
      %v3575 = vadd.f32 0.0, %v3574
      %v3576 = vpop.f32.mrb[0].mxu0
      %v3577 = vpop.f32.mrb[0].mxu0
      %v3578 = vadd.f32 0.0, %v3577
      %v3579 = vpop.f32.mrb[0].mxu0
      %3580 = vmatprep.mubr.bf16.mxu0 0
      %3581 = vmatmul.mubr.bf16.gmra.mrb[0].mxu0 %v3448
      %v3582 = vpop.f32.mrb[0].mxu0
      %v3583 = vadd.f32 0.0, %v3582
      %v3584 = vpop.f32.mrb[0].mxu0
      %v3585 = vpop.f32.mrb[0].mxu0
      %v3586 = vadd.f32 0.0, %v3585
      %v3587 = vpop.f32.mrb[0].mxu0
      %3588 = vmatprep.mubr.bf16.mxu0 0
      %3589 = vmatmul.mubr.bf16.gmra.mrb[0].mxu0 %v3451
      %v3590 = vpop.f32.mrb[0].mxu0
      %v3591 = vadd.f32 0.0, %v3590
      %v3592 = vpop.f32.mrb[0].mxu0
      %v3593 = vpop.f32.mrb[0].mxu0
      %v3594 = vadd.f32 0.0, %v3593
      %v3595 = vpop.f32.mrb[0].mxu0
      %3596 = vmatprep.mubr.bf16.mxu0 0
      %3597 = vmatmul.mubr.bf16.gmra.mrb[0].mxu0 %v3454
      %v3598 = vpop.f32.mrb[0].mxu0
      %v3599 = vadd.f32 0.0, %v3598
      %v3600 = vpop.f32.mrb[0].mxu0
      %v3601 = vpop.f32.mrb[0].mxu0
      %v3602 = vadd.f32 0.0, %v3601
      %v3603 = vpop.f32.mrb[0].mxu0
      %3604 = vmatprep.mubr.bf16.mxu0 0
      %3605 = vmatmul.mubr.bf16.gmra.mrb[0].mxu0 %v3457
      %v3606 = vpop.f32.mrb[0].mxu0
      %v3607 = vadd.f32 0.0, %v3606
      %v3608 = vpop.f32.mrb[0].mxu0
      %v3609 = vpop.f32.mrb[0].mxu0
      %v3610 = vadd.f32 0.0, %v3609
      %v3611 = vpop.f32.mrb[0].mxu0
      %3612 = vmatprep.mubr.bf16.mxu0 0
      %3613 = vmatmul.mubr.bf16.gmra.mrb[0].mxu0 %v3460
      %v3614 = vpop.f32.mrb[0].mxu0
      %v3615 = vadd.f32 0.0, %v3614
      %v3616 = vpop.f32.mrb[0].mxu0
      %v3617 = vpop.f32.mrb[0].mxu0
      %v3618 = vadd.f32 0.0, %v3617
      %v3619 = vpop.f32.mrb[0].mxu0
      %3620 = vmatprep.mubr.bf16.mxu0 0
      %3621 = vmatmul.mubr.bf16.gmra.mrb[0].mxu0 %v3463
      %v3622 = vpop.f32.mrb[0].mxu0
      %v3623 = vadd.f32 0.0, %v3622
      %v3624 = vpop.f32.mrb[0].mxu0
      %v3625 = vpop.f32.mrb[0].mxu0
      %v3626 = vadd.f32 0.0, %v3625
      %v3627 = vpop.f32.mrb[0].mxu0
      %3628 = vdwg.mxu0
      %v3629 = vadd.f32 %v3303, %v3503
      %v3630 = vadd.f32 %v3304, %v3506
      %v3631 = vadd.f32 %v3305, %v3511
      %v3632 = vadd.f32 %v3306, %v3514
      %v3633 = vadd.f32 %v3307, %v3519
      %v3634 = vadd.f32 %v3308, %v3522
      %v3635 = vadd.f32 %v3309, %v3527
      %v3636 = vadd.f32 %v3310, %v3530
      %v3637 = vadd.f32 %v3311, %v3535
      %v3638 = vadd.f32 %v3312, %v3538
      %v3639 = vadd.f32 %v3313, %v3543
      %v3640 = vadd.f32 %v3314, %v3546
      %v3641 = vadd.f32 %v3315, %v3551
      %v3642 = vadd.f32 %v3316, %v3554
      %v3643 = vadd.f32 %v3317, %v3559
      %v3644 = vadd.f32 %v3318, %v3562
      %v3645 = vadd.f32 %v3319, %v3567
      %v3646 = vadd.f32 %v3320, %v3570
      %v3647 = vadd.f32 %v3321, %v3575
      %v3648 = vadd.f32 %v3322, %v3578
      %v3649 = vadd.f32 %v3323, %v3583
      %v3650 = vadd.f32 %v3324, %v3586
      %v3651 = vadd.f32 %v3325, %v3591
      %v3652 = vadd.f32 %v3326, %v3594
      %v3653 = vadd.f32 %v3327, %v3599
      %v3654 = vadd.f32 %v3328, %v3602
      %v3655 = vadd.f32 %v3329, %v3607
      %v3656 = vadd.f32 %v3330, %v3610
      %v3657 = vadd.f32 %v3331, %v3615
      %v3658 = vadd.f32 %v3332, %v3618
      %v3659 = vadd.f32 %v3333, %v3623
      %v3660 = vadd.f32 %v3334, %v3626
      %v3661 = vld [vmem:[%s2] sm:$0x1]
      %v3663 = vlaneseq
      %v3664 = vshrl.u32 %v3663, 7
      %v3665 = vsub.s32 0, %v3664
      %v3666 = vrot.slane %v3661, %v3665
      %v3668 = vadd.f32 %v3629, %v3666
      %v3669 = vadd.f32 %v3630, %v3666
      %v3670 = vadd.f32 %v3631, %v3666
      %v3671 = vadd.f32 %v3632, %v3666
      %v3672 = vadd.f32 %v3633, %v3666
      %v3673 = vadd.f32 %v3634, %v3666
      %v3674 = vadd.f32 %v3635, %v3666
      %v3675 = vadd.f32 %v3636, %v3666
      %v3676 = vadd.f32 %v3637, %v3666
      %v3677 = vadd.f32 %v3638, %v3666
      %v3678 = vadd.f32 %v3639, %v3666
      %v3679 = vadd.f32 %v3640, %v3666
      %v3680 = vadd.f32 %v3641, %v3666
      %v3681 = vadd.f32 %v3642, %v3666
      %v3682 = vadd.f32 %v3643, %v3666
      %v3683 = vadd.f32 %v3644, %v3666
      %v3684 = vadd.f32 %v3645, %v3666
      %v3685 = vadd.f32 %v3646, %v3666
      %v3686 = vadd.f32 %v3647, %v3666
      %v3687 = vadd.f32 %v3648, %v3666
      %v3688 = vadd.f32 %v3649, %v3666
      %v3689 = vadd.f32 %v3650, %v3666
      %v3690 = vadd.f32 %v3651, %v3666
      %v3691 = vadd.f32 %v3652, %v3666
      %v3692 = vadd.f32 %v3653, %v3666
      %v3693 = vadd.f32 %v3654, %v3666
      %v3694 = vadd.f32 %v3655, %v3666
      %v3695 = vadd.f32 %v3656, %v3666
      %v3696 = vadd.f32 %v3657, %v3666
      %v3697 = vadd.f32 %v3658, %v3666
      %v3698 = vadd.f32 %v3659, %v3666
      %v3699 = vadd.f32 %v3660, %v3666
      %v3700 = vmul.f32 %v3668, 0.5
      %v3701 = vmul.f32 %v3669, 0.5
      %v3702 = vmul.f32 %v3670, 0.5
      %v3703 = vmul.f32 %v3671, 0.5
      %v3704 = vmul.f32 %v3672, 0.5
      %v3705 = vmul.f32 %v3673, 0.5
      %v3706 = vmul.f32 %v3674, 0.5
      %v3707 = vmul.f32 %v3675, 0.5
      %v3708 = vmul.f32 %v3676, 0.5
      %v3709 = vmul.f32 %v3677, 0.5
      %v3710 = vmul.f32 %v3678, 0.5
      %v3711 = vmul.f32 %v3679, 0.5
      %v3712 = vmul.f32 %v3680, 0.5
      %v3713 = vmul.f32 %v3681, 0.5
      %v3714 = vmul.f32 %v3682, 0.5
      %v3715 = vmul.f32 %v3683, 0.5
      %v3716 = vmul.f32 %v3684, 0.5
      %v3717 = vmul.f32 %v3685, 0.5
      %v3718 = vmul.f32 %v3686, 0.5
      %v3719 = vmul.f32 %v3687, 0.5
      %v3720 = vmul.f32 %v3688, 0.5
      %v3721 = vmul.f32 %v3689, 0.5
      %v3722 = vmul.f32 %v3690, 0.5
      %v3723 = vmul.f32 %v3691, 0.5
      %v3724 = vmul.f32 %v3692, 0.5
      %v3725 = vmul.f32 %v3693, 0.5
      %v3726 = vmul.f32 %v3694, 0.5
      %v3727 = vmul.f32 %v3695, 0.5
      %v3728 = vmul.f32 %v3696, 0.5
      %v3729 = vmul.f32 %v3697, 0.5
      %v3730 = vmul.f32 %v3698, 0.5
      %v3731 = vmul.f32 %v3699, 0.5
      %v3732 = vmul.f32 %v3668, 0.70710677
      %v3733 = vmul.f32 %v3669, 0.70710677
      %v3734 = vmul.f32 %v3670, 0.70710677
      %v3735 = vmul.f32 %v3671, 0.70710677
      %v3736 = vmul.f32 %v3672, 0.70710677
      %v3737 = vmul.f32 %v3673, 0.70710677
      %v3738 = vmul.f32 %v3674, 0.70710677
      %v3739 = vmul.f32 %v3675, 0.70710677
      %v3740 = vmul.f32 %v3676, 0.70710677
      %v3741 = vmul.f32 %v3677, 0.70710677
      %v3742 = vmul.f32 %v3678, 0.70710677
      %v3743 = vmul.f32 %v3679, 0.70710677
      %v3744 = vmul.f32 %v3680, 0.70710677
      %v3745 = vmul.f32 %v3681, 0.70710677
      %v3746 = vmul.f32 %v3682, 0.70710677
      %v3747 = vmul.f32 %v3683, 0.70710677
      %v3748 = vmul.f32 %v3684, 0.70710677
      %v3749 = vmul.f32 %v3685, 0.70710677
      %v3750 = vmul.f32 %v3686, 0.70710677
      %v3751 = vmul.f32 %v3687, 0.70710677
      %v3752 = vmul.f32 %v3688, 0.70710677
      %v3753 = vmul.f32 %v3689, 0.70710677
      %v3754 = vmul.f32 %v3690, 0.70710677
      %v3755 = vmul.f32 %v3691, 0.70710677
      %v3756 = vmul.f32 %v3692, 0.70710677
      %v3757 = vmul.f32 %v3693, 0.70710677
      %v3758 = vmul.f32 %v3694, 0.70710677
      %v3759 = vmul.f32 %v3695, 0.70710677
      %v3760 = vmul.f32 %v3696, 0.70710677
      %v3761 = vmul.f32 %v3697, 0.70710677
      %v3762 = vmul.f32 %v3698, 0.70710677
      %v3763 = vmul.f32 %v3699, 0.70710677
      %v3764 = verf.f32.pop %v3732
      %v3765 = verf.f32.pop %v3733
      %v3766 = verf.f32.pop %v3734
      %v3767 = verf.f32.pop %v3735
      %v3768 = verf.f32.pop %v3736
      %v3769 = verf.f32.pop %v3737
      %v3770 = verf.f32.pop %v3738
      %v3771 = verf.f32.pop %v3739
      %v3772 = verf.f32.pop %v3740
      %v3773 = verf.f32.pop %v3741
      %v3774 = verf.f32.pop %v3742
      %v3775 = verf.f32.pop %v3743
      %v3776 = verf.f32.pop %v3744
      %v3777 = verf.f32.pop %v3745
      %v3778 = verf.f32.pop %v3746
      %v3779 = verf.f32.pop %v3747
      %v3780 = verf.f32.pop %v3748
      %v3781 = verf.f32.pop %v3749
      %v3782 = verf.f32.pop %v3750
      %v3783 = verf.f32.pop %v3751
      %v3784 = verf.f32.pop %v3752
      %v3785 = verf.f32.pop %v3753
      %v3786 = verf.f32.pop %v3754
      %v3787 = verf.f32.pop %v3755
      %v3788 = verf.f32.pop %v3756
      %v3789 = verf.f32.pop %v3757
      %v3790 = verf.f32.pop %v3758
      %v3791 = verf.f32.pop %v3759
      %v3792 = verf.f32.pop %v3760
      %v3793 = verf.f32.pop %v3761
      %v3794 = verf.f32.pop %v3762
      %v3795 = verf.f32.pop %v3763
      %v3796 = vadd.f32 %v3764, 1.0
      %v3797 = vadd.f32 %v3765, 1.0
      %v3798 = vadd.f32 %v3766, 1.0
      %v3799 = vadd.f32 %v3767, 1.0
      %v3800 = vadd.f32 %v3768, 1.0
      %v3801 = vadd.f32 %v3769, 1.0
      %v3802 = vadd.f32 %v3770, 1.0
      %v3803 = vadd.f32 %v3771, 1.0
      %v3804 = vadd.f32 %v3772, 1.0
      %v3805 = vadd.f32 %v3773, 1.0
      %v3806 = vadd.f32 %v3774, 1.0
      %v3807 = vadd.f32 %v3775, 1.0
      %v3808 = vadd.f32 %v3776, 1.0
      %v3809 = vadd.f32 %v3777, 1.0
      %v3810 = vadd.f32 %v3778, 1.0
      %v3811 = vadd.f32 %v3779, 1.0
      %v3812 = vadd.f32 %v3780, 1.0
      %v3813 = vadd.f32 %v3781, 1.0
      %v3814 = vadd.f32 %v3782, 1.0
      %v3815 = vadd.f32 %v3783, 1.0
      %v3816 = vadd.f32 %v3784, 1.0
      %v3817 = vadd.f32 %v3785, 1.0
      %v3818 = vadd.f32 %v3786, 1.0
      %v3819 = vadd.f32 %v3787, 1.0
      %v3820 = vadd.f32 %v3788, 1.0
      %v3821 = vadd.f32 %v3789, 1.0
      %v3822 = vadd.f32 %v3790, 1.0
      %v3823 = vadd.f32 %v3791, 1.0
      %v3824 = vadd.f32 %v3792, 1.0
      %v3825 = vadd.f32 %v3793, 1.0
      %v3826 = vadd.f32 %v3794, 1.0
      %v3827 = vadd.f32 %v3795, 1.0
      %v3828 = vmul.f32 %v3700, %v3796
      %v3829 = vmul.f32 %v3701, %v3797
      %v3830 = vmul.f32 %v3702, %v3798
      %v3831 = vmul.f32 %v3703, %v3799
      %v3832 = vmul.f32 %v3704, %v3800
      %v3833 = vmul.f32 %v3705, %v3801
      %v3834 = vmul.f32 %v3706, %v3802
      %v3835 = vmul.f32 %v3707, %v3803
      %v3836 = vmul.f32 %v3708, %v3804
      %v3837 = vmul.f32 %v3709, %v3805
      %v3838 = vmul.f32 %v3710, %v3806
      %v3839 = vmul.f32 %v3711, %v3807
      %v3840 = vmul.f32 %v3712, %v3808
      %v3841 = vmul.f32 %v3713, %v3809
      %v3842 = vmul.f32 %v3714, %v3810
      %v3843 = vmul.f32 %v3715, %v3811
      %v3844 = vmul.f32 %v3716, %v3812
      %v3845 = vmul.f32 %v3717, %v3813
      %v3846 = vmul.f32 %v3718, %v3814
      %v3847 = vmul.f32 %v3719, %v3815
      %v3848 = vmul.f32 %v3720, %v3816
      %v3849 = vmul.f32 %v3721, %v3817
      %v3850 = vmul.f32 %v3722, %v3818
      %v3851 = vmul.f32 %v3723, %v3819
      %v3852 = vmul.f32 %v3724, %v3820
      %v3853 = vmul.f32 %v3725, %v3821
      %v3854 = vmul.f32 %v3726, %v3822
      %v3855 = vmul.f32 %v3727, %v3823
      %v3856 = vmul.f32 %v3728, %v3824
      %v3857 = vmul.f32 %v3729, %v3825
      %v3858 = vmul.f32 %v3730, %v3826
      %v3859 = vmul.f32 %v3731, %v3827
      %vm3860 = vcmask 261120
      %3861 = vst.msk [vmem:[%s170] sm:$0xff] %vm3860, %v3828
      %3862 = vst.msk [vmem:[%s170 + $0x8] sm:$0xff] %vm3860, %v3829
      %3863 = vst.msk [vmem:[%s170 + $0x10] sm:$0xff] %vm3860, %v3830
      %3864 = vst.msk [vmem:[%s170 + $0x18] sm:$0xff] %vm3860, %v3831
      %3865 = vst.msk [vmem:[%s170 + $0x20] sm:$0xff] %vm3860, %v3832
      %3866 = vst.msk [vmem:[%s170 + $0x28] sm:$0xff] %vm3860, %v3833
      %3867 = vst.msk [vmem:[%s170 + $0x30] sm:$0xff] %vm3860, %v3834
      %3868 = vst.msk [vmem:[%s170 + $0x38] sm:$0xff] %vm3860, %v3835
      %3869 = vst.msk [vmem:[%s170 + $0x40] sm:$0xff] %vm3860, %v3836
      %3870 = vst.msk [vmem:[%s170 + $0x48] sm:$0xff] %vm3860, %v3837
      %3871 = vst.msk [vmem:[%s170 + $0x50] sm:$0xff] %vm3860, %v3838
      %3872 = vst.msk [vmem:[%s170 + $0x58] sm:$0xff] %vm3860, %v3839
      %3873 = vst.msk [vmem:[%s170 + $0x60] sm:$0xff] %vm3860, %v3840
      %3874 = vst.msk [vmem:[%s170 + $0x68] sm:$0xff] %vm3860, %v3841
      %3875 = vst.msk [vmem:[%s170 + $0x70] sm:$0xff] %vm3860, %v3842
      %3876 = vst.msk [vmem:[%s170 + $0x78] sm:$0xff] %vm3860, %v3843
      %3877 = vst.msk [vmem:[%s170 + $0x80] sm:$0xff] %vm3860, %v3844
      %3878 = vst.msk [vmem:[%s170 + $0x88] sm:$0xff] %vm3860, %v3845
      %3879 = vst.msk [vmem:[%s170 + $0x90] sm:$0xff] %vm3860, %v3846
      %3880 = vst.msk [vmem:[%s170 + $0x98] sm:$0xff] %vm3860, %v3847
      %3881 = vst.msk [vmem:[%s170 + $0xa0] sm:$0xff] %vm3860, %v3848
      %3882 = vst.msk [vmem:[%s170 + $0xa8] sm:$0xff] %vm3860, %v3849
      %3883 = vst.msk [vmem:[%s170 + $0xb0] sm:$0xff] %vm3860, %v3850
      %3884 = vst.msk [vmem:[%s170 + $0xb8] sm:$0xff] %vm3860, %v3851
      %3885 = vst.msk [vmem:[%s170 + $0xc0] sm:$0xff] %vm3860, %v3852
      %3886 = vst.msk [vmem:[%s170 + $0xc8] sm:$0xff] %vm3860, %v3853
      %3887 = vst.msk [vmem:[%s170 + $0xd0] sm:$0xff] %vm3860, %v3854
      %3888 = vst.msk [vmem:[%s170 + $0xd8] sm:$0xff] %vm3860, %v3855
      %3889 = vst.msk [vmem:[%s170 + $0xe0] sm:$0xff] %vm3860, %v3856
      %3890 = vst.msk [vmem:[%s170 + $0xe8] sm:$0xff] %vm3860, %v3857
      %3891 = vst.msk [vmem:[%s170 + $0xf0] sm:$0xff] %vm3860, %v3858
      %3892 = vst.msk [vmem:[%s170 + $0xf8] sm:$0xff] %vm3860, %v3859
      %p3893 = scmp.lt.s32.totalorder %s14, 1
      %s3894 = scalar_select %p3893, %s14, 1
      %s3895 = smul.addr %s3894, 32
      %s3896 = smul.addr %s3895, 8
      %s3897 = scalar_lea.vmem %s3, %s3896
      // Predicated region
      $region33: #{encoder_forward.7} parent=31 // pred_check
        %p3898 = pneg %p100
      $region34: #{encoder_forward.7} parent=31 // pred_check_branch
        %3900 = sbr.rel (%p3898) target = $region36
      $region35: #{encoder_forward.7} parent=31 // pred_region
        _
      $region36: #{encoder_forward.7} parent=31 // pred_fallthru
        _
    $region32: #{encoder_forward.7} parent=5 // pred_fallthru
      _
    %p3901 = scmp.le.s32.totalorder 2, %s9
    // Predicated region
    $region37: #{encoder_forward.7} parent=5 // pred_check
      %p3902 = pneg %p3901
    $region38: #{encoder_forward.7} parent=5 // pred_check_branch
      %3904 = sbr.rel (%p3902) target = $region40
    $region39: #{encoder_forward.7} parent=5 // pred_region
      %s3905 = ssub.s32 %s9, 2
      // Predicated region
      $region41: #{encoder_forward.7} parent=39 // pred_check
        %p3906 = pneg %p106
      $region42: #{encoder_forward.7} parent=39 // pred_check_branch
        %3908 = sbr.rel (%p3906) target = $region44
      $region43: #{encoder_forward.7} parent=39 // pred_region
        %p3909 = scmp.lt.s32.totalorder %s15, 1
        %s3910 = scalar_select %p3909, %s15, 1
        %s3911 = smul.addr %s3910, 32
        %s3912 = smul.addr %s3911, 8
        %s3913 = scalar_lea.vmem %s3, %s3912
      $region44: #{encoder_forward.7} parent=39 // pred_fallthru
        _
    $region40: #{encoder_forward.7} parent=5 // pred_fallthru
      _
  $region6: #{encoder_forward.7} parent=0 // loop_footer
    %s13 = sadd.s32 1, %s9
  $region7: #{encoder_forward.7} parent=0 // loop_footer_branch
    %8 = sbr.rel target = $region3
  $region8: #{encoder_forward.7} parent=0 // loop_exit
    _

// kernel: encoder_forward.11
$region0: #{encoder_forward.11}
  #allocation0 [shape = 'u32[]', space=smem, size = 0x4, offset = 0x4, fixed_abs, tag = 'smem constant byte address 0x4 - core index']
  #allocation1 [shape = 'u32[144,128]{1,0:T(1,128)}', space=vmem, size = 0x12000, scoped, tag = 'internal scratch']
  %s0 = inlined_call_operand.vmem [shape: f32[2,4,128], index: 0, kind: input, shape index: {}]
  %s1 = inlined_call_operand.vmem [shape: f32[1,128], index: 1, kind: input, shape index: {}]
  %s2 = inlined_call_operand.vmem [shape: f32[1,128], index: 2, kind: input, shape index: {}]
  %s3 = inlined_call_operand.vmem [shape: bf16[128,64], index: 3, kind: input, shape index: {}]
  %s4 = inlined_call_operand.vmem [shape: f32[1,64], index: 4, kind: input, shape index: {}]
  %s5 = inlined_call_operand.vmem [shape: f32[2,4,64], index: 5, kind: output, shape index: {}]
  %s6 = sld [smem:[#allocation0]]
  $region53: #{encoder_forward.11} parent=0
    _
  %s8 = ssub.s32 1, %s6
  %s9 = scalar_select 0, %s8, %s6
  loop: start=0, step=1, limit=4
  $region2: #{encoder_forward.11} parent=0 // loop_pre_header
    _
  $region3: #{encoder_forward.11} parent=0 // loop_header
    %s11 = sphi 0, %s15
    %p12 = scmp.ge.s32.totalorder %s11, 4
    %s21 = sphi 0, %s23
    %s24 = sphi 0, %s21
    %s25 = sphi 0, %s24
    %s41 = sphi 0, %s25
    %s45 = sphi 0, %s45
    %s47 = sphi 0, %s45
    %s48 = sphi 0, %s47
    %s62 = sphi 0, %s48
    %s66 = sphi 0, %s66
    %s68 = sphi 0, %s66
    %s69 = sphi 0, %s68
    %s83 = sphi 0, %s69
    %s87 = sphi 0, %s87
    %s89 = sphi 0, %s87
    %s90 = sphi 0, %s89
    %s104 = sphi 0, %s90
    %s108 = sphi 0, %s108
    %s110 = sphi 0, %s108
    %s111 = sphi 0, %s110
    %s125 = sphi 0, %s111
    %s131 = sphi 0, %s133
    %s134 = sphi 0, %s131
    %s135 = sphi 0, %s134
    %s151 = sphi 0, %s135
  $region4: #{encoder_forward.11} parent=0 // loop_header_branch
    %14 = sbr.rel (%p12) target = $region8
  $region5: #{encoder_forward.11} parent=0 // loop_body
    %s16 = ssub.s32 %s11, 1
    %s17 = ssub.s32 %s11, 2
    %s18 = sadd.s32 %s11, 1
    %s19 = ssub.s32 %s11, %s18
    %p20 = scmp.eq.s32.totalorder %s19, 0
    %s22 = sadd.s32 %s21, 1
    %s23 = scalar_select %p20, %s21, %s22
    %p26 = pneg %p20
    %p27 = scmp.eq.s32.totalorder %s11, 1
    %p28 = por %p26, %p27
    %p29 = scmp.ne.s32.totalorder %s21, %s24
    %p30 = scmp.eq.s32.totalorder %s11, 0
    %p31 = por %p29, %p30
    %p32 = scmp.ne.s32.totalorder %s21, %s24
    %p33 = scmp.eq.s32.totalorder %s16, 1
    %p34 = por %p32, %p33
    %p35 = scmp.ne.s32.totalorder %s24, %s25
    %p36 = scmp.eq.s32.totalorder %s16, 0
    %p37 = por %p35, %p36
    %p38 = scmp.ne.s32.totalorder %s24, %s25
    %p39 = scmp.eq.s32.totalorder %s17, 1
    %p40 = por %p38, %p39
    %p42 = scmp.ne.s32.totalorder %s25, %s41
    %p43 = scmp.eq.s32.totalorder %s17, 0
    %p44 = por %p42, %p43
    %s46 = sadd.s32 %s45, 1
    %p49 = scmp.eq.s32.totalorder %s11, 1
    %p50 = scmp.ne.s32.totalorder %s45, %s47
    %p51 = scmp.eq.s32.totalorder %s11, 0
    %p52 = por %p50, %p51
    %p53 = scmp.ne.s32.totalorder %s45, %s47
    %p54 = scmp.eq.s32.totalorder %s16, 1
    %p55 = por %p53, %p54
    %p56 = scmp.ne.s32.totalorder %s47, %s48
    %p57 = scmp.eq.s32.totalorder %s16, 0
    %p58 = por %p56, %p57
    %p59 = scmp.ne.s32.totalorder %s47, %s48
    %p60 = scmp.eq.s32.totalorder %s17, 1
    %p61 = por %p59, %p60
    %p63 = scmp.ne.s32.totalorder %s48, %s62
    %p64 = scmp.eq.s32.totalorder %s17, 0
    %p65 = por %p63, %p64
    %s67 = sadd.s32 %s66, 1
    %p70 = scmp.eq.s32.totalorder %s11, 1
    %p71 = scmp.ne.s32.totalorder %s66, %s68
    %p72 = scmp.eq.s32.totalorder %s11, 0
    %p73 = por %p71, %p72
    %p74 = scmp.ne.s32.totalorder %s66, %s68
    %p75 = scmp.eq.s32.totalorder %s16, 1
    %p76 = por %p74, %p75
    %p77 = scmp.ne.s32.totalorder %s68, %s69
    %p78 = scmp.eq.s32.totalorder %s16, 0
    %p79 = por %p77, %p78
    %p80 = scmp.ne.s32.totalorder %s68, %s69
    %p81 = scmp.eq.s32.totalorder %s17, 1
    %p82 = por %p80, %p81
    %p84 = scmp.ne.s32.totalorder %s69, %s83
    %p85 = scmp.eq.s32.totalorder %s17, 0
    %p86 = por %p84, %p85
    %s88 = sadd.s32 %s87, 1
    %p91 = scmp.eq.s32.totalorder %s11, 1
    %p92 = scmp.ne.s32.totalorder %s87, %s89
    %p93 = scmp.eq.s32.totalorder %s11, 0
    %p94 = por %p92, %p93
    %p95 = scmp.ne.s32.totalorder %s87, %s89
    %p96 = scmp.eq.s32.totalorder %s16, 1
    %p97 = por %p95, %p96
    %p98 = scmp.ne.s32.totalorder %s89, %s90
    %p99 = scmp.eq.s32.totalorder %s16, 0
    %p100 = por %p98, %p99
    %p101 = scmp.ne.s32.totalorder %s89, %s90
    %p102 = scmp.eq.s32.totalorder %s17, 1
    %p103 = por %p101, %p102
    %p105 = scmp.ne.s32.totalorder %s90, %s104
    %p106 = scmp.eq.s32.totalorder %s17, 0
    %p107 = por %p105, %p106
    %s109 = sadd.s32 %s108, 1
    %p112 = scmp.eq.s32.totalorder %s11, 1
    %p113 = scmp.ne.s32.totalorder %s108, %s110
    %p114 = scmp.eq.s32.totalorder %s11, 0
    %p115 = por %p113, %p114
    %p116 = scmp.ne.s32.totalorder %s108, %s110
    %p117 = scmp.eq.s32.totalorder %s16, 1
    %p118 = por %p116, %p117
    %p119 = scmp.ne.s32.totalorder %s110, %s111
    %p120 = scmp.eq.s32.totalorder %s16, 0
    %p121 = por %p119, %p120
    %p122 = scmp.ne.s32.totalorder %s110, %s111
    %p123 = scmp.eq.s32.totalorder %s17, 1
    %p124 = por %p122, %p123
    %p126 = scmp.ne.s32.totalorder %s111, %s125
    %p127 = scmp.eq.s32.totalorder %s17, 0
    %p128 = por %p126, %p127
    %s129 = ssub.s32 %s11, %s18
    %p130 = scmp.eq.s32.totalorder %s129, 0
    %s132 = sadd.s32 %s131, 1
    %s133 = scalar_select %p130, %s131, %s132
    %p136 = pneg %p130
    %p137 = scmp.eq.s32.totalorder %s11, 1
    %p138 = por %p136, %p137
    %p139 = scmp.ne.s32.totalorder %s131, %s134
    %p140 = scmp.eq.s32.totalorder %s11, 0
    %p141 = por %p139, %p140
    %p142 = scmp.ne.s32.totalorder %s131, %s134
    %p143 = scmp.eq.s32.totalorder %s16, 1
    %p144 = por %p142, %p143
    %p145 = scmp.ne.s32.totalorder %s134, %s135
    %p146 = scmp.eq.s32.totalorder %s16, 0
    %p147 = por %p145, %p146
    %p148 = scmp.ne.s32.totalorder %s134, %s135
    %p149 = scmp.eq.s32.totalorder %s17, 1
    %p150 = por %p148, %p149
    %p152 = scmp.ne.s32.totalorder %s135, %s151
    %p153 = scmp.eq.s32.totalorder %s17, 0
    %p154 = por %p152, %p153
    %p155 = scmp.le.s32.totalorder 1, %s11
    %p156 = scmp.lt.s32.totalorder %s11, 3
    %p157 = pnand %p155, %p156
    %p158 = pneg %p157
    // Predicated region
    $region9: #{encoder_forward.11} parent=5 // pred_check
      _
    $region10: #{encoder_forward.11} parent=5 // pred_check_branch
      %160 = sbr.rel (%p157) target = $region12
    $region11: #{encoder_forward.11} parent=5 // pred_region
      %s161 = ssub.s32 %s11, 1
      // Predicated region
      $region13: #{encoder_forward.11} parent=11 // pred_check
        %p162 = pneg %p58
      $region14: #{encoder_forward.11} parent=11 // pred_check_branch
        %164 = sbr.rel (%p162) target = $region16
      $region15: #{encoder_forward.11} parent=11 // pred_region
        _
      $region16: #{encoder_forward.11} parent=11 // pred_fallthru
        _
      // Predicated region
      $region17: #{encoder_forward.11} parent=11 // pred_check
        %p165 = pneg %p79
      $region18: #{encoder_forward.11} parent=11 // pred_check_branch
        %167 = sbr.rel (%p165) target = $region20
      $region19: #{encoder_forward.11} parent=11 // pred_region
        _
      $region20: #{encoder_forward.11} parent=11 // pred_fallthru
        _
      // Predicated region
      $region21: #{encoder_forward.11} parent=11 // pred_check
        %p168 = pneg %p100
      $region22: #{encoder_forward.11} parent=11 // pred_check_branch
        %170 = sbr.rel (%p168) target = $region24
      $region23: #{encoder_forward.11} parent=11 // pred_region
        _
      $region24: #{encoder_forward.11} parent=11 // pred_fallthru
        _
      // Predicated region
      $region25: #{encoder_forward.11} parent=11 // pred_check
        %p171 = pneg %p121
      $region26: #{encoder_forward.11} parent=11 // pred_check_branch
        %173 = sbr.rel (%p171) target = $region28
      $region27: #{encoder_forward.11} parent=11 // pred_region
        _
      $region28: #{encoder_forward.11} parent=11 // pred_fallthru
        _
    $region12: #{encoder_forward.11} parent=5 // pred_fallthru
      _
    %p174 = scmp.lt.s32.totalorder %s11, 2
    // Predicated region
    $region29: #{encoder_forward.11} parent=5 // pred_check
      %p175 = pneg %p174
    $region30: #{encoder_forward.11} parent=5 // pred_check_branch
      %177 = sbr.rel (%p175) target = $region32
    $region31: #{encoder_forward.11} parent=5 // pred_region
      // Predicated region
      $region33: #{encoder_forward.11} parent=31 // pred_check
        %p178 = pneg %p31
      $region34: #{encoder_forward.11} parent=31 // pred_check_branch
        %180 = sbr.rel (%p178) target = $region36
      $region35: #{encoder_forward.11} parent=31 // pred_region
        %p181 = scmp.lt.s32.totalorder %s11, 1
        %s182 = scalar_select %p181, %s11, 1
        %s183 = smul.addr %s182, 4
        %s184 = scalar_lea.vmem %s0, %s183
      $region36: #{encoder_forward.11} parent=31 // pred_fallthru
        _
    $region32: #{encoder_forward.11} parent=5 // pred_fallthru
      _
    %p185 = scmp.le.s32.totalorder 1, %s11
    %p186 = scmp.lt.s32.totalorder %s11, 3
    %p187 = pnand %p185, %p186
    %p188 = pneg %p187
    // Predicated region
    $region37: #{encoder_forward.11} parent=5 // pred_check
      _
    $region38: #{encoder_forward.11} parent=5 // pred_check_branch
      %190 = sbr.rel (%p187) target = $region40
    $region39: #{encoder_forward.11} parent=5 // pred_region
      %s191 = ssub.s32 %s11, 1
      %p192 = scmp.lt.s32.totalorder %s16, 1
      %s193 = scalar_select %p192, %s16, 1
      %s194 = smul.addr %s193, 4
      %s195 = scalar_lea.vmem %s0, %s194
      %p196 = pneg %p37
      %p197 = pneg %p34
      %p198 = pneg %p58
      %p199 = pneg %p55
      %p200 = pneg %p79
      %p201 = pneg %p76
      %p202 = pneg %p100
      %p203 = pneg %p97
      %p204 = pneg %p121
      %p205 = pneg %p118
      %p206 = pneg %p147
      %p207 = pneg %p144
      %p208 = scmp.lt.s32.totalorder %s16, 1
      %s209 = scalar_select %p208, %s16, 1
      %s210 = smul.addr %s209, 4
      %s211 = scalar_lea.vmem %s5, %s210
      %p212 = scmp.lt.s32.totalorder %s16, 1
      %s213 = scalar_select %p212, %s16, 1
      %s214 = smul.addr %s213, 4
      %s215 = scalar_lea.vmem %s0, %s214
      %p216 = scmp.lt.s32.totalorder %s16, 1
      %s217 = scalar_select %p216, %s16, 1
      %s218 = smul.addr %s217, 4
      %s219 = scalar_lea.vmem %s5, %s218
      %v221 = vld [vmem:[%s215] sm:$0xf]
      %v222 = vld [vmem:[%s1] sm:$0x1]
      %v223 = vld [vmem:[%s2] sm:$0x1]
      %vm224 = vcmask 1043456
      %v225 = vsel %vm224, %v221, 0.0
      %v226 = vrot.slane %v225, 4
      %v227 = vadd.f32 %v225, %v226
      %v228 = vrot.slane %v227, 2
      %v229 = vadd.f32 %v227, %v228
      %v230 = vrot.slane %v229, 1
      %v231 = vadd.f32 %v229, %v230
      %v232 = vmul.f32 %v221, %v221
      %v233 = vsel %vm224, %v232, 0.0
      %v234 = vrot.slane %v233, 4
      %v235 = vadd.f32 %v233, %v234
      %v236 = vrot.slane %v235, 2
      %v237 = vadd.f32 %v235, %v236
      %v238 = vrot.slane %v237, 1
      %v239 = vadd.f32 %v237, %v238
      %240 = vadd.xlane.f32.xlu0 %v231
      %v241 = vpop.xlane.xlu0 %240
      %v242 = vrcp.pop 512.0
      %v243 = vmul.f32 %v241, %v242
      %244 = vadd.xlane.f32.xlu0 %v239
      %v245 = vpop.xlane.xlu0 %244
      %v246 = vmul.f32 %v245, %v242
      %v247 = vmul.f32 %v243, %v243
      %v248 = vsub.f32 %v246, %v247
      %v249 = vmax.f32 %v248, 0.0
      %v250 = vsub.f32 %v221, %v243
      %v251 = vadd.f32 %v249, 1e-05
      %v252 = vrsqrt.pop %v251
      %v253 = vmul.f32 %v250, %v252
      %v255 = vlaneseq
      %v256 = vshrl.u32 %v255, 7
      %v257 = vsub.s32 0, %v256
      %v258 = vrot.slane %v222, %v257
      %v260 = vmul.f32 %v253, %v258
      %v262 = vlaneseq
      %v263 = vshrl.u32 %v262, 7
      %v264 = vsub.s32 0, %v263
      %v265 = vrot.slane %v223, %v264
      %v267 = vadd.f32 %v260, %v265
      %v268 = vpack.c.bf16 %v267, %v267
      %v269 = vld [vmem:[%s3] sm:$0xf]
      %v270 = vld [vmem:[%s3 + $0x4] sm:$0xf]
      %v271 = vld [vmem:[%s3 + $0x8] sm:$0xf]
      %v272 = vld [vmem:[%s3 + $0xc] sm:$0xf]
      %v273 = vld [vmem:[%s3 + $0x10] sm:$0xf]
      %v274 = vld [vmem:[%s3 + $0x14] sm:$0xf]
      %v275 = vld [vmem:[%s3 + $0x18] sm:$0xf]
      %v276 = vld [vmem:[%s3 + $0x1c] sm:$0xf]
      %v277 = vld [vmem:[%s3 + $0x20] sm:$0xf]
      %v278 = vld [vmem:[%s3 + $0x24] sm:$0xf]
      %v279 = vld [vmem:[%s3 + $0x28] sm:$0xf]
      %v280 = vld [vmem:[%s3 + $0x2c] sm:$0xf]
      %v281 = vld [vmem:[%s3 + $0x30] sm:$0xf]
      %v282 = vld [vmem:[%s3 + $0x34] sm:$0xf]
      %v283 = vld [vmem:[%s3 + $0x38] sm:$0xf]
      %v284 = vld [vmem:[%s3 + $0x3c] sm:$0xf]
      %v285 = vld [vmem:[%s4] sm:$0x1]
      %v287 = vlaneseq
      %v288 = vshrl.u32 %v287, 7
      %v289 = vsub.s32 0, %v288
      %v290 = vrot.slane %v285, %v289
      %v308 = vunpack.c.l.b16 %v269
      %v309 = vunpack.c.l.b16 %v270
      %v310 = vunpack.c.l.b16 %v271
      %v311 = vunpack.c.l.b16 %v272
      %v312 = vunpack.c.l.b16 %v273
      %v313 = vunpack.c.l.b16 %v274
      %v314 = vunpack.c.l.b16 %v275
      %v315 = vunpack.c.l.b16 %v276
      %v316 = vunpack.c.l.b16 %v277
      %v317 = vunpack.c.l.b16 %v278
      %v318 = vunpack.c.l.b16 %v279
      %v319 = vunpack.c.l.b16 %v280
      %v320 = vunpack.c.l.b16 %v281
      %v321 = vunpack.c.l.b16 %v282
      %v322 = vunpack.c.l.b16 %v283
      %v323 = vunpack.c.l.b16 %v284
      %v324 = vpack.c.b16 %v309, %v308
      %v325 = vpack.c.b16 %v311, %v310
      %v326 = vpack.c.b16 %v313, %v312
      %v327 = vpack.c.b16 %v315, %v314
      %v328 = vpack.c.b16 %v317, %v316
      %v329 = vpack.c.b16 %v319, %v318
      %v330 = vpack.c.b16 %v321, %v320
      %v331 = vpack.c.b16 %v323, %v322
      %340 = vmatprep.subr.bf16.mxu0 0
      %341 = vmatpush1.bf16.msra.mxu0 %v324
      %342 = vmatprep.subr.bf16.mxu0 0
      %343 = vmatpush1.bf16.msra.mxu0 %v325
      %344 = vmatprep.subr.bf16.mxu0 0
      %345 = vmatpush1.bf16.msra.mxu0 %v326
      %346 = vmatprep.subr.bf16.mxu0 0
      %347 = vmatpush1.bf16.msra.mxu0 %v327
      %348 = vmatprep.subr.bf16.mxu0 0
      %349 = vmatpush1.bf16.msra.mxu0 %v328
      %350 = vmatprep.subr.bf16.mxu0 0
      %351 = vmatpush1.bf16.msra.mxu0 %v329
      %352 = vmatprep.subr.bf16.mxu0 0
      %353 = vmatpush1.bf16.msra.mxu0 %v330
      %354 = vmatprep.subr.bf16.mxu0 0
      %355 = vmatpush1.bf16.msra.mxu0 %v331
      %356 = vmatprep.subr.bf16.mxu0 0
      %357 = vmatpush1.bf16.msra.mxu0 0
      %358 = vmatprep.subr.bf16.mxu0 0
      %359 = vmatpush1.bf16.msra.mxu0 0
      %360 = vmatprep.subr.bf16.mxu0 0
      %361 = vmatpush1.bf16.msra.mxu0 0
      %362 = vmatprep.subr.bf16.mxu0 0
      %363 = vmatpush1.bf16.msra.mxu0 0
      %364 = vmatprep.subr.bf16.mxu0 0
      %365 = vmatpush1.bf16.msra.mxu0 0
      %366 = vmatprep.subr.bf16.mxu0 0
      %367 = vmatpush1.bf16.msra.mxu0 0
      %368 = vmatprep.subr.bf16.mxu0 0
      %369 = vmatpush1.bf16.msra.mxu0 0
      %370 = vmatprep.subr.bf16.mxu0 0
      %371 = vmatpush1.bf16.msra.mxu0 0
      %372 = vmatprep.mubr.bf16.mxu0 0
      %373 = vmatmul.mubr.bf16.gmra.mrb[0].mxu0 %v268
      %v374 = vpop.f32.mrb[0].mxu0
      %v375 = vadd.f32 %v290, %v374
      %v376 = vpop.f32.mrb[0].mxu0
      %v377 = vpop.f32.mrb[0].mxu0
      %v378 = vpop.f32.mrb[0].mxu0
      %379 = vdwg.mxu0
      %vm380 = vcmask 519168
      %381 = vst.msk [vmem:[%s219] sm:$0xf] %vm380, %v375
      %p382 = scmp.lt.s32.totalorder %s16, 1
      %s383 = scalar_select %p382, %s16, 1
      %s384 = smul.addr %s383, 4
      %s385 = scalar_lea.vmem %s5, %s384
      // Predicated region
      $region41: #{encoder_forward.11} parent=39 // pred_check
        %p386 = pneg %p144
      $region42: #{encoder_forward.11} parent=39 // pred_check_branch
        %388 = sbr.rel (%p386) target = $region44
      $region43: #{encoder_forward.11} parent=39 // pred_region
        _
      $region44: #{encoder_forward.11} parent=39 // pred_fallthru
        _
    $region40: #{encoder_forward.11} parent=5 // pred_fallthru
      _
    %p389 = scmp.le.s32.totalorder 2, %s11
    // Predicated region
    $region45: #{encoder_forward.11} parent=5 // pred_check
      %p390 = pneg %p389
    $region46: #{encoder_forward.11} parent=5 // pred_check_branch
      %392 = sbr.rel (%p390) target = $region48
    $region47: #{encoder_forward.11} parent=5 // pred_region
      %s393 = ssub.s32 %s11, 2
      // Predicated region
      $region49: #{encoder_forward.11} parent=47 // pred_check
        %p394 = pneg %p150
      $region50: #{encoder_forward.11} parent=47 // pred_check_branch
        %396 = sbr.rel (%p394) target = $region52
      $region51: #{encoder_forward.11} parent=47 // pred_region
        %p397 = scmp.lt.s32.totalorder %s17, 1
        %s398 = scalar_select %p397, %s17, 1
        %s399 = smul.addr %s398, 4
        %s400 = scalar_lea.vmem %s5, %s399
      $region52: #{encoder_forward.11} parent=47 // pred_fallthru
        _
    $region48: #{encoder_forward.11} parent=5 // pred_fallthru
      _
  $region6: #{encoder_forward.11} parent=0 // loop_footer
    %s15 = sadd.s32 1, %s11
  $region7: #{encoder_forward.11} parent=0 // loop_footer_branch
    %10 = sbr.rel target = $region3
  $region8: #{encoder_forward.11} parent=0 // loop_exit
    _

// kernel: encoder_forward.12
$region0: #{encoder_forward.12}
  #allocation0 [shape = 'u32[]', space=smem, size = 0x4, offset = 0x4, fixed_abs, tag = 'smem constant byte address 0x4 - core index']
  #allocation1 [shape = 'u32[144,128]{1,0:T(1,128)}', space=vmem, size = 0x12000, scoped, tag = 'internal scratch']
  #allocation2 [shape = 'f32[10,16]{1,0:T(8,128)}', space=vmem, size = 0x2000, scoped, tag = 'scratch operand']
  %s0 = inlined_call_operand.vmem [shape: f32[2,4,64], index: 0, kind: input, shape index: {}, may-alias: {0,10}]
  %s1 = inlined_call_operand.vmem [shape: bf16[64,16], index: 1, kind: input, shape index: {}]
  %s2 = inlined_call_operand.vmem [shape: f32[1,16], index: 2, kind: input, shape index: {}]
  %s3 = inlined_call_operand.vmem [shape: bf16[9,16,16], index: 3, kind: input, shape index: {}]
  %s4 = inlined_call_operand.vmem [shape: f32[1,16], index: 4, kind: input, shape index: {}]
  %s5 = inlined_call_operand.vmem [shape: f32[1,16], index: 5, kind: input, shape index: {}]
  %s6 = inlined_call_operand.vmem [shape: f32[1,16], index: 6, kind: input, shape index: {}]
  %s7 = inlined_call_operand.vmem [shape: bf16[16,64], index: 7, kind: input, shape index: {}]
  %s8 = inlined_call_operand.vmem [shape: f32[1,64], index: 8, kind: input, shape index: {}]
  %s9 = inlined_call_operand.vmem [shape: f32[1,64], index: 9, kind: input, shape index: {}]
  %s10 = inlined_call_operand.vmem [shape: f32[2,4,64], index: 10, kind: output, shape index: {}, may-alias: {0,10}]
  %s11 = sld [smem:[#allocation0]]
  $region73: #{encoder_forward.12} parent=0
    _
  %s13 = ssub.s32 1, %s11
  %s14 = scalar_select 0, %s13, %s11
  loop: start=0, step=1, limit=4
  $region2: #{encoder_forward.12} parent=0 // loop_pre_header
    _
  $region3: #{encoder_forward.12} parent=0 // loop_header
    %s16 = sphi 0, %s20
    %p17 = scmp.ge.s32.totalorder %s16, 4
    %s26 = sphi 0, %s28
    %s29 = sphi 0, %s26
    %s30 = sphi 0, %s29
    %s46 = sphi 0, %s30
    %s50 = sphi 0, %s50
    %s52 = sphi 0, %s50
    %s53 = sphi 0, %s52
    %s67 = sphi 0, %s53
    %s71 = sphi 0, %s71
    %s73 = sphi 0, %s71
    %s74 = sphi 0, %s73
    %s88 = sphi 0, %s74
    %s92 = sphi 0, %s92
    %s94 = sphi 0, %s92
    %s95 = sphi 0, %s94
    %s109 = sphi 0, %s95
    %s113 = sphi 0, %s113
    %s115 = sphi 0, %s113
    %s116 = sphi 0, %s115
    %s130 = sphi 0, %s116
    %s134 = sphi 0, %s134
    %s136 = sphi 0, %s134
    %s137 = sphi 0, %s136
    %s151 = sphi 0, %s137
    %s155 = sphi 0, %s155
    %s157 = sphi 0, %s155
    %s158 = sphi 0, %s157
    %s172 = sphi 0, %s158
    %s176 = sphi 0, %s176
    %s178 = sphi 0, %s176
    %s179 = sphi 0, %s178
    %s193 = sphi 0, %s179
    %s197 = sphi 0, %s197
    %s199 = sphi 0, %s197
    %s200 = sphi 0, %s199
    %s214 = sphi 0, %s200
    %s218 = sphi 0, %s218
    %s220 = sphi 0, %s218
    %s221 = sphi 0, %s220
    %s235 = sphi 0, %s221
    %s241 = sphi 0, %s243
    %s244 = sphi 0, %s241
    %s245 = sphi 0, %s244
    %s261 = sphi 0, %s245
  $region4: #{encoder_forward.12} parent=0 // loop_header_branch
    %19 = sbr.rel (%p17) target = $region8
  $region5: #{encoder_forward.12} parent=0 // loop_body
    %s21 = ssub.s32 %s16, 1
    %s22 = ssub.s32 %s16, 2
    %s23 = sadd.s32 %s16, 1
    %s24 = ssub.s32 %s16, %s23
    %p25 = scmp.eq.s32.totalorder %s24, 0
    %s27 = sadd.s32 %s26, 1
    %s28 = scalar_select %p25, %s26, %s27
    %p31 = pneg %p25
    %p32 = scmp.eq.s32.totalorder %s16, 1
    %p33 = por %p31, %p32
    %p34 = scmp.ne.s32.totalorder %s26, %s29
    %p35 = scmp.eq.s32.totalorder %s16, 0
    %p36 = por %p34, %p35
    %p37 = scmp.ne.s32.totalorder %s26, %s29
    %p38 = scmp.eq.s32.totalorder %s21, 1
    %p39 = por %p37, %p38
    %p40 = scmp.ne.s32.totalorder %s29, %s30
    %p41 = scmp.eq.s32.totalorder %s21, 0
    %p42 = por %p40, %p41
    %p43 = scmp.ne.s32.totalorder %s29, %s30
    %p44 = scmp.eq.s32.totalorder %s22, 1
    %p45 = por %p43, %p44
    %p47 = scmp.ne.s32.totalorder %s30, %s46
    %p48 = scmp.eq.s32.totalorder %s22, 0
    %p49 = por %p47, %p48
    %s51 = sadd.s32 %s50, 1
    %p54 = scmp.eq.s32.totalorder %s16, 1
    %p55 = scmp.ne.s32.totalorder %s50, %s52
    %p56 = scmp.eq.s32.totalorder %s16, 0
    %p57 = por %p55, %p56
    %p58 = scmp.ne.s32.totalorder %s50, %s52
    %p59 = scmp.eq.s32.totalorder %s21, 1
    %p60 = por %p58, %p59
    %p61 = scmp.ne.s32.totalorder %s52, %s53
    %p62 = scmp.eq.s32.totalorder %s21, 0
    %p63 = por %p61, %p62
    %p64 = scmp.ne.s32.totalorder %s52, %s53
    %p65 = scmp.eq.s32.totalorder %s22, 1
    %p66 = por %p64, %p65
    %p68 = scmp.ne.s32.totalorder %s53, %s67
    %p69 = scmp.eq.s32.totalorder %s22, 0
    %p70 = por %p68, %p69
    %s72 = sadd.s32 %s71, 1
    %p75 = scmp.eq.s32.totalorder %s16, 1
    %p76 = scmp.ne.s32.totalorder %s71, %s73
    %p77 = scmp.eq.s32.totalorder %s16, 0
    %p78 = por %p76, %p77
    %p79 = scmp.ne.s32.totalorder %s71, %s73
    %p80 = scmp.eq.s32.totalorder %s21, 1
    %p81 = por %p79, %p80
    %p82 = scmp.ne.s32.totalorder %s73, %s74
    %p83 = scmp.eq.s32.totalorder %s21, 0
    %p84 = por %p82, %p83
    %p85 = scmp.ne.s32.totalorder %s73, %s74
    %p86 = scmp.eq.s32.totalorder %s22, 1
    %p87 = por %p85, %p86
    %p89 = scmp.ne.s32.totalorder %s74, %s88
    %p90 = scmp.eq.s32.totalorder %s22, 0
    %p91 = por %p89, %p90
    %s93 = sadd.s32 %s92, 1
    %p96 = scmp.eq.s32.totalorder %s16, 1
    %p97 = scmp.ne.s32.totalorder %s92, %s94
    %p98 = scmp.eq.s32.totalorder %s16, 0
    %p99 = por %p97, %p98
    %p100 = scmp.ne.s32.totalorder %s92, %s94
    %p101 = scmp.eq.s32.totalorder %s21, 1
    %p102 = por %p100, %p101
    %p103 = scmp.ne.s32.totalorder %s94, %s95
    %p104 = scmp.eq.s32.totalorder %s21, 0
    %p105 = por %p103, %p104
    %p106 = scmp.ne.s32.totalorder %s94, %s95
    %p107 = scmp.eq.s32.totalorder %s22, 1
    %p108 = por %p106, %p107
    %p110 = scmp.ne.s32.totalorder %s95, %s109
    %p111 = scmp.eq.s32.totalorder %s22, 0
    %p112 = por %p110, %p111
    %s114 = sadd.s32 %s113, 1
    %p117 = scmp.eq.s32.totalorder %s16, 1
    %p118 = scmp.ne.s32.totalorder %s113, %s115
    %p119 = scmp.eq.s32.totalorder %s16, 0
    %p120 = por %p118, %p119
    %p121 = scmp.ne.s32.totalorder %s113, %s115
    %p122 = scmp.eq.s32.totalorder %s21, 1
    %p123 = por %p121, %p122
    %p124 = scmp.ne.s32.totalorder %s115, %s116
    %p125 = scmp.eq.s32.totalorder %s21, 0
    %p126 = por %p124, %p125
    %p127 = scmp.ne.s32.totalorder %s115, %s116
    %p128 = scmp.eq.s32.totalorder %s22, 1
    %p129 = por %p127, %p128
    %p131 = scmp.ne.s32.totalorder %s116, %s130
    %p132 = scmp.eq.s32.totalorder %s22, 0
    %p133 = por %p131, %p132
    %s135 = sadd.s32 %s134, 1
    %p138 = scmp.eq.s32.totalorder %s16, 1
    %p139 = scmp.ne.s32.totalorder %s134, %s136
    %p140 = scmp.eq.s32.totalorder %s16, 0
    %p141 = por %p139, %p140
    %p142 = scmp.ne.s32.totalorder %s134, %s136
    %p143 = scmp.eq.s32.totalorder %s21, 1
    %p144 = por %p142, %p143
    %p145 = scmp.ne.s32.totalorder %s136, %s137
    %p146 = scmp.eq.s32.totalorder %s21, 0
    %p147 = por %p145, %p146
    %p148 = scmp.ne.s32.totalorder %s136, %s137
    %p149 = scmp.eq.s32.totalorder %s22, 1
    %p150 = por %p148, %p149
    %p152 = scmp.ne.s32.totalorder %s137, %s151
    %p153 = scmp.eq.s32.totalorder %s22, 0
    %p154 = por %p152, %p153
    %s156 = sadd.s32 %s155, 1
    %p159 = scmp.eq.s32.totalorder %s16, 1
    %p160 = scmp.ne.s32.totalorder %s155, %s157
    %p161 = scmp.eq.s32.totalorder %s16, 0
    %p162 = por %p160, %p161
    %p163 = scmp.ne.s32.totalorder %s155, %s157
    %p164 = scmp.eq.s32.totalorder %s21, 1
    %p165 = por %p163, %p164
    %p166 = scmp.ne.s32.totalorder %s157, %s158
    %p167 = scmp.eq.s32.totalorder %s21, 0
    %p168 = por %p166, %p167
    %p169 = scmp.ne.s32.totalorder %s157, %s158
    %p170 = scmp.eq.s32.totalorder %s22, 1
    %p171 = por %p169, %p170
    %p173 = scmp.ne.s32.totalorder %s158, %s172
    %p174 = scmp.eq.s32.totalorder %s22, 0
    %p175 = por %p173, %p174
    %s177 = sadd.s32 %s176, 1
    %p180 = scmp.eq.s32.totalorder %s16, 1
    %p181 = scmp.ne.s32.totalorder %s176, %s178
    %p182 = scmp.eq.s32.totalorder %s16, 0
    %p183 = por %p181, %p182
    %p184 = scmp.ne.s32.totalorder %s176, %s178
    %p185 = scmp.eq.s32.totalorder %s21, 1
    %p186 = por %p184, %p185
    %p187 = scmp.ne.s32.totalorder %s178, %s179
    %p188 = scmp.eq.s32.totalorder %s21, 0
    %p189 = por %p187, %p188
    %p190 = scmp.ne.s32.totalorder %s178, %s179
    %p191 = scmp.eq.s32.totalorder %s22, 1
    %p192 = por %p190, %p191
    %p194 = scmp.ne.s32.totalorder %s179, %s193
    %p195 = scmp.eq.s32.totalorder %s22, 0
    %p196 = por %p194, %p195
    %s198 = sadd.s32 %s197, 1
    %p201 = scmp.eq.s32.totalorder %s16, 1
    %p202 = scmp.ne.s32.totalorder %s197, %s199
    %p203 = scmp.eq.s32.totalorder %s16, 0
    %p204 = por %p202, %p203
    %p205 = scmp.ne.s32.totalorder %s197, %s199
    %p206 = scmp.eq.s32.totalorder %s21, 1
    %p207 = por %p205, %p206
    %p208 = scmp.ne.s32.totalorder %s199, %s200
    %p209 = scmp.eq.s32.totalorder %s21, 0
    %p210 = por %p208, %p209
    %p211 = scmp.ne.s32.totalorder %s199, %s200
    %p212 = scmp.eq.s32.totalorder %s22, 1
    %p213 = por %p211, %p212
    %p215 = scmp.ne.s32.totalorder %s200, %s214
    %p216 = scmp.eq.s32.totalorder %s22, 0
    %p217 = por %p215, %p216
    %s219 = sadd.s32 %s218, 1
    %p222 = scmp.eq.s32.totalorder %s16, 1
    %p223 = scmp.ne.s32.totalorder %s218, %s220
    %p224 = scmp.eq.s32.totalorder %s16, 0
    %p225 = por %p223, %p224
    %p226 = scmp.ne.s32.totalorder %s218, %s220
    %p227 = scmp.eq.s32.totalorder %s21, 1
    %p228 = por %p226, %p227
    %p229 = scmp.ne.s32.totalorder %s220, %s221
    %p230 = scmp.eq.s32.totalorder %s21, 0
    %p231 = por %p229, %p230
    %p232 = scmp.ne.s32.totalorder %s220, %s221
    %p233 = scmp.eq.s32.totalorder %s22, 1
    %p234 = por %p232, %p233
    %p236 = scmp.ne.s32.totalorder %s221, %s235
    %p237 = scmp.eq.s32.totalorder %s22, 0
    %p238 = por %p236, %p237
    %s239 = ssub.s32 %s16, %s23
    %p240 = scmp.eq.s32.totalorder %s239, 0
    %s242 = sadd.s32 %s241, 1
    %s243 = scalar_select %p240, %s241, %s242
    %p246 = pneg %p240
    %p247 = scmp.eq.s32.totalorder %s16, 1
    %p248 = por %p246, %p247
    %p249 = scmp.ne.s32.totalorder %s241, %s244
    %p250 = scmp.eq.s32.totalorder %s16, 0
    %p251 = por %p249, %p250
    %p252 = scmp.ne.s32.totalorder %s241, %s244
    %p253 = scmp.eq.s32.totalorder %s21, 1
    %p254 = por %p252, %p253
    %p255 = scmp.ne.s32.totalorder %s244, %s245
    %p256 = scmp.eq.s32.totalorder %s21, 0
    %p257 = por %p255, %p256
    %p258 = scmp.ne.s32.totalorder %s244, %s245
    %p259 = scmp.eq.s32.totalorder %s22, 1
    %p260 = por %p258, %p259
    %p262 = scmp.ne.s32.totalorder %s245, %s261
    %p263 = scmp.eq.s32.totalorder %s22, 0
    %p264 = por %p262, %p263
    %p265 = scmp.le.s32.totalorder 1, %s16
    %p266 = scmp.lt.s32.totalorder %s16, 3
    %p267 = pnand %p265, %p266
    %p268 = pneg %p267
    // Predicated region
    $region9: #{encoder_forward.12} parent=5 // pred_check
      _
    $region10: #{encoder_forward.12} parent=5 // pred_check_branch
      %270 = sbr.rel (%p267) target = $region12
    $region11: #{encoder_forward.12} parent=5 // pred_region
      %s271 = ssub.s32 %s16, 1
      // Predicated region
      $region13: #{encoder_forward.12} parent=11 // pred_check
        %p272 = pneg %p63
      $region14: #{encoder_forward.12} parent=11 // pred_check_branch
        %274 = sbr.rel (%p272) target = $region16
      $region15: #{encoder_forward.12} parent=11 // pred_region
        _
      $region16: #{encoder_forward.12} parent=11 // pred_fallthru
        _
      // Predicated region
      $region17: #{encoder_forward.12} parent=11 // pred_check
        %p275 = pneg %p84
      $region18: #{encoder_forward.12} parent=11 // pred_check_branch
        %277 = sbr.rel (%p275) target = $region20
      $region19: #{encoder_forward.12} parent=11 // pred_region
        _
      $region20: #{encoder_forward.12} parent=11 // pred_fallthru
        _
      // Predicated region
      $region21: #{encoder_forward.12} parent=11 // pred_check
        %p278 = pneg %p105
      $region22: #{encoder_forward.12} parent=11 // pred_check_branch
        %280 = sbr.rel (%p278) target = $region24
      $region23: #{encoder_forward.12} parent=11 // pred_region
        _
      $region24: #{encoder_forward.12} parent=11 // pred_fallthru
        _
      // Predicated region
      $region25: #{encoder_forward.12} parent=11 // pred_check
        %p281 = pneg %p126
      $region26: #{encoder_forward.12} parent=11 // pred_check_branch
        %283 = sbr.rel (%p281) target = $region28
      $region27: #{encoder_forward.12} parent=11 // pred_region
        _
      $region28: #{encoder_forward.12} parent=11 // pred_fallthru
        _
      // Predicated region
      $region29: #{encoder_forward.12} parent=11 // pred_check
        %p284 = pneg %p147
      $region30: #{encoder_forward.12} parent=11 // pred_check_branch
        %286 = sbr.rel (%p284) target = $region32
      $region31: #{encoder_forward.12} parent=11 // pred_region
        _
      $region32: #{encoder_forward.12} parent=11 // pred_fallthru
        _
      // Predicated region
      $region33: #{encoder_forward.12} parent=11 // pred_check
        %p287 = pneg %p168
      $region34: #{encoder_forward.12} parent=11 // pred_check_branch
        %289 = sbr.rel (%p287) target = $region36
      $region35: #{encoder_forward.12} parent=11 // pred_region
        _
      $region36: #{encoder_forward.12} parent=11 // pred_fallthru
        _
      // Predicated region
      $region37: #{encoder_forward.12} parent=11 // pred_check
        %p290 = pneg %p189
      $region38: #{encoder_forward.12} parent=11 // pred_check_branch
        %292 = sbr.rel (%p290) target = $region40
      $region39: #{encoder_forward.12} parent=11 // pred_region
        _
      $region40: #{encoder_forward.12} parent=11 // pred_fallthru
        _
      // Predicated region
      $region41: #{encoder_forward.12} parent=11 // pred_check
        %p293 = pneg %p210
      $region42: #{encoder_forward.12} parent=11 // pred_check_branch
        %295 = sbr.rel (%p293) target = $region44
      $region43: #{encoder_forward.12} parent=11 // pred_region
        _
      $region44: #{encoder_forward.12} parent=11 // pred_fallthru
        _
      // Predicated region
      $region45: #{encoder_forward.12} parent=11 // pred_check
        %p296 = pneg %p231
      $region46: #{encoder_forward.12} parent=11 // pred_check_branch
        %298 = sbr.rel (%p296) target = $region48
      $region47: #{encoder_forward.12} parent=11 // pred_region
        _
      $region48: #{encoder_forward.12} parent=11 // pred_fallthru
        _
    $region12: #{encoder_forward.12} parent=5 // pred_fallthru
      _
    %p299 = scmp.lt.s32.totalorder %s16, 2
    // Predicated region
    $region49: #{encoder_forward.12} parent=5 // pred_check
      %p300 = pneg %p299
    $region50: #{encoder_forward.12} parent=5 // pred_check_branch
      %302 = sbr.rel (%p300) target = $region52
    $region51: #{encoder_forward.12} parent=5 // pred_region
      // Predicated region
      $region53: #{encoder_forward.12} parent=51 // pred_check
        %p303 = pneg %p36
      $region54: #{encoder_forward.12} parent=51 // pred_check_branch
        %305 = sbr.rel (%p303) target = $region56
      $region55: #{encoder_forward.12} parent=51 // pred_region
        %p306 = scmp.lt.s32.totalorder %s16, 1
        %s307 = scalar_select %p306, %s16, 1
        %s308 = smul.addr %s307, 4
        %s309 = scalar_lea.vmem %s0, %s308
      $region56: #{encoder_forward.12} parent=51 // pred_fallthru
        _
    $region52: #{encoder_forward.12} parent=5 // pred_fallthru
      _
    %p310 = scmp.le.s32.totalorder 1, %s16
    %p311 = scmp.lt.s32.totalorder %s16, 3
    %p312 = pnand %p310, %p311
    %p313 = pneg %p312
    // Predicated region
    $region57: #{encoder_forward.12} parent=5 // pred_check
      _
    $region58: #{encoder_forward.12} parent=5 // pred_check_branch
      %315 = sbr.rel (%p312) target = $region60
    $region59: #{encoder_forward.12} parent=5 // pred_region
      %s316 = ssub.s32 %s16, 1
      %p317 = scmp.lt.s32.totalorder %s21, 1
      %s318 = scalar_select %p317, %s21, 1
      %s319 = smul.addr %s318, 4
      %s320 = scalar_lea.vmem %s0, %s319
      %p321 = pneg %p42
      %p322 = pneg %p39
      %p323 = pneg %p63
      %p324 = pneg %p60
      %p325 = pneg %p84
      %p326 = pneg %p81
      %p327 = pneg %p105
      %p328 = pneg %p102
      %p329 = pneg %p126
      %p330 = pneg %p123
      %p331 = pneg %p147
      %p332 = pneg %p144
      %p333 = pneg %p168
      %p334 = pneg %p165
      %p335 = pneg %p189
      %p336 = pneg %p186
      %p337 = pneg %p210
      %p338 = pneg %p207
      %p339 = pneg %p231
      %p340 = pneg %p228
      %p341 = pneg %p257
      %p342 = pneg %p254
      %p343 = scmp.lt.s32.totalorder %s21, 1
      %s344 = scalar_select %p343, %s21, 1
      %s345 = smul.addr %s344, 4
      %s346 = scalar_lea.vmem %s10, %s345
      %p347 = scmp.lt.s32.totalorder %s21, 1
      %s348 = scalar_select %p347, %s21, 1
      %s349 = smul.addr %s348, 4
      %s350 = scalar_lea.vmem %s0, %s349
      %p351 = scmp.lt.s32.totalorder %s21, 1
      %s352 = scalar_select %p351, %s21, 1
      %s353 = smul.addr %s352, 4
      %s354 = scalar_lea.vmem %s10, %s353
      %v356 = vld [vmem:[%s350] sm:$0xf]
      %v357 = vpack.c.bf16 %v356, %v356
      %v358 = vld [vmem:[%s1] sm:$0xf]
      %v359 = vld [vmem:[%s1 + $0x4] sm:$0xf]
      %v360 = vld [vmem:[%s1 + $0x8] sm:$0xf]
      %v361 = vld [vmem:[%s1 + $0xc] sm:$0xf]
      %v362 = vld [vmem:[%s1 + $0x10] sm:$0xf]
      %v363 = vld [vmem:[%s1 + $0x14] sm:$0xf]
      %v364 = vld [vmem:[%s1 + $0x18] sm:$0xf]
      %v365 = vld [vmem:[%s1 + $0x1c] sm:$0xf]
      %v366 = vld [vmem:[%s2] sm:$0x1]
      %v368 = vlaneseq
      %v369 = vshrl.u32 %v368, 7
      %v370 = vsub.s32 0, %v369
      %v371 = vrot.slane %v366, %v370
      %v381 = vunpack.c.l.b16 %v358
      %v382 = vunpack.c.l.b16 %v359
      %v383 = vunpack.c.l.b16 %v360
      %v384 = vunpack.c.l.b16 %v361
      %v385 = vunpack.c.l.b16 %v362
      %v386 = vunpack.c.l.b16 %v363
      %v387 = vunpack.c.l.b16 %v364
      %v388 = vunpack.c.l.b16 %v365
      %v389 = vpack.c.b16 %v382, %v381
      %v390 = vpack.c.b16 %v384, %v383
      %v391 = vpack.c.b16 %v386, %v385
      %v392 = vpack.c.b16 %v388, %v387
      %vm397 = vcmask 523264
      %v399 = vsel %vm397, %v357, 0
      %401 = vmatprep.subr.bf16.mxu0 0
      %402 = vmatpush1.bf16.msra.mxu0 %v389
      %403 = vmatprep.subr.bf16.mxu0 0
      %404 = vmatpush1.bf16.msra.mxu0 %v390
      %405 = vmatprep.subr.bf16.mxu0 0
      %406 = vmatpush1.bf16.msra.mxu0 %v391
      %407 = vmatprep.subr.bf16.mxu0 0
      %408 = vmatpush1.bf16.msra.mxu0 %v392
      %409 = vmatprep.subr.bf16.mxu0 0
      %410 = vmatpush1.bf16.msra.mxu0 0
      %411 = vmatprep.subr.bf16.mxu0 0
      %412 = vmatpush1.bf16.msra.mxu0 0
      %413 = vmatprep.subr.bf16.mxu0 0
      %414 = vmatpush1.bf16.msra.mxu0 0
      %415 = vmatprep.subr.bf16.mxu0 0
      %416 = vmatpush1.bf16.msra.mxu0 0
      %417 = vmatprep.subr.bf16.mxu0 0
      %418 = vmatpush1.bf16.msra.mxu0 0
      %419 = vmatprep.subr.bf16.mxu0 0
      %420 = vmatpush1.bf16.msra.mxu0 0
      %421 = vmatprep.subr.bf16.mxu0 0
      %422 = vmatpush1.bf16.msra.mxu0 0
      %423 = vmatprep.subr.bf16.mxu0 0
      %424 = vmatpush1.bf16.msra.mxu0 0
      %425 = vmatprep.subr.bf16.mxu0 0
      %426 = vmatpush1.bf16.msra.mxu0 0
      %427 = vmatprep.subr.bf16.mxu0 0
      %428 = vmatpush1.bf16.msra.mxu0 0
      %429 = vmatprep.subr.bf16.mxu0 0
      %430 = vmatpush1.bf16.msra.mxu0 0
      %431 = vmatprep.subr.bf16.mxu0 0
      %432 = vmatpush1.bf16.msra.mxu0 0
      %433 = vmatprep.mubr.bf16.mxu0 0
      %434 = vmatmul.mubr.bf16.gmra.mrb[0].mxu0 %v399
      %v435 = vpop.f32.mrb[0].mxu0
      %v436 = vadd.f32 %v371, %v435
      %v437 = vpop.f32.mrb[0].mxu0
      %v438 = vpop.f32.mrb[0].mxu0
      %v439 = vpop.f32.mrb[0].mxu0
      %440 = vdwg.mxu0
      %v441 = vld [vmem:[%s5] sm:$0x1]
      %v442 = vld [vmem:[%s6] sm:$0x1]
      %vm443 = vcmask 125952
      %v444 = vsel %vm443, %v436, 0.0
      %v445 = vrot.slane %v444, 4
      %v446 = vadd.f32 %v444, %v445
      %v447 = vrot.slane %v446, 2
      %v448 = vadd.f32 %v446, %v447
      %v449 = vrot.slane %v448, 1
      %v450 = vadd.f32 %v448, %v449
      %v451 = vmul.f32 %v436, %v436
      %v452 = vsel %vm443, %v451, 0.0
      %v453 = vrot.slane %v452, 4
      %v454 = vadd.f32 %v452, %v453
      %v455 = vrot.slane %v454, 2
      %v456 = vadd.f32 %v454, %v455
      %v457 = vrot.slane %v456, 1
      %v458 = vadd.f32 %v456, %v457
      %vm459 = vcmask 130048
      %v460 = vsel %vm459, %v450, 0.0
      %461 = vadd.xlane.f32.xlu0 %v460
      %v462 = vpop.xlane.xlu0 %461
      %v463 = vrcp.pop 64.0
      %v464 = vmul.f32 %v462, %v463
      %v465 = vsel %vm459, %v458, 0.0
      %466 = vadd.xlane.f32.xlu0 %v465
      %v467 = vpop.xlane.xlu0 %466
      %v468 = vmul.f32 %v467, %v463
      %v469 = vmul.f32 %v464, %v464
      %v470 = vsub.f32 %v468, %v469
      %v471 = vmax.f32 %v470, 0.0
      %v472 = vsub.f32 %v436, %v464
      %v473 = vadd.f32 %v471, 1e-05
      %v474 = vrsqrt.pop %v473
      %v475 = vmul.f32 %v472, %v474
      %v477 = vlaneseq
      %v478 = vshrl.u32 %v477, 7
      %v479 = vsub.s32 0, %v478
      %v480 = vrot.slane %v441, %v479
      %v482 = vmul.f32 %v475, %v480
      %v484 = vlaneseq
      %v485 = vshrl.u32 %v484, 7
      %v486 = vsub.s32 0, %v485
      %v487 = vrot.slane %v442, %v486
      %v489 = vadd.f32 %v482, %v487
      %v490 = vmul.f32 %v489, 0.5
      %v491 = vmul.f32 %v489, 0.70710677
      %v492 = verf.f32.pop %v491
      %v493 = vadd.f32 %v492, 1.0
      %v494 = vmul.f32 %v490, %v493
      %495 = vst.msk [vmem:[#allocation2] sm:$0xff] %vm459, 0.0
      %vm496 = vcmask 123904
      %497 = vst.msk [vmem:[#allocation2 + $0x8] sm:$0x3] %vm496, 0.0
      %498 = vst.msk [vmem:[#allocation2 + $0x3] sm:$0xf] %vm443, %v494
      %v499 = vlaneseq
      %v500 = vshrl.u32 %v499, 7
      %vm501 = vcmp.lt.s32.totalorder %v500, 0
      %v502 = vsub.s32 0, %v500
      %v503 = vsel %vm501, %v502, %v500
      %v504 = vshrl.u32 %v503, 1
      %v505 = vand.u32 %v503, 1
      %v506 = vsub.s32 0, %v505
      %v507 = vsel %vm501, %v506, %v505
      %vm508 = vcmp.ne.s32.totalorder %v507, 0
      %vm509 = vcmp.lt.s32.totalorder %v507, 0
      %vm510 = vmand %vm509, %vm508
      %v511 = vadd.s32 %v507, 2
      %v512 = vsel %vm510, %v511, %v507
      %vm513 = vcmp.ge.s32.totalorder %v512, 1
      %vm514 = vcmp.le.s32.totalorder %v512, 0
      %v515 = vld [vmem:[#allocation2] sm:$0xf]
      %v516 = vsel %vm513, 1, 0
      %vm517 = vcmp.eq.s32.totalorder %v516, 1
      %v518 = vsel %vm517, %v515, 0.0
      %v519 = vpack.c.bf16 %v518, %v518
      %v520 = vld [vmem:[%s3] sm:$0xf]
      %v521 = vld [vmem:[%s3 + $0x4] sm:$0xf]
      %v522 = vld [vmem:[#allocation2 + $0x1] sm:$0xf]
      %v523 = vpack.c.bf16 %v522, %v522
      %s524 = scalar_lea.vmem %s3, 8
      %v525 = vld [vmem:[%s524] sm:$0xf]
      %v526 = vld [vmem:[%s524 + $0x4] sm:$0xf]
      %v529 = vunpack.c.l.b16 %v525
      %v530 = vunpack.c.l.b16 %v526
      %v531 = vpack.c.b16 %v530, %v529
      %v534 = vsel %vm459, %v523, 0
      %536 = vmatprep.subr.bf16.mxu0 0
      %537 = vmatpush1.bf16.msra.mxu0 %v531
      %538 = vmatprep.subr.bf16.mxu0 0
      %539 = vmatpush1.bf16.msra.mxu0 0
      %540 = vmatprep.subr.bf16.mxu0 0
      %541 = vmatpush1.bf16.msra.mxu0 0
      %542 = vmatprep.subr.bf16.mxu0 0
      %543 = vmatpush1.bf16.msra.mxu0 0
      %544 = vmatprep.subr.bf16.mxu0 0
      %545 = vmatpush1.bf16.msra.mxu0 0
      %546 = vmatprep.subr.bf16.mxu0 0
      %547 = vmatpush1.bf16.msra.mxu0 0
      %548 = vmatprep.subr.bf16.mxu0 0
      %549 = vmatpush1.bf16.msra.mxu0 0
      %550 = vmatprep.subr.bf16.mxu0 0
      %551 = vmatpush1.bf16.msra.mxu0 0
      %552 = vmatprep.subr.bf16.mxu0 0
      %553 = vmatpush1.bf16.msra.mxu0 0
      %554 = vmatprep.subr.bf16.mxu0 0
      %555 = vmatpush1.bf16.msra.mxu0 0
      %556 = vmatprep.subr.bf16.mxu0 0
      %557 = vmatpush1.bf16.msra.mxu0 0
      %558 = vmatprep.subr.bf16.mxu0 0
      %559 = vmatpush1.bf16.msra.mxu0 0
      %560 = vmatprep.subr.bf16.mxu0 0
      %561 = vmatpush1.bf16.msra.mxu0 0
      %562 = vmatprep.subr.bf16.mxu0 0
      %563 = vmatpush1.bf16.msra.mxu0 0
      %564 = vmatprep.subr.bf16.mxu0 0
      %565 = vmatpush1.bf16.msra.mxu0 0
      %566 = vmatprep.subr.bf16.mxu0 0
      %567 = vmatpush1.bf16.msra.mxu0 0
      %568 = vmatprep.mubr.bf16.mxu0 0
      %569 = vmatmul.mubr.bf16.gmra.mrb[0].mxu0 %v534
      %v570 = vpop.f32.mrb[0].mxu0
      %v571 = vadd.f32 0.0, %v570
      %v572 = vpop.f32.mrb[0].mxu0
      %v573 = vpop.f32.mrb[0].mxu0
      %v574 = vpop.f32.mrb[0].mxu0
      %575 = vdwg.mxu0
      %v578 = vunpack.c.l.b16 %v520
      %v579 = vunpack.c.l.b16 %v521
      %v580 = vpack.c.b16 %v579, %v578
      %v583 = vsel %vm459, %v519, 0
      %585 = vmatprep.subr.bf16.mxu0 0
      %586 = vmatpush1.bf16.msra.mxu0 %v580
      %587 = vmatprep.subr.bf16.mxu0 0
      %588 = vmatpush1.bf16.msra.mxu0 0
      %589 = vmatprep.subr.bf16.mxu0 0
      %590 = vmatpush1.bf16.msra.mxu0 0
      %591 = vmatprep.subr.bf16.mxu0 0
      %592 = vmatpush1.bf16.msra.mxu0 0
      %593 = vmatprep.subr.bf16.mxu0 0
      %594 = vmatpush1.bf16.msra.mxu0 0
      %595 = vmatprep.subr.bf16.mxu0 0
      %596 = vmatpush1.bf16.msra.mxu0 0
      %597 = vmatprep.subr.bf16.mxu0 0
      %598 = vmatpush1.bf16.msra.mxu0 0
      %599 = vmatprep.subr.bf16.mxu0 0
      %600 = vmatpush1.bf16.msra.mxu0 0
      %601 = vmatprep.subr.bf16.mxu0 0
      %602 = vmatpush1.bf16.msra.mxu0 0
      %603 = vmatprep.subr.bf16.mxu0 0
      %604 = vmatpush1.bf16.msra.mxu0 0
      %605 = vmatprep.subr.bf16.mxu0 0
      %606 = vmatpush1.bf16.msra.mxu0 0
      %607 = vmatprep.subr.bf16.mxu0 0
      %608 = vmatpush1.bf16.msra.mxu0 0
      %609 = vmatprep.subr.bf16.mxu0 0
      %610 = vmatpush1.bf16.msra.mxu0 0
      %611 = vmatprep.subr.bf16.mxu0 0
      %612 = vmatpush1.bf16.msra.mxu0 0
      %613 = vmatprep.subr.bf16.mxu0 0
      %614 = vmatpush1.bf16.msra.mxu0 0
      %615 = vmatprep.subr.bf16.mxu0 0
      %616 = vmatpush1.bf16.msra.mxu0 0
      %617 = vmatprep.mubr.bf16.mxu0 0
      %618 = vmatmul.mubr.bf16.gmra.mrb[0].mxu0 %v583
      %v619 = vpop.f32.mrb[0].mxu0
      %v620 = vadd.f32 %v571, %v619
      %v621 = vpop.f32.mrb[0].mxu0
      %v622 = vpop.f32.mrb[0].mxu0
      %v623 = vpop.f32.mrb[0].mxu0
      %624 = vdwg.mxu0
      %v625 = vld [vmem:[#allocation2 + $0x2] sm:$0xf]
      %v626 = vsel %vm514, 1, 0
      %vm627 = vcmp.eq.s32.totalorder %v626, 1
      %v628 = vsel %vm627, %v625, 0.0
      %v629 = vpack.c.bf16 %v628, %v628
      %s630 = scalar_lea.vmem %s3, 16
      %v631 = vld [vmem:[%s630] sm:$0xf]
      %v632 = vld [vmem:[%s630 + $0x4] sm:$0xf]
      %v635 = vunpack.c.l.b16 %v631
      %v636 = vunpack.c.l.b16 %v632
      %v637 = vpack.c.b16 %v636, %v635
      %v640 = vsel %vm459, %v629, 0
      %642 = vmatprep.subr.bf16.mxu0 0
      %643 = vmatpush1.bf16.msra.mxu0 %v637
      %644 = vmatprep.subr.bf16.mxu0 0
      %645 = vmatpush1.bf16.msra.mxu0 0
      %646 = vmatprep.subr.bf16.mxu0 0
      %647 = vmatpush1.bf16.msra.mxu0 0
      %648 = vmatprep.subr.bf16.mxu0 0
      %649 = vmatpush1.bf16.msra.mxu0 0
      %650 = vmatprep.subr.bf16.mxu0 0
      %651 = vmatpush1.bf16.msra.mxu0 0
      %652 = vmatprep.subr.bf16.mxu0 0
      %653 = vmatpush1.bf16.msra.mxu0 0
      %654 = vmatprep.subr.bf16.mxu0 0
      %655 = vmatpush1.bf16.msra.mxu0 0
      %656 = vmatprep.subr.bf16.mxu0 0
      %657 = vmatpush1.bf16.msra.mxu0 0
      %658 = vmatprep.subr.bf16.mxu0 0
      %659 = vmatpush1.bf16.msra.mxu0 0
      %660 = vmatprep.subr.bf16.mxu0 0
      %661 = vmatpush1.bf16.msra.mxu0 0
      %662 = vmatprep.subr.bf16.mxu0 0
      %663 = vmatpush1.bf16.msra.mxu0 0
      %664 = vmatprep.subr.bf16.mxu0 0
      %665 = vmatpush1.bf16.msra.mxu0 0
      %666 = vmatprep.subr.bf16.mxu0 0
      %667 = vmatpush1.bf16.msra.mxu0 0
      %668 = vmatprep.subr.bf16.mxu0 0
      %669 = vmatpush1.bf16.msra.mxu0 0
      %670 = vmatprep.subr.bf16.mxu0 0
      %671 = vmatpush1.bf16.msra.mxu0 0
      %672 = vmatprep.subr.bf16.mxu0 0
      %673 = vmatpush1.bf16.msra.mxu0 0
      %674 = vmatprep.mubr.bf16.mxu0 0
      %675 = vmatmul.mubr.bf16.gmra.mrb[0].mxu0 %v640
      %v676 = vpop.f32.mrb[0].mxu0
      %v677 = vadd.f32 0.0, %v676
      %v678 = vpop.f32.mrb[0].mxu0
      %v679 = vpop.f32.mrb[0].mxu0
      %v680 = vpop.f32.mrb[0].mxu0
      %681 = vdwg.mxu0
      %v682 = vadd.f32 %v620, %v677
      %v683 = vsel %vm517, %v625, 0.0
      %v684 = vpack.c.bf16 %v683, %v683
      %s685 = scalar_lea.vmem %s3, 24
      %v686 = vld [vmem:[%s685] sm:$0xf]
      %v687 = vld [vmem:[%s685 + $0x4] sm:$0xf]
      %v690 = vunpack.c.l.b16 %v686
      %v691 = vunpack.c.l.b16 %v687
      %v692 = vpack.c.b16 %v691, %v690
      %v695 = vsel %vm459, %v684, 0
      %697 = vmatprep.subr.bf16.mxu0 0
      %698 = vmatpush1.bf16.msra.mxu0 %v692
      %699 = vmatprep.subr.bf16.mxu0 0
      %700 = vmatpush1.bf16.msra.mxu0 0
      %701 = vmatprep.subr.bf16.mxu0 0
      %702 = vmatpush1.bf16.msra.mxu0 0
      %703 = vmatprep.subr.bf16.mxu0 0
      %704 = vmatpush1.bf16.msra.mxu0 0
      %705 = vmatprep.subr.bf16.mxu0 0
      %706 = vmatpush1.bf16.msra.mxu0 0
      %707 = vmatprep.subr.bf16.mxu0 0
      %708 = vmatpush1.bf16.msra.mxu0 0
      %709 = vmatprep.subr.bf16.mxu0 0
      %710 = vmatpush1.bf16.msra.mxu0 0
      %711 = vmatprep.subr.bf16.mxu0 0
      %712 = vmatpush1.bf16.msra.mxu0 0
      %713 = vmatprep.subr.bf16.mxu0 0
      %714 = vmatpush1.bf16.msra.mxu0 0
      %715 = vmatprep.subr.bf16.mxu0 0
      %716 = vmatpush1.bf16.msra.mxu0 0
      %717 = vmatprep.subr.bf16.mxu0 0
      %718 = vmatpush1.bf16.msra.mxu0 0
      %719 = vmatprep.subr.bf16.mxu0 0
      %720 = vmatpush1.bf16.msra.mxu0 0
      %721 = vmatprep.subr.bf16.mxu0 0
      %722 = vmatpush1.bf16.msra.mxu0 0
      %723 = vmatprep.subr.bf16.mxu0 0
      %724 = vmatpush1.bf16.msra.mxu0 0
      %725 = vmatprep.subr.bf16.mxu0 0
      %726 = vmatpush1.bf16.msra.mxu0 0
      %727 = vmatprep.subr.bf16.mxu0 0
      %728 = vmatpush1.bf16.msra.mxu0 0
      %729 = vmatprep.mubr.bf16.mxu0 0
      %730 = vmatmul.mubr.bf16.gmra.mrb[0].mxu0 %v695
      %v731 = vpop.f32.mrb[0].mxu0
      %v732 = vadd.f32 0.0, %v731
      %v733 = vpop.f32.mrb[0].mxu0
      %v734 = vpop.f32.mrb[0].mxu0
      %v735 = vpop.f32.mrb[0].mxu0
      %736 = vdwg.mxu0
      %v737 = vadd.f32 %v682, %v732
      %v738 = vld [vmem:[#allocation2 + $0x3] sm:$0xf]
      %v739 = vpack.c.bf16 %v738, %v738
      %s740 = scalar_lea.vmem %s3, 32
      %v741 = vld [vmem:[%s740] sm:$0xf]
      %v742 = vld [vmem:[%s740 + $0x4] sm:$0xf]
      %v745 = vunpack.c.l.b16 %v741
      %v746 = vunpack.c.l.b16 %v742
      %v747 = vpack.c.b16 %v746, %v745
      %v750 = vsel %vm459, %v739, 0
      %752 = vmatprep.subr.bf16.mxu0 0
      %753 = vmatpush1.bf16.msra.mxu0 %v747
      %754 = vmatprep.subr.bf16.mxu0 0
      %755 = vmatpush1.bf16.msra.mxu0 0
      %756 = vmatprep.subr.bf16.mxu0 0
      %757 = vmatpush1.bf16.msra.mxu0 0
      %758 = vmatprep.subr.bf16.mxu0 0
      %759 = vmatpush1.bf16.msra.mxu0 0
      %760 = vmatprep.subr.bf16.mxu0 0
      %761 = vmatpush1.bf16.msra.mxu0 0
      %762 = vmatprep.subr.bf16.mxu0 0
      %763 = vmatpush1.bf16.msra.mxu0 0
      %764 = vmatprep.subr.bf16.mxu0 0
      %765 = vmatpush1.bf16.msra.mxu0 0
      %766 = vmatprep.subr.bf16.mxu0 0
      %767 = vmatpush1.bf16.msra.mxu0 0
      %768 = vmatprep.subr.bf16.mxu0 0
      %769 = vmatpush1.bf16.msra.mxu0 0
      %770 = vmatprep.subr.bf16.mxu0 0
      %771 = vmatpush1.bf16.msra.mxu0 0
      %772 = vmatprep.subr.bf16.mxu0 0
      %773 = vmatpush1.bf16.msra.mxu0 0
      %774 = vmatprep.subr.bf16.mxu0 0
      %775 = vmatpush1.bf16.msra.mxu0 0
      %776 = vmatprep.subr.bf16.mxu0 0
      %777 = vmatpush1.bf16.msra.mxu0 0
      %778 = vmatprep.subr.bf16.mxu0 0
      %779 = vmatpush1.bf16.msra.mxu0 0
      %780 = vmatprep.subr.bf16.mxu0 0
      %781 = vmatpush1.bf16.msra.mxu0 0
      %782 = vmatprep.subr.bf16.mxu0 0
      %783 = vmatpush1.bf16.msra.mxu0 0
      %784 = vmatprep.mubr.bf16.mxu0 0
      %785 = vmatmul.mubr.bf16.gmra.mrb[0].mxu0 %v750
      %v786 = vpop.f32.mrb[0].mxu0
      %v787 = vadd.f32 0.0, %v786
      %v788 = vpop.f32.mrb[0].mxu0
      %v789 = vpop.f32.mrb[0].mxu0
      %v790 = vpop.f32.mrb[0].mxu0
      %791 = vdwg.mxu0
      %v792 = vadd.f32 %v737, %v787
      %v793 = vld [vmem:[#allocation2 + $0x4] sm:$0xf]
      %v794 = vsel %vm627, %v793, 0.0
      %v795 = vpack.c.bf16 %v794, %v794
      %s796 = scalar_lea.vmem %s3, 40
      %v797 = vld [vmem:[%s796] sm:$0xf]
      %v798 = vld [vmem:[%s796 + $0x4] sm:$0xf]
      %v801 = vunpack.c.l.b16 %v797
      %v802 = vunpack.c.l.b16 %v798
      %v803 = vpack.c.b16 %v802, %v801
      %v806 = vsel %vm459, %v795, 0
      %808 = vmatprep.subr.bf16.mxu0 0
      %809 = vmatpush1.bf16.msra.mxu0 %v803
      %810 = vmatprep.subr.bf16.mxu0 0
      %811 = vmatpush1.bf16.msra.mxu0 0
      %812 = vmatprep.subr.bf16.mxu0 0
      %813 = vmatpush1.bf16.msra.mxu0 0
      %814 = vmatprep.subr.bf16.mxu0 0
      %815 = vmatpush1.bf16.msra.mxu0 0
      %816 = vmatprep.subr.bf16.mxu0 0
      %817 = vmatpush1.bf16.msra.mxu0 0
      %818 = vmatprep.subr.bf16.mxu0 0
      %819 = vmatpush1.bf16.msra.mxu0 0
      %820 = vmatprep.subr.bf16.mxu0 0
      %821 = vmatpush1.bf16.msra.mxu0 0
      %822 = vmatprep.subr.bf16.mxu0 0
      %823 = vmatpush1.bf16.msra.mxu0 0
      %824 = vmatprep.subr.bf16.mxu0 0
      %825 = vmatpush1.bf16.msra.mxu0 0
      %826 = vmatprep.subr.bf16.mxu0 0
      %827 = vmatpush1.bf16.msra.mxu0 0
      %828 = vmatprep.subr.bf16.mxu0 0
      %829 = vmatpush1.bf16.msra.mxu0 0
      %830 = vmatprep.subr.bf16.mxu0 0
      %831 = vmatpush1.bf16.msra.mxu0 0
      %832 = vmatprep.subr.bf16.mxu0 0
      %833 = vmatpush1.bf16.msra.mxu0 0
      %834 = vmatprep.subr.bf16.mxu0 0
      %835 = vmatpush1.bf16.msra.mxu0 0
      %836 = vmatprep.subr.bf16.mxu0 0
      %837 = vmatpush1.bf16.msra.mxu0 0
      %838 = vmatprep.subr.bf16.mxu0 0
      %839 = vmatpush1.bf16.msra.mxu0 0
      %840 = vmatprep.mubr.bf16.mxu0 0
      %841 = vmatmul.mubr.bf16.gmra.mrb[0].mxu0 %v806
      %v842 = vpop.f32.mrb[0].mxu0
      %v843 = vadd.f32 0.0, %v842
      %v844 = vpop.f32.mrb[0].mxu0
      %v845 = vpop.f32.mrb[0].mxu0
      %v846 = vpop.f32.mrb[0].mxu0
      %847 = vdwg.mxu0
      %v848 = vadd.f32 %v792, %v843
      %v849 = vsel %vm517, %v793, 0.0
      %v850 = vpack.c.bf16 %v849, %v849
      %s851 = scalar_lea.vmem %s3, 48
      %v852 = vld [vmem:[%s851] sm:$0xf]
      %v853 = vld [vmem:[%s851 + $0x4] sm:$0xf]
      %v856 = vunpack.c.l.b16 %v852
      %v857 = vunpack.c.l.b16 %v853
      %v858 = vpack.c.b16 %v857, %v856
      %v861 = vsel %vm459, %v850, 0
      %863 = vmatprep.subr.bf16.mxu0 0
      %864 = vmatpush1.bf16.msra.mxu0 %v858
      %865 = vmatprep.subr.bf16.mxu0 0
      %866 = vmatpush1.bf16.msra.mxu0 0
      %867 = vmatprep.subr.bf16.mxu0 0
      %868 = vmatpush1.bf16.msra.mxu0 0
      %869 = vmatprep.subr.bf16.mxu0 0
      %870 = vmatpush1.bf16.msra.mxu0 0
      %871 = vmatprep.subr.bf16.mxu0 0
      %872 = vmatpush1.bf16.msra.mxu0 0
      %873 = vmatprep.subr.bf16.mxu0 0
      %874 = vmatpush1.bf16.msra.mxu0 0
      %875 = vmatprep.subr.bf16.mxu0 0
      %876 = vmatpush1.bf16.msra.mxu0 0
      %877 = vmatprep.subr.bf16.mxu0 0
      %878 = vmatpush1.bf16.msra.mxu0 0
      %879 = vmatprep.subr.bf16.mxu0 0
      %880 = vmatpush1.bf16.msra.mxu0 0
      %881 = vmatprep.subr.bf16.mxu0 0
      %882 = vmatpush1.bf16.msra.mxu0 0
      %883 = vmatprep.subr.bf16.mxu0 0
      %884 = vmatpush1.bf16.msra.mxu0 0
      %885 = vmatprep.subr.bf16.mxu0 0
      %886 = vmatpush1.bf16.msra.mxu0 0
      %887 = vmatprep.subr.bf16.mxu0 0
      %888 = vmatpush1.bf16.msra.mxu0 0
      %889 = vmatprep.subr.bf16.mxu0 0
      %890 = vmatpush1.bf16.msra.mxu0 0
      %891 = vmatprep.subr.bf16.mxu0 0
      %892 = vmatpush1.bf16.msra.mxu0 0
      %893 = vmatprep.subr.bf16.mxu0 0
      %894 = vmatpush1.bf16.msra.mxu0 0
      %895 = vmatprep.mubr.bf16.mxu0 0
      %896 = vmatmul.mubr.bf16.gmra.mrb[0].mxu0 %v861
      %v897 = vpop.f32.mrb[0].mxu0
      %v898 = vadd.f32 0.0, %v897
      %v899 = vpop.f32.mrb[0].mxu0
      %v900 = vpop.f32.mrb[0].mxu0
      %v901 = vpop.f32.mrb[0].mxu0
      %902 = vdwg.mxu0
      %v903 = vadd.f32 %v848, %v898
      %v904 = vld [vmem:[#allocation2 + $0x5] sm:$0xf]
      %v905 = vpack.c.bf16 %v904, %v904
      %s906 = scalar_lea.vmem %s3, 56
      %v907 = vld [vmem:[%s906] sm:$0xf]
      %v908 = vld [vmem:[%s906 + $0x4] sm:$0xf]
      %v911 = vunpack.c.l.b16 %v907
      %v912 = vunpack.c.l.b16 %v908
      %v913 = vpack.c.b16 %v912, %v911
      %v916 = vsel %vm459, %v905, 0
      %918 = vmatprep.subr.bf16.mxu0 0
      %919 = vmatpush1.bf16.msra.mxu0 %v913
      %920 = vmatprep.subr.bf16.mxu0 0
      %921 = vmatpush1.bf16.msra.mxu0 0
      %922 = vmatprep.subr.bf16.mxu0 0
      %923 = vmatpush1.bf16.msra.mxu0 0
      %924 = vmatprep.subr.bf16.mxu0 0
      %925 = vmatpush1.bf16.msra.mxu0 0
      %926 = vmatprep.subr.bf16.mxu0 0
      %927 = vmatpush1.bf16.msra.mxu0 0
      %928 = vmatprep.subr.bf16.mxu0 0
      %929 = vmatpush1.bf16.msra.mxu0 0
      %930 = vmatprep.subr.bf16.mxu0 0
      %931 = vmatpush1.bf16.msra.mxu0 0
      %932 = vmatprep.subr.bf16.mxu0 0
      %933 = vmatpush1.bf16.msra.mxu0 0
      %934 = vmatprep.subr.bf16.mxu0 0
      %935 = vmatpush1.bf16.msra.mxu0 0
      %936 = vmatprep.subr.bf16.mxu0 0
      %937 = vmatpush1.bf16.msra.mxu0 0
      %938 = vmatprep.subr.bf16.mxu0 0
      %939 = vmatpush1.bf16.msra.mxu0 0
      %940 = vmatprep.subr.bf16.mxu0 0
      %941 = vmatpush1.bf16.msra.mxu0 0
      %942 = vmatprep.subr.bf16.mxu0 0
      %943 = vmatpush1.bf16.msra.mxu0 0
      %944 = vmatprep.subr.bf16.mxu0 0
      %945 = vmatpush1.bf16.msra.mxu0 0
      %946 = vmatprep.subr.bf16.mxu0 0
      %947 = vmatpush1.bf16.msra.mxu0 0
      %948 = vmatprep.subr.bf16.mxu0 0
      %949 = vmatpush1.bf16.msra.mxu0 0
      %950 = vmatprep.mubr.bf16.mxu0 0
      %951 = vmatmul.mubr.bf16.gmra.mrb[0].mxu0 %v916
      %v952 = vpop.f32.mrb[0].mxu0
      %v953 = vadd.f32 0.0, %v952
      %v954 = vpop.f32.mrb[0].mxu0
      %v955 = vpop.f32.mrb[0].mxu0
      %v956 = vpop.f32.mrb[0].mxu0
      %957 = vdwg.mxu0
      %v958 = vadd.f32 %v903, %v953
      %v959 = vld [vmem:[#allocation2 + $0x6] sm:$0xf]
      %v960 = vsel %vm627, %v959, 0.0
      %v961 = vpack.c.bf16 %v960, %v960
      %s962 = scalar_lea.vmem %s3, 64
      %v963 = vld [vmem:[%s962] sm:$0xf]
      %v964 = vld [vmem:[%s962 + $0x4] sm:$0xf]
      %v967 = vunpack.c.l.b16 %v963
      %v968 = vunpack.c.l.b16 %v964
      %v969 = vpack.c.b16 %v968, %v967
      %v972 = vsel %vm459, %v961, 0
      %974 = vmatprep.subr.bf16.mxu0 0
      %975 = vmatpush1.bf16.msra.mxu0 %v969
      %976 = vmatprep.subr.bf16.mxu0 0
      %977 = vmatpush1.bf16.msra.mxu0 0
      %978 = vmatprep.subr.bf16.mxu0 0
      %979 = vmatpush1.bf16.msra.mxu0 0
      %980 = vmatprep.subr.bf16.mxu0 0
      %981 = vmatpush1.bf16.msra.mxu0 0
      %982 = vmatprep.subr.bf16.mxu0 0
      %983 = vmatpush1.bf16.msra.mxu0 0
      %984 = vmatprep.subr.bf16.mxu0 0
      %985 = vmatpush1.bf16.msra.mxu0 0
      %986 = vmatprep.subr.bf16.mxu0 0
      %987 = vmatpush1.bf16.msra.mxu0 0
      %988 = vmatprep.subr.bf16.mxu0 0
      %989 = vmatpush1.bf16.msra.mxu0 0
      %990 = vmatprep.subr.bf16.mxu0 0
      %991 = vmatpush1.bf16.msra.mxu0 0
      %992 = vmatprep.subr.bf16.mxu0 0
      %993 = vmatpush1.bf16.msra.mxu0 0
      %994 = vmatprep.subr.bf16.mxu0 0
      %995 = vmatpush1.bf16.msra.mxu0 0
      %996 = vmatprep.subr.bf16.mxu0 0
      %997 = vmatpush1.bf16.msra.mxu0 0
      %998 = vmatprep.subr.bf16.mxu0 0
      %999 = vmatpush1.bf16.msra.mxu0 0
      %1000 = vmatprep.subr.bf16.mxu0 0
      %1001 = vmatpush1.bf16.msra.mxu0 0
      %1002 = vmatprep.subr.bf16.mxu0 0
      %1003 = vmatpush1.bf16.msra.mxu0 0
      %1004 = vmatprep.subr.bf16.mxu0 0
      %1005 = vmatpush1.bf16.msra.mxu0 0
      %1006 = vmatprep.mubr.bf16.mxu0 0
      %1007 = vmatmul.mubr.bf16.gmra.mrb[0].mxu0 %v972
      %v1008 = vpop.f32.mrb[0].mxu0
      %v1009 = vadd.f32 0.0, %v1008
      %v1010 = vpop.f32.mrb[0].mxu0
      %v1011 = vpop.f32.mrb[0].mxu0
      %v1012 = vpop.f32.mrb[0].mxu0
      %1013 = vdwg.mxu0
      %v1014 = vadd.f32 %v958, %v1009
      %v1015 = vld [vmem:[%s4] sm:$0x1]
      %v1017 = vlaneseq
      %v1018 = vshrl.u32 %v1017, 7
      %v1019 = vsub.s32 0, %v1018
      %v1020 = vrot.slane %v1015, %v1019
      %v1022 = vadd.f32 %v1014, %v1020
      %v1023 = vld [vmem:[%s5] sm:$0x1]
      %v1024 = vld [vmem:[%s6] sm:$0x1]
      %v1025 = vsel %vm443, %v1022, 0.0
      %v1026 = vrot.slane %v1025, 4
      %v1027 = vadd.f32 %v1025, %v1026
      %v1028 = vrot.slane %v1027, 2
      %v1029 = vadd.f32 %v1027, %v1028
      %v1030 = vrot.slane %v1029, 1
      %v1031 = vadd.f32 %v1029, %v1030
      %v1032 = vmul.f32 %v1022, %v1022
      %v1033 = vsel %vm443, %v1032, 0.0
      %v1034 = vrot.slane %v1033, 4
      %v1035 = vadd.f32 %v1033, %v1034
      %v1036 = vrot.slane %v1035, 2
      %v1037 = vadd.f32 %v1035, %v1036
      %v1038 = vrot.slane %v1037, 1
      %v1039 = vadd.f32 %v1037, %v1038
      %v1040 = vsel %vm459, %v1031, 0.0
      %1041 = vadd.xlane.f32.xlu0 %v1040
      %v1042 = vpop.xlane.xlu0 %1041
      %v1043 = vmul.f32 %v1042, %v463
      %v1044 = vsel %vm459, %v1039, 0.0
      %1045 = vadd.xlane.f32.xlu0 %v1044
      %v1046 = vpop.xlane.xlu0 %1045
      %v1047 = vmul.f32 %v1046, %v463
      %v1048 = vmul.f32 %v1043, %v1043
      %v1049 = vsub.f32 %v1047, %v1048
      %v1050 = vmax.f32 %v1049, 0.0
      %v1051 = vsub.f32 %v1022, %v1043
      %v1052 = vadd.f32 %v1050, 1e-05
      %v1053 = vrsqrt.pop %v1052
      %v1054 = vmul.f32 %v1051, %v1053
      %v1056 = vlaneseq
      %v1057 = vshrl.u32 %v1056, 7
      %v1058 = vsub.s32 0, %v1057
      %v1059 = vrot.slane %v1023, %v1058
      %v1061 = vmul.f32 %v1054, %v1059
      %v1063 = vlaneseq
      %v1064 = vshrl.u32 %v1063, 7
      %v1065 = vsub.s32 0, %v1064
      %v1066 = vrot.slane %v1024, %v1065
      %v1068 = vadd.f32 %v1061, %v1066
      %v1069 = vmul.f32 %v1068, 0.5
      %v1070 = vmul.f32 %v1068, 0.70710677
      %v1071 = verf.f32.pop %v1070
      %v1072 = vadd.f32 %v1071, 1.0
      %v1073 = vmul.f32 %v1069, %v1072
      %v1074 = vpack.c.bf16 %v1073, %v1073
      %v1075 = vld [vmem:[%s7] sm:$0xf]
      %v1076 = vld [vmem:[%s7 + $0x4] sm:$0xf]
      %v1077 = vld [vmem:[%s8] sm:$0x1]
      %v1079 = vlaneseq
      %v1080 = vshrl.u32 %v1079, 7
      %v1081 = vsub.s32 0, %v1080
      %v1082 = vrot.slane %v1077, %v1081
      %v1086 = vunpack.c.l.b16 %v1075
      %v1087 = vunpack.c.l.b16 %v1076
      %v1088 = vpack.c.b16 %v1087, %v1086
      %v1091 = vsel %vm459, %v1074, 0
      %1093 = vmatprep.subr.bf16.mxu0 0
      %1094 = vmatpush1.bf16.msra.mxu0 %v1088
      %1095 = vmatprep.subr.bf16.mxu0 0
      %1096 = vmatpush1.bf16.msra.mxu0 0
      %1097 = vmatprep.subr.bf16.mxu0 0
      %1098 = vmatpush1.bf16.msra.mxu0 0
      %1099 = vmatprep.subr.bf16.mxu0 0
      %1100 = vmatpush1.bf16.msra.mxu0 0
      %1101 = vmatprep.subr.bf16.mxu0 0
      %1102 = vmatpush1.bf16.msra.mxu0 0
      %1103 = vmatprep.subr.bf16.mxu0 0
      %1104 = vmatpush1.bf16.msra.mxu0 0
      %1105 = vmatprep.subr.bf16.mxu0 0
      %1106 = vmatpush1.bf16.msra.mxu0 0
      %1107 = vmatprep.subr.bf16.mxu0 0
      %1108 = vmatpush1.bf16.msra.mxu0 0
      %1109 = vmatprep.subr.bf16.mxu0 0
      %1110 = vmatpush1.bf16.msra.mxu0 0
      %1111 = vmatprep.subr.bf16.mxu0 0
      %1112 = vmatpush1.bf16.msra.mxu0 0
      %1113 = vmatprep.subr.bf16.mxu0 0
      %1114 = vmatpush1.bf16.msra.mxu0 0
      %1115 = vmatprep.subr.bf16.mxu0 0
      %1116 = vmatpush1.bf16.msra.mxu0 0
      %1117 = vmatprep.subr.bf16.mxu0 0
      %1118 = vmatpush1.bf16.msra.mxu0 0
      %1119 = vmatprep.subr.bf16.mxu0 0
      %1120 = vmatpush1.bf16.msra.mxu0 0
      %1121 = vmatprep.subr.bf16.mxu0 0
      %1122 = vmatpush1.bf16.msra.mxu0 0
      %1123 = vmatprep.subr.bf16.mxu0 0
      %1124 = vmatpush1.bf16.msra.mxu0 0
      %1125 = vmatprep.mubr.bf16.mxu0 0
      %1126 = vmatmul.mubr.bf16.gmra.mrb[0].mxu0 %v1091
      %v1127 = vpop.f32.mrb[0].mxu0
      %v1128 = vadd.f32 %v1082, %v1127
      %v1129 = vpop.f32.mrb[0].mxu0
      %v1130 = vpop.f32.mrb[0].mxu0
      %v1131 = vpop.f32.mrb[0].mxu0
      %1132 = vdwg.mxu0
      %v1133 = vld [vmem:[%s9] sm:$0x1]
      %v1135 = vlaneseq
      %v1136 = vshrl.u32 %v1135, 7
      %v1137 = vsub.s32 0, %v1136
      %v1138 = vrot.slane %v1133, %v1137
      %v1140 = vmul.f32 %v1138, %v1128
      %v1141 = vadd.f32 %v356, %v1140
      %vm1142 = vcmask 519168
      %1143 = vst.msk [vmem:[%s354] sm:$0xf] %vm1142, %v1141
      %p1144 = scmp.lt.s32.totalorder %s21, 1
      %s1145 = scalar_select %p1144, %s21, 1
      %s1146 = smul.addr %s1145, 4
      %s1147 = scalar_lea.vmem %s10, %s1146
      // Predicated region
      $region61: #{encoder_forward.12} parent=59 // pred_check
        %p1148 = pneg %p254
      $region62: #{encoder_forward.12} parent=59 // pred_check_branch
        %1150 = sbr.rel (%p1148) target = $region64
      $region63: #{encoder_forward.12} parent=59 // pred_region
        _
      $region64: #{encoder_forward.12} parent=59 // pred_fallthru
        _
    $region60: #{encoder_forward.12} parent=5 // pred_fallthru
      _
    %p1151 = scmp.le.s32.totalorder 2, %s16
    // Predicated region
    $region65: #{encoder_forward.12} parent=5 // pred_check
      %p1152 = pneg %p1151
    $region66: #{encoder_forward.12} parent=5 // pred_check_branch
      %1154 = sbr.rel (%p1152) target = $region68
    $region67: #{encoder_forward.12} parent=5 // pred_region
      %s1155 = ssub.s32 %s16, 2
      // Predicated region
      $region69: #{encoder_forward.12} parent=67 // pred_check
        %p1156 = pneg %p260
      $region70: #{encoder_forward.12} parent=67 // pred_check_branch
        %1158 = sbr.rel (%p1156) target = $region72
      $region71: #{encoder_forward.12} parent=67 // pred_region
        %p1159 = scmp.lt.s32.totalorder %s22, 1
        %s1160 = scalar_select %p1159, %s22, 1
        %s1161 = smul.addr %s1160, 4
        %s1162 = scalar_lea.vmem %s10, %s1161
      $region72: #{encoder_forward.12} parent=67 // pred_fallthru
        _
    $region68: #{encoder_forward.12} parent=5 // pred_fallthru
      _
  $region6: #{encoder_forward.12} parent=0 // loop_footer
    %s20 = sadd.s32 1, %s16
  $region7: #{encoder_forward.12} parent=0 // loop_footer_branch
    %15 = sbr.rel target = $region3
  $region8: #{encoder_forward.12} parent=0 // loop_exit
    _

</llo_original>
